<compile_context>
chip_gen: v6e
topology: v6e:2x2x1
jax: 0.10.0
libtpu: 0.0.40
codegen_flags: <defaults>
</compile_context>

<pallas_src>
import functools
import math

import jax
import jax.numpy as jnp
from jax.experimental import pallas as pl
from jax.experimental.pallas import tpu as pltpu


_VMEM = pl.BlockSpec(memory_space=pltpu.MemorySpace.VMEM)
_LN_EPS = 1e-5
_NEG = -1e30  # finite "minus infinity" -> exp underflows to exactly 0 in f32


# ----------------------------------------------------------------------------
# Pallas kernels
# ----------------------------------------------------------------------------
def _mha_block_kernel(*refs, num_heads, n_batch, sq, sk, causal, has_kpm, same_kv, eps):
    """Fused multi-head-attention block:
         out = LayerNorm(xq + OutProj(Attention(QKV(xq[, xkv]))))
       Activations live in (N*S, E) layout (row = n*S + s), E on the lane axis."""
    it = iter(refs)
    xq_ref = next(it)                                # (Mq, E) query / residual stream
    xkv_ref = xq_ref if same_kv else next(it)        # (Mk, E) key/value source
    kpm_ref = next(it) if has_kpm else None          # (n_batch, sk) additive f32 mask
    wqkv_ref = next(it)                              # (E, 3E) pre-transposed in_proj
    bqkv_ref = next(it)                              # (1, 3E)
    wo_ref = next(it)                                # (E, E)  pre-transposed out_proj
    bo_ref = next(it)                                # (1, E)
    g_ref = next(it)                                 # (1, E)  LayerNorm gamma
    b_ref = next(it)                                 # (1, E)  LayerNorm beta
    o_ref = next(it)                                 # (Mq, E) output
    ctx_ref = next(it)                               # (Mq, E) VMEM scratch

    E = xq_ref.shape[-1]
    dh = E // num_heads
    scale = 1.0 / math.sqrt(dh)

    xq = xq_ref[...].astype(jnp.float32)
    bqkv = bqkv_ref[...]

    if same_kv:
        # Single fused QKV matmul (Nout = 3E): better MXU occupancy, one pass over xq.
        qkv = jnp.dot(xq, wqkv_ref[...], preferred_element_type=jnp.float32) + bqkv
        q = qkv[:, :E]
        k = qkv[:, E:2 * E]
        v = qkv[:, 2 * E:]
    else:
        xkv = xkv_ref[...].astype(jnp.float32)
        q = jnp.dot(xq, wqkv_ref[:, :E], preferred_element_type=jnp.float32) + bqkv[:, :E]
        kv = jnp.dot(xkv, wqkv_ref[:, E:], preferred_element_type=jnp.float32) + bqkv[:, E:]
        k = kv[:, :E]
        v = kv[:, E:]

    if causal:
        rows = jax.lax.broadcasted_iota(jnp.int32, (sq, sk), 0)
        cols = jax.lax.broadcasted_iota(jnp.int32, (sq, sk), 1)
        causal_bias = jnp.where(cols > rows, jnp.float32(_NEG), jnp.float32(0.0))
    kpm = kpm_ref[...] if has_kpm else None

    for n in range(n_batch):                      # static unrolled: n_batch, num_heads tiny
        q_n = q[n * sq:(n + 1) * sq, :]
        k_n = k[n * sk:(n + 1) * sk, :]
        v_n = v[n * sk:(n + 1) * sk, :]
        for h in range(num_heads):
            qh = q_n[:, h * dh:(h + 1) * dh] * scale
            kh = k_n[:, h * dh:(h + 1) * dh]
            vh = v_n[:, h * dh:(h + 1) * dh]
            s = jax.lax.dot_general(qh, kh, (((1,), (1,)), ((), ())),
                                    preferred_element_type=jnp.float32)     # (sq, sk)
            if causal:
                s = s + causal_bias
            if has_kpm:
                s = s + kpm[n:n + 1, :]
            m = jnp.max(s, axis=-1, keepdims=True)
            p = jnp.exp(s - m)
            denom = jnp.sum(p, axis=-1, keepdims=True)
            ctx = jnp.dot(p, vh, preferred_element_type=jnp.float32)        # (sq, dh)
            # Deferred softmax normalization on the small (sq, dh) result; EUP reciprocal.
            ctx = ctx * pl.reciprocal(denom, approx=True)
            ctx_ref[n * sq:(n + 1) * sq, h * dh:(h + 1) * dh] = ctx

    # Out-projection + residual add + LayerNorm epilogue.
    y = jnp.dot(ctx_ref[...], wo_ref[...], preferred_element_type=jnp.float32) + bo_ref[...]
    z = xq + y
    mu = jnp.mean(z, axis=-1, keepdims=True)
    var = jnp.mean((z - mu) ** 2, axis=-1, keepdims=True)
    zn = (z - mu) * jax.lax.rsqrt(var + eps)
    o_ref[...] = (zn * g_ref[...] + b_ref[...]).astype(o_ref.dtype)


def _ffn_block_kernel(x_ref, w1_ref, b1_ref, w2_ref, b2_ref, g_ref, be_ref, o_ref, *, eps):
    """out = LayerNorm(x + lin2(relu(lin1(x)))); FF-wide hidden stays in VMEM."""
    x = x_ref[...].astype(jnp.float32)
    h = jnp.dot(x, w1_ref[...], preferred_element_type=jnp.float32) + b1_ref[...]
    h = jnp.maximum(h, 0.0)
    y = jnp.dot(h, w2_ref[...], preferred_element_type=jnp.float32) + b2_ref[...]
    z = x + y
    mu = jnp.mean(z, axis=-1, keepdims=True)
    var = jnp.mean((z - mu) ** 2, axis=-1, keepdims=True)
    zn = (z - mu) * jax.lax.rsqrt(var + eps)
    o_ref[...] = (zn * g_ref[...] + be_ref[...]).astype(o_ref.dtype)


def _ln_kernel(x_ref, g_ref, b_ref, o_ref, *, eps):
    x = x_ref[...].astype(jnp.float32)
    mu = jnp.mean(x, axis=-1, keepdims=True)
    var = jnp.mean((x - mu) ** 2, axis=-1, keepdims=True)
    xn = (x - mu) * jax.lax.rsqrt(var + eps)
    o_ref[...] = (xn * g_ref[...] + b_ref[...]).astype(o_ref.dtype)


# ----------------------------------------------------------------------------
# Wrappers (toy sizes -> whole problem fits VMEM; single-invocation kernels)
# ----------------------------------------------------------------------------
def mha_block(xq, p, ln_g, ln_b, *, num_heads, n_batch, sq, sk,
              causal=False, xkv=None, kpm_add=None, eps=_LN_EPS):
    same_kv = xkv is None
    has_kpm = kpm_add is not None
    Mq, E = xq.shape
    inputs = [xq]
    if not same_kv:
        inputs.append(xkv)
    if has_kpm:
        inputs.append(kpm_add)
    inputs += [p["in_proj_wt"], p["in_proj_b"], p["out_proj_wt"], p["out_proj_b"], ln_g, ln_b]
    kernel = functools.partial(
        _mha_block_kernel, num_heads=num_heads, n_batch=n_batch, sq=sq, sk=sk,
        causal=causal, has_kpm=has_kpm, same_kv=same_kv, eps=eps)
    return pl.pallas_call(
        kernel,
        out_shape=jax.ShapeDtypeStruct((Mq, E), jnp.float32),
        in_specs=[_VMEM] * len(inputs),
        out_specs=_VMEM,
        scratch_shapes=[pltpu.VMEM((Mq, E), jnp.float32)],
    )(*inputs)


def ffn_block(x, w1t, b1, w2t, b2, ln_g, ln_b, *, eps=_LN_EPS):
    M, E = x.shape
    return pl.pallas_call(
        functools.partial(_ffn_block_kernel, eps=eps),
        out_shape=jax.ShapeDtypeStruct((M, E), jnp.float32),
        in_specs=[_VMEM] * 7,
        out_specs=_VMEM,
    )(x, w1t, b1, w2t, b2, ln_g, ln_b)


def layernorm(x, ln_g, ln_b, *, eps=_LN_EPS):
    return pl.pallas_call(
        functools.partial(_ln_kernel, eps=eps),
        out_shape=jax.ShapeDtypeStruct(x.shape, jnp.float32),
        in_specs=[_VMEM] * 3,
        out_specs=_VMEM,
    )(x, ln_g, ln_b)


# ----------------------------------------------------------------------------
# Encoder / decoder layers (post-norm, ReLU FFN -- nn.Transformer defaults)
# ----------------------------------------------------------------------------
def encoder_layer(x, p, *, num_heads, n_batch, s_src, kpm_add):
    x = mha_block(x, p["self_attn"], p["ln1_g"], p["ln1_b"],
                  num_heads=num_heads, n_batch=n_batch, sq=s_src, sk=s_src,
                  causal=False, kpm_add=kpm_add)
    x = ffn_block(x, p["lin1_wt"], p["lin1_b"], p["lin2_wt"], p["lin2_b"],
                  p["ln2_g"], p["ln2_b"])
    return x


def decoder_layer(y, memory, p, *, num_heads, n_batch, s_tgt, s_src):
    y = mha_block(y, p["self_attn"], p["ln1_g"], p["ln1_b"],
                  num_heads=num_heads, n_batch=n_batch, sq=s_tgt, sk=s_tgt, causal=True)
    y = mha_block(y, p["cross_attn"], p["ln2_g"], p["ln2_b"],
                  num_heads=num_heads, n_batch=n_batch, sq=s_tgt, sk=s_src,
                  causal=False, xkv=memory)   # memory_key_padding_mask=None (reference)
    y = ffn_block(y, p["lin1_wt"], p["lin1_b"], p["lin2_wt"], p["lin2_b"],
                  p["ln3_g"], p["ln3_b"])
    return y


# ----------------------------------------------------------------------------
# Full Transformer forward (mirrors the PyTorch module's forward)
# ----------------------------------------------------------------------------
def transformer_forward(params, src, tgt, *, src_pad_idx, num_heads):
    S_src, N = src.shape
    S_tgt, _ = tgt.shape
    E = params["src_word_emb"].shape[1]

    src_positions = jnp.broadcast_to(jnp.arange(S_src)[:, None], (S_src, N))
    tgt_positions = jnp.broadcast_to(jnp.arange(S_tgt)[:, None], (S_tgt, N))

    # TODO(synk): embedding gathers stay in plain JAX (glue); no Pallas gather here.
    embed_src = params["src_word_emb"][src] + params["src_pos_emb"][src_positions]
    # Faithful to reference bug: tgt_positional_embedding used for the token lookup too.
    embed_tgt = params["tgt_pos_emb"][tgt] + params["tgt_pos_emb"][tgt_positions]
    # dropout -> identity (eval mode)

    # Lane-dense residual stream: (S, N, E) -> (N, S, E) -> (N*S, E); one transpose each way.
    x = embed_src.transpose(1, 0, 2).reshape(N * S_src, E)
    y = embed_tgt.transpose(1, 0, 2).reshape(N * S_tgt, E)

    # Tiny (N, S_src) additive key-padding mask; expanded to (Sq, Sk) inside the kernel.
    kpm_add = jnp.where(src.T == src_pad_idx, jnp.float32(_NEG), jnp.float32(0.0))

    for lp in params["encoder_layers"]:
        x = encoder_layer(x, lp, num_heads=num_heads, n_batch=N, s_src=S_src, kpm_add=kpm_add)
    memory = layernorm(x, params["enc_norm_g"], params["enc_norm_b"])

    for lp in params["decoder_layers"]:
        y = decoder_layer(y, memory, lp, num_heads=num_heads, n_batch=N,
                          s_tgt=S_tgt, s_src=S_src)
    out = layernorm(y, params["dec_norm_g"], params["dec_norm_b"])

    # Back to PyTorch layout (tgt_len, N, E); fc_out not applied, matching reference forward.
    return out.reshape(N, S_tgt, E).transpose(1, 0, 2)


# ----------------------------------------------------------------------------
# Deterministic parameter init (shapes match the nn modules; weights pre-transposed)
# ----------------------------------------------------------------------------
def _dense(key, shape, scale=0.08):
    return jax.random.normal(key, shape, jnp.float32) * scale


def _init_mha(key, E):
    k = jax.random.split(key, 4)
    return dict(
        in_proj_wt=_dense(k[0], (3 * E, E)).T,            # stored (E, 3E): x @ W directly
        in_proj_b=_dense(k[1], (3 * E,)).reshape(1, -1),
        out_proj_wt=_dense(k[2], (E, E)).T,               # stored (E, E)
        out_proj_b=_dense(k[3], (E,)).reshape(1, -1),
    )


def _init_enc_layer(key, E, FF):
    k = jax.random.split(key, 5)
    return dict(
        self_attn=_init_mha(k[0], E),
        lin1_wt=_dense(k[1], (FF, E)).T,                  # (E, FF)
        lin1_b=_dense(k[2], (FF,)).reshape(1, -1),
        lin2_wt=_dense(k[3], (E, FF)).T,                  # (FF, E)
        lin2_b=_dense(k[4], (E,)).reshape(1, -1),
        ln1_g=jnp.ones((1, E), jnp.float32), ln1_b=jnp.zeros((1, E), jnp.float32),
        ln2_g=jnp.ones((1, E), jnp.float32), ln2_b=jnp.zeros((1, E), jnp.float32),
    )


def _init_dec_layer(key, E, FF):
    k = jax.random.split(key, 6)
    return dict(
        self_attn=_init_mha(k[0], E),
        cross_attn=_init_mha(k[1], E),
        lin1_wt=_dense(k[2], (FF, E)).T,
        lin1_b=_dense(k[3], (FF,)).reshape(1, -1),
        lin2_wt=_dense(k[4], (E, FF)).T,
        lin2_b=_dense(k[5], (E,)).reshape(1, -1),
        ln1_g=jnp.ones((1, E), jnp.float32), ln1_b=jnp.zeros((1, E), jnp.float32),
        ln2_g=jnp.ones((1, E), jnp.float32), ln2_b=jnp.zeros((1, E), jnp.float32),
        ln3_g=jnp.ones((1, E), jnp.float32), ln3_b=jnp.zeros((1, E), jnp.float32),
    )


def init_params(key, src_vocab, tgt_vocab, E, FF, max_length, n_enc, n_dec):
    keys = jax.random.split(key, 8 + n_enc + n_dec)
    return dict(
        src_word_emb=_dense(keys[0], (src_vocab, E), scale=0.5),
        src_pos_emb=_dense(keys[1], (max_length, E), scale=0.5),
        tgt_word_emb=_dense(keys[2], (tgt_vocab, E), scale=0.5),  # unused (reference bug)
        tgt_pos_emb=_dense(keys[3], (max_length, E), scale=0.5),
        enc_norm_g=jnp.ones((1, E), jnp.float32), enc_norm_b=jnp.zeros((1, E), jnp.float32),
        dec_norm_g=jnp.ones((1, E), jnp.float32), dec_norm_b=jnp.zeros((1, E), jnp.float32),
        fc_out_w=_dense(keys[4], (tgt_vocab, E)),   # defined but never applied (reference)
        fc_out_b=_dense(keys[5], (tgt_vocab,)),
        encoder_layers=[_init_enc_layer(keys[8 + i], E, FF) for i in range(n_enc)],
        decoder_layers=[_init_dec_layer(keys[8 + n_enc + i], E, FF) for i in range(n_dec)],
    )


# ----------------------------------------------------------------------------
if __name__ == "__main__":
    # Hyper-parameters consistent with the reference constructor (small demo sizes)
    src_vocab_size = 20
    tgt_vocab_size = 20
    embedding_size = 32
    num_heads = 4
    num_encoder_layers = 2
    num_decoder_layers = 2
    max_length = 16
    forward_expansion = 64    # dim_feedforward in nn.Transformer
    src_pad_idx = 0

    root = jax.random.PRNGKey(0)
    k_params, k_src, k_tgt = jax.random.split(root, 3)

    params = init_params(k_params, src_vocab_size, tgt_vocab_size, embedding_size,
                         forward_expansion, max_length,
                         num_encoder_layers, num_decoder_layers)

    # Inputs: src (src_len, N), tgt (tgt_len, N)
    src_len, tgt_len, N = 8, 6, 2
    src = jax.random.randint(k_src, (src_len, N), 1, src_vocab_size, dtype=jnp.int32)
    src = src.at[-2:, 0].set(src_pad_idx)          # some padded positions in batch 0
    # tgt ids kept < max_length so the reference's buggy embedding lookup stays in-bounds
    tgt = jax.random.randint(k_tgt, (tgt_len, N), 1, max_length, dtype=jnp.int32)

    fwd = jax.jit(functools.partial(transformer_forward,
                                    src_pad_idx=src_pad_idx, num_heads=num_heads))
    out = fwd(params, src, tgt)
    jax.block_until_ready(out)

    assert out.shape == (tgt_len, N, embedding_size), out.shape
    assert bool(jnp.all(jnp.isfinite(out))), "non-finite output"
    print("KERNEL_OK")
</pallas_src>

<mosaic_0001>
module attributes {stable_mosaic.version = 11 : i64} {
  func.func @_ffn_block_kernel(%arg0: memref<16x32xf32, #tpu.memory_space<vmem>>, %arg1: memref<32x64xf32, #tpu.memory_space<vmem>>, %arg2: memref<1x64xf32, #tpu.memory_space<vmem>>, %arg3: memref<64x32xf32, #tpu.memory_space<vmem>>, %arg4: memref<1x32xf32, #tpu.memory_space<vmem>>, %arg5: memref<1x32xf32, #tpu.memory_space<vmem>>, %arg6: memref<1x32xf32, #tpu.memory_space<vmem>>, %arg7: memref<16x32xf32, #tpu.memory_space<vmem>>) attributes {dimension_semantics = [], scalar_prefetch = 0 : i64, scratch_operands = 0 : i64, tpu.core_type = #tpu.core_type<tc>} {
    %c0 = arith.constant 0 : index
    %c0_0 = arith.constant 0 : index
    %0 = vector.load %arg0[%c0, %c0_0] : memref<16x32xf32, #tpu.memory_space<vmem>>, vector<16x32xf32>
    %c0_1 = arith.constant 0 : index
    %c0_2 = arith.constant 0 : index
    %1 = vector.load %arg1[%c0_1, %c0_2] : memref<32x64xf32, #tpu.memory_space<vmem>>, vector<32x64xf32>
    %cst = arith.constant dense<0.000000e+00> : vector<16x64xf32>
    %2 = tpu.matmul %0, %1, %cst {dimension_numbers = #tpu.dot_dimension_numbers<[1], [0], [0], [1], [0, 0, 1, 1], [], []>} : vector<16x32xf32>, vector<32x64xf32>, vector<16x64xf32> -> vector<16x64xf32>
    %c0_3 = arith.constant 0 : index
    %c0_4 = arith.constant 0 : index
    %3 = vector.load %arg2[%c0_3, %c0_4] : memref<1x64xf32, #tpu.memory_space<vmem>>, vector<1x64xf32>
    %4 = vector.broadcast %3 : vector<1x64xf32> to vector<16x64xf32>
    %5 = arith.addf %2, %4 : vector<16x64xf32>
    %cst_5 = arith.constant 0.000000e+00 : f32
    %6 = vector.broadcast %cst_5 : f32 to vector<16x64xf32>
    %7 = arith.maximumf %5, %6 : vector<16x64xf32>
    %c0_6 = arith.constant 0 : index
    %c0_7 = arith.constant 0 : index
    %8 = vector.load %arg3[%c0_6, %c0_7] : memref<64x32xf32, #tpu.memory_space<vmem>>, vector<64x32xf32>
    %cst_8 = arith.constant dense<0.000000e+00> : vector<16x32xf32>
    %9 = tpu.matmul %7, %8, %cst_8 {dimension_numbers = #tpu.dot_dimension_numbers<[1], [0], [0], [1], [0, 0, 1, 1], [], []>} : vector<16x64xf32>, vector<64x32xf32>, vector<16x32xf32> -> vector<16x32xf32>
    %c0_9 = arith.constant 0 : index
    %c0_10 = arith.constant 0 : index
    %10 = vector.load %arg4[%c0_9, %c0_10] : memref<1x32xf32, #tpu.memory_space<vmem>>, vector<1x32xf32>
    %11 = vector.broadcast %10 : vector<1x32xf32> to vector<16x32xf32>
    %12 = arith.addf %9, %11 : vector<16x32xf32>
    %13 = arith.addf %0, %12 : vector<16x32xf32>
    %cst_11 = arith.constant dense<0.000000e+00> : vector<16xf32>
    %14 = vector.multi_reduction <add>, %13, %cst_11 [1] : vector<16x32xf32> to vector<16xf32>
    %15 = vector.shape_cast %14 : vector<16xf32> to vector<16x1xf32>
    %cst_12 = arith.constant 3.200000e+01 : f32
    %16 = vector.broadcast %cst_12 : f32 to vector<16x1xf32>
    %17 = arith.divf %15, %16 : vector<16x1xf32>
    %18 = vector.broadcast %17 : vector<16x1xf32> to vector<16x32xf32>
    %19 = arith.subf %13, %18 : vector<16x32xf32>
    %20 = arith.mulf %19, %19 : vector<16x32xf32>
    %cst_13 = arith.constant dense<0.000000e+00> : vector<16xf32>
    %21 = vector.multi_reduction <add>, %20, %cst_13 [1] : vector<16x32xf32> to vector<16xf32>
    %22 = vector.shape_cast %21 : vector<16xf32> to vector<16x1xf32>
    %cst_14 = arith.constant 3.200000e+01 : f32
    %23 = vector.broadcast %cst_14 : f32 to vector<16x1xf32>
    %24 = arith.divf %22, %23 : vector<16x1xf32>
    %25 = vector.broadcast %17 : vector<16x1xf32> to vector<16x32xf32>
    %26 = arith.subf %13, %25 : vector<16x32xf32>
    %cst_15 = arith.constant 9.99999974E-6 : f32
    %27 = vector.broadcast %cst_15 : f32 to vector<16x1xf32>
    %28 = arith.addf %24, %27 : vector<16x1xf32>
    %29 = math.rsqrt %28 : vector<16x1xf32>
    %30 = vector.broadcast %29 : vector<16x1xf32> to vector<16x32xf32>
    %31 = arith.mulf %26, %30 : vector<16x32xf32>
    %c0_16 = arith.constant 0 : index
    %c0_17 = arith.constant 0 : index
    %32 = vector.load %arg5[%c0_16, %c0_17] : memref<1x32xf32, #tpu.memory_space<vmem>>, vector<1x32xf32>
    %33 = vector.broadcast %32 : vector<1x32xf32> to vector<16x32xf32>
    %34 = arith.mulf %31, %33 : vector<16x32xf32>
    %c0_18 = arith.constant 0 : index
    %c0_19 = arith.constant 0 : index
    %35 = vector.load %arg6[%c0_18, %c0_19] : memref<1x32xf32, #tpu.memory_space<vmem>>, vector<1x32xf32>
    %36 = vector.broadcast %35 : vector<1x32xf32> to vector<16x32xf32>
    %37 = arith.addf %34, %36 : vector<16x32xf32>
    %c0_20 = arith.constant 0 : index
    %c0_21 = arith.constant 0 : index
    %38 = vector.load %arg7[%c0_20, %c0_21] : memref<16x32xf32, #tpu.memory_space<vmem>>, vector<16x32xf32>
    tpu.vector_store %arg7[%c0_20, %c0_21], %37 {strides = array<i32>} : memref<16x32xf32, #tpu.memory_space<vmem>>, vector<16x32xf32>,
    return
  }
}

module attributes {stable_mosaic.version = 11 : i64} {
  func.func @_ln_kernel(%arg0: memref<16x32xf32, #tpu.memory_space<vmem>>, %arg1: memref<1x32xf32, #tpu.memory_space<vmem>>, %arg2: memref<1x32xf32, #tpu.memory_space<vmem>>, %arg3: memref<16x32xf32, #tpu.memory_space<vmem>>) attributes {dimension_semantics = [], scalar_prefetch = 0 : i64, scratch_operands = 0 : i64, tpu.core_type = #tpu.core_type<tc>} {
    %c0 = arith.constant 0 : index
    %c0_0 = arith.constant 0 : index
    %0 = vector.load %arg0[%c0, %c0_0] : memref<16x32xf32, #tpu.memory_space<vmem>>, vector<16x32xf32>
    %cst = arith.constant dense<0.000000e+00> : vector<16xf32>
    %1 = vector.multi_reduction <add>, %0, %cst [1] : vector<16x32xf32> to vector<16xf32>
    %2 = vector.shape_cast %1 : vector<16xf32> to vector<16x1xf32>
    %cst_1 = arith.constant 3.200000e+01 : f32
    %3 = vector.broadcast %cst_1 : f32 to vector<16x1xf32>
    %4 = arith.divf %2, %3 : vector<16x1xf32>
    %5 = vector.broadcast %4 : vector<16x1xf32> to vector<16x32xf32>
    %6 = arith.subf %0, %5 : vector<16x32xf32>
    %7 = arith.mulf %6, %6 : vector<16x32xf32>
    %cst_2 = arith.constant dense<0.000000e+00> : vector<16xf32>
    %8 = vector.multi_reduction <add>, %7, %cst_2 [1] : vector<16x32xf32> to vector<16xf32>
    %9 = vector.shape_cast %8 : vector<16xf32> to vector<16x1xf32>
    %cst_3 = arith.constant 3.200000e+01 : f32
    %10 = vector.broadcast %cst_3 : f32 to vector<16x1xf32>
    %11 = arith.divf %9, %10 : vector<16x1xf32>
    %12 = vector.broadcast %4 : vector<16x1xf32> to vector<16x32xf32>
    %13 = arith.subf %0, %12 : vector<16x32xf32>
    %cst_4 = arith.constant 9.99999974E-6 : f32
    %14 = vector.broadcast %cst_4 : f32 to vector<16x1xf32>
    %15 = arith.addf %11, %14 : vector<16x1xf32>
    %16 = math.rsqrt %15 : vector<16x1xf32>
    %17 = vector.broadcast %16 : vector<16x1xf32> to vector<16x32xf32>
    %18 = arith.mulf %13, %17 : vector<16x32xf32>
    %c0_5 = arith.constant 0 : index
    %c0_6 = arith.constant 0 : index
    %19 = vector.load %arg1[%c0_5, %c0_6] : memref<1x32xf32, #tpu.memory_space<vmem>>, vector<1x32xf32>
    %20 = vector.broadcast %19 : vector<1x32xf32> to vector<16x32xf32>
    %21 = arith.mulf %18, %20 : vector<16x32xf32>
    %c0_7 = arith.constant 0 : index
    %c0_8 = arith.constant 0 : index
    %22 = vector.load %arg2[%c0_7, %c0_8] : memref<1x32xf32, #tpu.memory_space<vmem>>, vector<1x32xf32>
    %23 = vector.broadcast %22 : vector<1x32xf32> to vector<16x32xf32>
    %24 = arith.addf %21, %23 : vector<16x32xf32>
    %c0_9 = arith.constant 0 : index
    %c0_10 = arith.constant 0 : index
    %25 = vector.load %arg3[%c0_9, %c0_10] : memref<16x32xf32, #tpu.memory_space<vmem>>, vector<16x32xf32>
    tpu.vector_store %arg3[%c0_9, %c0_10], %24 {strides = array<i32>} : memref<16x32xf32, #tpu.memory_space<vmem>>, vector<16x32xf32>,
    return
  }
}

module attributes {stable_mosaic.version = 11 : i64} {
  func.func @_mha_block_kernel(%arg0: memref<16x32xf32, #tpu.memory_space<vmem>>, %arg1: memref<2x8xf32, #tpu.memory_space<vmem>>, %arg2: memref<32x96xf32, #tpu.memory_space<vmem>>, %arg3: memref<1x96xf32, #tpu.memory_space<vmem>>, %arg4: memref<32x32xf32, #tpu.memory_space<vmem>>, %arg5: memref<1x32xf32, #tpu.memory_space<vmem>>, %arg6: memref<1x32xf32, #tpu.memory_space<vmem>>, %arg7: memref<1x32xf32, #tpu.memory_space<vmem>>, %arg8: memref<16x32xf32, #tpu.memory_space<vmem>>, %arg9: memref<16x32xf32, #tpu.memory_space<vmem>>) attributes {dimension_semantics = [], scalar_prefetch = 0 : i64, scratch_operands = 1 : i64, tpu.core_type = #tpu.core_type<tc>} {
    %c0 = arith.constant 0 : index
    %c0_0 = arith.constant 0 : index
    %0 = vector.load %arg0[%c0, %c0_0] : memref<16x32xf32, #tpu.memory_space<vmem>>, vector<16x32xf32>
    %c0_1 = arith.constant 0 : index
    %c0_2 = arith.constant 0 : index
    %1 = vector.load %arg3[%c0_1, %c0_2] : memref<1x96xf32, #tpu.memory_space<vmem>>, vector<1x96xf32>
    %c0_3 = arith.constant 0 : index
    %c0_4 = arith.constant 0 : index
    %2 = vector.load %arg2[%c0_3, %c0_4] : memref<32x96xf32, #tpu.memory_space<vmem>>, vector<32x96xf32>
    %cst = arith.constant dense<0.000000e+00> : vector<16x96xf32>
    %3 = tpu.matmul %0, %2, %cst {dimension_numbers = #tpu.dot_dimension_numbers<[1], [0], [0], [1], [0, 0, 1, 1], [], []>} : vector<16x32xf32>, vector<32x96xf32>, vector<16x96xf32> -> vector<16x96xf32>
    %4 = vector.broadcast %1 : vector<1x96xf32> to vector<16x96xf32>
    %5 = arith.addf %3, %4 : vector<16x96xf32>
    %6 = vector.extract_strided_slice %5 {offsets = [0, 0], sizes = [16, 32], strides = [1, 1]} : vector<16x96xf32> to vector<16x32xf32>
    %7 = vector.extract_strided_slice %5 {offsets = [0, 32], sizes = [16, 32], strides = [1, 1]} : vector<16x96xf32> to vector<16x32xf32>
    %8 = vector.extract_strided_slice %5 {offsets = [0, 64], sizes = [16, 32], strides = [1, 1]} : vector<16x96xf32> to vector<16x32xf32>
    %c0_5 = arith.constant 0 : index
    %c0_6 = arith.constant 0 : index
    %9 = vector.load %arg1[%c0_5, %c0_6] : memref<2x8xf32, #tpu.memory_space<vmem>>, vector<2x8xf32>
    %10 = vector.extract_strided_slice %6 {offsets = [0, 0], sizes = [8, 32], strides = [1, 1]} : vector<16x32xf32> to vector<8x32xf32>
    %11 = vector.extract_strided_slice %7 {offsets = [0, 0], sizes = [8, 32], strides = [1, 1]} : vector<16x32xf32> to vector<8x32xf32>
    %12 = vector.extract_strided_slice %8 {offsets = [0, 0], sizes = [8, 32], strides = [1, 1]} : vector<16x32xf32> to vector<8x32xf32>
    %13 = vector.extract_strided_slice %10 {offsets = [0, 0], sizes = [8, 8], strides = [1, 1]} : vector<8x32xf32> to vector<8x8xf32>
    %cst_7 = arith.constant 0.353553385 : f32
    %14 = vector.broadcast %cst_7 : f32 to vector<8x8xf32>
    %15 = arith.mulf %13, %14 : vector<8x8xf32>
    %16 = vector.extract_strided_slice %11 {offsets = [0, 0], sizes = [8, 8], strides = [1, 1]} : vector<8x32xf32> to vector<8x8xf32>
    %17 = vector.extract_strided_slice %12 {offsets = [0, 0], sizes = [8, 8], strides = [1, 1]} : vector<8x32xf32> to vector<8x8xf32>
    %cst_8 = arith.constant dense<0.000000e+00> : vector<8x8xf32>
    %18 = tpu.matmul %15, %16, %cst_8 {dimension_numbers = #tpu.dot_dimension_numbers<[1], [1], [0], [0], [0, 0, 1, 0], [], []>} : vector<8x8xf32>, vector<8x8xf32>, vector<8x8xf32> -> vector<8x8xf32>
    %19 = vector.extract_strided_slice %9 {offsets = [0, 0], sizes = [1, 8], strides = [1, 1]} : vector<2x8xf32> to vector<1x8xf32>
    %20 = vector.broadcast %19 : vector<1x8xf32> to vector<8x8xf32>
    %21 = arith.addf %18, %20 : vector<8x8xf32>
    %cst_9 = arith.constant dense<0xFF800000> : vector<8xf32>
    %22 = vector.multi_reduction <maximumf>, %21, %cst_9 [1] : vector<8x8xf32> to vector<8xf32>
    %23 = vector.shape_cast %22 : vector<8xf32> to vector<8x1xf32>
    %24 = vector.broadcast %23 : vector<8x1xf32> to vector<8x8xf32>
    %25 = arith.subf %21, %24 : vector<8x8xf32>
    %26 = math.exp %25 : vector<8x8xf32>
    %cst_10 = arith.constant dense<0.000000e+00> : vector<8xf32>
    %27 = vector.multi_reduction <add>, %26, %cst_10 [1] : vector<8x8xf32> to vector<8xf32>
    %28 = vector.shape_cast %27 : vector<8xf32> to vector<8x1xf32>
    %cst_11 = arith.constant dense<0.000000e+00> : vector<8x8xf32>
    %29 = tpu.matmul %26, %17, %cst_11 {dimension_numbers = #tpu.dot_dimension_numbers<[1], [0], [0], [1], [0, 0, 1, 1], [], []>} : vector<8x8xf32>, vector<8x8xf32>, vector<8x8xf32> -> vector<8x8xf32>
    %30 = tpu.reciprocal %28 {approx = true} : vector<8x1xf32> -> vector<8x1xf32>
    %31 = vector.broadcast %30 : vector<8x1xf32> to vector<8x8xf32>
    %32 = arith.mulf %29, %31 : vector<8x8xf32>
    %c0_12 = arith.constant 0 : index
    %c0_13 = arith.constant 0 : index
    %33 = vector.load %arg9[%c0_12, %c0_13] : memref<16x32xf32, #tpu.memory_space<vmem>>, vector<8x8xf32>
    tpu.vector_store %arg9[%c0_12, %c0_13], %32 {strides = array<i32>} : memref<16x32xf32, #tpu.memory_space<vmem>>, vector<8x8xf32>,
    %34 = vector.extract_strided_slice %10 {offsets = [0, 8], sizes = [8, 8], strides = [1, 1]} : vector<8x32xf32> to vector<8x8xf32>
    %cst_14 = arith.constant 0.353553385 : f32
    %35 = vector.broadcast %cst_14 : f32 to vector<8x8xf32>
    %36 = arith.mulf %34, %35 : vector<8x8xf32>
    %37 = vector.extract_strided_slice %11 {offsets = [0, 8], sizes = [8, 8], strides = [1, 1]} : vector<8x32xf32> to vector<8x8xf32>
    %38 = vector.extract_strided_slice %12 {offsets = [0, 8], sizes = [8, 8], strides = [1, 1]} : vector<8x32xf32> to vector<8x8xf32>
    %cst_15 = arith.constant dense<0.000000e+00> : vector<8x8xf32>
    %39 = tpu.matmul %36, %37, %cst_15 {dimension_numbers = #tpu.dot_dimension_numbers<[1], [1], [0], [0], [0, 0, 1, 0], [], []>} : vector<8x8xf32>, vector<8x8xf32>, vector<8x8xf32> -> vector<8x8xf32>
    %40 = vector.extract_strided_slice %9 {offsets = [0, 0], sizes = [1, 8], strides = [1, 1]} : vector<2x8xf32> to vector<1x8xf32>
    %41 = vector.broadcast %40 : vector<1x8xf32> to vector<8x8xf32>
    %42 = arith.addf %39, %41 : vector<8x8xf32>
    %cst_16 = arith.constant dense<0xFF800000> : vector<8xf32>
    %43 = vector.multi_reduction <maximumf>, %42, %cst_16 [1] : vector<8x8xf32> to vector<8xf32>
    %44 = vector.shape_cast %43 : vector<8xf32> to vector<8x1xf32>
    %45 = vector.broadcast %44 : vector<8x1xf32> to vector<8x8xf32>
    %46 = arith.subf %42, %45 : vector<8x8xf32>
    %47 = math.exp %46 : vector<8x8xf32>
    %cst_17 = arith.constant dense<0.000000e+00> : vector<8xf32>
    %48 = vector.multi_reduction <add>, %47, %cst_17 [1] : vector<8x8xf32> to vector<8xf32>
    %49 = vector.shape_cast %48 : vector<8xf32> to vector<8x1xf32>
    %cst_18 = arith.constant dense<0.000000e+00> : vector<8x8xf32>
    %50 = tpu.matmul %47, %38, %cst_18 {dimension_numbers = #tpu.dot_dimension_numbers<[1], [0], [0], [1], [0, 0, 1, 1], [], []>} : vector<8x8xf32>, vector<8x8xf32>, vector<8x8xf32> -> vector<8x8xf32>
    %51 = tpu.reciprocal %49 {approx = true} : vector<8x1xf32> -> vector<8x1xf32>
    %52 = vector.broadcast %51 : vector<8x1xf32> to vector<8x8xf32>
    %53 = arith.mulf %50, %52 : vector<8x8xf32>
    %c0_19 = arith.constant 0 : index
    %c8 = arith.constant 8 : index
    %54 = vector.load %arg9[%c0_19, %c8] : memref<16x32xf32, #tpu.memory_space<vmem>>, vector<8x8xf32>
    tpu.vector_store %arg9[%c0_19, %c8], %53 {strides = array<i32>} : memref<16x32xf32, #tpu.memory_space<vmem>>, vector<8x8xf32>,
    %55 = vector.extract_strided_slice %10 {offsets = [0, 16], sizes = [8, 8], strides = [1, 1]} : vector<8x32xf32> to vector<8x8xf32>
    %cst_20 = arith.constant 0.353553385 : f32
    %56 = vector.broadcast %cst_20 : f32 to vector<8x8xf32>
    %57 = arith.mulf %55, %56 : vector<8x8xf32>
    %58 = vector.extract_strided_slice %11 {offsets = [0, 16], sizes = [8, 8], strides = [1, 1]} : vector<8x32xf32> to vector<8x8xf32>
    %59 = vector.extract_strided_slice %12 {offsets = [0, 16], sizes = [8, 8], strides = [1, 1]} : vector<8x32xf32> to vector<8x8xf32>
    %cst_21 = arith.constant dense<0.000000e+00> : vector<8x8xf32>
    %60 = tpu.matmul %57, %58, %cst_21 {dimension_numbers = #tpu.dot_dimension_numbers<[1], [1], [0], [0], [0, 0, 1, 0], [], []>} : vector<8x8xf32>, vector<8x8xf32>, vector<8x8xf32> -> vector<8x8xf32>
    %61 = vector.extract_strided_slice %9 {offsets = [0, 0], sizes = [1, 8], strides = [1, 1]} : vector<2x8xf32> to vector<1x8xf32>
    %62 = vector.broadcast %61 : vector<1x8xf32> to vector<8x8xf32>
    %63 = arith.addf %60, %62 : vector<8x8xf32>
    %cst_22 = arith.constant dense<0xFF800000> : vector<8xf32>
    %64 = vector.multi_reduction <maximumf>, %63, %cst_22 [1] : vector<8x8xf32> to vector<8xf32>
    %65 = vector.shape_cast %64 : vector<8xf32> to vector<8x1xf32>
    %66 = vector.broadcast %65 : vector<8x1xf32> to vector<8x8xf32>
    %67 = arith.subf %63, %66 : vector<8x8xf32>
    %68 = math.exp %67 : vector<8x8xf32>
    %cst_23 = arith.constant dense<0.000000e+00> : vector<8xf32>
    %69 = vector.multi_reduction <add>, %68, %cst_23 [1] : vector<8x8xf32> to vector<8xf32>
    %70 = vector.shape_cast %69 : vector<8xf32> to vector<8x1xf32>
    %cst_24 = arith.constant dense<0.000000e+00> : vector<8x8xf32>
    %71 = tpu.matmul %68, %59, %cst_24 {dimension_numbers = #tpu.dot_dimension_numbers<[1], [0], [0], [1], [0, 0, 1, 1], [], []>} : vector<8x8xf32>, vector<8x8xf32>, vector<8x8xf32> -> vector<8x8xf32>
    %72 = tpu.reciprocal %70 {approx = true} : vector<8x1xf32> -> vector<8x1xf32>
    %73 = vector.broadcast %72 : vector<8x1xf32> to vector<8x8xf32>
    %74 = arith.mulf %71, %73 : vector<8x8xf32>
    %c0_25 = arith.constant 0 : index
    %c16 = arith.constant 16 : index
    %75 = vector.load %arg9[%c0_25, %c16] : memref<16x32xf32, #tpu.memory_space<vmem>>, vector<8x8xf32>
    tpu.vector_store %arg9[%c0_25, %c16], %74 {strides = array<i32>} : memref<16x32xf32, #tpu.memory_space<vmem>>, vector<8x8xf32>,
    %76 = vector.extract_strided_slice %10 {offsets = [0, 24], sizes = [8, 8], strides = [1, 1]} : vector<8x32xf32> to vector<8x8xf32>
    %cst_26 = arith.constant 0.353553385 : f32
    %77 = vector.broadcast %cst_26 : f32 to vector<8x8xf32>
    %78 = arith.mulf %76, %77 : vector<8x8xf32>
    %79 = vector.extract_strided_slice %11 {offsets = [0, 24], sizes = [8, 8], strides = [1, 1]} : vector<8x32xf32> to vector<8x8xf32>
    %80 = vector.extract_strided_slice %12 {offsets = [0, 24], sizes = [8, 8], strides = [1, 1]} : vector<8x32xf32> to vector<8x8xf32>
    %cst_27 = arith.constant dense<0.000000e+00> : vector<8x8xf32>
    %81 = tpu.matmul %78, %79, %cst_27 {dimension_numbers = #tpu.dot_dimension_numbers<[1], [1], [0], [0], [0, 0, 1, 0], [], []>} : vector<8x8xf32>, vector<8x8xf32>, vector<8x8xf32> -> vector<8x8xf32>
    %82 = vector.extract_strided_slice %9 {offsets = [0, 0], sizes = [1, 8], strides = [1, 1]} : vector<2x8xf32> to vector<1x8xf32>
    %83 = vector.broadcast %82 : vector<1x8xf32> to vector<8x8xf32>
    %84 = arith.addf %81, %83 : vector<8x8xf32>
    %cst_28 = arith.constant dense<0xFF800000> : vector<8xf32>
    %85 = vector.multi_reduction <maximumf>, %84, %cst_28 [1] : vector<8x8xf32> to vector<8xf32>
    %86 = vector.shape_cast %85 : vector<8xf32> to vector<8x1xf32>
    %87 = vector.broadcast %86 : vector<8x1xf32> to vector<8x8xf32>
    %88 = arith.subf %84, %87 : vector<8x8xf32>
    %89 = math.exp %88 : vector<8x8xf32>
    %cst_29 = arith.constant dense<0.000000e+00> : vector<8xf32>
    %90 = vector.multi_reduction <add>, %89, %cst_29 [1] : vector<8x8xf32> to vector<8xf32>
    %91 = vector.shape_cast %90 : vector<8xf32> to vector<8x1xf32>
    %cst_30 = arith.constant dense<0.000000e+00> : vector<8x8xf32>
    %92 = tpu.matmul %89, %80, %cst_30 {dimension_numbers = #tpu.dot_dimension_numbers<[1], [0], [0], [1], [0, 0, 1, 1], [], []>} : vector<8x8xf32>, vector<8x8xf32>, vector<8x8xf32> -> vector<8x8xf32>
    %93 = tpu.reciprocal %91 {approx = true} : vector<8x1xf32> -> vector<8x1xf32>
    %94 = vector.broadcast %93 : vector<8x1xf32> to vector<8x8xf32>
    %95 = arith.mulf %92, %94 : vector<8x8xf32>
    %c0_31 = arith.constant 0 : index
    %c24 = arith.constant 24 : index
    %96 = vector.load %arg9[%c0_31, %c24] : memref<16x32xf32, #tpu.memory_space<vmem>>, vector<8x8xf32>
    tpu.vector_store %arg9[%c0_31, %c24], %95 {strides = array<i32>} : memref<16x32xf32, #tpu.memory_space<vmem>>, vector<8x8xf32>,
    %97 = vector.extract_strided_slice %6 {offsets = [8, 0], sizes = [8, 32], strides = [1, 1]} : vector<16x32xf32> to vector<8x32xf32>
    %98 = vector.extract_strided_slice %7 {offsets = [8, 0], sizes = [8, 32], strides = [1, 1]} : vector<16x32xf32> to vector<8x32xf32>
    %99 = vector.extract_strided_slice %8 {offsets = [8, 0], sizes = [8, 32], strides = [1, 1]} : vector<16x32xf32> to vector<8x32xf32>
    %100 = vector.extract_strided_slice %97 {offsets = [0, 0], sizes = [8, 8], strides = [1, 1]} : vector<8x32xf32> to vector<8x8xf32>
    %cst_32 = arith.constant 0.353553385 : f32
    %101 = vector.broadcast %cst_32 : f32 to vector<8x8xf32>
    %102 = arith.mulf %100, %101 : vector<8x8xf32>
    %103 = vector.extract_strided_slice %98 {offsets = [0, 0], sizes = [8, 8], strides = [1, 1]} : vector<8x32xf32> to vector<8x8xf32>
    %104 = vector.extract_strided_slice %99 {offsets = [0, 0], sizes = [8, 8], strides = [1, 1]} : vector<8x32xf32> to vector<8x8xf32>
    %cst_33 = arith.constant dense<0.000000e+00> : vector<8x8xf32>
    %105 = tpu.matmul %102, %103, %cst_33 {dimension_numbers = #tpu.dot_dimension_numbers<[1], [1], [0], [0], [0, 0, 1, 0], [], []>} : vector<8x8xf32>, vector<8x8xf32>, vector<8x8xf32> -> vector<8x8xf32>
    %106 = vector.extract_strided_slice %9 {offsets = [1, 0], sizes = [1, 8], strides = [1, 1]} : vector<2x8xf32> to vector<1x8xf32>
    %107 = vector.broadcast %106 : vector<1x8xf32> to vector<8x8xf32>
    %108 = arith.addf %105, %107 : vector<8x8xf32>
    %cst_34 = arith.constant dense<0xFF800000> : vector<8xf32>
    %109 = vector.multi_reduction <maximumf>, %108, %cst_34 [1] : vector<8x8xf32> to vector<8xf32>
    %110 = vector.shape_cast %109 : vector<8xf32> to vector<8x1xf32>
    %111 = vector.broadcast %110 : vector<8x1xf32> to vector<8x8xf32>
    %112 = arith.subf %108, %111 : vector<8x8xf32>
    %113 = math.exp %112 : vector<8x8xf32>
    %cst_35 = arith.constant dense<0.000000e+00> : vector<8xf32>
    %114 = vector.multi_reduction <add>, %113, %cst_35 [1] : vector<8x8xf32> to vector<8xf32>
    %115 = vector.shape_cast %114 : vector<8xf32> to vector<8x1xf32>
    %cst_36 = arith.constant dense<0.000000e+00> : vector<8x8xf32>
    %116 = tpu.matmul %113, %104, %cst_36 {dimension_numbers = #tpu.dot_dimension_numbers<[1], [0], [0], [1], [0, 0, 1, 1], [], []>} : vector<8x8xf32>, vector<8x8xf32>, vector<8x8xf32> -> vector<8x8xf32>
    %117 = tpu.reciprocal %115 {approx = true} : vector<8x1xf32> -> vector<8x1xf32>
    %118 = vector.broadcast %117 : vector<8x1xf32> to vector<8x8xf32>
    %119 = arith.mulf %116, %118 : vector<8x8xf32>
    %c8_37 = arith.constant 8 : index
    %c0_38 = arith.constant 0 : index
    %120 = vector.load %arg9[%c8_37, %c0_38] : memref<16x32xf32, #tpu.memory_space<vmem>>, vector<8x8xf32>
    tpu.vector_store %arg9[%c8_37, %c0_38], %119 {strides = array<i32>} : memref<16x32xf32, #tpu.memory_space<vmem>>, vector<8x8xf32>,
    %121 = vector.extract_strided_slice %97 {offsets = [0, 8], sizes = [8, 8], strides = [1, 1]} : vector<8x32xf32> to vector<8x8xf32>
    %cst_39 = arith.constant 0.353553385 : f32
    %122 = vector.broadcast %cst_39 : f32 to vector<8x8xf32>
    %123 = arith.mulf %121, %122 : vector<8x8xf32>
    %124 = vector.extract_strided_slice %98 {offsets = [0, 8], sizes = [8, 8], strides = [1, 1]} : vector<8x32xf32> to vector<8x8xf32>
    %125 = vector.extract_strided_slice %99 {offsets = [0, 8], sizes = [8, 8], strides = [1, 1]} : vector<8x32xf32> to vector<8x8xf32>
    %cst_40 = arith.constant dense<0.000000e+00> : vector<8x8xf32>
    %126 = tpu.matmul %123, %124, %cst_40 {dimension_numbers = #tpu.dot_dimension_numbers<[1], [1], [0], [0], [0, 0, 1, 0], [], []>} : vector<8x8xf32>, vector<8x8xf32>, vector<8x8xf32> -> vector<8x8xf32>
    %127 = vector.extract_strided_slice %9 {offsets = [1, 0], sizes = [1, 8], strides = [1, 1]} : vector<2x8xf32> to vector<1x8xf32>
    %128 = vector.broadcast %127 : vector<1x8xf32> to vector<8x8xf32>
    %129 = arith.addf %126, %128 : vector<8x8xf32>
    %cst_41 = arith.constant dense<0xFF800000> : vector<8xf32>
    %130 = vector.multi_reduction <maximumf>, %129, %cst_41 [1] : vector<8x8xf32> to vector<8xf32>
    %131 = vector.shape_cast %130 : vector<8xf32> to vector<8x1xf32>
    %132 = vector.broadcast %131 : vector<8x1xf32> to vector<8x8xf32>
    %133 = arith.subf %129, %132 : vector<8x8xf32>
    %134 = math.exp %133 : vector<8x8xf32>
    %cst_42 = arith.constant dense<0.000000e+00> : vector<8xf32>
    %135 = vector.multi_reduction <add>, %134, %cst_42 [1] : vector<8x8xf32> to vector<8xf32>
    %136 = vector.shape_cast %135 : vector<8xf32> to vector<8x1xf32>
    %cst_43 = arith.constant dense<0.000000e+00> : vector<8x8xf32>
    %137 = tpu.matmul %134, %125, %cst_43 {dimension_numbers = #tpu.dot_dimension_numbers<[1], [0], [0], [1], [0, 0, 1, 1], [], []>} : vector<8x8xf32>, vector<8x8xf32>, vector<8x8xf32> -> vector<8x8xf32>
    %138 = tpu.reciprocal %136 {approx = true} : vector<8x1xf32> -> vector<8x1xf32>
    %139 = vector.broadcast %138 : vector<8x1xf32> to vector<8x8xf32>
    %140 = arith.mulf %137, %139 : vector<8x8xf32>
    %c8_44 = arith.constant 8 : index
    %c8_45 = arith.constant 8 : index
    %141 = vector.load %arg9[%c8_44, %c8_45] : memref<16x32xf32, #tpu.memory_space<vmem>>, vector<8x8xf32>
    tpu.vector_store %arg9[%c8_44, %c8_45], %140 {strides = array<i32>} : memref<16x32xf32, #tpu.memory_space<vmem>>, vector<8x8xf32>,
    %142 = vector.extract_strided_slice %97 {offsets = [0, 16], sizes = [8, 8], strides = [1, 1]} : vector<8x32xf32> to vector<8x8xf32>
    %cst_46 = arith.constant 0.353553385 : f32
    %143 = vector.broadcast %cst_46 : f32 to vector<8x8xf32>
    %144 = arith.mulf %142, %143 : vector<8x8xf32>
    %145 = vector.extract_strided_slice %98 {offsets = [0, 16], sizes = [8, 8], strides = [1, 1]} : vector<8x32xf32> to vector<8x8xf32>
    %146 = vector.extract_strided_slice %99 {offsets = [0, 16], sizes = [8, 8], strides = [1, 1]} : vector<8x32xf32> to vector<8x8xf32>
    %cst_47 = arith.constant dense<0.000000e+00> : vector<8x8xf32>
    %147 = tpu.matmul %144, %145, %cst_47 {dimension_numbers = #tpu.dot_dimension_numbers<[1], [1], [0], [0], [0, 0, 1, 0], [], []>} : vector<8x8xf32>, vector<8x8xf32>, vector<8x8xf32> -> vector<8x8xf32>
    %148 = vector.extract_strided_slice %9 {offsets = [1, 0], sizes = [1, 8], strides = [1, 1]} : vector<2x8xf32> to vector<1x8xf32>
    %149 = vector.broadcast %148 : vector<1x8xf32> to vector<8x8xf32>
    %150 = arith.addf %147, %149 : vector<8x8xf32>
    %cst_48 = arith.constant dense<0xFF800000> : vector<8xf32>
    %151 = vector.multi_reduction <maximumf>, %150, %cst_48 [1] : vector<8x8xf32> to vector<8xf32>
    %152 = vector.shape_cast %151 : vector<8xf32> to vector<8x1xf32>
    %153 = vector.broadcast %152 : vector<8x1xf32> to vector<8x8xf32>
    %154 = arith.subf %150, %153 : vector<8x8xf32>
    %155 = math.exp %154 : vector<8x8xf32>
    %cst_49 = arith.constant dense<0.000000e+00> : vector<8xf32>
    %156 = vector.multi_reduction <add>, %155, %cst_49 [1] : vector<8x8xf32> to vector<8xf32>
    %157 = vector.shape_cast %156 : vector<8xf32> to vector<8x1xf32>
    %cst_50 = arith.constant dense<0.000000e+00> : vector<8x8xf32>
    %158 = tpu.matmul %155, %146, %cst_50 {dimension_numbers = #tpu.dot_dimension_numbers<[1], [0], [0], [1], [0, 0, 1, 1], [], []>} : vector<8x8xf32>, vector<8x8xf32>, vector<8x8xf32> -> vector<8x8xf32>
    %159 = tpu.reciprocal %157 {approx = true} : vector<8x1xf32> -> vector<8x1xf32>
    %160 = vector.broadcast %159 : vector<8x1xf32> to vector<8x8xf32>
    %161 = arith.mulf %158, %160 : vector<8x8xf32>
    %c8_51 = arith.constant 8 : index
    %c16_52 = arith.constant 16 : index
    %162 = vector.load %arg9[%c8_51, %c16_52] : memref<16x32xf32, #tpu.memory_space<vmem>>, vector<8x8xf32>
    tpu.vector_store %arg9[%c8_51, %c16_52], %161 {strides = array<i32>} : memref<16x32xf32, #tpu.memory_space<vmem>>, vector<8x8xf32>,
    %163 = vector.extract_strided_slice %97 {offsets = [0, 24], sizes = [8, 8], strides = [1, 1]} : vector<8x32xf32> to vector<8x8xf32>
    %cst_53 = arith.constant 0.353553385 : f32
    %164 = vector.broadcast %cst_53 : f32 to vector<8x8xf32>
    %165 = arith.mulf %163, %164 : vector<8x8xf32>
    %166 = vector.extract_strided_slice %98 {offsets = [0, 24], sizes = [8, 8], strides = [1, 1]} : vector<8x32xf32> to vector<8x8xf32>
    %167 = vector.extract_strided_slice %99 {offsets = [0, 24], sizes = [8, 8], strides = [1, 1]} : vector<8x32xf32> to vector<8x8xf32>
    %cst_54 = arith.constant dense<0.000000e+00> : vector<8x8xf32>
    %168 = tpu.matmul %165, %166, %cst_54 {dimension_numbers = #tpu.dot_dimension_numbers<[1], [1], [0], [0], [0, 0, 1, 0], [], []>} : vector<8x8xf32>, vector<8x8xf32>, vector<8x8xf32> -> vector<8x8xf32>
    %169 = vector.extract_strided_slice %9 {offsets = [1, 0], sizes = [1, 8], strides = [1, 1]} : vector<2x8xf32> to vector<1x8xf32>
    %170 = vector.broadcast %169 : vector<1x8xf32> to vector<8x8xf32>
    %171 = arith.addf %168, %170 : vector<8x8xf32>
    %cst_55 = arith.constant dense<0xFF800000> : vector<8xf32>
    %172 = vector.multi_reduction <maximumf>, %171, %cst_55 [1] : vector<8x8xf32> to vector<8xf32>
    %173 = vector.shape_cast %172 : vector<8xf32> to vector<8x1xf32>
    %174 = vector.broadcast %173 : vector<8x1xf32> to vector<8x8xf32>
    %175 = arith.subf %171, %174 : vector<8x8xf32>
    %176 = math.exp %175 : vector<8x8xf32>
    %cst_56 = arith.constant dense<0.000000e+00> : vector<8xf32>
    %177 = vector.multi_reduction <add>, %176, %cst_56 [1] : vector<8x8xf32> to vector<8xf32>
    %178 = vector.shape_cast %177 : vector<8xf32> to vector<8x1xf32>
    %cst_57 = arith.constant dense<0.000000e+00> : vector<8x8xf32>
    %179 = tpu.matmul %176, %167, %cst_57 {dimension_numbers = #tpu.dot_dimension_numbers<[1], [0], [0], [1], [0, 0, 1, 1], [], []>} : vector<8x8xf32>, vector<8x8xf32>, vector<8x8xf32> -> vector<8x8xf32>
    %180 = tpu.reciprocal %178 {approx = true} : vector<8x1xf32> -> vector<8x1xf32>
    %181 = vector.broadcast %180 : vector<8x1xf32> to vector<8x8xf32>
    %182 = arith.mulf %179, %181 : vector<8x8xf32>
    %c8_58 = arith.constant 8 : index
    %c24_59 = arith.constant 24 : index
    %183 = vector.load %arg9[%c8_58, %c24_59] : memref<16x32xf32, #tpu.memory_space<vmem>>, vector<8x8xf32>
    tpu.vector_store %arg9[%c8_58, %c24_59], %182 {strides = array<i32>} : memref<16x32xf32, #tpu.memory_space<vmem>>, vector<8x8xf32>,
    %c0_60 = arith.constant 0 : index
    %c0_61 = arith.constant 0 : index
    %184 = vector.load %arg9[%c0_60, %c0_61] : memref<16x32xf32, #tpu.memory_space<vmem>>, vector<16x32xf32>
    %c0_62 = arith.constant 0 : index
    %c0_63 = arith.constant 0 : index
    %185 = vector.load %arg4[%c0_62, %c0_63] : memref<32x32xf32, #tpu.memory_space<vmem>>, vector<32x32xf32>
    %cst_64 = arith.constant dense<0.000000e+00> : vector<16x32xf32>
    %186 = tpu.matmul %184, %185, %cst_64 {dimension_numbers = #tpu.dot_dimension_numbers<[1], [0], [0], [1], [0, 0, 1, 1], [], []>} : vector<16x32xf32>, vector<32x32xf32>, vector<16x32xf32> -> vector<16x32xf32>
    %c0_65 = arith.constant 0 : index
    %c0_66 = arith.constant 0 : index
    %187 = vector.load %arg5[%c0_65, %c0_66] : memref<1x32xf32, #tpu.memory_space<vmem>>, vector<1x32xf32>
    %188 = vector.broadcast %187 : vector<1x32xf32> to vector<16x32xf32>
    %189 = arith.addf %186, %188 : vector<16x32xf32>
    %190 = arith.addf %0, %189 : vector<16x32xf32>
    %cst_67 = arith.constant dense<0.000000e+00> : vector<16xf32>
    %191 = vector.multi_reduction <add>, %190, %cst_67 [1] : vector<16x32xf32> to vector<16xf32>
    %192 = vector.shape_cast %191 : vector<16xf32> to vector<16x1xf32>
    %cst_68 = arith.constant 3.200000e+01 : f32
    %193 = vector.broadcast %cst_68 : f32 to vector<16x1xf32>
    %194 = arith.divf %192, %193 : vector<16x1xf32>
    %195 = vector.broadcast %194 : vector<16x1xf32> to vector<16x32xf32>
    %196 = arith.subf %190, %195 : vector<16x32xf32>
    %197 = arith.mulf %196, %196 : vector<16x32xf32>
    %cst_69 = arith.constant dense<0.000000e+00> : vector<16xf32>
    %198 = vector.multi_reduction <add>, %197, %cst_69 [1] : vector<16x32xf32> to vector<16xf32>
    %199 = vector.shape_cast %198 : vector<16xf32> to vector<16x1xf32>
    %cst_70 = arith.constant 3.200000e+01 : f32
    %200 = vector.broadcast %cst_70 : f32 to vector<16x1xf32>
    %201 = arith.divf %199, %200 : vector<16x1xf32>
    %202 = vector.broadcast %194 : vector<16x1xf32> to vector<16x32xf32>
    %203 = arith.subf %190, %202 : vector<16x32xf32>
    %cst_71 = arith.constant 9.99999974E-6 : f32
    %204 = vector.broadcast %cst_71 : f32 to vector<16x1xf32>
    %205 = arith.addf %201, %204 : vector<16x1xf32>
    %206 = math.rsqrt %205 : vector<16x1xf32>
    %207 = vector.broadcast %206 : vector<16x1xf32> to vector<16x32xf32>
    %208 = arith.mulf %203, %207 : vector<16x32xf32>
    %c0_72 = arith.constant 0 : index
    %c0_73 = arith.constant 0 : index
    %209 = vector.load %arg6[%c0_72, %c0_73] : memref<1x32xf32, #tpu.memory_space<vmem>>, vector<1x32xf32>
    %210 = vector.broadcast %209 : vector<1x32xf32> to vector<16x32xf32>
    %211 = arith.mulf %208, %210 : vector<16x32xf32>
    %c0_74 = arith.constant 0 : index
    %c0_75 = arith.constant 0 : index
    %212 = vector.load %arg7[%c0_74, %c0_75] : memref<1x32xf32, #tpu.memory_space<vmem>>, vector<1x32xf32>
    %213 = vector.broadcast %212 : vector<1x32xf32> to vector<16x32xf32>
    %214 = arith.addf %211, %213 : vector<16x32xf32>
    %c0_76 = arith.constant 0 : index
    %c0_77 = arith.constant 0 : index
    %215 = vector.load %arg8[%c0_76, %c0_77] : memref<16x32xf32, #tpu.memory_space<vmem>>, vector<16x32xf32>
    tpu.vector_store %arg8[%c0_76, %c0_77], %214 {strides = array<i32>} : memref<16x32xf32, #tpu.memory_space<vmem>>, vector<16x32xf32>,
    return
  }
}

module attributes {stable_mosaic.version = 11 : i64} {
  func.func @_mha_block_kernel(%arg0: memref<12x32xf32, #tpu.memory_space<vmem>>, %arg1: memref<32x96xf32, #tpu.memory_space<vmem>>, %arg2: memref<1x96xf32, #tpu.memory_space<vmem>>, %arg3: memref<32x32xf32, #tpu.memory_space<vmem>>, %arg4: memref<1x32xf32, #tpu.memory_space<vmem>>, %arg5: memref<1x32xf32, #tpu.memory_space<vmem>>, %arg6: memref<1x32xf32, #tpu.memory_space<vmem>>, %arg7: memref<12x32xf32, #tpu.memory_space<vmem>>, %arg8: memref<12x32xf32, #tpu.memory_space<vmem>>) attributes {dimension_semantics = [], scalar_prefetch = 0 : i64, scratch_operands = 1 : i64, tpu.core_type = #tpu.core_type<tc>} {
    %c0 = arith.constant 0 : index
    %c0_0 = arith.constant 0 : index
    %0 = vector.load %arg0[%c0, %c0_0] : memref<12x32xf32, #tpu.memory_space<vmem>>, vector<12x32xf32>
    %c0_1 = arith.constant 0 : index
    %c0_2 = arith.constant 0 : index
    %1 = vector.load %arg2[%c0_1, %c0_2] : memref<1x96xf32, #tpu.memory_space<vmem>>, vector<1x96xf32>
    %c0_3 = arith.constant 0 : index
    %c0_4 = arith.constant 0 : index
    %2 = vector.load %arg1[%c0_3, %c0_4] : memref<32x96xf32, #tpu.memory_space<vmem>>, vector<32x96xf32>
    %cst = arith.constant dense<0.000000e+00> : vector<12x96xf32>
    %3 = tpu.matmul %0, %2, %cst {dimension_numbers = #tpu.dot_dimension_numbers<[1], [0], [0], [1], [0, 0, 1, 1], [], []>} : vector<12x32xf32>, vector<32x96xf32>, vector<12x96xf32> -> vector<12x96xf32>
    %4 = vector.broadcast %1 : vector<1x96xf32> to vector<12x96xf32>
    %5 = arith.addf %3, %4 : vector<12x96xf32>
    %6 = vector.extract_strided_slice %5 {offsets = [0, 0], sizes = [12, 32], strides = [1, 1]} : vector<12x96xf32> to vector<12x32xf32>
    %7 = vector.extract_strided_slice %5 {offsets = [0, 32], sizes = [12, 32], strides = [1, 1]} : vector<12x96xf32> to vector<12x32xf32>
    %8 = vector.extract_strided_slice %5 {offsets = [0, 64], sizes = [12, 32], strides = [1, 1]} : vector<12x96xf32> to vector<12x32xf32>
    %9 = tpu.iota {dimensions = array<i32: 0>} : vector<6x6xi32>
    %10 = tpu.iota {dimensions = array<i32: 1>} : vector<6x6xi32>
    %11 = arith.cmpi sgt, %10, %9 : vector<6x6xi32>
    %cst_5 = arith.constant -1.000000e+30 : f32
    %cst_6 = arith.constant 0.000000e+00 : f32
    %12 = vector.broadcast %cst_5 : f32 to vector<6x6xf32>
    %13 = vector.broadcast %cst_6 : f32 to vector<6x6xf32>
    %14 = arith.select %11, %12, %13 : vector<6x6xi1>, vector<6x6xf32>
    %15 = vector.extract_strided_slice %6 {offsets = [0, 0], sizes = [6, 32], strides = [1, 1]} : vector<12x32xf32> to vector<6x32xf32>
    %16 = vector.extract_strided_slice %7 {offsets = [0, 0], sizes = [6, 32], strides = [1, 1]} : vector<12x32xf32> to vector<6x32xf32>
    %17 = vector.extract_strided_slice %8 {offsets = [0, 0], sizes = [6, 32], strides = [1, 1]} : vector<12x32xf32> to vector<6x32xf32>
    %18 = vector.extract_strided_slice %15 {offsets = [0, 0], sizes = [6, 8], strides = [1, 1]} : vector<6x32xf32> to vector<6x8xf32>
    %cst_7 = arith.constant 0.353553385 : f32
    %19 = vector.broadcast %cst_7 : f32 to vector<6x8xf32>
    %20 = arith.mulf %18, %19 : vector<6x8xf32>
    %21 = vector.extract_strided_slice %16 {offsets = [0, 0], sizes = [6, 8], strides = [1, 1]} : vector<6x32xf32> to vector<6x8xf32>
    %22 = vector.extract_strided_slice %17 {offsets = [0, 0], sizes = [6, 8], strides = [1, 1]} : vector<6x32xf32> to vector<6x8xf32>
    %cst_8 = arith.constant dense<0.000000e+00> : vector<6x6xf32>
    %23 = tpu.matmul %20, %21, %cst_8 {dimension_numbers = #tpu.dot_dimension_numbers<[1], [1], [0], [0], [0, 0, 1, 0], [], []>} : vector<6x8xf32>, vector<6x8xf32>, vector<6x6xf32> -> vector<6x6xf32>
    %24 = arith.addf %23, %14 : vector<6x6xf32>
    %cst_9 = arith.constant dense<0xFF800000> : vector<6xf32>
    %25 = vector.multi_reduction <maximumf>, %24, %cst_9 [1] : vector<6x6xf32> to vector<6xf32>
    %26 = vector.shape_cast %25 : vector<6xf32> to vector<6x1xf32>
    %27 = vector.broadcast %26 : vector<6x1xf32> to vector<6x6xf32>
    %28 = arith.subf %24, %27 : vector<6x6xf32>
    %29 = math.exp %28 : vector<6x6xf32>
    %cst_10 = arith.constant dense<0.000000e+00> : vector<6xf32>
    %30 = vector.multi_reduction <add>, %29, %cst_10 [1] : vector<6x6xf32> to vector<6xf32>
    %31 = vector.shape_cast %30 : vector<6xf32> to vector<6x1xf32>
    %cst_11 = arith.constant dense<0.000000e+00> : vector<6x8xf32>
    %32 = tpu.matmul %29, %22, %cst_11 {dimension_numbers = #tpu.dot_dimension_numbers<[1], [0], [0], [1], [0, 0, 1, 1], [], []>} : vector<6x6xf32>, vector<6x8xf32>, vector<6x8xf32> -> vector<6x8xf32>
    %33 = tpu.reciprocal %31 {approx = true} : vector<6x1xf32> -> vector<6x1xf32>
    %34 = vector.broadcast %33 : vector<6x1xf32> to vector<6x8xf32>
    %35 = arith.mulf %32, %34 : vector<6x8xf32>
    %c0_12 = arith.constant 0 : index
    %c0_13 = arith.constant 0 : index
    %36 = vector.load %arg8[%c0_12, %c0_13] : memref<12x32xf32, #tpu.memory_space<vmem>>, vector<6x8xf32>
    tpu.vector_store %arg8[%c0_12, %c0_13], %35 {strides = array<i32>} : memref<12x32xf32, #tpu.memory_space<vmem>>, vector<6x8xf32>,
    %37 = vector.extract_strided_slice %15 {offsets = [0, 8], sizes = [6, 8], strides = [1, 1]} : vector<6x32xf32> to vector<6x8xf32>
    %cst_14 = arith.constant 0.353553385 : f32
    %38 = vector.broadcast %cst_14 : f32 to vector<6x8xf32>
    %39 = arith.mulf %37, %38 : vector<6x8xf32>
    %40 = vector.extract_strided_slice %16 {offsets = [0, 8], sizes = [6, 8], strides = [1, 1]} : vector<6x32xf32> to vector<6x8xf32>
    %41 = vector.extract_strided_slice %17 {offsets = [0, 8], sizes = [6, 8], strides = [1, 1]} : vector<6x32xf32> to vector<6x8xf32>
    %cst_15 = arith.constant dense<0.000000e+00> : vector<6x6xf32>
    %42 = tpu.matmul %39, %40, %cst_15 {dimension_numbers = #tpu.dot_dimension_numbers<[1], [1], [0], [0], [0, 0, 1, 0], [], []>} : vector<6x8xf32>, vector<6x8xf32>, vector<6x6xf32> -> vector<6x6xf32>
    %43 = arith.addf %42, %14 : vector<6x6xf32>
    %cst_16 = arith.constant dense<0xFF800000> : vector<6xf32>
    %44 = vector.multi_reduction <maximumf>, %43, %cst_16 [1] : vector<6x6xf32> to vector<6xf32>
    %45 = vector.shape_cast %44 : vector<6xf32> to vector<6x1xf32>
    %46 = vector.broadcast %45 : vector<6x1xf32> to vector<6x6xf32>
    %47 = arith.subf %43, %46 : vector<6x6xf32>
    %48 = math.exp %47 : vector<6x6xf32>
    %cst_17 = arith.constant dense<0.000000e+00> : vector<6xf32>
    %49 = vector.multi_reduction <add>, %48, %cst_17 [1] : vector<6x6xf32> to vector<6xf32>
    %50 = vector.shape_cast %49 : vector<6xf32> to vector<6x1xf32>
    %cst_18 = arith.constant dense<0.000000e+00> : vector<6x8xf32>
    %51 = tpu.matmul %48, %41, %cst_18 {dimension_numbers = #tpu.dot_dimension_numbers<[1], [0], [0], [1], [0, 0, 1, 1], [], []>} : vector<6x6xf32>, vector<6x8xf32>, vector<6x8xf32> -> vector<6x8xf32>
    %52 = tpu.reciprocal %50 {approx = true} : vector<6x1xf32> -> vector<6x1xf32>
    %53 = vector.broadcast %52 : vector<6x1xf32> to vector<6x8xf32>
    %54 = arith.mulf %51, %53 : vector<6x8xf32>
    %c0_19 = arith.constant 0 : index
    %c8 = arith.constant 8 : index
    %55 = vector.load %arg8[%c0_19, %c8] : memref<12x32xf32, #tpu.memory_space<vmem>>, vector<6x8xf32>
    tpu.vector_store %arg8[%c0_19, %c8], %54 {strides = array<i32>} : memref<12x32xf32, #tpu.memory_space<vmem>>, vector<6x8xf32>,
    %56 = vector.extract_strided_slice %15 {offsets = [0, 16], sizes = [6, 8], strides = [1, 1]} : vector<6x32xf32> to vector<6x8xf32>
    %cst_20 = arith.constant 0.353553385 : f32
    %57 = vector.broadcast %cst_20 : f32 to vector<6x8xf32>
    %58 = arith.mulf %56, %57 : vector<6x8xf32>
    %59 = vector.extract_strided_slice %16 {offsets = [0, 16], sizes = [6, 8], strides = [1, 1]} : vector<6x32xf32> to vector<6x8xf32>
    %60 = vector.extract_strided_slice %17 {offsets = [0, 16], sizes = [6, 8], strides = [1, 1]} : vector<6x32xf32> to vector<6x8xf32>
    %cst_21 = arith.constant dense<0.000000e+00> : vector<6x6xf32>
    %61 = tpu.matmul %58, %59, %cst_21 {dimension_numbers = #tpu.dot_dimension_numbers<[1], [1], [0], [0], [0, 0, 1, 0], [], []>} : vector<6x8xf32>, vector<6x8xf32>, vector<6x6xf32> -> vector<6x6xf32>
    %62 = arith.addf %61, %14 : vector<6x6xf32>
    %cst_22 = arith.constant dense<0xFF800000> : vector<6xf32>
    %63 = vector.multi_reduction <maximumf>, %62, %cst_22 [1] : vector<6x6xf32> to vector<6xf32>
    %64 = vector.shape_cast %63 : vector<6xf32> to vector<6x1xf32>
    %65 = vector.broadcast %64 : vector<6x1xf32> to vector<6x6xf32>
    %66 = arith.subf %62, %65 : vector<6x6xf32>
    %67 = math.exp %66 : vector<6x6xf32>
    %cst_23 = arith.constant dense<0.000000e+00> : vector<6xf32>
    %68 = vector.multi_reduction <add>, %67, %cst_23 [1] : vector<6x6xf32> to vector<6xf32>
    %69 = vector.shape_cast %68 : vector<6xf32> to vector<6x1xf32>
    %cst_24 = arith.constant dense<0.000000e+00> : vector<6x8xf32>
    %70 = tpu.matmul %67, %60, %cst_24 {dimension_numbers = #tpu.dot_dimension_numbers<[1], [0], [0], [1], [0, 0, 1, 1], [], []>} : vector<6x6xf32>, vector<6x8xf32>, vector<6x8xf32> -> vector<6x8xf32>
    %71 = tpu.reciprocal %69 {approx = true} : vector<6x1xf32> -> vector<6x1xf32>
    %72 = vector.broadcast %71 : vector<6x1xf32> to vector<6x8xf32>
    %73 = arith.mulf %70, %72 : vector<6x8xf32>
    %c0_25 = arith.constant 0 : index
    %c16 = arith.constant 16 : index
    %74 = vector.load %arg8[%c0_25, %c16] : memref<12x32xf32, #tpu.memory_space<vmem>>, vector<6x8xf32>
    tpu.vector_store %arg8[%c0_25, %c16], %73 {strides = array<i32>} : memref<12x32xf32, #tpu.memory_space<vmem>>, vector<6x8xf32>,
    %75 = vector.extract_strided_slice %15 {offsets = [0, 24], sizes = [6, 8], strides = [1, 1]} : vector<6x32xf32> to vector<6x8xf32>
    %cst_26 = arith.constant 0.353553385 : f32
    %76 = vector.broadcast %cst_26 : f32 to vector<6x8xf32>
    %77 = arith.mulf %75, %76 : vector<6x8xf32>
    %78 = vector.extract_strided_slice %16 {offsets = [0, 24], sizes = [6, 8], strides = [1, 1]} : vector<6x32xf32> to vector<6x8xf32>
    %79 = vector.extract_strided_slice %17 {offsets = [0, 24], sizes = [6, 8], strides = [1, 1]} : vector<6x32xf32> to vector<6x8xf32>
    %cst_27 = arith.constant dense<0.000000e+00> : vector<6x6xf32>
    %80 = tpu.matmul %77, %78, %cst_27 {dimension_numbers = #tpu.dot_dimension_numbers<[1], [1], [0], [0], [0, 0, 1, 0], [], []>} : vector<6x8xf32>, vector<6x8xf32>, vector<6x6xf32> -> vector<6x6xf32>
    %81 = arith.addf %80, %14 : vector<6x6xf32>
    %cst_28 = arith.constant dense<0xFF800000> : vector<6xf32>
    %82 = vector.multi_reduction <maximumf>, %81, %cst_28 [1] : vector<6x6xf32> to vector<6xf32>
    %83 = vector.shape_cast %82 : vector<6xf32> to vector<6x1xf32>
    %84 = vector.broadcast %83 : vector<6x1xf32> to vector<6x6xf32>
    %85 = arith.subf %81, %84 : vector<6x6xf32>
    %86 = math.exp %85 : vector<6x6xf32>
    %cst_29 = arith.constant dense<0.000000e+00> : vector<6xf32>
    %87 = vector.multi_reduction <add>, %86, %cst_29 [1] : vector<6x6xf32> to vector<6xf32>
    %88 = vector.shape_cast %87 : vector<6xf32> to vector<6x1xf32>
    %cst_30 = arith.constant dense<0.000000e+00> : vector<6x8xf32>
    %89 = tpu.matmul %86, %79, %cst_30 {dimension_numbers = #tpu.dot_dimension_numbers<[1], [0], [0], [1], [0, 0, 1, 1], [], []>} : vector<6x6xf32>, vector<6x8xf32>, vector<6x8xf32> -> vector<6x8xf32>
    %90 = tpu.reciprocal %88 {approx = true} : vector<6x1xf32> -> vector<6x1xf32>
    %91 = vector.broadcast %90 : vector<6x1xf32> to vector<6x8xf32>
    %92 = arith.mulf %89, %91 : vector<6x8xf32>
    %c0_31 = arith.constant 0 : index
    %c24 = arith.constant 24 : index
    %93 = vector.load %arg8[%c0_31, %c24] : memref<12x32xf32, #tpu.memory_space<vmem>>, vector<6x8xf32>
    tpu.vector_store %arg8[%c0_31, %c24], %92 {strides = array<i32>} : memref<12x32xf32, #tpu.memory_space<vmem>>, vector<6x8xf32>,
    %94 = vector.extract_strided_slice %6 {offsets = [6, 0], sizes = [6, 32], strides = [1, 1]} : vector<12x32xf32> to vector<6x32xf32>
    %95 = vector.extract_strided_slice %7 {offsets = [6, 0], sizes = [6, 32], strides = [1, 1]} : vector<12x32xf32> to vector<6x32xf32>
    %96 = vector.extract_strided_slice %8 {offsets = [6, 0], sizes = [6, 32], strides = [1, 1]} : vector<12x32xf32> to vector<6x32xf32>
    %97 = vector.extract_strided_slice %94 {offsets = [0, 0], sizes = [6, 8], strides = [1, 1]} : vector<6x32xf32> to vector<6x8xf32>
    %cst_32 = arith.constant 0.353553385 : f32
    %98 = vector.broadcast %cst_32 : f32 to vector<6x8xf32>
    %99 = arith.mulf %97, %98 : vector<6x8xf32>
    %100 = vector.extract_strided_slice %95 {offsets = [0, 0], sizes = [6, 8], strides = [1, 1]} : vector<6x32xf32> to vector<6x8xf32>
    %101 = vector.extract_strided_slice %96 {offsets = [0, 0], sizes = [6, 8], strides = [1, 1]} : vector<6x32xf32> to vector<6x8xf32>
    %cst_33 = arith.constant dense<0.000000e+00> : vector<6x6xf32>
    %102 = tpu.matmul %99, %100, %cst_33 {dimension_numbers = #tpu.dot_dimension_numbers<[1], [1], [0], [0], [0, 0, 1, 0], [], []>} : vector<6x8xf32>, vector<6x8xf32>, vector<6x6xf32> -> vector<6x6xf32>
    %103 = arith.addf %102, %14 : vector<6x6xf32>
    %cst_34 = arith.constant dense<0xFF800000> : vector<6xf32>
    %104 = vector.multi_reduction <maximumf>, %103, %cst_34 [1] : vector<6x6xf32> to vector<6xf32>
    %105 = vector.shape_cast %104 : vector<6xf32> to vector<6x1xf32>
    %106 = vector.broadcast %105 : vector<6x1xf32> to vector<6x6xf32>
    %107 = arith.subf %103, %106 : vector<6x6xf32>
    %108 = math.exp %107 : vector<6x6xf32>
    %cst_35 = arith.constant dense<0.000000e+00> : vector<6xf32>
    %109 = vector.multi_reduction <add>, %108, %cst_35 [1] : vector<6x6xf32> to vector<6xf32>
    %110 = vector.shape_cast %109 : vector<6xf32> to vector<6x1xf32>
    %cst_36 = arith.constant dense<0.000000e+00> : vector<6x8xf32>
    %111 = tpu.matmul %108, %101, %cst_36 {dimension_numbers = #tpu.dot_dimension_numbers<[1], [0], [0], [1], [0, 0, 1, 1], [], []>} : vector<6x6xf32>, vector<6x8xf32>, vector<6x8xf32> -> vector<6x8xf32>
    %112 = tpu.reciprocal %110 {approx = true} : vector<6x1xf32> -> vector<6x1xf32>
    %113 = vector.broadcast %112 : vector<6x1xf32> to vector<6x8xf32>
    %114 = arith.mulf %111, %113 : vector<6x8xf32>
    %c6 = arith.constant 6 : index
    %c0_37 = arith.constant 0 : index
    %115 = vector.load %arg8[%c6, %c0_37] : memref<12x32xf32, #tpu.memory_space<vmem>>, vector<6x8xf32>
    tpu.vector_store %arg8[%c6, %c0_37], %114 {strides = array<i32>} : memref<12x32xf32, #tpu.memory_space<vmem>>, vector<6x8xf32>,
    %116 = vector.extract_strided_slice %94 {offsets = [0, 8], sizes = [6, 8], strides = [1, 1]} : vector<6x32xf32> to vector<6x8xf32>
    %cst_38 = arith.constant 0.353553385 : f32
    %117 = vector.broadcast %cst_38 : f32 to vector<6x8xf32>
    %118 = arith.mulf %116, %117 : vector<6x8xf32>
    %119 = vector.extract_strided_slice %95 {offsets = [0, 8], sizes = [6, 8], strides = [1, 1]} : vector<6x32xf32> to vector<6x8xf32>
    %120 = vector.extract_strided_slice %96 {offsets = [0, 8], sizes = [6, 8], strides = [1, 1]} : vector<6x32xf32> to vector<6x8xf32>
    %cst_39 = arith.constant dense<0.000000e+00> : vector<6x6xf32>
    %121 = tpu.matmul %118, %119, %cst_39 {dimension_numbers = #tpu.dot_dimension_numbers<[1], [1], [0], [0], [0, 0, 1, 0], [], []>} : vector<6x8xf32>, vector<6x8xf32>, vector<6x6xf32> -> vector<6x6xf32>
    %122 = arith.addf %121, %14 : vector<6x6xf32>
    %cst_40 = arith.constant dense<0xFF800000> : vector<6xf32>
    %123 = vector.multi_reduction <maximumf>, %122, %cst_40 [1] : vector<6x6xf32> to vector<6xf32>
    %124 = vector.shape_cast %123 : vector<6xf32> to vector<6x1xf32>
    %125 = vector.broadcast %124 : vector<6x1xf32> to vector<6x6xf32>
    %126 = arith.subf %122, %125 : vector<6x6xf32>
    %127 = math.exp %126 : vector<6x6xf32>
    %cst_41 = arith.constant dense<0.000000e+00> : vector<6xf32>
    %128 = vector.multi_reduction <add>, %127, %cst_41 [1] : vector<6x6xf32> to vector<6xf32>
    %129 = vector.shape_cast %128 : vector<6xf32> to vector<6x1xf32>
    %cst_42 = arith.constant dense<0.000000e+00> : vector<6x8xf32>
    %130 = tpu.matmul %127, %120, %cst_42 {dimension_numbers = #tpu.dot_dimension_numbers<[1], [0], [0], [1], [0, 0, 1, 1], [], []>} : vector<6x6xf32>, vector<6x8xf32>, vector<6x8xf32> -> vector<6x8xf32>
    %131 = tpu.reciprocal %129 {approx = true} : vector<6x1xf32> -> vector<6x1xf32>
    %132 = vector.broadcast %131 : vector<6x1xf32> to vector<6x8xf32>
    %133 = arith.mulf %130, %132 : vector<6x8xf32>
    %c6_43 = arith.constant 6 : index
    %c8_44 = arith.constant 8 : index
    %134 = vector.load %arg8[%c6_43, %c8_44] : memref<12x32xf32, #tpu.memory_space<vmem>>, vector<6x8xf32>
    tpu.vector_store %arg8[%c6_43, %c8_44], %133 {strides = array<i32>} : memref<12x32xf32, #tpu.memory_space<vmem>>, vector<6x8xf32>,
    %135 = vector.extract_strided_slice %94 {offsets = [0, 16], sizes = [6, 8], strides = [1, 1]} : vector<6x32xf32> to vector<6x8xf32>
    %cst_45 = arith.constant 0.353553385 : f32
    %136 = vector.broadcast %cst_45 : f32 to vector<6x8xf32>
    %137 = arith.mulf %135, %136 : vector<6x8xf32>
    %138 = vector.extract_strided_slice %95 {offsets = [0, 16], sizes = [6, 8], strides = [1, 1]} : vector<6x32xf32> to vector<6x8xf32>
    %139 = vector.extract_strided_slice %96 {offsets = [0, 16], sizes = [6, 8], strides = [1, 1]} : vector<6x32xf32> to vector<6x8xf32>
    %cst_46 = arith.constant dense<0.000000e+00> : vector<6x6xf32>
    %140 = tpu.matmul %137, %138, %cst_46 {dimension_numbers = #tpu.dot_dimension_numbers<[1], [1], [0], [0], [0, 0, 1, 0], [], []>} : vector<6x8xf32>, vector<6x8xf32>, vector<6x6xf32> -> vector<6x6xf32>
    %141 = arith.addf %140, %14 : vector<6x6xf32>
    %cst_47 = arith.constant dense<0xFF800000> : vector<6xf32>
    %142 = vector.multi_reduction <maximumf>, %141, %cst_47 [1] : vector<6x6xf32> to vector<6xf32>
    %143 = vector.shape_cast %142 : vector<6xf32> to vector<6x1xf32>
    %144 = vector.broadcast %143 : vector<6x1xf32> to vector<6x6xf32>
    %145 = arith.subf %141, %144 : vector<6x6xf32>
    %146 = math.exp %145 : vector<6x6xf32>
    %cst_48 = arith.constant dense<0.000000e+00> : vector<6xf32>
    %147 = vector.multi_reduction <add>, %146, %cst_48 [1] : vector<6x6xf32> to vector<6xf32>
    %148 = vector.shape_cast %147 : vector<6xf32> to vector<6x1xf32>
    %cst_49 = arith.constant dense<0.000000e+00> : vector<6x8xf32>
    %149 = tpu.matmul %146, %139, %cst_49 {dimension_numbers = #tpu.dot_dimension_numbers<[1], [0], [0], [1], [0, 0, 1, 1], [], []>} : vector<6x6xf32>, vector<6x8xf32>, vector<6x8xf32> -> vector<6x8xf32>
    %150 = tpu.reciprocal %148 {approx = true} : vector<6x1xf32> -> vector<6x1xf32>
    %151 = vector.broadcast %150 : vector<6x1xf32> to vector<6x8xf32>
    %152 = arith.mulf %149, %151 : vector<6x8xf32>
    %c6_50 = arith.constant 6 : index
    %c16_51 = arith.constant 16 : index
    %153 = vector.load %arg8[%c6_50, %c16_51] : memref<12x32xf32, #tpu.memory_space<vmem>>, vector<6x8xf32>
    tpu.vector_store %arg8[%c6_50, %c16_51], %152 {strides = array<i32>} : memref<12x32xf32, #tpu.memory_space<vmem>>, vector<6x8xf32>,
    %154 = vector.extract_strided_slice %94 {offsets = [0, 24], sizes = [6, 8], strides = [1, 1]} : vector<6x32xf32> to vector<6x8xf32>
    %cst_52 = arith.constant 0.353553385 : f32
    %155 = vector.broadcast %cst_52 : f32 to vector<6x8xf32>
    %156 = arith.mulf %154, %155 : vector<6x8xf32>
    %157 = vector.extract_strided_slice %95 {offsets = [0, 24], sizes = [6, 8], strides = [1, 1]} : vector<6x32xf32> to vector<6x8xf32>
    %158 = vector.extract_strided_slice %96 {offsets = [0, 24], sizes = [6, 8], strides = [1, 1]} : vector<6x32xf32> to vector<6x8xf32>
    %cst_53 = arith.constant dense<0.000000e+00> : vector<6x6xf32>
    %159 = tpu.matmul %156, %157, %cst_53 {dimension_numbers = #tpu.dot_dimension_numbers<[1], [1], [0], [0], [0, 0, 1, 0], [], []>} : vector<6x8xf32>, vector<6x8xf32>, vector<6x6xf32> -> vector<6x6xf32>
    %160 = arith.addf %159, %14 : vector<6x6xf32>
    %cst_54 = arith.constant dense<0xFF800000> : vector<6xf32>
    %161 = vector.multi_reduction <maximumf>, %160, %cst_54 [1] : vector<6x6xf32> to vector<6xf32>
    %162 = vector.shape_cast %161 : vector<6xf32> to vector<6x1xf32>
    %163 = vector.broadcast %162 : vector<6x1xf32> to vector<6x6xf32>
    %164 = arith.subf %160, %163 : vector<6x6xf32>
    %165 = math.exp %164 : vector<6x6xf32>
    %cst_55 = arith.constant dense<0.000000e+00> : vector<6xf32>
    %166 = vector.multi_reduction <add>, %165, %cst_55 [1] : vector<6x6xf32> to vector<6xf32>
    %167 = vector.shape_cast %166 : vector<6xf32> to vector<6x1xf32>
    %cst_56 = arith.constant dense<0.000000e+00> : vector<6x8xf32>
    %168 = tpu.matmul %165, %158, %cst_56 {dimension_numbers = #tpu.dot_dimension_numbers<[1], [0], [0], [1], [0, 0, 1, 1], [], []>} : vector<6x6xf32>, vector<6x8xf32>, vector<6x8xf32> -> vector<6x8xf32>
    %169 = tpu.reciprocal %167 {approx = true} : vector<6x1xf32> -> vector<6x1xf32>
    %170 = vector.broadcast %169 : vector<6x1xf32> to vector<6x8xf32>
    %171 = arith.mulf %168, %170 : vector<6x8xf32>
    %c6_57 = arith.constant 6 : index
    %c24_58 = arith.constant 24 : index
    %172 = vector.load %arg8[%c6_57, %c24_58] : memref<12x32xf32, #tpu.memory_space<vmem>>, vector<6x8xf32>
    tpu.vector_store %arg8[%c6_57, %c24_58], %171 {strides = array<i32>} : memref<12x32xf32, #tpu.memory_space<vmem>>, vector<6x8xf32>,
    %c0_59 = arith.constant 0 : index
    %c0_60 = arith.constant 0 : index
    %173 = vector.load %arg8[%c0_59, %c0_60] : memref<12x32xf32, #tpu.memory_space<vmem>>, vector<12x32xf32>
    %c0_61 = arith.constant 0 : index
    %c0_62 = arith.constant 0 : index
    %174 = vector.load %arg3[%c0_61, %c0_62] : memref<32x32xf32, #tpu.memory_space<vmem>>, vector<32x32xf32>
    %cst_63 = arith.constant dense<0.000000e+00> : vector<12x32xf32>
    %175 = tpu.matmul %173, %174, %cst_63 {dimension_numbers = #tpu.dot_dimension_numbers<[1], [0], [0], [1], [0, 0, 1, 1], [], []>} : vector<12x32xf32>, vector<32x32xf32>, vector<12x32xf32> -> vector<12x32xf32>
    %c0_64 = arith.constant 0 : index
    %c0_65 = arith.constant 0 : index
    %176 = vector.load %arg4[%c0_64, %c0_65] : memref<1x32xf32, #tpu.memory_space<vmem>>, vector<1x32xf32>
    %177 = vector.broadcast %176 : vector<1x32xf32> to vector<12x32xf32>
    %178 = arith.addf %175, %177 : vector<12x32xf32>
    %179 = arith.addf %0, %178 : vector<12x32xf32>
    %cst_66 = arith.constant dense<0.000000e+00> : vector<12xf32>
    %180 = vector.multi_reduction <add>, %179, %cst_66 [1] : vector<12x32xf32> to vector<12xf32>
    %181 = vector.shape_cast %180 : vector<12xf32> to vector<12x1xf32>
    %cst_67 = arith.constant 3.200000e+01 : f32
    %182 = vector.broadcast %cst_67 : f32 to vector<12x1xf32>
    %183 = arith.divf %181, %182 : vector<12x1xf32>
    %184 = vector.broadcast %183 : vector<12x1xf32> to vector<12x32xf32>
    %185 = arith.subf %179, %184 : vector<12x32xf32>
    %186 = arith.mulf %185, %185 : vector<12x32xf32>
    %cst_68 = arith.constant dense<0.000000e+00> : vector<12xf32>
    %187 = vector.multi_reduction <add>, %186, %cst_68 [1] : vector<12x32xf32> to vector<12xf32>
    %188 = vector.shape_cast %187 : vector<12xf32> to vector<12x1xf32>
    %cst_69 = arith.constant 3.200000e+01 : f32
    %189 = vector.broadcast %cst_69 : f32 to vector<12x1xf32>
    %190 = arith.divf %188, %189 : vector<12x1xf32>
    %191 = vector.broadcast %183 : vector<12x1xf32> to vector<12x32xf32>
    %192 = arith.subf %179, %191 : vector<12x32xf32>
    %cst_70 = arith.constant 9.99999974E-6 : f32
    %193 = vector.broadcast %cst_70 : f32 to vector<12x1xf32>
    %194 = arith.addf %190, %193 : vector<12x1xf32>
    %195 = math.rsqrt %194 : vector<12x1xf32>
    %196 = vector.broadcast %195 : vector<12x1xf32> to vector<12x32xf32>
    %197 = arith.mulf %192, %196 : vector<12x32xf32>
    %c0_71 = arith.constant 0 : index
    %c0_72 = arith.constant 0 : index
    %198 = vector.load %arg5[%c0_71, %c0_72] : memref<1x32xf32, #tpu.memory_space<vmem>>, vector<1x32xf32>
    %199 = vector.broadcast %198 : vector<1x32xf32> to vector<12x32xf32>
    %200 = arith.mulf %197, %199 : vector<12x32xf32>
    %c0_73 = arith.constant 0 : index
    %c0_74 = arith.constant 0 : index
    %201 = vector.load %arg6[%c0_73, %c0_74] : memref<1x32xf32, #tpu.memory_space<vmem>>, vector<1x32xf32>
    %202 = vector.broadcast %201 : vector<1x32xf32> to vector<12x32xf32>
    %203 = arith.addf %200, %202 : vector<12x32xf32>
    %c0_75 = arith.constant 0 : index
    %c0_76 = arith.constant 0 : index
    %204 = vector.load %arg7[%c0_75, %c0_76] : memref<12x32xf32, #tpu.memory_space<vmem>>, vector<12x32xf32>
    tpu.vector_store %arg7[%c0_75, %c0_76], %203 {strides = array<i32>} : memref<12x32xf32, #tpu.memory_space<vmem>>, vector<12x32xf32>,
    return
  }
}

module attributes {stable_mosaic.version = 11 : i64} {
  func.func @_mha_block_kernel(%arg0: memref<12x32xf32, #tpu.memory_space<vmem>>, %arg1: memref<16x32xf32, #tpu.memory_space<vmem>>, %arg2: memref<32x96xf32, #tpu.memory_space<vmem>>, %arg3: memref<1x96xf32, #tpu.memory_space<vmem>>, %arg4: memref<32x32xf32, #tpu.memory_space<vmem>>, %arg5: memref<1x32xf32, #tpu.memory_space<vmem>>, %arg6: memref<1x32xf32, #tpu.memory_space<vmem>>, %arg7: memref<1x32xf32, #tpu.memory_space<vmem>>, %arg8: memref<12x32xf32, #tpu.memory_space<vmem>>, %arg9: memref<12x32xf32, #tpu.memory_space<vmem>>) attributes {dimension_semantics = [], scalar_prefetch = 0 : i64, scratch_operands = 1 : i64, tpu.core_type = #tpu.core_type<tc>} {
    %c0 = arith.constant 0 : index
    %c0_0 = arith.constant 0 : index
    %0 = vector.load %arg0[%c0, %c0_0] : memref<12x32xf32, #tpu.memory_space<vmem>>, vector<12x32xf32>
    %c0_1 = arith.constant 0 : index
    %c0_2 = arith.constant 0 : index
    %1 = vector.load %arg3[%c0_1, %c0_2] : memref<1x96xf32, #tpu.memory_space<vmem>>, vector<1x96xf32>
    %c0_3 = arith.constant 0 : index
    %c0_4 = arith.constant 0 : index
    %2 = vector.load %arg1[%c0_3, %c0_4] : memref<16x32xf32, #tpu.memory_space<vmem>>, vector<16x32xf32>
    %c0_5 = arith.constant 0 : index
    %c0_6 = arith.constant 0 : index
    %3 = vector.load %arg2[%c0_5, %c0_6] : memref<32x96xf32, #tpu.memory_space<vmem>>, vector<32x32xf32>
    %cst = arith.constant dense<0.000000e+00> : vector<12x32xf32>
    %4 = tpu.matmul %0, %3, %cst {dimension_numbers = #tpu.dot_dimension_numbers<[1], [0], [0], [1], [0, 0, 1, 1], [], []>} : vector<12x32xf32>, vector<32x32xf32>, vector<12x32xf32> -> vector<12x32xf32>
    %5 = vector.extract_strided_slice %1 {offsets = [0, 0], sizes = [1, 32], strides = [1, 1]} : vector<1x96xf32> to vector<1x32xf32>
    %6 = vector.broadcast %5 : vector<1x32xf32> to vector<12x32xf32>
    %7 = arith.addf %4, %6 : vector<12x32xf32>
    %c0_7 = arith.constant 0 : index
    %c32 = arith.constant 32 : index
    %8 = vector.load %arg2[%c0_7, %c32] : memref<32x96xf32, #tpu.memory_space<vmem>>, vector<32x64xf32>
    %cst_8 = arith.constant dense<0.000000e+00> : vector<16x64xf32>
    %9 = tpu.matmul %2, %8, %cst_8 {dimension_numbers = #tpu.dot_dimension_numbers<[1], [0], [0], [1], [0, 0, 1, 1], [], []>} : vector<16x32xf32>, vector<32x64xf32>, vector<16x64xf32> -> vector<16x64xf32>
    %10 = vector.extract_strided_slice %1 {offsets = [0, 32], sizes = [1, 64], strides = [1, 1]} : vector<1x96xf32> to vector<1x64xf32>
    %11 = vector.broadcast %10 : vector<1x64xf32> to vector<16x64xf32>
    %12 = arith.addf %9, %11 : vector<16x64xf32>
    %13 = vector.extract_strided_slice %12 {offsets = [0, 0], sizes = [16, 32], strides = [1, 1]} : vector<16x64xf32> to vector<16x32xf32>
    %14 = vector.extract_strided_slice %12 {offsets = [0, 32], sizes = [16, 32], strides = [1, 1]} : vector<16x64xf32> to vector<16x32xf32>
    %15 = vector.extract_strided_slice %7 {offsets = [0, 0], sizes = [6, 32], strides = [1, 1]} : vector<12x32xf32> to vector<6x32xf32>
    %16 = vector.extract_strided_slice %13 {offsets = [0, 0], sizes = [8, 32], strides = [1, 1]} : vector<16x32xf32> to vector<8x32xf32>
    %17 = vector.extract_strided_slice %14 {offsets = [0, 0], sizes = [8, 32], strides = [1, 1]} : vector<16x32xf32> to vector<8x32xf32>
    %18 = vector.extract_strided_slice %15 {offsets = [0, 0], sizes = [6, 8], strides = [1, 1]} : vector<6x32xf32> to vector<6x8xf32>
    %cst_9 = arith.constant 0.353553385 : f32
    %19 = vector.broadcast %cst_9 : f32 to vector<6x8xf32>
    %20 = arith.mulf %18, %19 : vector<6x8xf32>
    %21 = vector.extract_strided_slice %16 {offsets = [0, 0], sizes = [8, 8], strides = [1, 1]} : vector<8x32xf32> to vector<8x8xf32>
    %22 = vector.extract_strided_slice %17 {offsets = [0, 0], sizes = [8, 8], strides = [1, 1]} : vector<8x32xf32> to vector<8x8xf32>
    %cst_10 = arith.constant dense<0.000000e+00> : vector<6x8xf32>
    %23 = tpu.matmul %20, %21, %cst_10 {dimension_numbers = #tpu.dot_dimension_numbers<[1], [1], [0], [0], [0, 0, 1, 0], [], []>} : vector<6x8xf32>, vector<8x8xf32>, vector<6x8xf32> -> vector<6x8xf32>
    %cst_11 = arith.constant dense<0xFF800000> : vector<6xf32>
    %24 = vector.multi_reduction <maximumf>, %23, %cst_11 [1] : vector<6x8xf32> to vector<6xf32>
    %25 = vector.shape_cast %24 : vector<6xf32> to vector<6x1xf32>
    %26 = vector.broadcast %25 : vector<6x1xf32> to vector<6x8xf32>
    %27 = arith.subf %23, %26 : vector<6x8xf32>
    %28 = math.exp %27 : vector<6x8xf32>
    %cst_12 = arith.constant dense<0.000000e+00> : vector<6xf32>
    %29 = vector.multi_reduction <add>, %28, %cst_12 [1] : vector<6x8xf32> to vector<6xf32>
    %30 = vector.shape_cast %29 : vector<6xf32> to vector<6x1xf32>
    %cst_13 = arith.constant dense<0.000000e+00> : vector<6x8xf32>
    %31 = tpu.matmul %28, %22, %cst_13 {dimension_numbers = #tpu.dot_dimension_numbers<[1], [0], [0], [1], [0, 0, 1, 1], [], []>} : vector<6x8xf32>, vector<8x8xf32>, vector<6x8xf32> -> vector<6x8xf32>
    %32 = tpu.reciprocal %30 {approx = true} : vector<6x1xf32> -> vector<6x1xf32>
    %33 = vector.broadcast %32 : vector<6x1xf32> to vector<6x8xf32>
    %34 = arith.mulf %31, %33 : vector<6x8xf32>
    %c0_14 = arith.constant 0 : index
    %c0_15 = arith.constant 0 : index
    %35 = vector.load %arg9[%c0_14, %c0_15] : memref<12x32xf32, #tpu.memory_space<vmem>>, vector<6x8xf32>
    tpu.vector_store %arg9[%c0_14, %c0_15], %34 {strides = array<i32>} : memref<12x32xf32, #tpu.memory_space<vmem>>, vector<6x8xf32>,
    %36 = vector.extract_strided_slice %15 {offsets = [0, 8], sizes = [6, 8], strides = [1, 1]} : vector<6x32xf32> to vector<6x8xf32>
    %cst_16 = arith.constant 0.353553385 : f32
    %37 = vector.broadcast %cst_16 : f32 to vector<6x8xf32>
    %38 = arith.mulf %36, %37 : vector<6x8xf32>
    %39 = vector.extract_strided_slice %16 {offsets = [0, 8], sizes = [8, 8], strides = [1, 1]} : vector<8x32xf32> to vector<8x8xf32>
    %40 = vector.extract_strided_slice %17 {offsets = [0, 8], sizes = [8, 8], strides = [1, 1]} : vector<8x32xf32> to vector<8x8xf32>
    %cst_17 = arith.constant dense<0.000000e+00> : vector<6x8xf32>
    %41 = tpu.matmul %38, %39, %cst_17 {dimension_numbers = #tpu.dot_dimension_numbers<[1], [1], [0], [0], [0, 0, 1, 0], [], []>} : vector<6x8xf32>, vector<8x8xf32>, vector<6x8xf32> -> vector<6x8xf32>
    %cst_18 = arith.constant dense<0xFF800000> : vector<6xf32>
    %42 = vector.multi_reduction <maximumf>, %41, %cst_18 [1] : vector<6x8xf32> to vector<6xf32>
    %43 = vector.shape_cast %42 : vector<6xf32> to vector<6x1xf32>
    %44 = vector.broadcast %43 : vector<6x1xf32> to vector<6x8xf32>
    %45 = arith.subf %41, %44 : vector<6x8xf32>
    %46 = math.exp %45 : vector<6x8xf32>
    %cst_19 = arith.constant dense<0.000000e+00> : vector<6xf32>
    %47 = vector.multi_reduction <add>, %46, %cst_19 [1] : vector<6x8xf32> to vector<6xf32>
    %48 = vector.shape_cast %47 : vector<6xf32> to vector<6x1xf32>
    %cst_20 = arith.constant dense<0.000000e+00> : vector<6x8xf32>
    %49 = tpu.matmul %46, %40, %cst_20 {dimension_numbers = #tpu.dot_dimension_numbers<[1], [0], [0], [1], [0, 0, 1, 1], [], []>} : vector<6x8xf32>, vector<8x8xf32>, vector<6x8xf32> -> vector<6x8xf32>
    %50 = tpu.reciprocal %48 {approx = true} : vector<6x1xf32> -> vector<6x1xf32>
    %51 = vector.broadcast %50 : vector<6x1xf32> to vector<6x8xf32>
    %52 = arith.mulf %49, %51 : vector<6x8xf32>
    %c0_21 = arith.constant 0 : index
    %c8 = arith.constant 8 : index
    %53 = vector.load %arg9[%c0_21, %c8] : memref<12x32xf32, #tpu.memory_space<vmem>>, vector<6x8xf32>
    tpu.vector_store %arg9[%c0_21, %c8], %52 {strides = array<i32>} : memref<12x32xf32, #tpu.memory_space<vmem>>, vector<6x8xf32>,
    %54 = vector.extract_strided_slice %15 {offsets = [0, 16], sizes = [6, 8], strides = [1, 1]} : vector<6x32xf32> to vector<6x8xf32>
    %cst_22 = arith.constant 0.353553385 : f32
    %55 = vector.broadcast %cst_22 : f32 to vector<6x8xf32>
    %56 = arith.mulf %54, %55 : vector<6x8xf32>
    %57 = vector.extract_strided_slice %16 {offsets = [0, 16], sizes = [8, 8], strides = [1, 1]} : vector<8x32xf32> to vector<8x8xf32>
    %58 = vector.extract_strided_slice %17 {offsets = [0, 16], sizes = [8, 8], strides = [1, 1]} : vector<8x32xf32> to vector<8x8xf32>
    %cst_23 = arith.constant dense<0.000000e+00> : vector<6x8xf32>
    %59 = tpu.matmul %56, %57, %cst_23 {dimension_numbers = #tpu.dot_dimension_numbers<[1], [1], [0], [0], [0, 0, 1, 0], [], []>} : vector<6x8xf32>, vector<8x8xf32>, vector<6x8xf32> -> vector<6x8xf32>
    %cst_24 = arith.constant dense<0xFF800000> : vector<6xf32>
    %60 = vector.multi_reduction <maximumf>, %59, %cst_24 [1] : vector<6x8xf32> to vector<6xf32>
    %61 = vector.shape_cast %60 : vector<6xf32> to vector<6x1xf32>
    %62 = vector.broadcast %61 : vector<6x1xf32> to vector<6x8xf32>
    %63 = arith.subf %59, %62 : vector<6x8xf32>
    %64 = math.exp %63 : vector<6x8xf32>
    %cst_25 = arith.constant dense<0.000000e+00> : vector<6xf32>
    %65 = vector.multi_reduction <add>, %64, %cst_25 [1] : vector<6x8xf32> to vector<6xf32>
    %66 = vector.shape_cast %65 : vector<6xf32> to vector<6x1xf32>
    %cst_26 = arith.constant dense<0.000000e+00> : vector<6x8xf32>
    %67 = tpu.matmul %64, %58, %cst_26 {dimension_numbers = #tpu.dot_dimension_numbers<[1], [0], [0], [1], [0, 0, 1, 1], [], []>} : vector<6x8xf32>, vector<8x8xf32>, vector<6x8xf32> -> vector<6x8xf32>
    %68 = tpu.reciprocal %66 {approx = true} : vector<6x1xf32> -> vector<6x1xf32>
    %69 = vector.broadcast %68 : vector<6x1xf32> to vector<6x8xf32>
    %70 = arith.mulf %67, %69 : vector<6x8xf32>
    %c0_27 = arith.constant 0 : index
    %c16 = arith.constant 16 : index
    %71 = vector.load %arg9[%c0_27, %c16] : memref<12x32xf32, #tpu.memory_space<vmem>>, vector<6x8xf32>
    tpu.vector_store %arg9[%c0_27, %c16], %70 {strides = array<i32>} : memref<12x32xf32, #tpu.memory_space<vmem>>, vector<6x8xf32>,
    %72 = vector.extract_strided_slice %15 {offsets = [0, 24], sizes = [6, 8], strides = [1, 1]} : vector<6x32xf32> to vector<6x8xf32>
    %cst_28 = arith.constant 0.353553385 : f32
    %73 = vector.broadcast %cst_28 : f32 to vector<6x8xf32>
    %74 = arith.mulf %72, %73 : vector<6x8xf32>
    %75 = vector.extract_strided_slice %16 {offsets = [0, 24], sizes = [8, 8], strides = [1, 1]} : vector<8x32xf32> to vector<8x8xf32>
    %76 = vector.extract_strided_slice %17 {offsets = [0, 24], sizes = [8, 8], strides = [1, 1]} : vector<8x32xf32> to vector<8x8xf32>
    %cst_29 = arith.constant dense<0.000000e+00> : vector<6x8xf32>
    %77 = tpu.matmul %74, %75, %cst_29 {dimension_numbers = #tpu.dot_dimension_numbers<[1], [1], [0], [0], [0, 0, 1, 0], [], []>} : vector<6x8xf32>, vector<8x8xf32>, vector<6x8xf32> -> vector<6x8xf32>
    %cst_30 = arith.constant dense<0xFF800000> : vector<6xf32>
    %78 = vector.multi_reduction <maximumf>, %77, %cst_30 [1] : vector<6x8xf32> to vector<6xf32>
    %79 = vector.shape_cast %78 : vector<6xf32> to vector<6x1xf32>
    %80 = vector.broadcast %79 : vector<6x1xf32> to vector<6x8xf32>
    %81 = arith.subf %77, %80 : vector<6x8xf32>
    %82 = math.exp %81 : vector<6x8xf32>
    %cst_31 = arith.constant dense<0.000000e+00> : vector<6xf32>
    %83 = vector.multi_reduction <add>, %82, %cst_31 [1] : vector<6x8xf32> to vector<6xf32>
    %84 = vector.shape_cast %83 : vector<6xf32> to vector<6x1xf32>
    %cst_32 = arith.constant dense<0.000000e+00> : vector<6x8xf32>
    %85 = tpu.matmul %82, %76, %cst_32 {dimension_numbers = #tpu.dot_dimension_numbers<[1], [0], [0], [1], [0, 0, 1, 1], [], []>} : vector<6x8xf32>, vector<8x8xf32>, vector<6x8xf32> -> vector<6x8xf32>
    %86 = tpu.reciprocal %84 {approx = true} : vector<6x1xf32> -> vector<6x1xf32>
    %87 = vector.broadcast %86 : vector<6x1xf32> to vector<6x8xf32>
    %88 = arith.mulf %85, %87 : vector<6x8xf32>
    %c0_33 = arith.constant 0 : index
    %c24 = arith.constant 24 : index
    %89 = vector.load %arg9[%c0_33, %c24] : memref<12x32xf32, #tpu.memory_space<vmem>>, vector<6x8xf32>
    tpu.vector_store %arg9[%c0_33, %c24], %88 {strides = array<i32>} : memref<12x32xf32, #tpu.memory_space<vmem>>, vector<6x8xf32>,
    %90 = vector.extract_strided_slice %7 {offsets = [6, 0], sizes = [6, 32], strides = [1, 1]} : vector<12x32xf32> to vector<6x32xf32>
    %91 = vector.extract_strided_slice %13 {offsets = [8, 0], sizes = [8, 32], strides = [1, 1]} : vector<16x32xf32> to vector<8x32xf32>
    %92 = vector.extract_strided_slice %14 {offsets = [8, 0], sizes = [8, 32], strides = [1, 1]} : vector<16x32xf32> to vector<8x32xf32>
    %93 = vector.extract_strided_slice %90 {offsets = [0, 0], sizes = [6, 8], strides = [1, 1]} : vector<6x32xf32> to vector<6x8xf32>
    %cst_34 = arith.constant 0.353553385 : f32
    %94 = vector.broadcast %cst_34 : f32 to vector<6x8xf32>
    %95 = arith.mulf %93, %94 : vector<6x8xf32>
    %96 = vector.extract_strided_slice %91 {offsets = [0, 0], sizes = [8, 8], strides = [1, 1]} : vector<8x32xf32> to vector<8x8xf32>
    %97 = vector.extract_strided_slice %92 {offsets = [0, 0], sizes = [8, 8], strides = [1, 1]} : vector<8x32xf32> to vector<8x8xf32>
    %cst_35 = arith.constant dense<0.000000e+00> : vector<6x8xf32>
    %98 = tpu.matmul %95, %96, %cst_35 {dimension_numbers = #tpu.dot_dimension_numbers<[1], [1], [0], [0], [0, 0, 1, 0], [], []>} : vector<6x8xf32>, vector<8x8xf32>, vector<6x8xf32> -> vector<6x8xf32>
    %cst_36 = arith.constant dense<0xFF800000> : vector<6xf32>
    %99 = vector.multi_reduction <maximumf>, %98, %cst_36 [1] : vector<6x8xf32> to vector<6xf32>
    %100 = vector.shape_cast %99 : vector<6xf32> to vector<6x1xf32>
    %101 = vector.broadcast %100 : vector<6x1xf32> to vector<6x8xf32>
    %102 = arith.subf %98, %101 : vector<6x8xf32>
    %103 = math.exp %102 : vector<6x8xf32>
    %cst_37 = arith.constant dense<0.000000e+00> : vector<6xf32>
    %104 = vector.multi_reduction <add>, %103, %cst_37 [1] : vector<6x8xf32> to vector<6xf32>
    %105 = vector.shape_cast %104 : vector<6xf32> to vector<6x1xf32>
    %cst_38 = arith.constant dense<0.000000e+00> : vector<6x8xf32>
    %106 = tpu.matmul %103, %97, %cst_38 {dimension_numbers = #tpu.dot_dimension_numbers<[1], [0], [0], [1], [0, 0, 1, 1], [], []>} : vector<6x8xf32>, vector<8x8xf32>, vector<6x8xf32> -> vector<6x8xf32>
    %107 = tpu.reciprocal %105 {approx = true} : vector<6x1xf32> -> vector<6x1xf32>
    %108 = vector.broadcast %107 : vector<6x1xf32> to vector<6x8xf32>
    %109 = arith.mulf %106, %108 : vector<6x8xf32>
    %c6 = arith.constant 6 : index
    %c0_39 = arith.constant 0 : index
    %110 = vector.load %arg9[%c6, %c0_39] : memref<12x32xf32, #tpu.memory_space<vmem>>, vector<6x8xf32>
    tpu.vector_store %arg9[%c6, %c0_39], %109 {strides = array<i32>} : memref<12x32xf32, #tpu.memory_space<vmem>>, vector<6x8xf32>,
    %111 = vector.extract_strided_slice %90 {offsets = [0, 8], sizes = [6, 8], strides = [1, 1]} : vector<6x32xf32> to vector<6x8xf32>
    %cst_40 = arith.constant 0.353553385 : f32
    %112 = vector.broadcast %cst_40 : f32 to vector<6x8xf32>
    %113 = arith.mulf %111, %112 : vector<6x8xf32>
    %114 = vector.extract_strided_slice %91 {offsets = [0, 8], sizes = [8, 8], strides = [1, 1]} : vector<8x32xf32> to vector<8x8xf32>
    %115 = vector.extract_strided_slice %92 {offsets = [0, 8], sizes = [8, 8], strides = [1, 1]} : vector<8x32xf32> to vector<8x8xf32>
    %cst_41 = arith.constant dense<0.000000e+00> : vector<6x8xf32>
    %116 = tpu.matmul %113, %114, %cst_41 {dimension_numbers = #tpu.dot_dimension_numbers<[1], [1], [0], [0], [0, 0, 1, 0], [], []>} : vector<6x8xf32>, vector<8x8xf32>, vector<6x8xf32> -> vector<6x8xf32>
    %cst_42 = arith.constant dense<0xFF800000> : vector<6xf32>
    %117 = vector.multi_reduction <maximumf>, %116, %cst_42 [1] : vector<6x8xf32> to vector<6xf32>
    %118 = vector.shape_cast %117 : vector<6xf32> to vector<6x1xf32>
    %119 = vector.broadcast %118 : vector<6x1xf32> to vector<6x8xf32>
    %120 = arith.subf %116, %119 : vector<6x8xf32>
    %121 = math.exp %120 : vector<6x8xf32>
    %cst_43 = arith.constant dense<0.000000e+00> : vector<6xf32>
    %122 = vector.multi_reduction <add>, %121, %cst_43 [1] : vector<6x8xf32> to vector<6xf32>
    %123 = vector.shape_cast %122 : vector<6xf32> to vector<6x1xf32>
    %cst_44 = arith.constant dense<0.000000e+00> : vector<6x8xf32>
    %124 = tpu.matmul %121, %115, %cst_44 {dimension_numbers = #tpu.dot_dimension_numbers<[1], [0], [0], [1], [0, 0, 1, 1], [], []>} : vector<6x8xf32>, vector<8x8xf32>, vector<6x8xf32> -> vector<6x8xf32>
    %125 = tpu.reciprocal %123 {approx = true} : vector<6x1xf32> -> vector<6x1xf32>
    %126 = vector.broadcast %125 : vector<6x1xf32> to vector<6x8xf32>
    %127 = arith.mulf %124, %126 : vector<6x8xf32>
    %c6_45 = arith.constant 6 : index
    %c8_46 = arith.constant 8 : index
    %128 = vector.load %arg9[%c6_45, %c8_46] : memref<12x32xf32, #tpu.memory_space<vmem>>, vector<6x8xf32>
    tpu.vector_store %arg9[%c6_45, %c8_46], %127 {strides = array<i32>} : memref<12x32xf32, #tpu.memory_space<vmem>>, vector<6x8xf32>,
    %129 = vector.extract_strided_slice %90 {offsets = [0, 16], sizes = [6, 8], strides = [1, 1]} : vector<6x32xf32> to vector<6x8xf32>
    %cst_47 = arith.constant 0.353553385 : f32
    %130 = vector.broadcast %cst_47 : f32 to vector<6x8xf32>
    %131 = arith.mulf %129, %130 : vector<6x8xf32>
    %132 = vector.extract_strided_slice %91 {offsets = [0, 16], sizes = [8, 8], strides = [1, 1]} : vector<8x32xf32> to vector<8x8xf32>
    %133 = vector.extract_strided_slice %92 {offsets = [0, 16], sizes = [8, 8], strides = [1, 1]} : vector<8x32xf32> to vector<8x8xf32>
    %cst_48 = arith.constant dense<0.000000e+00> : vector<6x8xf32>
    %134 = tpu.matmul %131, %132, %cst_48 {dimension_numbers = #tpu.dot_dimension_numbers<[1], [1], [0], [0], [0, 0, 1, 0], [], []>} : vector<6x8xf32>, vector<8x8xf32>, vector<6x8xf32> -> vector<6x8xf32>
    %cst_49 = arith.constant dense<0xFF800000> : vector<6xf32>
    %135 = vector.multi_reduction <maximumf>, %134, %cst_49 [1] : vector<6x8xf32> to vector<6xf32>
    %136 = vector.shape_cast %135 : vector<6xf32> to vector<6x1xf32>
    %137 = vector.broadcast %136 : vector<6x1xf32> to vector<6x8xf32>
    %138 = arith.subf %134, %137 : vector<6x8xf32>
    %139 = math.exp %138 : vector<6x8xf32>
    %cst_50 = arith.constant dense<0.000000e+00> : vector<6xf32>
    %140 = vector.multi_reduction <add>, %139, %cst_50 [1] : vector<6x8xf32> to vector<6xf32>
    %141 = vector.shape_cast %140 : vector<6xf32> to vector<6x1xf32>
    %cst_51 = arith.constant dense<0.000000e+00> : vector<6x8xf32>
    %142 = tpu.matmul %139, %133, %cst_51 {dimension_numbers = #tpu.dot_dimension_numbers<[1], [0], [0], [1], [0, 0, 1, 1], [], []>} : vector<6x8xf32>, vector<8x8xf32>, vector<6x8xf32> -> vector<6x8xf32>
    %143 = tpu.reciprocal %141 {approx = true} : vector<6x1xf32> -> vector<6x1xf32>
    %144 = vector.broadcast %143 : vector<6x1xf32> to vector<6x8xf32>
    %145 = arith.mulf %142, %144 : vector<6x8xf32>
    %c6_52 = arith.constant 6 : index
    %c16_53 = arith.constant 16 : index
    %146 = vector.load %arg9[%c6_52, %c16_53] : memref<12x32xf32, #tpu.memory_space<vmem>>, vector<6x8xf32>
    tpu.vector_store %arg9[%c6_52, %c16_53], %145 {strides = array<i32>} : memref<12x32xf32, #tpu.memory_space<vmem>>, vector<6x8xf32>,
    %147 = vector.extract_strided_slice %90 {offsets = [0, 24], sizes = [6, 8], strides = [1, 1]} : vector<6x32xf32> to vector<6x8xf32>
    %cst_54 = arith.constant 0.353553385 : f32
    %148 = vector.broadcast %cst_54 : f32 to vector<6x8xf32>
    %149 = arith.mulf %147, %148 : vector<6x8xf32>
    %150 = vector.extract_strided_slice %91 {offsets = [0, 24], sizes = [8, 8], strides = [1, 1]} : vector<8x32xf32> to vector<8x8xf32>
    %151 = vector.extract_strided_slice %92 {offsets = [0, 24], sizes = [8, 8], strides = [1, 1]} : vector<8x32xf32> to vector<8x8xf32>
    %cst_55 = arith.constant dense<0.000000e+00> : vector<6x8xf32>
    %152 = tpu.matmul %149, %150, %cst_55 {dimension_numbers = #tpu.dot_dimension_numbers<[1], [1], [0], [0], [0, 0, 1, 0], [], []>} : vector<6x8xf32>, vector<8x8xf32>, vector<6x8xf32> -> vector<6x8xf32>
    %cst_56 = arith.constant dense<0xFF800000> : vector<6xf32>
    %153 = vector.multi_reduction <maximumf>, %152, %cst_56 [1] : vector<6x8xf32> to vector<6xf32>
    %154 = vector.shape_cast %153 : vector<6xf32> to vector<6x1xf32>
    %155 = vector.broadcast %154 : vector<6x1xf32> to vector<6x8xf32>
    %156 = arith.subf %152, %155 : vector<6x8xf32>
    %157 = math.exp %156 : vector<6x8xf32>
    %cst_57 = arith.constant dense<0.000000e+00> : vector<6xf32>
    %158 = vector.multi_reduction <add>, %157, %cst_57 [1] : vector<6x8xf32> to vector<6xf32>
    %159 = vector.shape_cast %158 : vector<6xf32> to vector<6x1xf32>
    %cst_58 = arith.constant dense<0.000000e+00> : vector<6x8xf32>
    %160 = tpu.matmul %157, %151, %cst_58 {dimension_numbers = #tpu.dot_dimension_numbers<[1], [0], [0], [1], [0, 0, 1, 1], [], []>} : vector<6x8xf32>, vector<8x8xf32>, vector<6x8xf32> -> vector<6x8xf32>
    %161 = tpu.reciprocal %159 {approx = true} : vector<6x1xf32> -> vector<6x1xf32>
    %162 = vector.broadcast %161 : vector<6x1xf32> to vector<6x8xf32>
    %163 = arith.mulf %160, %162 : vector<6x8xf32>
    %c6_59 = arith.constant 6 : index
    %c24_60 = arith.constant 24 : index
    %164 = vector.load %arg9[%c6_59, %c24_60] : memref<12x32xf32, #tpu.memory_space<vmem>>, vector<6x8xf32>
    tpu.vector_store %arg9[%c6_59, %c24_60], %163 {strides = array<i32>} : memref<12x32xf32, #tpu.memory_space<vmem>>, vector<6x8xf32>,
    %c0_61 = arith.constant 0 : index
    %c0_62 = arith.constant 0 : index
    %165 = vector.load %arg9[%c0_61, %c0_62] : memref<12x32xf32, #tpu.memory_space<vmem>>, vector<12x32xf32>
    %c0_63 = arith.constant 0 : index
    %c0_64 = arith.constant 0 : index
    %166 = vector.load %arg4[%c0_63, %c0_64] : memref<32x32xf32, #tpu.memory_space<vmem>>, vector<32x32xf32>
    %cst_65 = arith.constant dense<0.000000e+00> : vector<12x32xf32>
    %167 = tpu.matmul %165, %166, %cst_65 {dimension_numbers = #tpu.dot_dimension_numbers<[1], [0], [0], [1], [0, 0, 1, 1], [], []>} : vector<12x32xf32>, vector<32x32xf32>, vector<12x32xf32> -> vector<12x32xf32>
    %c0_66 = arith.constant 0 : index
    %c0_67 = arith.constant 0 : index
    %168 = vector.load %arg5[%c0_66, %c0_67] : memref<1x32xf32, #tpu.memory_space<vmem>>, vector<1x32xf32>
    %169 = vector.broadcast %168 : vector<1x32xf32> to vector<12x32xf32>
    %170 = arith.addf %167, %169 : vector<12x32xf32>
    %171 = arith.addf %0, %170 : vector<12x32xf32>
    %cst_68 = arith.constant dense<0.000000e+00> : vector<12xf32>
    %172 = vector.multi_reduction <add>, %171, %cst_68 [1] : vector<12x32xf32> to vector<12xf32>
    %173 = vector.shape_cast %172 : vector<12xf32> to vector<12x1xf32>
    %cst_69 = arith.constant 3.200000e+01 : f32
    %174 = vector.broadcast %cst_69 : f32 to vector<12x1xf32>
    %175 = arith.divf %173, %174 : vector<12x1xf32>
    %176 = vector.broadcast %175 : vector<12x1xf32> to vector<12x32xf32>
    %177 = arith.subf %171, %176 : vector<12x32xf32>
    %178 = arith.mulf %177, %177 : vector<12x32xf32>
    %cst_70 = arith.constant dense<0.000000e+00> : vector<12xf32>
    %179 = vector.multi_reduction <add>, %178, %cst_70 [1] : vector<12x32xf32> to vector<12xf32>
    %180 = vector.shape_cast %179 : vector<12xf32> to vector<12x1xf32>
    %cst_71 = arith.constant 3.200000e+01 : f32
    %181 = vector.broadcast %cst_71 : f32 to vector<12x1xf32>
    %182 = arith.divf %180, %181 : vector<12x1xf32>
    %183 = vector.broadcast %175 : vector<12x1xf32> to vector<12x32xf32>
    %184 = arith.subf %171, %183 : vector<12x32xf32>
    %cst_72 = arith.constant 9.99999974E-6 : f32
    %185 = vector.broadcast %cst_72 : f32 to vector<12x1xf32>
    %186 = arith.addf %182, %185 : vector<12x1xf32>
    %187 = math.rsqrt %186 : vector<12x1xf32>
    %188 = vector.broadcast %187 : vector<12x1xf32> to vector<12x32xf32>
    %189 = arith.mulf %184, %188 : vector<12x32xf32>
    %c0_73 = arith.constant 0 : index
    %c0_74 = arith.constant 0 : index
    %190 = vector.load %arg6[%c0_73, %c0_74] : memref<1x32xf32, #tpu.memory_space<vmem>>, vector<1x32xf32>
    %191 = vector.broadcast %190 : vector<1x32xf32> to vector<12x32xf32>
    %192 = arith.mulf %189, %191 : vector<12x32xf32>
    %c0_75 = arith.constant 0 : index
    %c0_76 = arith.constant 0 : index
    %193 = vector.load %arg7[%c0_75, %c0_76] : memref<1x32xf32, #tpu.memory_space<vmem>>, vector<1x32xf32>
    %194 = vector.broadcast %193 : vector<1x32xf32> to vector<12x32xf32>
    %195 = arith.addf %192, %194 : vector<12x32xf32>
    %c0_77 = arith.constant 0 : index
    %c0_78 = arith.constant 0 : index
    %196 = vector.load %arg8[%c0_77, %c0_78] : memref<12x32xf32, #tpu.memory_space<vmem>>, vector<12x32xf32>
    tpu.vector_store %arg8[%c0_77, %c0_78], %195 {strides = array<i32>} : memref<12x32xf32, #tpu.memory_space<vmem>>, vector<12x32xf32>,
    return
  }
}

module attributes {stable_mosaic.version = 11 : i64} {
  func.func @_ffn_block_kernel(%arg0: memref<12x32xf32, #tpu.memory_space<vmem>>, %arg1: memref<32x64xf32, #tpu.memory_space<vmem>>, %arg2: memref<1x64xf32, #tpu.memory_space<vmem>>, %arg3: memref<64x32xf32, #tpu.memory_space<vmem>>, %arg4: memref<1x32xf32, #tpu.memory_space<vmem>>, %arg5: memref<1x32xf32, #tpu.memory_space<vmem>>, %arg6: memref<1x32xf32, #tpu.memory_space<vmem>>, %arg7: memref<12x32xf32, #tpu.memory_space<vmem>>) attributes {dimension_semantics = [], scalar_prefetch = 0 : i64, scratch_operands = 0 : i64, tpu.core_type = #tpu.core_type<tc>} {
    %c0 = arith.constant 0 : index
    %c0_0 = arith.constant 0 : index
    %0 = vector.load %arg0[%c0, %c0_0] : memref<12x32xf32, #tpu.memory_space<vmem>>, vector<12x32xf32>
    %c0_1 = arith.constant 0 : index
    %c0_2 = arith.constant 0 : index
    %1 = vector.load %arg1[%c0_1, %c0_2] : memref<32x64xf32, #tpu.memory_space<vmem>>, vector<32x64xf32>
    %cst = arith.constant dense<0.000000e+00> : vector<12x64xf32>
    %2 = tpu.matmul %0, %1, %cst {dimension_numbers = #tpu.dot_dimension_numbers<[1], [0], [0], [1], [0, 0, 1, 1], [], []>} : vector<12x32xf32>, vector<32x64xf32>, vector<12x64xf32> -> vector<12x64xf32>
    %c0_3 = arith.constant 0 : index
    %c0_4 = arith.constant 0 : index
    %3 = vector.load %arg2[%c0_3, %c0_4] : memref<1x64xf32, #tpu.memory_space<vmem>>, vector<1x64xf32>
    %4 = vector.broadcast %3 : vector<1x64xf32> to vector<12x64xf32>
    %5 = arith.addf %2, %4 : vector<12x64xf32>
    %cst_5 = arith.constant 0.000000e+00 : f32
    %6 = vector.broadcast %cst_5 : f32 to vector<12x64xf32>
    %7 = arith.maximumf %5, %6 : vector<12x64xf32>
    %c0_6 = arith.constant 0 : index
    %c0_7 = arith.constant 0 : index
    %8 = vector.load %arg3[%c0_6, %c0_7] : memref<64x32xf32, #tpu.memory_space<vmem>>, vector<64x32xf32>
    %cst_8 = arith.constant dense<0.000000e+00> : vector<12x32xf32>
    %9 = tpu.matmul %7, %8, %cst_8 {dimension_numbers = #tpu.dot_dimension_numbers<[1], [0], [0], [1], [0, 0, 1, 1], [], []>} : vector<12x64xf32>, vector<64x32xf32>, vector<12x32xf32> -> vector<12x32xf32>
    %c0_9 = arith.constant 0 : index
    %c0_10 = arith.constant 0 : index
    %10 = vector.load %arg4[%c0_9, %c0_10] : memref<1x32xf32, #tpu.memory_space<vmem>>, vector<1x32xf32>
    %11 = vector.broadcast %10 : vector<1x32xf32> to vector<12x32xf32>
    %12 = arith.addf %9, %11 : vector<12x32xf32>
    %13 = arith.addf %0, %12 : vector<12x32xf32>
    %cst_11 = arith.constant dense<0.000000e+00> : vector<12xf32>
    %14 = vector.multi_reduction <add>, %13, %cst_11 [1] : vector<12x32xf32> to vector<12xf32>
    %15 = vector.shape_cast %14 : vector<12xf32> to vector<12x1xf32>
    %cst_12 = arith.constant 3.200000e+01 : f32
    %16 = vector.broadcast %cst_12 : f32 to vector<12x1xf32>
    %17 = arith.divf %15, %16 : vector<12x1xf32>
    %18 = vector.broadcast %17 : vector<12x1xf32> to vector<12x32xf32>
    %19 = arith.subf %13, %18 : vector<12x32xf32>
    %20 = arith.mulf %19, %19 : vector<12x32xf32>
    %cst_13 = arith.constant dense<0.000000e+00> : vector<12xf32>
    %21 = vector.multi_reduction <add>, %20, %cst_13 [1] : vector<12x32xf32> to vector<12xf32>
    %22 = vector.shape_cast %21 : vector<12xf32> to vector<12x1xf32>
    %cst_14 = arith.constant 3.200000e+01 : f32
    %23 = vector.broadcast %cst_14 : f32 to vector<12x1xf32>
    %24 = arith.divf %22, %23 : vector<12x1xf32>
    %25 = vector.broadcast %17 : vector<12x1xf32> to vector<12x32xf32>
    %26 = arith.subf %13, %25 : vector<12x32xf32>
    %cst_15 = arith.constant 9.99999974E-6 : f32
    %27 = vector.broadcast %cst_15 : f32 to vector<12x1xf32>
    %28 = arith.addf %24, %27 : vector<12x1xf32>
    %29 = math.rsqrt %28 : vector<12x1xf32>
    %30 = vector.broadcast %29 : vector<12x1xf32> to vector<12x32xf32>
    %31 = arith.mulf %26, %30 : vector<12x32xf32>
    %c0_16 = arith.constant 0 : index
    %c0_17 = arith.constant 0 : index
    %32 = vector.load %arg5[%c0_16, %c0_17] : memref<1x32xf32, #tpu.memory_space<vmem>>, vector<1x32xf32>
    %33 = vector.broadcast %32 : vector<1x32xf32> to vector<12x32xf32>
    %34 = arith.mulf %31, %33 : vector<12x32xf32>
    %c0_18 = arith.constant 0 : index
    %c0_19 = arith.constant 0 : index
    %35 = vector.load %arg6[%c0_18, %c0_19] : memref<1x32xf32, #tpu.memory_space<vmem>>, vector<1x32xf32>
    %36 = vector.broadcast %35 : vector<1x32xf32> to vector<12x32xf32>
    %37 = arith.addf %34, %36 : vector<12x32xf32>
    %c0_20 = arith.constant 0 : index
    %c0_21 = arith.constant 0 : index
    %38 = vector.load %arg7[%c0_20, %c0_21] : memref<12x32xf32, #tpu.memory_space<vmem>>, vector<12x32xf32>
    tpu.vector_store %arg7[%c0_20, %c0_21], %37 {strides = array<i32>} : memref<12x32xf32, #tpu.memory_space<vmem>>, vector<12x32xf32>,
    return
  }
}

module attributes {stable_mosaic.version = 11 : i64} {
  func.func @_ln_kernel(%arg0: memref<12x32xf32, #tpu.memory_space<vmem>>, %arg1: memref<1x32xf32, #tpu.memory_space<vmem>>, %arg2: memref<1x32xf32, #tpu.memory_space<vmem>>, %arg3: memref<12x32xf32, #tpu.memory_space<vmem>>) attributes {dimension_semantics = [], scalar_prefetch = 0 : i64, scratch_operands = 0 : i64, tpu.core_type = #tpu.core_type<tc>} {
    %c0 = arith.constant 0 : index
    %c0_0 = arith.constant 0 : index
    %0 = vector.load %arg0[%c0, %c0_0] : memref<12x32xf32, #tpu.memory_space<vmem>>, vector<12x32xf32>
    %cst = arith.constant dense<0.000000e+00> : vector<12xf32>
    %1 = vector.multi_reduction <add>, %0, %cst [1] : vector<12x32xf32> to vector<12xf32>
    %2 = vector.shape_cast %1 : vector<12xf32> to vector<12x1xf32>
    %cst_1 = arith.constant 3.200000e+01 : f32
    %3 = vector.broadcast %cst_1 : f32 to vector<12x1xf32>
    %4 = arith.divf %2, %3 : vector<12x1xf32>
    %5 = vector.broadcast %4 : vector<12x1xf32> to vector<12x32xf32>
    %6 = arith.subf %0, %5 : vector<12x32xf32>
    %7 = arith.mulf %6, %6 : vector<12x32xf32>
    %cst_2 = arith.constant dense<0.000000e+00> : vector<12xf32>
    %8 = vector.multi_reduction <add>, %7, %cst_2 [1] : vector<12x32xf32> to vector<12xf32>
    %9 = vector.shape_cast %8 : vector<12xf32> to vector<12x1xf32>
    %cst_3 = arith.constant 3.200000e+01 : f32
    %10 = vector.broadcast %cst_3 : f32 to vector<12x1xf32>
    %11 = arith.divf %9, %10 : vector<12x1xf32>
    %12 = vector.broadcast %4 : vector<12x1xf32> to vector<12x32xf32>
    %13 = arith.subf %0, %12 : vector<12x32xf32>
    %cst_4 = arith.constant 9.99999974E-6 : f32
    %14 = vector.broadcast %cst_4 : f32 to vector<12x1xf32>
    %15 = arith.addf %11, %14 : vector<12x1xf32>
    %16 = math.rsqrt %15 : vector<12x1xf32>
    %17 = vector.broadcast %16 : vector<12x1xf32> to vector<12x32xf32>
    %18 = arith.mulf %13, %17 : vector<12x32xf32>
    %c0_5 = arith.constant 0 : index
    %c0_6 = arith.constant 0 : index
    %19 = vector.load %arg1[%c0_5, %c0_6] : memref<1x32xf32, #tpu.memory_space<vmem>>, vector<1x32xf32>
    %20 = vector.broadcast %19 : vector<1x32xf32> to vector<12x32xf32>
    %21 = arith.mulf %18, %20 : vector<12x32xf32>
    %c0_7 = arith.constant 0 : index
    %c0_8 = arith.constant 0 : index
    %22 = vector.load %arg2[%c0_7, %c0_8] : memref<1x32xf32, #tpu.memory_space<vmem>>, vector<1x32xf32>
    %23 = vector.broadcast %22 : vector<1x32xf32> to vector<12x32xf32>
    %24 = arith.addf %21, %23 : vector<12x32xf32>
    %c0_9 = arith.constant 0 : index
    %c0_10 = arith.constant 0 : index
    %25 = vector.load %arg3[%c0_9, %c0_10] : memref<12x32xf32, #tpu.memory_space<vmem>>, vector<12x32xf32>
    tpu.vector_store %arg3[%c0_9, %c0_10], %24 {strides = array<i32>} : memref<12x32xf32, #tpu.memory_space<vmem>>, vector<12x32xf32>,
    return
  }
}

</mosaic_0001>

<llo_original>
// kernel: transformer_forward.16
$region0: #{transformer_forward.16}
  #allocation0 [shape = 'u32[]', space=smem, size = 0x4, offset = 0x4, fixed_abs, tag = 'smem constant byte address 0x4 - core index']
  #allocation1 [shape = 'u32[144,128]{1,0:T(1,128)}', space=vmem, size = 0x12000, scoped, tag = 'internal scratch']
  %s0 = inlined_call_operand.vmem [shape: f32[16,32], index: 0, kind: input, shape index: {}]
  %s1 = inlined_call_operand.vmem [shape: f32[1,32], index: 1, kind: input, shape index: {}]
  %s2 = inlined_call_operand.vmem [shape: f32[1,32], index: 2, kind: input, shape index: {}]
  %s3 = inlined_call_operand.vmem [shape: f32[16,32], index: 3, kind: output, shape index: {}]
  %s4 = sld [smem:[#allocation0]]
  $region22: #{transformer_forward.16} parent=0
    _
  %s6 = ssub.s32 1, %s4
  %s7 = scalar_select 0, %s6, %s4
  // Predicated region
  $region2: #{transformer_forward.16} parent=0 // pred_check
    _
  $region3: #{transformer_forward.16} parent=0 // pred_check_branch
    %9 = sbr.rel (0) target = $region5
  $region4: #{transformer_forward.16} parent=0 // pred_region
    _
  $region5: #{transformer_forward.16} parent=0 // pred_fallthru
    _
  // Predicated region
  $region6: #{transformer_forward.16} parent=0 // pred_check
    _
  $region7: #{transformer_forward.16} parent=0 // pred_check_branch
    %11 = sbr.rel (0) target = $region9
  $region8: #{transformer_forward.16} parent=0 // pred_region
    _
  $region9: #{transformer_forward.16} parent=0 // pred_fallthru
    _
  // Predicated region
  $region10: #{transformer_forward.16} parent=0 // pred_check
    _
  $region11: #{transformer_forward.16} parent=0 // pred_check_branch
    %13 = sbr.rel (0) target = $region13
  $region12: #{transformer_forward.16} parent=0 // pred_region
    _
  $region13: #{transformer_forward.16} parent=0 // pred_fallthru
    _
  %v14 = vld [vmem:[%s0] sm:$0xff]
  %v15 = vld [vmem:[%s0 + $0x8] sm:$0xff]
  %vm16 = vcmask 261120
  %v17 = vsel %vm16, %v14, 0.0
  %18 = vadd.xlane.f32.xlu0 %v17
  %v19 = vpop.xlane.xlu0 %18
  %v20 = vsel %vm16, %v15, 0.0
  %21 = vadd.xlane.f32.xlu0 %v20
  %v22 = vpop.xlane.xlu0 %21
  %v23 = vrcp.pop 32.0
  %v24 = vmul.f32 %v19, %v23
  %v25 = vmul.f32 %v22, %v23
  %v26 = vsub.f32 %v14, %v24
  %v27 = vsub.f32 %v15, %v25
  %v28 = vmul.f32 %v26, %v26
  %v29 = vmul.f32 %v27, %v27
  %v30 = vsel %vm16, %v28, 0.0
  %31 = vadd.xlane.f32.xlu0 %v30
  %v32 = vpop.xlane.xlu0 %31
  %v33 = vsel %vm16, %v29, 0.0
  %34 = vadd.xlane.f32.xlu0 %v33
  %v35 = vpop.xlane.xlu0 %34
  %v36 = vmul.f32 %v32, %v23
  %v37 = vmul.f32 %v35, %v23
  %v38 = vadd.f32 %v36, 1e-05
  %v39 = vadd.f32 %v37, 1e-05
  %v40 = vrsqrt.pop %v38
  %v41 = vrsqrt.pop %v39
  %v42 = vmul.f32 %v26, %v40
  %v43 = vmul.f32 %v27, %v41
  %v44 = vld [vmem:[%s1] sm:$0x1]
  %v46 = vlaneseq
  %v47 = vshrl.u32 %v46, 7
  %v48 = vsub.s32 0, %v47
  %v49 = vrot.slane %v44, %v48
  %v51 = vmul.f32 %v42, %v49
  %v52 = vmul.f32 %v43, %v49
  %v53 = vld [vmem:[%s2] sm:$0x1]
  %v55 = vlaneseq
  %v56 = vshrl.u32 %v55, 7
  %v57 = vsub.s32 0, %v56
  %v58 = vrot.slane %v53, %v57
  %v60 = vadd.f32 %v51, %v58
  %v61 = vadd.f32 %v52, %v58
  %62 = vst.msk [vmem:[%s3] sm:$0xff] %vm16, %v60
  %63 = vst.msk [vmem:[%s3 + $0x8] sm:$0xff] %vm16, %v61
  // Predicated region
  $region14: #{transformer_forward.16} parent=0 // pred_check
    _
  $region15: #{transformer_forward.16} parent=0 // pred_check_branch
    %65 = sbr.rel (0) target = $region17
  $region16: #{transformer_forward.16} parent=0 // pred_region
    _
  $region17: #{transformer_forward.16} parent=0 // pred_fallthru
    _
  // Predicated region
  $region18: #{transformer_forward.16} parent=0 // pred_check
    _
  $region19: #{transformer_forward.16} parent=0 // pred_check_branch
    %67 = sbr.rel (0) target = $region21
  $region20: #{transformer_forward.16} parent=0 // pred_region
    _
  $region21: #{transformer_forward.16} parent=0 // pred_fallthru
    _

// kernel: transformer_forward.13
$region0: #{transformer_forward.13}
  #allocation0 [shape = 'u32[]', space=smem, size = 0x4, offset = 0x4, fixed_abs, tag = 'smem constant byte address 0x4 - core index']
  #allocation1 [shape = 'u32[144,128]{1,0:T(1,128)}', space=vmem, size = 0x12000, scoped, tag = 'internal scratch']
  %s0 = inlined_call_operand.vmem [shape: f32[16,32], index: 0, kind: input, shape index: {}]
  %s1 = inlined_call_operand.vmem [shape: f32[32,64], index: 1, kind: input, shape index: {}]
  %s2 = inlined_call_operand.vmem [shape: f32[1,64], index: 2, kind: input, shape index: {}]
  %s3 = inlined_call_operand.vmem [shape: f32[64,32], index: 3, kind: input, shape index: {}]
  %s4 = inlined_call_operand.vmem [shape: f32[1,32], index: 4, kind: input, shape index: {}]
  %s5 = inlined_call_operand.vmem [shape: f32[1,32], index: 5, kind: input, shape index: {}]
  %s6 = inlined_call_operand.vmem [shape: f32[1,32], index: 6, kind: input, shape index: {}]
  %s7 = inlined_call_operand.vmem [shape: f32[16,32], index: 7, kind: output, shape index: {}]
  %s8 = sld [smem:[#allocation0]]
  $region38: #{transformer_forward.13} parent=0
    _
  %s10 = ssub.s32 1, %s8
  %s11 = scalar_select 0, %s10, %s8
  // Predicated region
  $region2: #{transformer_forward.13} parent=0 // pred_check
    _
  $region3: #{transformer_forward.13} parent=0 // pred_check_branch
    %13 = sbr.rel (0) target = $region5
  $region4: #{transformer_forward.13} parent=0 // pred_region
    _
  $region5: #{transformer_forward.13} parent=0 // pred_fallthru
    _
  // Predicated region
  $region6: #{transformer_forward.13} parent=0 // pred_check
    _
  $region7: #{transformer_forward.13} parent=0 // pred_check_branch
    %15 = sbr.rel (0) target = $region9
  $region8: #{transformer_forward.13} parent=0 // pred_region
    _
  $region9: #{transformer_forward.13} parent=0 // pred_fallthru
    _
  // Predicated region
  $region10: #{transformer_forward.13} parent=0 // pred_check
    _
  $region11: #{transformer_forward.13} parent=0 // pred_check_branch
    %17 = sbr.rel (0) target = $region13
  $region12: #{transformer_forward.13} parent=0 // pred_region
    _
  $region13: #{transformer_forward.13} parent=0 // pred_fallthru
    _
  // Predicated region
  $region14: #{transformer_forward.13} parent=0 // pred_check
    _
  $region15: #{transformer_forward.13} parent=0 // pred_check_branch
    %19 = sbr.rel (0) target = $region17
  $region16: #{transformer_forward.13} parent=0 // pred_region
    _
  $region17: #{transformer_forward.13} parent=0 // pred_fallthru
    _
  // Predicated region
  $region18: #{transformer_forward.13} parent=0 // pred_check
    _
  $region19: #{transformer_forward.13} parent=0 // pred_check_branch
    %21 = sbr.rel (0) target = $region21
  $region20: #{transformer_forward.13} parent=0 // pred_region
    _
  $region21: #{transformer_forward.13} parent=0 // pred_fallthru
    _
  // Predicated region
  $region22: #{transformer_forward.13} parent=0 // pred_check
    _
  $region23: #{transformer_forward.13} parent=0 // pred_check_branch
    %23 = sbr.rel (0) target = $region25
  $region24: #{transformer_forward.13} parent=0 // pred_region
    _
  $region25: #{transformer_forward.13} parent=0 // pred_fallthru
    _
  // Predicated region
  $region26: #{transformer_forward.13} parent=0 // pred_check
    _
  $region27: #{transformer_forward.13} parent=0 // pred_check_branch
    %25 = sbr.rel (0) target = $region29
  $region28: #{transformer_forward.13} parent=0 // pred_region
    _
  $region29: #{transformer_forward.13} parent=0 // pred_fallthru
    _
  %v26 = vld [vmem:[%s0] sm:$0xff]
  %v27 = vld [vmem:[%s0 + $0x8] sm:$0xff]
  %v28 = vld [vmem:[%s1] sm:$0xff]
  %v29 = vld [vmem:[%s1 + $0x8] sm:$0xff]
  %v30 = vld [vmem:[%s1 + $0x10] sm:$0xff]
  %v31 = vld [vmem:[%s1 + $0x18] sm:$0xff]
  %v32 = vld [vmem:[%s2] sm:$0x1]
  %v34 = vlaneseq
  %v35 = vshrl.u32 %v34, 7
  %v36 = vsub.s32 0, %v35
  %v37 = vrot.slane %v32, %v36
  %vm39 = vcmask 261120
  %v41 = vsel %vm39, %v26, 0
  %v44 = vsel %vm39, %v27, 0
  %46 = vmatprep.subr.mxu0 0.0
  %47 = vmatpush1.msra.mxu0 0.0
  %48 = vmatprep.subr.mxu0 0.0
  %49 = vmatpush1.msra.mxu0 0.0
  %50 = vmatprep.subr.mxu0 0.0
  %51 = vmatpush1.msra.mxu0 0.0
  %52 = vmatprep.subr.mxu0 0.0
  %53 = vmatpush1.msra.mxu0 0.0
  %54 = vmatprep.subr.mxu0 0.0
  %55 = vmatpush1.msra.mxu0 0.0
  %56 = vmatprep.subr.mxu0 0.0
  %57 = vmatpush1.msra.mxu0 0.0
  %58 = vmatprep.subr.mxu0 0.0
  %59 = vmatpush1.msra.mxu0 0.0
  %60 = vmatprep.subr.mxu0 0.0
  %61 = vmatpush1.msra.mxu0 0.0
  %62 = vmatprep.subr.mxu0 0.0
  %63 = vmatpush1.msra.mxu0 0.0
  %64 = vmatprep.subr.mxu0 0.0
  %65 = vmatpush1.msra.mxu0 0.0
  %66 = vmatprep.subr.mxu0 0.0
  %67 = vmatpush1.msra.mxu0 0.0
  %68 = vmatprep.subr.mxu0 0.0
  %69 = vmatpush1.msra.mxu0 0.0
  %70 = vmatprep.subr.mxu0 0.0
  %71 = vmatpush1.msra.mxu0 %v31
  %72 = vmatprep.subr.mxu0 0.0
  %73 = vmatpush1.msra.mxu0 %v30
  %74 = vmatprep.subr.mxu0 0.0
  %75 = vmatpush1.msra.mxu0 %v29
  %76 = vmatprep.subr.mxu0 0.0
  %77 = vmatpush1.msra.mxu0 %v28
  %78 = vmatprep.subr.mxu0 0.0
  %79 = vmatpush2.msra.mxu0 0.0
  %80 = vmatprep.subr.mxu0 0.0
  %81 = vmatpush2.msra.mxu0 0.0
  %82 = vmatprep.subr.mxu0 0.0
  %83 = vmatpush2.msra.mxu0 0.0
  %84 = vmatprep.subr.mxu0 0.0
  %85 = vmatpush2.msra.mxu0 0.0
  %86 = vmatprep.subr.mxu0 0.0
  %87 = vmatpush2.msra.mxu0 0.0
  %88 = vmatprep.subr.mxu0 0.0
  %89 = vmatpush2.msra.mxu0 0.0
  %90 = vmatprep.subr.mxu0 0.0
  %91 = vmatpush2.msra.mxu0 0.0
  %92 = vmatprep.subr.mxu0 0.0
  %93 = vmatpush2.msra.mxu0 0.0
  %94 = vmatprep.subr.mxu0 0.0
  %95 = vmatpush2.msra.mxu0 0.0
  %96 = vmatprep.subr.mxu0 0.0
  %97 = vmatpush2.msra.mxu0 0.0
  %98 = vmatprep.subr.mxu0 0.0
  %99 = vmatpush2.msra.mxu0 0.0
  %100 = vmatprep.subr.mxu0 0.0
  %101 = vmatpush2.msra.mxu0 0.0
  %102 = vmatprep.subr.mxu0 0.0
  %103 = vmatpush2.msra.mxu0 0.0
  %104 = vmatprep.subr.mxu0 0.0
  %105 = vmatpush2.msra.mxu0 0.0
  %106 = vmatprep.subr.mxu0 0.0
  %107 = vmatpush2.msra.mxu0 0.0
  %108 = vmatprep.subr.mxu0 0.0
  %109 = vmatpush2.msra.mxu0 0.0
  %110 = vmatprep.mubr.f32.mxu0 0.0
  %111 = vmatmul.mubr.f32.gmra.mxu0 %v41
  %v112 = vpop.f32.mrf.mxu0
  %v113 = vadd.f32 %v37, %v112
  %v114 = vpop.f32.mrf.mxu0
  %115 = vmatprep.mubr.f32.mxu0 0.0
  %116 = vmatmul.mubr.f32.gmra.mxu0 %v44
  %v117 = vpop.f32.mrf.mxu0
  %v118 = vadd.f32 %v37, %v117
  %v119 = vpop.f32.mrf.mxu0
  %120 = vdwg.mxu0
  %v121 = vmax.f32 %v113, 0.0
  %v122 = vmax.f32 %v118, 0.0
  %v123 = vld [vmem:[%s3] sm:$0xff]
  %v124 = vld [vmem:[%s3 + $0x8] sm:$0xff]
  %v125 = vld [vmem:[%s3 + $0x10] sm:$0xff]
  %v126 = vld [vmem:[%s3 + $0x18] sm:$0xff]
  %v127 = vld [vmem:[%s3 + $0x20] sm:$0xff]
  %v128 = vld [vmem:[%s3 + $0x28] sm:$0xff]
  %v129 = vld [vmem:[%s3 + $0x30] sm:$0xff]
  %v130 = vld [vmem:[%s3 + $0x38] sm:$0xff]
  %v131 = vld [vmem:[%s4] sm:$0x1]
  %v133 = vlaneseq
  %v134 = vshrl.u32 %v133, 7
  %v135 = vsub.s32 0, %v134
  %v136 = vrot.slane %v131, %v135
  %vm138 = vcmask 523264
  %v140 = vsel %vm138, %v121, 0
  %v143 = vsel %vm138, %v122, 0
  %145 = vmatprep.subr.mxu0 0.0
  %146 = vmatpush1.msra.mxu0 0.0
  %147 = vmatprep.subr.mxu0 0.0
  %148 = vmatpush1.msra.mxu0 0.0
  %149 = vmatprep.subr.mxu0 0.0
  %150 = vmatpush1.msra.mxu0 0.0
  %151 = vmatprep.subr.mxu0 0.0
  %152 = vmatpush1.msra.mxu0 0.0
  %153 = vmatprep.subr.mxu0 0.0
  %154 = vmatpush1.msra.mxu0 0.0
  %155 = vmatprep.subr.mxu0 0.0
  %156 = vmatpush1.msra.mxu0 0.0
  %157 = vmatprep.subr.mxu0 0.0
  %158 = vmatpush1.msra.mxu0 0.0
  %159 = vmatprep.subr.mxu0 0.0
  %160 = vmatpush1.msra.mxu0 0.0
  %161 = vmatprep.subr.mxu0 0.0
  %162 = vmatpush1.msra.mxu0 %v130
  %163 = vmatprep.subr.mxu0 0.0
  %164 = vmatpush1.msra.mxu0 %v129
  %165 = vmatprep.subr.mxu0 0.0
  %166 = vmatpush1.msra.mxu0 %v128
  %167 = vmatprep.subr.mxu0 0.0
  %168 = vmatpush1.msra.mxu0 %v127
  %169 = vmatprep.subr.mxu0 0.0
  %170 = vmatpush1.msra.mxu0 %v126
  %171 = vmatprep.subr.mxu0 0.0
  %172 = vmatpush1.msra.mxu0 %v125
  %173 = vmatprep.subr.mxu0 0.0
  %174 = vmatpush1.msra.mxu0 %v124
  %175 = vmatprep.subr.mxu0 0.0
  %176 = vmatpush1.msra.mxu0 %v123
  %177 = vmatprep.subr.mxu0 0.0
  %178 = vmatpush2.msra.mxu0 0.0
  %179 = vmatprep.subr.mxu0 0.0
  %180 = vmatpush2.msra.mxu0 0.0
  %181 = vmatprep.subr.mxu0 0.0
  %182 = vmatpush2.msra.mxu0 0.0
  %183 = vmatprep.subr.mxu0 0.0
  %184 = vmatpush2.msra.mxu0 0.0
  %185 = vmatprep.subr.mxu0 0.0
  %186 = vmatpush2.msra.mxu0 0.0
  %187 = vmatprep.subr.mxu0 0.0
  %188 = vmatpush2.msra.mxu0 0.0
  %189 = vmatprep.subr.mxu0 0.0
  %190 = vmatpush2.msra.mxu0 0.0
  %191 = vmatprep.subr.mxu0 0.0
  %192 = vmatpush2.msra.mxu0 0.0
  %193 = vmatprep.subr.mxu0 0.0
  %194 = vmatpush2.msra.mxu0 0.0
  %195 = vmatprep.subr.mxu0 0.0
  %196 = vmatpush2.msra.mxu0 0.0
  %197 = vmatprep.subr.mxu0 0.0
  %198 = vmatpush2.msra.mxu0 0.0
  %199 = vmatprep.subr.mxu0 0.0
  %200 = vmatpush2.msra.mxu0 0.0
  %201 = vmatprep.subr.mxu0 0.0
  %202 = vmatpush2.msra.mxu0 0.0
  %203 = vmatprep.subr.mxu0 0.0
  %204 = vmatpush2.msra.mxu0 0.0
  %205 = vmatprep.subr.mxu0 0.0
  %206 = vmatpush2.msra.mxu0 0.0
  %207 = vmatprep.subr.mxu0 0.0
  %208 = vmatpush2.msra.mxu0 0.0
  %209 = vmatprep.mubr.f32.mxu0 0.0
  %210 = vmatmul.mubr.f32.gmra.mxu0 %v140
  %v211 = vpop.f32.mrf.mxu0
  %v212 = vadd.f32 %v136, %v211
  %v213 = vpop.f32.mrf.mxu0
  %214 = vmatprep.mubr.f32.mxu0 0.0
  %215 = vmatmul.mubr.f32.gmra.mxu0 %v143
  %v216 = vpop.f32.mrf.mxu0
  %v217 = vadd.f32 %v136, %v216
  %v218 = vpop.f32.mrf.mxu0
  %219 = vdwg.mxu0
  %v220 = vadd.f32 %v26, %v212
  %v221 = vadd.f32 %v27, %v217
  %v222 = vsel %vm39, %v220, 0.0
  %223 = vadd.xlane.f32.xlu0 %v222
  %v224 = vpop.xlane.xlu0 %223
  %v225 = vsel %vm39, %v221, 0.0
  %226 = vadd.xlane.f32.xlu0 %v225
  %v227 = vpop.xlane.xlu0 %226
  %v228 = vrcp.pop 32.0
  %v229 = vmul.f32 %v224, %v228
  %v230 = vmul.f32 %v227, %v228
  %v231 = vsub.f32 %v220, %v229
  %v232 = vsub.f32 %v221, %v230
  %v233 = vmul.f32 %v231, %v231
  %v234 = vmul.f32 %v232, %v232
  %v235 = vsel %vm39, %v233, 0.0
  %236 = vadd.xlane.f32.xlu0 %v235
  %v237 = vpop.xlane.xlu0 %236
  %v238 = vsel %vm39, %v234, 0.0
  %239 = vadd.xlane.f32.xlu0 %v238
  %v240 = vpop.xlane.xlu0 %239
  %v241 = vmul.f32 %v237, %v228
  %v242 = vmul.f32 %v240, %v228
  %v243 = vadd.f32 %v241, 1e-05
  %v244 = vadd.f32 %v242, 1e-05
  %v245 = vrsqrt.pop %v243
  %v246 = vrsqrt.pop %v244
  %v247 = vmul.f32 %v231, %v245
  %v248 = vmul.f32 %v232, %v246
  %v249 = vld [vmem:[%s5] sm:$0x1]
  %v251 = vlaneseq
  %v252 = vshrl.u32 %v251, 7
  %v253 = vsub.s32 0, %v252
  %v254 = vrot.slane %v249, %v253
  %v256 = vmul.f32 %v247, %v254
  %v257 = vmul.f32 %v248, %v254
  %v258 = vld [vmem:[%s6] sm:$0x1]
  %v260 = vlaneseq
  %v261 = vshrl.u32 %v260, 7
  %v262 = vsub.s32 0, %v261
  %v263 = vrot.slane %v258, %v262
  %v265 = vadd.f32 %v256, %v263
  %v266 = vadd.f32 %v257, %v263
  %267 = vst.msk [vmem:[%s7] sm:$0xff] %vm39, %v265
  %268 = vst.msk [vmem:[%s7 + $0x8] sm:$0xff] %vm39, %v266
  // Predicated region
  $region30: #{transformer_forward.13} parent=0 // pred_check
    _
  $region31: #{transformer_forward.13} parent=0 // pred_check_branch
    %270 = sbr.rel (0) target = $region33
  $region32: #{transformer_forward.13} parent=0 // pred_region
    _
  $region33: #{transformer_forward.13} parent=0 // pred_fallthru
    _
  // Predicated region
  $region34: #{transformer_forward.13} parent=0 // pred_check
    _
  $region35: #{transformer_forward.13} parent=0 // pred_check_branch
    %272 = sbr.rel (0) target = $region37
  $region36: #{transformer_forward.13} parent=0 // pred_region
    _
  $region37: #{transformer_forward.13} parent=0 // pred_fallthru
    _

// kernel: transformer_forward.12
$region0: #{transformer_forward.12}
  #allocation0 [shape = 'u32[]', space=smem, size = 0x4, offset = 0x4, fixed_abs, tag = 'smem constant byte address 0x4 - core index']
  #allocation1 [shape = 'u32[144,128]{1,0:T(1,128)}', space=vmem, size = 0x12000, scoped, tag = 'internal scratch']
  #allocation2 [shape = 'f32[16,32]{1,0:T(8,128)}', space=vmem, size = 0x2000, scoped, tag = 'scratch operand']
  %s0 = inlined_call_operand.vmem [shape: f32[16,32], index: 0, kind: input, shape index: {}]
  %s1 = inlined_call_operand.vmem [shape: f32[2,8], index: 1, kind: input, shape index: {}]
  %s2 = inlined_call_operand.vmem [shape: f32[32,96], index: 2, kind: input, shape index: {}]
  %s3 = inlined_call_operand.vmem [shape: f32[1,96], index: 3, kind: input, shape index: {}]
  %s4 = inlined_call_operand.vmem [shape: f32[32,32], index: 4, kind: input, shape index: {}]
  %s5 = inlined_call_operand.vmem [shape: f32[1,32], index: 5, kind: input, shape index: {}]
  %s6 = inlined_call_operand.vmem [shape: f32[1,32], index: 6, kind: input, shape index: {}]
  %s7 = inlined_call_operand.vmem [shape: f32[1,32], index: 7, kind: input, shape index: {}]
  %s8 = inlined_call_operand.vmem [shape: f32[16,32], index: 8, kind: output, shape index: {}]
  %s9 = sld [smem:[#allocation0]]
  $region42: #{transformer_forward.12} parent=0
    _
  %s11 = ssub.s32 1, %s9
  %s12 = scalar_select 0, %s11, %s9
  // Predicated region
  $region2: #{transformer_forward.12} parent=0 // pred_check
    _
  $region3: #{transformer_forward.12} parent=0 // pred_check_branch
    %14 = sbr.rel (0) target = $region5
  $region4: #{transformer_forward.12} parent=0 // pred_region
    _
  $region5: #{transformer_forward.12} parent=0 // pred_fallthru
    _
  // Predicated region
  $region6: #{transformer_forward.12} parent=0 // pred_check
    _
  $region7: #{transformer_forward.12} parent=0 // pred_check_branch
    %16 = sbr.rel (0) target = $region9
  $region8: #{transformer_forward.12} parent=0 // pred_region
    _
  $region9: #{transformer_forward.12} parent=0 // pred_fallthru
    _
  // Predicated region
  $region10: #{transformer_forward.12} parent=0 // pred_check
    _
  $region11: #{transformer_forward.12} parent=0 // pred_check_branch
    %18 = sbr.rel (0) target = $region13
  $region12: #{transformer_forward.12} parent=0 // pred_region
    _
  $region13: #{transformer_forward.12} parent=0 // pred_fallthru
    _
  // Predicated region
  $region14: #{transformer_forward.12} parent=0 // pred_check
    _
  $region15: #{transformer_forward.12} parent=0 // pred_check_branch
    %20 = sbr.rel (0) target = $region17
  $region16: #{transformer_forward.12} parent=0 // pred_region
    _
  $region17: #{transformer_forward.12} parent=0 // pred_fallthru
    _
  // Predicated region
  $region18: #{transformer_forward.12} parent=0 // pred_check
    _
  $region19: #{transformer_forward.12} parent=0 // pred_check_branch
    %22 = sbr.rel (0) target = $region21
  $region20: #{transformer_forward.12} parent=0 // pred_region
    _
  $region21: #{transformer_forward.12} parent=0 // pred_fallthru
    _
  // Predicated region
  $region22: #{transformer_forward.12} parent=0 // pred_check
    _
  $region23: #{transformer_forward.12} parent=0 // pred_check_branch
    %24 = sbr.rel (0) target = $region25
  $region24: #{transformer_forward.12} parent=0 // pred_region
    _
  $region25: #{transformer_forward.12} parent=0 // pred_fallthru
    _
  // Predicated region
  $region26: #{transformer_forward.12} parent=0 // pred_check
    _
  $region27: #{transformer_forward.12} parent=0 // pred_check_branch
    %26 = sbr.rel (0) target = $region29
  $region28: #{transformer_forward.12} parent=0 // pred_region
    _
  $region29: #{transformer_forward.12} parent=0 // pred_fallthru
    _
  // Predicated region
  $region30: #{transformer_forward.12} parent=0 // pred_check
    _
  $region31: #{transformer_forward.12} parent=0 // pred_check_branch
    %28 = sbr.rel (0) target = $region33
  $region32: #{transformer_forward.12} parent=0 // pred_region
    _
  $region33: #{transformer_forward.12} parent=0 // pred_fallthru
    _
  %v29 = vld [vmem:[%s0] sm:$0xff]
  %v30 = vld [vmem:[%s0 + $0x8] sm:$0xff]
  %v31 = vld [vmem:[%s3] sm:$0x1]
  %v32 = vld [vmem:[%s2] sm:$0xff]
  %v33 = vld [vmem:[%s2 + $0x8] sm:$0xff]
  %v34 = vld [vmem:[%s2 + $0x10] sm:$0xff]
  %v35 = vld [vmem:[%s2 + $0x18] sm:$0xff]
  %v37 = vlaneseq
  %v38 = vshrl.u32 %v37, 7
  %v39 = vsub.s32 0, %v38
  %v40 = vrot.slane %v31, %v39
  %vm42 = vcmask 261120
  %v44 = vsel %vm42, %v29, 0
  %v47 = vsel %vm42, %v30, 0
  %49 = vmatprep.subr.mxu0 0.0
  %50 = vmatpush1.msra.mxu0 0.0
  %51 = vmatprep.subr.mxu0 0.0
  %52 = vmatpush1.msra.mxu0 0.0
  %53 = vmatprep.subr.mxu0 0.0
  %54 = vmatpush1.msra.mxu0 0.0
  %55 = vmatprep.subr.mxu0 0.0
  %56 = vmatpush1.msra.mxu0 0.0
  %57 = vmatprep.subr.mxu0 0.0
  %58 = vmatpush1.msra.mxu0 0.0
  %59 = vmatprep.subr.mxu0 0.0
  %60 = vmatpush1.msra.mxu0 0.0
  %61 = vmatprep.subr.mxu0 0.0
  %62 = vmatpush1.msra.mxu0 0.0
  %63 = vmatprep.subr.mxu0 0.0
  %64 = vmatpush1.msra.mxu0 0.0
  %65 = vmatprep.subr.mxu0 0.0
  %66 = vmatpush1.msra.mxu0 0.0
  %67 = vmatprep.subr.mxu0 0.0
  %68 = vmatpush1.msra.mxu0 0.0
  %69 = vmatprep.subr.mxu0 0.0
  %70 = vmatpush1.msra.mxu0 0.0
  %71 = vmatprep.subr.mxu0 0.0
  %72 = vmatpush1.msra.mxu0 0.0
  %73 = vmatprep.subr.mxu0 0.0
  %74 = vmatpush1.msra.mxu0 %v35
  %75 = vmatprep.subr.mxu0 0.0
  %76 = vmatpush1.msra.mxu0 %v34
  %77 = vmatprep.subr.mxu0 0.0
  %78 = vmatpush1.msra.mxu0 %v33
  %79 = vmatprep.subr.mxu0 0.0
  %80 = vmatpush1.msra.mxu0 %v32
  %81 = vmatprep.subr.mxu0 0.0
  %82 = vmatpush2.msra.mxu0 0.0
  %83 = vmatprep.subr.mxu0 0.0
  %84 = vmatpush2.msra.mxu0 0.0
  %85 = vmatprep.subr.mxu0 0.0
  %86 = vmatpush2.msra.mxu0 0.0
  %87 = vmatprep.subr.mxu0 0.0
  %88 = vmatpush2.msra.mxu0 0.0
  %89 = vmatprep.subr.mxu0 0.0
  %90 = vmatpush2.msra.mxu0 0.0
  %91 = vmatprep.subr.mxu0 0.0
  %92 = vmatpush2.msra.mxu0 0.0
  %93 = vmatprep.subr.mxu0 0.0
  %94 = vmatpush2.msra.mxu0 0.0
  %95 = vmatprep.subr.mxu0 0.0
  %96 = vmatpush2.msra.mxu0 0.0
  %97 = vmatprep.subr.mxu0 0.0
  %98 = vmatpush2.msra.mxu0 0.0
  %99 = vmatprep.subr.mxu0 0.0
  %100 = vmatpush2.msra.mxu0 0.0
  %101 = vmatprep.subr.mxu0 0.0
  %102 = vmatpush2.msra.mxu0 0.0
  %103 = vmatprep.subr.mxu0 0.0
  %104 = vmatpush2.msra.mxu0 0.0
  %105 = vmatprep.subr.mxu0 0.0
  %106 = vmatpush2.msra.mxu0 0.0
  %107 = vmatprep.subr.mxu0 0.0
  %108 = vmatpush2.msra.mxu0 0.0
  %109 = vmatprep.subr.mxu0 0.0
  %110 = vmatpush2.msra.mxu0 0.0
  %111 = vmatprep.subr.mxu0 0.0
  %112 = vmatpush2.msra.mxu0 0.0
  %113 = vmatprep.mubr.f32.mxu0 0.0
  %114 = vmatmul.mubr.f32.gmra.mxu0 %v44
  %v115 = vpop.f32.mrf.mxu0
  %v116 = vadd.f32 %v40, %v115
  %v117 = vpop.f32.mrf.mxu0
  %118 = vmatprep.mubr.f32.mxu0 0.0
  %119 = vmatmul.mubr.f32.gmra.mxu0 %v47
  %v120 = vpop.f32.mrf.mxu0
  %v121 = vadd.f32 %v40, %v120
  %v122 = vpop.f32.mrf.mxu0
  %123 = vdwg.mxu0
  %v124 = vld [vmem:[%s1] sm:$0x3]
  %v125 = vmul.f32 %v116, 0.35355338
  %v126 = vlaneseq
  %v127 = vshrl.u32 %v126, 7
  %v128 = vsub.s32 0, %v127
  %v129 = vrot.slane %v124, %v128
  %131 = vrot.lane.b32.xlu0 %v116, 96
  %v132 = vpop.permute.xlu0 %131
  %vm133 = vcmask 64512
  %v135 = vsel %vm133, %v125, 0
  %v137 = vsel %vm133, %v132, 0
  %139 = vmatprep.subr.mxu0 0.0
  %140 = vmatpush1.xpose.msra.mxu0 0.0
  %141 = vmatprep.subr.mxu0 0.0
  %142 = vmatpush1.xpose.msra.mxu0 0.0
  %143 = vmatprep.subr.mxu0 0.0
  %144 = vmatpush1.xpose.msra.mxu0 0.0
  %145 = vmatprep.subr.mxu0 0.0
  %146 = vmatpush1.xpose.msra.mxu0 0.0
  %147 = vmatprep.subr.mxu0 0.0
  %148 = vmatpush1.xpose.msra.mxu0 0.0
  %149 = vmatprep.subr.mxu0 0.0
  %150 = vmatpush1.xpose.msra.mxu0 0.0
  %151 = vmatprep.subr.mxu0 0.0
  %152 = vmatpush1.xpose.msra.mxu0 0.0
  %153 = vmatprep.subr.mxu0 0.0
  %154 = vmatpush1.xpose.msra.mxu0 0.0
  %155 = vmatprep.subr.mxu0 0.0
  %156 = vmatpush1.xpose.msra.mxu0 0.0
  %157 = vmatprep.subr.mxu0 0.0
  %158 = vmatpush1.xpose.msra.mxu0 0.0
  %159 = vmatprep.subr.mxu0 0.0
  %160 = vmatpush1.xpose.msra.mxu0 0.0
  %161 = vmatprep.subr.mxu0 0.0
  %162 = vmatpush1.xpose.msra.mxu0 0.0
  %163 = vmatprep.subr.mxu0 0.0
  %164 = vmatpush1.xpose.msra.mxu0 0.0
  %165 = vmatprep.subr.mxu0 0.0
  %166 = vmatpush1.xpose.msra.mxu0 0.0
  %167 = vmatprep.subr.mxu0 0.0
  %168 = vmatpush1.xpose.msra.mxu0 0.0
  %169 = vmatprep.subr.mxu0 0.0
  %170 = vmatpush1.xpose.msra.mxu0 %v137
  %171 = vmatprep.subr.mxu0 0.0
  %172 = vmatpush2.xpose.msra.mxu0 0.0
  %173 = vmatprep.subr.mxu0 0.0
  %174 = vmatpush2.xpose.msra.mxu0 0.0
  %175 = vmatprep.subr.mxu0 0.0
  %176 = vmatpush2.xpose.msra.mxu0 0.0
  %177 = vmatprep.subr.mxu0 0.0
  %178 = vmatpush2.xpose.msra.mxu0 0.0
  %179 = vmatprep.subr.mxu0 0.0
  %180 = vmatpush2.xpose.msra.mxu0 0.0
  %181 = vmatprep.subr.mxu0 0.0
  %182 = vmatpush2.xpose.msra.mxu0 0.0
  %183 = vmatprep.subr.mxu0 0.0
  %184 = vmatpush2.xpose.msra.mxu0 0.0
  %185 = vmatprep.subr.mxu0 0.0
  %186 = vmatpush2.xpose.msra.mxu0 0.0
  %187 = vmatprep.subr.mxu0 0.0
  %188 = vmatpush2.xpose.msra.mxu0 0.0
  %189 = vmatprep.subr.mxu0 0.0
  %190 = vmatpush2.xpose.msra.mxu0 0.0
  %191 = vmatprep.subr.mxu0 0.0
  %192 = vmatpush2.xpose.msra.mxu0 0.0
  %193 = vmatprep.subr.mxu0 0.0
  %194 = vmatpush2.xpose.msra.mxu0 0.0
  %195 = vmatprep.subr.mxu0 0.0
  %196 = vmatpush2.xpose.msra.mxu0 0.0
  %197 = vmatprep.subr.mxu0 0.0
  %198 = vmatpush2.xpose.msra.mxu0 0.0
  %199 = vmatprep.subr.mxu0 0.0
  %200 = vmatpush2.xpose.msra.mxu0 0.0
  %201 = vmatprep.subr.mxu0 0.0
  %202 = vmatpush2.xpose.msra.mxu0 0.0
  %203 = vmatprep.mubr.f32.mxu0 0.0
  %204 = vmatmul.mubr.f32.gmra.mxu0 %v135
  %v205 = vpop.f32.mrf.mxu0
  %v206 = vadd.f32 %v129, %v205
  %v207 = vpop.f32.mrf.mxu0
  %208 = vdwg.mxu0
  %v209 = vsel %vm133, %v206, -inf
  %210 = vmax.xlane.f32.xlu0 %v209
  %v211 = vpop.xlane.xlu0 %210
  %v212 = vsub.f32 %v206, %v211
  %v213 = vmul.f32 %v212, 1.442695
  %v214 = vpow.pop %v213
  %v215 = vsel %vm133, %v214, 0.0
  %216 = vadd.xlane.f32.xlu0 %v215
  %v217 = vpop.xlane.xlu0 %216
  %218 = vrot.lane.b32.xlu0 %v116, 64
  %v219 = vpop.permute.xlu0 %218
  %v222 = vsel %vm133, %v214, 0
  %224 = vmatprep.subr.mxu0 0.0
  %225 = vmatpush1.msra.mxu0 0.0
  %226 = vmatprep.subr.mxu0 0.0
  %227 = vmatpush1.msra.mxu0 0.0
  %228 = vmatprep.subr.mxu0 0.0
  %229 = vmatpush1.msra.mxu0 0.0
  %230 = vmatprep.subr.mxu0 0.0
  %231 = vmatpush1.msra.mxu0 0.0
  %232 = vmatprep.subr.mxu0 0.0
  %233 = vmatpush1.msra.mxu0 0.0
  %234 = vmatprep.subr.mxu0 0.0
  %235 = vmatpush1.msra.mxu0 0.0
  %236 = vmatprep.subr.mxu0 0.0
  %237 = vmatpush1.msra.mxu0 0.0
  %238 = vmatprep.subr.mxu0 0.0
  %239 = vmatpush1.msra.mxu0 0.0
  %240 = vmatprep.subr.mxu0 0.0
  %241 = vmatpush1.msra.mxu0 0.0
  %242 = vmatprep.subr.mxu0 0.0
  %243 = vmatpush1.msra.mxu0 0.0
  %244 = vmatprep.subr.mxu0 0.0
  %245 = vmatpush1.msra.mxu0 0.0
  %246 = vmatprep.subr.mxu0 0.0
  %247 = vmatpush1.msra.mxu0 0.0
  %248 = vmatprep.subr.mxu0 0.0
  %249 = vmatpush1.msra.mxu0 0.0
  %250 = vmatprep.subr.mxu0 0.0
  %251 = vmatpush1.msra.mxu0 0.0
  %252 = vmatprep.subr.mxu0 0.0
  %253 = vmatpush1.msra.mxu0 0.0
  %254 = vmatprep.subr.mxu0 0.0
  %255 = vmatpush1.msra.mxu0 %v219
  %256 = vmatprep.subr.mxu0 0.0
  %257 = vmatpush2.msra.mxu0 0.0
  %258 = vmatprep.subr.mxu0 0.0
  %259 = vmatpush2.msra.mxu0 0.0
  %260 = vmatprep.subr.mxu0 0.0
  %261 = vmatpush2.msra.mxu0 0.0
  %262 = vmatprep.subr.mxu0 0.0
  %263 = vmatpush2.msra.mxu0 0.0
  %264 = vmatprep.subr.mxu0 0.0
  %265 = vmatpush2.msra.mxu0 0.0
  %266 = vmatprep.subr.mxu0 0.0
  %267 = vmatpush2.msra.mxu0 0.0
  %268 = vmatprep.subr.mxu0 0.0
  %269 = vmatpush2.msra.mxu0 0.0
  %270 = vmatprep.subr.mxu0 0.0
  %271 = vmatpush2.msra.mxu0 0.0
  %272 = vmatprep.subr.mxu0 0.0
  %273 = vmatpush2.msra.mxu0 0.0
  %274 = vmatprep.subr.mxu0 0.0
  %275 = vmatpush2.msra.mxu0 0.0
  %276 = vmatprep.subr.mxu0 0.0
  %277 = vmatpush2.msra.mxu0 0.0
  %278 = vmatprep.subr.mxu0 0.0
  %279 = vmatpush2.msra.mxu0 0.0
  %280 = vmatprep.subr.mxu0 0.0
  %281 = vmatpush2.msra.mxu0 0.0
  %282 = vmatprep.subr.mxu0 0.0
  %283 = vmatpush2.msra.mxu0 0.0
  %284 = vmatprep.subr.mxu0 0.0
  %285 = vmatpush2.msra.mxu0 0.0
  %286 = vmatprep.subr.mxu0 0.0
  %287 = vmatpush2.msra.mxu0 0.0
  %288 = vmatprep.mubr.f32.mxu0 0.0
  %289 = vmatmul.mubr.f32.gmra.mxu0 %v222
  %v290 = vpop.f32.mrf.mxu0
  %v291 = vadd.f32 0.0, %v290
  %v292 = vpop.f32.mrf.mxu0
  %293 = vdwg.mxu0
  %v294 = vrcp.pop %v217
  %v295 = vmul.f32 %v291, %v294
  %296 = vst.msk [vmem:[#allocation2] sm:$0xff] %vm133, %v295
  %297 = vrot.lane.b32.xlu0 %v125, 120
  %v298 = vpop.permute.xlu0 %297
  %299 = vrot.lane.b32.xlu0 %v116, 88
  %v300 = vpop.permute.xlu0 %299
  %v301 = vsel %vm133, %v298, 0
  %v303 = vsel %vm133, %v300, 0
  %305 = vmatprep.subr.mxu0 0.0
  %306 = vmatpush1.xpose.msra.mxu0 0.0
  %307 = vmatprep.subr.mxu0 0.0
  %308 = vmatpush1.xpose.msra.mxu0 0.0
  %309 = vmatprep.subr.mxu0 0.0
  %310 = vmatpush1.xpose.msra.mxu0 0.0
  %311 = vmatprep.subr.mxu0 0.0
  %312 = vmatpush1.xpose.msra.mxu0 0.0
  %313 = vmatprep.subr.mxu0 0.0
  %314 = vmatpush1.xpose.msra.mxu0 0.0
  %315 = vmatprep.subr.mxu0 0.0
  %316 = vmatpush1.xpose.msra.mxu0 0.0
  %317 = vmatprep.subr.mxu0 0.0
  %318 = vmatpush1.xpose.msra.mxu0 0.0
  %319 = vmatprep.subr.mxu0 0.0
  %320 = vmatpush1.xpose.msra.mxu0 0.0
  %321 = vmatprep.subr.mxu0 0.0
  %322 = vmatpush1.xpose.msra.mxu0 0.0
  %323 = vmatprep.subr.mxu0 0.0
  %324 = vmatpush1.xpose.msra.mxu0 0.0
  %325 = vmatprep.subr.mxu0 0.0
  %326 = vmatpush1.xpose.msra.mxu0 0.0
  %327 = vmatprep.subr.mxu0 0.0
  %328 = vmatpush1.xpose.msra.mxu0 0.0
  %329 = vmatprep.subr.mxu0 0.0
  %330 = vmatpush1.xpose.msra.mxu0 0.0
  %331 = vmatprep.subr.mxu0 0.0
  %332 = vmatpush1.xpose.msra.mxu0 0.0
  %333 = vmatprep.subr.mxu0 0.0
  %334 = vmatpush1.xpose.msra.mxu0 0.0
  %335 = vmatprep.subr.mxu0 0.0
  %336 = vmatpush1.xpose.msra.mxu0 %v303
  %337 = vmatprep.subr.mxu0 0.0
  %338 = vmatpush2.xpose.msra.mxu0 0.0
  %339 = vmatprep.subr.mxu0 0.0
  %340 = vmatpush2.xpose.msra.mxu0 0.0
  %341 = vmatprep.subr.mxu0 0.0
  %342 = vmatpush2.xpose.msra.mxu0 0.0
  %343 = vmatprep.subr.mxu0 0.0
  %344 = vmatpush2.xpose.msra.mxu0 0.0
  %345 = vmatprep.subr.mxu0 0.0
  %346 = vmatpush2.xpose.msra.mxu0 0.0
  %347 = vmatprep.subr.mxu0 0.0
  %348 = vmatpush2.xpose.msra.mxu0 0.0
  %349 = vmatprep.subr.mxu0 0.0
  %350 = vmatpush2.xpose.msra.mxu0 0.0
  %351 = vmatprep.subr.mxu0 0.0
  %352 = vmatpush2.xpose.msra.mxu0 0.0
  %353 = vmatprep.subr.mxu0 0.0
  %354 = vmatpush2.xpose.msra.mxu0 0.0
  %355 = vmatprep.subr.mxu0 0.0
  %356 = vmatpush2.xpose.msra.mxu0 0.0
  %357 = vmatprep.subr.mxu0 0.0
  %358 = vmatpush2.xpose.msra.mxu0 0.0
  %359 = vmatprep.subr.mxu0 0.0
  %360 = vmatpush2.xpose.msra.mxu0 0.0
  %361 = vmatprep.subr.mxu0 0.0
  %362 = vmatpush2.xpose.msra.mxu0 0.0
  %363 = vmatprep.subr.mxu0 0.0
  %364 = vmatpush2.xpose.msra.mxu0 0.0
  %365 = vmatprep.subr.mxu0 0.0
  %366 = vmatpush2.xpose.msra.mxu0 0.0
  %367 = vmatprep.subr.mxu0 0.0
  %368 = vmatpush2.xpose.msra.mxu0 0.0
  %369 = vmatprep.mubr.f32.mxu0 0.0
  %370 = vmatmul.mubr.f32.gmra.mxu0 %v301
  %v371 = vpop.f32.mrf.mxu0
  %v372 = vadd.f32 %v129, %v371
  %v373 = vpop.f32.mrf.mxu0
  %374 = vdwg.mxu0
  %v375 = vsel %vm133, %v372, -inf
  %376 = vmax.xlane.f32.xlu0 %v375
  %v377 = vpop.xlane.xlu0 %376
  %v378 = vsub.f32 %v372, %v377
  %v379 = vmul.f32 %v378, 1.442695
  %v380 = vpow.pop %v379
  %v381 = vsel %vm133, %v380, 0.0
  %382 = vadd.xlane.f32.xlu0 %v381
  %v383 = vpop.xlane.xlu0 %382
  %384 = vrot.lane.b32.xlu0 %v116, 56
  %v385 = vpop.permute.xlu0 %384
  %v388 = vsel %vm133, %v380, 0
  %390 = vmatprep.subr.mxu0 0.0
  %391 = vmatpush1.msra.mxu0 0.0
  %392 = vmatprep.subr.mxu0 0.0
  %393 = vmatpush1.msra.mxu0 0.0
  %394 = vmatprep.subr.mxu0 0.0
  %395 = vmatpush1.msra.mxu0 0.0
  %396 = vmatprep.subr.mxu0 0.0
  %397 = vmatpush1.msra.mxu0 0.0
  %398 = vmatprep.subr.mxu0 0.0
  %399 = vmatpush1.msra.mxu0 0.0
  %400 = vmatprep.subr.mxu0 0.0
  %401 = vmatpush1.msra.mxu0 0.0
  %402 = vmatprep.subr.mxu0 0.0
  %403 = vmatpush1.msra.mxu0 0.0
  %404 = vmatprep.subr.mxu0 0.0
  %405 = vmatpush1.msra.mxu0 0.0
  %406 = vmatprep.subr.mxu0 0.0
  %407 = vmatpush1.msra.mxu0 0.0
  %408 = vmatprep.subr.mxu0 0.0
  %409 = vmatpush1.msra.mxu0 0.0
  %410 = vmatprep.subr.mxu0 0.0
  %411 = vmatpush1.msra.mxu0 0.0
  %412 = vmatprep.subr.mxu0 0.0
  %413 = vmatpush1.msra.mxu0 0.0
  %414 = vmatprep.subr.mxu0 0.0
  %415 = vmatpush1.msra.mxu0 0.0
  %416 = vmatprep.subr.mxu0 0.0
  %417 = vmatpush1.msra.mxu0 0.0
  %418 = vmatprep.subr.mxu0 0.0
  %419 = vmatpush1.msra.mxu0 0.0
  %420 = vmatprep.subr.mxu0 0.0
  %421 = vmatpush1.msra.mxu0 %v385
  %422 = vmatprep.subr.mxu0 0.0
  %423 = vmatpush2.msra.mxu0 0.0
  %424 = vmatprep.subr.mxu0 0.0
  %425 = vmatpush2.msra.mxu0 0.0
  %426 = vmatprep.subr.mxu0 0.0
  %427 = vmatpush2.msra.mxu0 0.0
  %428 = vmatprep.subr.mxu0 0.0
  %429 = vmatpush2.msra.mxu0 0.0
  %430 = vmatprep.subr.mxu0 0.0
  %431 = vmatpush2.msra.mxu0 0.0
  %432 = vmatprep.subr.mxu0 0.0
  %433 = vmatpush2.msra.mxu0 0.0
  %434 = vmatprep.subr.mxu0 0.0
  %435 = vmatpush2.msra.mxu0 0.0
  %436 = vmatprep.subr.mxu0 0.0
  %437 = vmatpush2.msra.mxu0 0.0
  %438 = vmatprep.subr.mxu0 0.0
  %439 = vmatpush2.msra.mxu0 0.0
  %440 = vmatprep.subr.mxu0 0.0
  %441 = vmatpush2.msra.mxu0 0.0
  %442 = vmatprep.subr.mxu0 0.0
  %443 = vmatpush2.msra.mxu0 0.0
  %444 = vmatprep.subr.mxu0 0.0
  %445 = vmatpush2.msra.mxu0 0.0
  %446 = vmatprep.subr.mxu0 0.0
  %447 = vmatpush2.msra.mxu0 0.0
  %448 = vmatprep.subr.mxu0 0.0
  %449 = vmatpush2.msra.mxu0 0.0
  %450 = vmatprep.subr.mxu0 0.0
  %451 = vmatpush2.msra.mxu0 0.0
  %452 = vmatprep.subr.mxu0 0.0
  %453 = vmatpush2.msra.mxu0 0.0
  %454 = vmatprep.mubr.f32.mxu0 0.0
  %455 = vmatmul.mubr.f32.gmra.mxu0 %v388
  %v456 = vpop.f32.mrf.mxu0
  %v457 = vadd.f32 0.0, %v456
  %v458 = vpop.f32.mrf.mxu0
  %459 = vdwg.mxu0
  %v460 = vrcp.pop %v383
  %v461 = vmul.f32 %v457, %v460
  %463 = vrot.lane.b32.xlu0 %v461, 8
  %v464 = vpop.permute.xlu0 %463
  %vm466 = vcmask 130112
  %467 = vst.msk [vmem:[#allocation2] sm:$0xff] %vm466, %v464
  %468 = vrot.lane.b32.xlu0 %v125, 112
  %v469 = vpop.permute.xlu0 %468
  %470 = vrot.lane.b32.xlu0 %v116, 80
  %v471 = vpop.permute.xlu0 %470
  %v472 = vsel %vm133, %v469, 0
  %v474 = vsel %vm133, %v471, 0
  %476 = vmatprep.subr.mxu0 0.0
  %477 = vmatpush1.xpose.msra.mxu0 0.0
  %478 = vmatprep.subr.mxu0 0.0
  %479 = vmatpush1.xpose.msra.mxu0 0.0
  %480 = vmatprep.subr.mxu0 0.0
  %481 = vmatpush1.xpose.msra.mxu0 0.0
  %482 = vmatprep.subr.mxu0 0.0
  %483 = vmatpush1.xpose.msra.mxu0 0.0
  %484 = vmatprep.subr.mxu0 0.0
  %485 = vmatpush1.xpose.msra.mxu0 0.0
  %486 = vmatprep.subr.mxu0 0.0
  %487 = vmatpush1.xpose.msra.mxu0 0.0
  %488 = vmatprep.subr.mxu0 0.0
  %489 = vmatpush1.xpose.msra.mxu0 0.0
  %490 = vmatprep.subr.mxu0 0.0
  %491 = vmatpush1.xpose.msra.mxu0 0.0
  %492 = vmatprep.subr.mxu0 0.0
  %493 = vmatpush1.xpose.msra.mxu0 0.0
  %494 = vmatprep.subr.mxu0 0.0
  %495 = vmatpush1.xpose.msra.mxu0 0.0
  %496 = vmatprep.subr.mxu0 0.0
  %497 = vmatpush1.xpose.msra.mxu0 0.0
  %498 = vmatprep.subr.mxu0 0.0
  %499 = vmatpush1.xpose.msra.mxu0 0.0
  %500 = vmatprep.subr.mxu0 0.0
  %501 = vmatpush1.xpose.msra.mxu0 0.0
  %502 = vmatprep.subr.mxu0 0.0
  %503 = vmatpush1.xpose.msra.mxu0 0.0
  %504 = vmatprep.subr.mxu0 0.0
  %505 = vmatpush1.xpose.msra.mxu0 0.0
  %506 = vmatprep.subr.mxu0 0.0
  %507 = vmatpush1.xpose.msra.mxu0 %v474
  %508 = vmatprep.subr.mxu0 0.0
  %509 = vmatpush2.xpose.msra.mxu0 0.0
  %510 = vmatprep.subr.mxu0 0.0
  %511 = vmatpush2.xpose.msra.mxu0 0.0
  %512 = vmatprep.subr.mxu0 0.0
  %513 = vmatpush2.xpose.msra.mxu0 0.0
  %514 = vmatprep.subr.mxu0 0.0
  %515 = vmatpush2.xpose.msra.mxu0 0.0
  %516 = vmatprep.subr.mxu0 0.0
  %517 = vmatpush2.xpose.msra.mxu0 0.0
  %518 = vmatprep.subr.mxu0 0.0
  %519 = vmatpush2.xpose.msra.mxu0 0.0
  %520 = vmatprep.subr.mxu0 0.0
  %521 = vmatpush2.xpose.msra.mxu0 0.0
  %522 = vmatprep.subr.mxu0 0.0
  %523 = vmatpush2.xpose.msra.mxu0 0.0
  %524 = vmatprep.subr.mxu0 0.0
  %525 = vmatpush2.xpose.msra.mxu0 0.0
  %526 = vmatprep.subr.mxu0 0.0
  %527 = vmatpush2.xpose.msra.mxu0 0.0
  %528 = vmatprep.subr.mxu0 0.0
  %529 = vmatpush2.xpose.msra.mxu0 0.0
  %530 = vmatprep.subr.mxu0 0.0
  %531 = vmatpush2.xpose.msra.mxu0 0.0
  %532 = vmatprep.subr.mxu0 0.0
  %533 = vmatpush2.xpose.msra.mxu0 0.0
  %534 = vmatprep.subr.mxu0 0.0
  %535 = vmatpush2.xpose.msra.mxu0 0.0
  %536 = vmatprep.subr.mxu0 0.0
  %537 = vmatpush2.xpose.msra.mxu0 0.0
  %538 = vmatprep.subr.mxu0 0.0
  %539 = vmatpush2.xpose.msra.mxu0 0.0
  %540 = vmatprep.mubr.f32.mxu0 0.0
  %541 = vmatmul.mubr.f32.gmra.mxu0 %v472
  %v542 = vpop.f32.mrf.mxu0
  %v543 = vadd.f32 %v129, %v542
  %v544 = vpop.f32.mrf.mxu0
  %545 = vdwg.mxu0
  %v546 = vsel %vm133, %v543, -inf
  %547 = vmax.xlane.f32.xlu0 %v546
  %v548 = vpop.xlane.xlu0 %547
  %v549 = vsub.f32 %v543, %v548
  %v550 = vmul.f32 %v549, 1.442695
  %v551 = vpow.pop %v550
  %v552 = vsel %vm133, %v551, 0.0
  %553 = vadd.xlane.f32.xlu0 %v552
  %v554 = vpop.xlane.xlu0 %553
  %555 = vrot.lane.b32.xlu0 %v116, 48
  %v556 = vpop.permute.xlu0 %555
  %v559 = vsel %vm133, %v551, 0
  %561 = vmatprep.subr.mxu0 0.0
  %562 = vmatpush1.msra.mxu0 0.0
  %563 = vmatprep.subr.mxu0 0.0
  %564 = vmatpush1.msra.mxu0 0.0
  %565 = vmatprep.subr.mxu0 0.0
  %566 = vmatpush1.msra.mxu0 0.0
  %567 = vmatprep.subr.mxu0 0.0
  %568 = vmatpush1.msra.mxu0 0.0
  %569 = vmatprep.subr.mxu0 0.0
  %570 = vmatpush1.msra.mxu0 0.0
  %571 = vmatprep.subr.mxu0 0.0
  %572 = vmatpush1.msra.mxu0 0.0
  %573 = vmatprep.subr.mxu0 0.0
  %574 = vmatpush1.msra.mxu0 0.0
  %575 = vmatprep.subr.mxu0 0.0
  %576 = vmatpush1.msra.mxu0 0.0
  %577 = vmatprep.subr.mxu0 0.0
  %578 = vmatpush1.msra.mxu0 0.0
  %579 = vmatprep.subr.mxu0 0.0
  %580 = vmatpush1.msra.mxu0 0.0
  %581 = vmatprep.subr.mxu0 0.0
  %582 = vmatpush1.msra.mxu0 0.0
  %583 = vmatprep.subr.mxu0 0.0
  %584 = vmatpush1.msra.mxu0 0.0
  %585 = vmatprep.subr.mxu0 0.0
  %586 = vmatpush1.msra.mxu0 0.0
  %587 = vmatprep.subr.mxu0 0.0
  %588 = vmatpush1.msra.mxu0 0.0
  %589 = vmatprep.subr.mxu0 0.0
  %590 = vmatpush1.msra.mxu0 0.0
  %591 = vmatprep.subr.mxu0 0.0
  %592 = vmatpush1.msra.mxu0 %v556
  %593 = vmatprep.subr.mxu0 0.0
  %594 = vmatpush2.msra.mxu0 0.0
  %595 = vmatprep.subr.mxu0 0.0
  %596 = vmatpush2.msra.mxu0 0.0
  %597 = vmatprep.subr.mxu0 0.0
  %598 = vmatpush2.msra.mxu0 0.0
  %599 = vmatprep.subr.mxu0 0.0
  %600 = vmatpush2.msra.mxu0 0.0
  %601 = vmatprep.subr.mxu0 0.0
  %602 = vmatpush2.msra.mxu0 0.0
  %603 = vmatprep.subr.mxu0 0.0
  %604 = vmatpush2.msra.mxu0 0.0
  %605 = vmatprep.subr.mxu0 0.0
  %606 = vmatpush2.msra.mxu0 0.0
  %607 = vmatprep.subr.mxu0 0.0
  %608 = vmatpush2.msra.mxu0 0.0
  %609 = vmatprep.subr.mxu0 0.0
  %610 = vmatpush2.msra.mxu0 0.0
  %611 = vmatprep.subr.mxu0 0.0
  %612 = vmatpush2.msra.mxu0 0.0
  %613 = vmatprep.subr.mxu0 0.0
  %614 = vmatpush2.msra.mxu0 0.0
  %615 = vmatprep.subr.mxu0 0.0
  %616 = vmatpush2.msra.mxu0 0.0
  %617 = vmatprep.subr.mxu0 0.0
  %618 = vmatpush2.msra.mxu0 0.0
  %619 = vmatprep.subr.mxu0 0.0
  %620 = vmatpush2.msra.mxu0 0.0
  %621 = vmatprep.subr.mxu0 0.0
  %622 = vmatpush2.msra.mxu0 0.0
  %623 = vmatprep.subr.mxu0 0.0
  %624 = vmatpush2.msra.mxu0 0.0
  %625 = vmatprep.mubr.f32.mxu0 0.0
  %626 = vmatmul.mubr.f32.gmra.mxu0 %v559
  %v627 = vpop.f32.mrf.mxu0
  %v628 = vadd.f32 0.0, %v627
  %v629 = vpop.f32.mrf.mxu0
  %630 = vdwg.mxu0
  %v631 = vrcp.pop %v554
  %v632 = vmul.f32 %v628, %v631
  %634 = vrot.lane.b32.xlu0 %v632, 16
  %v635 = vpop.permute.xlu0 %634
  %vm637 = vcmask 195712
  %638 = vst.msk [vmem:[#allocation2] sm:$0xff] %vm637, %v635
  %639 = vrot.lane.b32.xlu0 %v125, 104
  %v640 = vpop.permute.xlu0 %639
  %641 = vrot.lane.b32.xlu0 %v116, 72
  %v642 = vpop.permute.xlu0 %641
  %v643 = vsel %vm133, %v640, 0
  %v645 = vsel %vm133, %v642, 0
  %647 = vmatprep.subr.mxu0 0.0
  %648 = vmatpush1.xpose.msra.mxu0 0.0
  %649 = vmatprep.subr.mxu0 0.0
  %650 = vmatpush1.xpose.msra.mxu0 0.0
  %651 = vmatprep.subr.mxu0 0.0
  %652 = vmatpush1.xpose.msra.mxu0 0.0
  %653 = vmatprep.subr.mxu0 0.0
  %654 = vmatpush1.xpose.msra.mxu0 0.0
  %655 = vmatprep.subr.mxu0 0.0
  %656 = vmatpush1.xpose.msra.mxu0 0.0
  %657 = vmatprep.subr.mxu0 0.0
  %658 = vmatpush1.xpose.msra.mxu0 0.0
  %659 = vmatprep.subr.mxu0 0.0
  %660 = vmatpush1.xpose.msra.mxu0 0.0
  %661 = vmatprep.subr.mxu0 0.0
  %662 = vmatpush1.xpose.msra.mxu0 0.0
  %663 = vmatprep.subr.mxu0 0.0
  %664 = vmatpush1.xpose.msra.mxu0 0.0
  %665 = vmatprep.subr.mxu0 0.0
  %666 = vmatpush1.xpose.msra.mxu0 0.0
  %667 = vmatprep.subr.mxu0 0.0
  %668 = vmatpush1.xpose.msra.mxu0 0.0
  %669 = vmatprep.subr.mxu0 0.0
  %670 = vmatpush1.xpose.msra.mxu0 0.0
  %671 = vmatprep.subr.mxu0 0.0
  %672 = vmatpush1.xpose.msra.mxu0 0.0
  %673 = vmatprep.subr.mxu0 0.0
  %674 = vmatpush1.xpose.msra.mxu0 0.0
  %675 = vmatprep.subr.mxu0 0.0
  %676 = vmatpush1.xpose.msra.mxu0 0.0
  %677 = vmatprep.subr.mxu0 0.0
  %678 = vmatpush1.xpose.msra.mxu0 %v645
  %679 = vmatprep.subr.mxu0 0.0
  %680 = vmatpush2.xpose.msra.mxu0 0.0
  %681 = vmatprep.subr.mxu0 0.0
  %682 = vmatpush2.xpose.msra.mxu0 0.0
  %683 = vmatprep.subr.mxu0 0.0
  %684 = vmatpush2.xpose.msra.mxu0 0.0
  %685 = vmatprep.subr.mxu0 0.0
  %686 = vmatpush2.xpose.msra.mxu0 0.0
  %687 = vmatprep.subr.mxu0 0.0
  %688 = vmatpush2.xpose.msra.mxu0 0.0
  %689 = vmatprep.subr.mxu0 0.0
  %690 = vmatpush2.xpose.msra.mxu0 0.0
  %691 = vmatprep.subr.mxu0 0.0
  %692 = vmatpush2.xpose.msra.mxu0 0.0
  %693 = vmatprep.subr.mxu0 0.0
  %694 = vmatpush2.xpose.msra.mxu0 0.0
  %695 = vmatprep.subr.mxu0 0.0
  %696 = vmatpush2.xpose.msra.mxu0 0.0
  %697 = vmatprep.subr.mxu0 0.0
  %698 = vmatpush2.xpose.msra.mxu0 0.0
  %699 = vmatprep.subr.mxu0 0.0
  %700 = vmatpush2.xpose.msra.mxu0 0.0
  %701 = vmatprep.subr.mxu0 0.0
  %702 = vmatpush2.xpose.msra.mxu0 0.0
  %703 = vmatprep.subr.mxu0 0.0
  %704 = vmatpush2.xpose.msra.mxu0 0.0
  %705 = vmatprep.subr.mxu0 0.0
  %706 = vmatpush2.xpose.msra.mxu0 0.0
  %707 = vmatprep.subr.mxu0 0.0
  %708 = vmatpush2.xpose.msra.mxu0 0.0
  %709 = vmatprep.subr.mxu0 0.0
  %710 = vmatpush2.xpose.msra.mxu0 0.0
  %711 = vmatprep.mubr.f32.mxu0 0.0
  %712 = vmatmul.mubr.f32.gmra.mxu0 %v643
  %v713 = vpop.f32.mrf.mxu0
  %v714 = vadd.f32 %v129, %v713
  %v715 = vpop.f32.mrf.mxu0
  %716 = vdwg.mxu0
  %v717 = vsel %vm133, %v714, -inf
  %718 = vmax.xlane.f32.xlu0 %v717
  %v719 = vpop.xlane.xlu0 %718
  %v720 = vsub.f32 %v714, %v719
  %v721 = vmul.f32 %v720, 1.442695
  %v722 = vpow.pop %v721
  %v723 = vsel %vm133, %v722, 0.0
  %724 = vadd.xlane.f32.xlu0 %v723
  %v725 = vpop.xlane.xlu0 %724
  %726 = vrot.lane.b32.xlu0 %v116, 40
  %v727 = vpop.permute.xlu0 %726
  %v730 = vsel %vm133, %v722, 0
  %732 = vmatprep.subr.mxu0 0.0
  %733 = vmatpush1.msra.mxu0 0.0
  %734 = vmatprep.subr.mxu0 0.0
  %735 = vmatpush1.msra.mxu0 0.0
  %736 = vmatprep.subr.mxu0 0.0
  %737 = vmatpush1.msra.mxu0 0.0
  %738 = vmatprep.subr.mxu0 0.0
  %739 = vmatpush1.msra.mxu0 0.0
  %740 = vmatprep.subr.mxu0 0.0
  %741 = vmatpush1.msra.mxu0 0.0
  %742 = vmatprep.subr.mxu0 0.0
  %743 = vmatpush1.msra.mxu0 0.0
  %744 = vmatprep.subr.mxu0 0.0
  %745 = vmatpush1.msra.mxu0 0.0
  %746 = vmatprep.subr.mxu0 0.0
  %747 = vmatpush1.msra.mxu0 0.0
  %748 = vmatprep.subr.mxu0 0.0
  %749 = vmatpush1.msra.mxu0 0.0
  %750 = vmatprep.subr.mxu0 0.0
  %751 = vmatpush1.msra.mxu0 0.0
  %752 = vmatprep.subr.mxu0 0.0
  %753 = vmatpush1.msra.mxu0 0.0
  %754 = vmatprep.subr.mxu0 0.0
  %755 = vmatpush1.msra.mxu0 0.0
  %756 = vmatprep.subr.mxu0 0.0
  %757 = vmatpush1.msra.mxu0 0.0
  %758 = vmatprep.subr.mxu0 0.0
  %759 = vmatpush1.msra.mxu0 0.0
  %760 = vmatprep.subr.mxu0 0.0
  %761 = vmatpush1.msra.mxu0 0.0
  %762 = vmatprep.subr.mxu0 0.0
  %763 = vmatpush1.msra.mxu0 %v727
  %764 = vmatprep.subr.mxu0 0.0
  %765 = vmatpush2.msra.mxu0 0.0
  %766 = vmatprep.subr.mxu0 0.0
  %767 = vmatpush2.msra.mxu0 0.0
  %768 = vmatprep.subr.mxu0 0.0
  %769 = vmatpush2.msra.mxu0 0.0
  %770 = vmatprep.subr.mxu0 0.0
  %771 = vmatpush2.msra.mxu0 0.0
  %772 = vmatprep.subr.mxu0 0.0
  %773 = vmatpush2.msra.mxu0 0.0
  %774 = vmatprep.subr.mxu0 0.0
  %775 = vmatpush2.msra.mxu0 0.0
  %776 = vmatprep.subr.mxu0 0.0
  %777 = vmatpush2.msra.mxu0 0.0
  %778 = vmatprep.subr.mxu0 0.0
  %779 = vmatpush2.msra.mxu0 0.0
  %780 = vmatprep.subr.mxu0 0.0
  %781 = vmatpush2.msra.mxu0 0.0
  %782 = vmatprep.subr.mxu0 0.0
  %783 = vmatpush2.msra.mxu0 0.0
  %784 = vmatprep.subr.mxu0 0.0
  %785 = vmatpush2.msra.mxu0 0.0
  %786 = vmatprep.subr.mxu0 0.0
  %787 = vmatpush2.msra.mxu0 0.0
  %788 = vmatprep.subr.mxu0 0.0
  %789 = vmatpush2.msra.mxu0 0.0
  %790 = vmatprep.subr.mxu0 0.0
  %791 = vmatpush2.msra.mxu0 0.0
  %792 = vmatprep.subr.mxu0 0.0
  %793 = vmatpush2.msra.mxu0 0.0
  %794 = vmatprep.subr.mxu0 0.0
  %795 = vmatpush2.msra.mxu0 0.0
  %796 = vmatprep.mubr.f32.mxu0 0.0
  %797 = vmatmul.mubr.f32.gmra.mxu0 %v730
  %v798 = vpop.f32.mrf.mxu0
  %v799 = vadd.f32 0.0, %v798
  %v800 = vpop.f32.mrf.mxu0
  %801 = vdwg.mxu0
  %v802 = vrcp.pop %v725
  %v803 = vmul.f32 %v799, %v802
  %805 = vrot.lane.b32.xlu0 %v803, 24
  %v806 = vpop.permute.xlu0 %805
  %vm808 = vcmask 261312
  %809 = vst.msk [vmem:[#allocation2] sm:$0xff] %vm808, %v806
  %v810 = vmul.f32 %v121, 0.35355338
  %v811 = vlaneseq
  %v812 = vshrl.u32 %v811, 7
  %v813 = vsub.s32 1, %v812
  %v814 = vrot.slane %v124, %v813
  %816 = vrot.lane.b32.xlu0 %v121, 96
  %v817 = vpop.permute.xlu0 %816
  %v819 = vsel %vm133, %v810, 0
  %v821 = vsel %vm133, %v817, 0
  %823 = vmatprep.subr.mxu0 0.0
  %824 = vmatpush1.xpose.msra.mxu0 0.0
  %825 = vmatprep.subr.mxu0 0.0
  %826 = vmatpush1.xpose.msra.mxu0 0.0
  %827 = vmatprep.subr.mxu0 0.0
  %828 = vmatpush1.xpose.msra.mxu0 0.0
  %829 = vmatprep.subr.mxu0 0.0
  %830 = vmatpush1.xpose.msra.mxu0 0.0
  %831 = vmatprep.subr.mxu0 0.0
  %832 = vmatpush1.xpose.msra.mxu0 0.0
  %833 = vmatprep.subr.mxu0 0.0
  %834 = vmatpush1.xpose.msra.mxu0 0.0
  %835 = vmatprep.subr.mxu0 0.0
  %836 = vmatpush1.xpose.msra.mxu0 0.0
  %837 = vmatprep.subr.mxu0 0.0
  %838 = vmatpush1.xpose.msra.mxu0 0.0
  %839 = vmatprep.subr.mxu0 0.0
  %840 = vmatpush1.xpose.msra.mxu0 0.0
  %841 = vmatprep.subr.mxu0 0.0
  %842 = vmatpush1.xpose.msra.mxu0 0.0
  %843 = vmatprep.subr.mxu0 0.0
  %844 = vmatpush1.xpose.msra.mxu0 0.0
  %845 = vmatprep.subr.mxu0 0.0
  %846 = vmatpush1.xpose.msra.mxu0 0.0
  %847 = vmatprep.subr.mxu0 0.0
  %848 = vmatpush1.xpose.msra.mxu0 0.0
  %849 = vmatprep.subr.mxu0 0.0
  %850 = vmatpush1.xpose.msra.mxu0 0.0
  %851 = vmatprep.subr.mxu0 0.0
  %852 = vmatpush1.xpose.msra.mxu0 0.0
  %853 = vmatprep.subr.mxu0 0.0
  %854 = vmatpush1.xpose.msra.mxu0 %v821
  %855 = vmatprep.subr.mxu0 0.0
  %856 = vmatpush2.xpose.msra.mxu0 0.0
  %857 = vmatprep.subr.mxu0 0.0
  %858 = vmatpush2.xpose.msra.mxu0 0.0
  %859 = vmatprep.subr.mxu0 0.0
  %860 = vmatpush2.xpose.msra.mxu0 0.0
  %861 = vmatprep.subr.mxu0 0.0
  %862 = vmatpush2.xpose.msra.mxu0 0.0
  %863 = vmatprep.subr.mxu0 0.0
  %864 = vmatpush2.xpose.msra.mxu0 0.0
  %865 = vmatprep.subr.mxu0 0.0
  %866 = vmatpush2.xpose.msra.mxu0 0.0
  %867 = vmatprep.subr.mxu0 0.0
  %868 = vmatpush2.xpose.msra.mxu0 0.0
  %869 = vmatprep.subr.mxu0 0.0
  %870 = vmatpush2.xpose.msra.mxu0 0.0
  %871 = vmatprep.subr.mxu0 0.0
  %872 = vmatpush2.xpose.msra.mxu0 0.0
  %873 = vmatprep.subr.mxu0 0.0
  %874 = vmatpush2.xpose.msra.mxu0 0.0
  %875 = vmatprep.subr.mxu0 0.0
  %876 = vmatpush2.xpose.msra.mxu0 0.0
  %877 = vmatprep.subr.mxu0 0.0
  %878 = vmatpush2.xpose.msra.mxu0 0.0
  %879 = vmatprep.subr.mxu0 0.0
  %880 = vmatpush2.xpose.msra.mxu0 0.0
  %881 = vmatprep.subr.mxu0 0.0
  %882 = vmatpush2.xpose.msra.mxu0 0.0
  %883 = vmatprep.subr.mxu0 0.0
  %884 = vmatpush2.xpose.msra.mxu0 0.0
  %885 = vmatprep.subr.mxu0 0.0
  %886 = vmatpush2.xpose.msra.mxu0 0.0
  %887 = vmatprep.mubr.f32.mxu0 0.0
  %888 = vmatmul.mubr.f32.gmra.mxu0 %v819
  %v889 = vpop.f32.mrf.mxu0
  %v890 = vadd.f32 %v814, %v889
  %v891 = vpop.f32.mrf.mxu0
  %892 = vdwg.mxu0
  %v893 = vsel %vm133, %v890, -inf
  %894 = vmax.xlane.f32.xlu0 %v893
  %v895 = vpop.xlane.xlu0 %894
  %v896 = vsub.f32 %v890, %v895
  %v897 = vmul.f32 %v896, 1.442695
  %v898 = vpow.pop %v897
  %v899 = vsel %vm133, %v898, 0.0
  %900 = vadd.xlane.f32.xlu0 %v899
  %v901 = vpop.xlane.xlu0 %900
  %902 = vrot.lane.b32.xlu0 %v121, 64
  %v903 = vpop.permute.xlu0 %902
  %v906 = vsel %vm133, %v898, 0
  %908 = vmatprep.subr.mxu0 0.0
  %909 = vmatpush1.msra.mxu0 0.0
  %910 = vmatprep.subr.mxu0 0.0
  %911 = vmatpush1.msra.mxu0 0.0
  %912 = vmatprep.subr.mxu0 0.0
  %913 = vmatpush1.msra.mxu0 0.0
  %914 = vmatprep.subr.mxu0 0.0
  %915 = vmatpush1.msra.mxu0 0.0
  %916 = vmatprep.subr.mxu0 0.0
  %917 = vmatpush1.msra.mxu0 0.0
  %918 = vmatprep.subr.mxu0 0.0
  %919 = vmatpush1.msra.mxu0 0.0
  %920 = vmatprep.subr.mxu0 0.0
  %921 = vmatpush1.msra.mxu0 0.0
  %922 = vmatprep.subr.mxu0 0.0
  %923 = vmatpush1.msra.mxu0 0.0
  %924 = vmatprep.subr.mxu0 0.0
  %925 = vmatpush1.msra.mxu0 0.0
  %926 = vmatprep.subr.mxu0 0.0
  %927 = vmatpush1.msra.mxu0 0.0
  %928 = vmatprep.subr.mxu0 0.0
  %929 = vmatpush1.msra.mxu0 0.0
  %930 = vmatprep.subr.mxu0 0.0
  %931 = vmatpush1.msra.mxu0 0.0
  %932 = vmatprep.subr.mxu0 0.0
  %933 = vmatpush1.msra.mxu0 0.0
  %934 = vmatprep.subr.mxu0 0.0
  %935 = vmatpush1.msra.mxu0 0.0
  %936 = vmatprep.subr.mxu0 0.0
  %937 = vmatpush1.msra.mxu0 0.0
  %938 = vmatprep.subr.mxu0 0.0
  %939 = vmatpush1.msra.mxu0 %v903
  %940 = vmatprep.subr.mxu0 0.0
  %941 = vmatpush2.msra.mxu0 0.0
  %942 = vmatprep.subr.mxu0 0.0
  %943 = vmatpush2.msra.mxu0 0.0
  %944 = vmatprep.subr.mxu0 0.0
  %945 = vmatpush2.msra.mxu0 0.0
  %946 = vmatprep.subr.mxu0 0.0
  %947 = vmatpush2.msra.mxu0 0.0
  %948 = vmatprep.subr.mxu0 0.0
  %949 = vmatpush2.msra.mxu0 0.0
  %950 = vmatprep.subr.mxu0 0.0
  %951 = vmatpush2.msra.mxu0 0.0
  %952 = vmatprep.subr.mxu0 0.0
  %953 = vmatpush2.msra.mxu0 0.0
  %954 = vmatprep.subr.mxu0 0.0
  %955 = vmatpush2.msra.mxu0 0.0
  %956 = vmatprep.subr.mxu0 0.0
  %957 = vmatpush2.msra.mxu0 0.0
  %958 = vmatprep.subr.mxu0 0.0
  %959 = vmatpush2.msra.mxu0 0.0
  %960 = vmatprep.subr.mxu0 0.0
  %961 = vmatpush2.msra.mxu0 0.0
  %962 = vmatprep.subr.mxu0 0.0
  %963 = vmatpush2.msra.mxu0 0.0
  %964 = vmatprep.subr.mxu0 0.0
  %965 = vmatpush2.msra.mxu0 0.0
  %966 = vmatprep.subr.mxu0 0.0
  %967 = vmatpush2.msra.mxu0 0.0
  %968 = vmatprep.subr.mxu0 0.0
  %969 = vmatpush2.msra.mxu0 0.0
  %970 = vmatprep.subr.mxu0 0.0
  %971 = vmatpush2.msra.mxu0 0.0
  %972 = vmatprep.mubr.f32.mxu0 0.0
  %973 = vmatmul.mubr.f32.gmra.mxu0 %v906
  %v974 = vpop.f32.mrf.mxu0
  %v975 = vadd.f32 0.0, %v974
  %v976 = vpop.f32.mrf.mxu0
  %977 = vdwg.mxu0
  %v978 = vrcp.pop %v901
  %v979 = vmul.f32 %v975, %v978
  %980 = vst.msk [vmem:[#allocation2 + $0x8] sm:$0xff] %vm133, %v979
  %981 = vrot.lane.b32.xlu0 %v810, 120
  %v982 = vpop.permute.xlu0 %981
  %983 = vrot.lane.b32.xlu0 %v121, 88
  %v984 = vpop.permute.xlu0 %983
  %v985 = vsel %vm133, %v982, 0
  %v987 = vsel %vm133, %v984, 0
  %989 = vmatprep.subr.mxu0 0.0
  %990 = vmatpush1.xpose.msra.mxu0 0.0
  %991 = vmatprep.subr.mxu0 0.0
  %992 = vmatpush1.xpose.msra.mxu0 0.0
  %993 = vmatprep.subr.mxu0 0.0
  %994 = vmatpush1.xpose.msra.mxu0 0.0
  %995 = vmatprep.subr.mxu0 0.0
  %996 = vmatpush1.xpose.msra.mxu0 0.0
  %997 = vmatprep.subr.mxu0 0.0
  %998 = vmatpush1.xpose.msra.mxu0 0.0
  %999 = vmatprep.subr.mxu0 0.0
  %1000 = vmatpush1.xpose.msra.mxu0 0.0
  %1001 = vmatprep.subr.mxu0 0.0
  %1002 = vmatpush1.xpose.msra.mxu0 0.0
  %1003 = vmatprep.subr.mxu0 0.0
  %1004 = vmatpush1.xpose.msra.mxu0 0.0
  %1005 = vmatprep.subr.mxu0 0.0
  %1006 = vmatpush1.xpose.msra.mxu0 0.0
  %1007 = vmatprep.subr.mxu0 0.0
  %1008 = vmatpush1.xpose.msra.mxu0 0.0
  %1009 = vmatprep.subr.mxu0 0.0
  %1010 = vmatpush1.xpose.msra.mxu0 0.0
  %1011 = vmatprep.subr.mxu0 0.0
  %1012 = vmatpush1.xpose.msra.mxu0 0.0
  %1013 = vmatprep.subr.mxu0 0.0
  %1014 = vmatpush1.xpose.msra.mxu0 0.0
  %1015 = vmatprep.subr.mxu0 0.0
  %1016 = vmatpush1.xpose.msra.mxu0 0.0
  %1017 = vmatprep.subr.mxu0 0.0
  %1018 = vmatpush1.xpose.msra.mxu0 0.0
  %1019 = vmatprep.subr.mxu0 0.0
  %1020 = vmatpush1.xpose.msra.mxu0 %v987
  %1021 = vmatprep.subr.mxu0 0.0
  %1022 = vmatpush2.xpose.msra.mxu0 0.0
  %1023 = vmatprep.subr.mxu0 0.0
  %1024 = vmatpush2.xpose.msra.mxu0 0.0
  %1025 = vmatprep.subr.mxu0 0.0
  %1026 = vmatpush2.xpose.msra.mxu0 0.0
  %1027 = vmatprep.subr.mxu0 0.0
  %1028 = vmatpush2.xpose.msra.mxu0 0.0
  %1029 = vmatprep.subr.mxu0 0.0
  %1030 = vmatpush2.xpose.msra.mxu0 0.0
  %1031 = vmatprep.subr.mxu0 0.0
  %1032 = vmatpush2.xpose.msra.mxu0 0.0
  %1033 = vmatprep.subr.mxu0 0.0
  %1034 = vmatpush2.xpose.msra.mxu0 0.0
  %1035 = vmatprep.subr.mxu0 0.0
  %1036 = vmatpush2.xpose.msra.mxu0 0.0
  %1037 = vmatprep.subr.mxu0 0.0
  %1038 = vmatpush2.xpose.msra.mxu0 0.0
  %1039 = vmatprep.subr.mxu0 0.0
  %1040 = vmatpush2.xpose.msra.mxu0 0.0
  %1041 = vmatprep.subr.mxu0 0.0
  %1042 = vmatpush2.xpose.msra.mxu0 0.0
  %1043 = vmatprep.subr.mxu0 0.0
  %1044 = vmatpush2.xpose.msra.mxu0 0.0
  %1045 = vmatprep.subr.mxu0 0.0
  %1046 = vmatpush2.xpose.msra.mxu0 0.0
  %1047 = vmatprep.subr.mxu0 0.0
  %1048 = vmatpush2.xpose.msra.mxu0 0.0
  %1049 = vmatprep.subr.mxu0 0.0
  %1050 = vmatpush2.xpose.msra.mxu0 0.0
  %1051 = vmatprep.subr.mxu0 0.0
  %1052 = vmatpush2.xpose.msra.mxu0 0.0
  %1053 = vmatprep.mubr.f32.mxu0 0.0
  %1054 = vmatmul.mubr.f32.gmra.mxu0 %v985
  %v1055 = vpop.f32.mrf.mxu0
  %v1056 = vadd.f32 %v814, %v1055
  %v1057 = vpop.f32.mrf.mxu0
  %1058 = vdwg.mxu0
  %v1059 = vsel %vm133, %v1056, -inf
  %1060 = vmax.xlane.f32.xlu0 %v1059
  %v1061 = vpop.xlane.xlu0 %1060
  %v1062 = vsub.f32 %v1056, %v1061
  %v1063 = vmul.f32 %v1062, 1.442695
  %v1064 = vpow.pop %v1063
  %v1065 = vsel %vm133, %v1064, 0.0
  %1066 = vadd.xlane.f32.xlu0 %v1065
  %v1067 = vpop.xlane.xlu0 %1066
  %1068 = vrot.lane.b32.xlu0 %v121, 56
  %v1069 = vpop.permute.xlu0 %1068
  %v1072 = vsel %vm133, %v1064, 0
  %1074 = vmatprep.subr.mxu0 0.0
  %1075 = vmatpush1.msra.mxu0 0.0
  %1076 = vmatprep.subr.mxu0 0.0
  %1077 = vmatpush1.msra.mxu0 0.0
  %1078 = vmatprep.subr.mxu0 0.0
  %1079 = vmatpush1.msra.mxu0 0.0
  %1080 = vmatprep.subr.mxu0 0.0
  %1081 = vmatpush1.msra.mxu0 0.0
  %1082 = vmatprep.subr.mxu0 0.0
  %1083 = vmatpush1.msra.mxu0 0.0
  %1084 = vmatprep.subr.mxu0 0.0
  %1085 = vmatpush1.msra.mxu0 0.0
  %1086 = vmatprep.subr.mxu0 0.0
  %1087 = vmatpush1.msra.mxu0 0.0
  %1088 = vmatprep.subr.mxu0 0.0
  %1089 = vmatpush1.msra.mxu0 0.0
  %1090 = vmatprep.subr.mxu0 0.0
  %1091 = vmatpush1.msra.mxu0 0.0
  %1092 = vmatprep.subr.mxu0 0.0
  %1093 = vmatpush1.msra.mxu0 0.0
  %1094 = vmatprep.subr.mxu0 0.0
  %1095 = vmatpush1.msra.mxu0 0.0
  %1096 = vmatprep.subr.mxu0 0.0
  %1097 = vmatpush1.msra.mxu0 0.0
  %1098 = vmatprep.subr.mxu0 0.0
  %1099 = vmatpush1.msra.mxu0 0.0
  %1100 = vmatprep.subr.mxu0 0.0
  %1101 = vmatpush1.msra.mxu0 0.0
  %1102 = vmatprep.subr.mxu0 0.0
  %1103 = vmatpush1.msra.mxu0 0.0
  %1104 = vmatprep.subr.mxu0 0.0
  %1105 = vmatpush1.msra.mxu0 %v1069
  %1106 = vmatprep.subr.mxu0 0.0
  %1107 = vmatpush2.msra.mxu0 0.0
  %1108 = vmatprep.subr.mxu0 0.0
  %1109 = vmatpush2.msra.mxu0 0.0
  %1110 = vmatprep.subr.mxu0 0.0
  %1111 = vmatpush2.msra.mxu0 0.0
  %1112 = vmatprep.subr.mxu0 0.0
  %1113 = vmatpush2.msra.mxu0 0.0
  %1114 = vmatprep.subr.mxu0 0.0
  %1115 = vmatpush2.msra.mxu0 0.0
  %1116 = vmatprep.subr.mxu0 0.0
  %1117 = vmatpush2.msra.mxu0 0.0
  %1118 = vmatprep.subr.mxu0 0.0
  %1119 = vmatpush2.msra.mxu0 0.0
  %1120 = vmatprep.subr.mxu0 0.0
  %1121 = vmatpush2.msra.mxu0 0.0
  %1122 = vmatprep.subr.mxu0 0.0
  %1123 = vmatpush2.msra.mxu0 0.0
  %1124 = vmatprep.subr.mxu0 0.0
  %1125 = vmatpush2.msra.mxu0 0.0
  %1126 = vmatprep.subr.mxu0 0.0
  %1127 = vmatpush2.msra.mxu0 0.0
  %1128 = vmatprep.subr.mxu0 0.0
  %1129 = vmatpush2.msra.mxu0 0.0
  %1130 = vmatprep.subr.mxu0 0.0
  %1131 = vmatpush2.msra.mxu0 0.0
  %1132 = vmatprep.subr.mxu0 0.0
  %1133 = vmatpush2.msra.mxu0 0.0
  %1134 = vmatprep.subr.mxu0 0.0
  %1135 = vmatpush2.msra.mxu0 0.0
  %1136 = vmatprep.subr.mxu0 0.0
  %1137 = vmatpush2.msra.mxu0 0.0
  %1138 = vmatprep.mubr.f32.mxu0 0.0
  %1139 = vmatmul.mubr.f32.gmra.mxu0 %v1072
  %v1140 = vpop.f32.mrf.mxu0
  %v1141 = vadd.f32 0.0, %v1140
  %v1142 = vpop.f32.mrf.mxu0
  %1143 = vdwg.mxu0
  %v1144 = vrcp.pop %v1067
  %v1145 = vmul.f32 %v1141, %v1144
  %1147 = vrot.lane.b32.xlu0 %v1145, 8
  %v1148 = vpop.permute.xlu0 %1147
  %1150 = vst.msk [vmem:[#allocation2 + $0x8] sm:$0xff] %vm466, %v1148
  %1151 = vrot.lane.b32.xlu0 %v810, 112
  %v1152 = vpop.permute.xlu0 %1151
  %1153 = vrot.lane.b32.xlu0 %v121, 80
  %v1154 = vpop.permute.xlu0 %1153
  %v1155 = vsel %vm133, %v1152, 0
  %v1157 = vsel %vm133, %v1154, 0
  %1159 = vmatprep.subr.mxu0 0.0
  %1160 = vmatpush1.xpose.msra.mxu0 0.0
  %1161 = vmatprep.subr.mxu0 0.0
  %1162 = vmatpush1.xpose.msra.mxu0 0.0
  %1163 = vmatprep.subr.mxu0 0.0
  %1164 = vmatpush1.xpose.msra.mxu0 0.0
  %1165 = vmatprep.subr.mxu0 0.0
  %1166 = vmatpush1.xpose.msra.mxu0 0.0
  %1167 = vmatprep.subr.mxu0 0.0
  %1168 = vmatpush1.xpose.msra.mxu0 0.0
  %1169 = vmatprep.subr.mxu0 0.0
  %1170 = vmatpush1.xpose.msra.mxu0 0.0
  %1171 = vmatprep.subr.mxu0 0.0
  %1172 = vmatpush1.xpose.msra.mxu0 0.0
  %1173 = vmatprep.subr.mxu0 0.0
  %1174 = vmatpush1.xpose.msra.mxu0 0.0
  %1175 = vmatprep.subr.mxu0 0.0
  %1176 = vmatpush1.xpose.msra.mxu0 0.0
  %1177 = vmatprep.subr.mxu0 0.0
  %1178 = vmatpush1.xpose.msra.mxu0 0.0
  %1179 = vmatprep.subr.mxu0 0.0
  %1180 = vmatpush1.xpose.msra.mxu0 0.0
  %1181 = vmatprep.subr.mxu0 0.0
  %1182 = vmatpush1.xpose.msra.mxu0 0.0
  %1183 = vmatprep.subr.mxu0 0.0
  %1184 = vmatpush1.xpose.msra.mxu0 0.0
  %1185 = vmatprep.subr.mxu0 0.0
  %1186 = vmatpush1.xpose.msra.mxu0 0.0
  %1187 = vmatprep.subr.mxu0 0.0
  %1188 = vmatpush1.xpose.msra.mxu0 0.0
  %1189 = vmatprep.subr.mxu0 0.0
  %1190 = vmatpush1.xpose.msra.mxu0 %v1157
  %1191 = vmatprep.subr.mxu0 0.0
  %1192 = vmatpush2.xpose.msra.mxu0 0.0
  %1193 = vmatprep.subr.mxu0 0.0
  %1194 = vmatpush2.xpose.msra.mxu0 0.0
  %1195 = vmatprep.subr.mxu0 0.0
  %1196 = vmatpush2.xpose.msra.mxu0 0.0
  %1197 = vmatprep.subr.mxu0 0.0
  %1198 = vmatpush2.xpose.msra.mxu0 0.0
  %1199 = vmatprep.subr.mxu0 0.0
  %1200 = vmatpush2.xpose.msra.mxu0 0.0
  %1201 = vmatprep.subr.mxu0 0.0
  %1202 = vmatpush2.xpose.msra.mxu0 0.0
  %1203 = vmatprep.subr.mxu0 0.0
  %1204 = vmatpush2.xpose.msra.mxu0 0.0
  %1205 = vmatprep.subr.mxu0 0.0
  %1206 = vmatpush2.xpose.msra.mxu0 0.0
  %1207 = vmatprep.subr.mxu0 0.0
  %1208 = vmatpush2.xpose.msra.mxu0 0.0
  %1209 = vmatprep.subr.mxu0 0.0
  %1210 = vmatpush2.xpose.msra.mxu0 0.0
  %1211 = vmatprep.subr.mxu0 0.0
  %1212 = vmatpush2.xpose.msra.mxu0 0.0
  %1213 = vmatprep.subr.mxu0 0.0
  %1214 = vmatpush2.xpose.msra.mxu0 0.0
  %1215 = vmatprep.subr.mxu0 0.0
  %1216 = vmatpush2.xpose.msra.mxu0 0.0
  %1217 = vmatprep.subr.mxu0 0.0
  %1218 = vmatpush2.xpose.msra.mxu0 0.0
  %1219 = vmatprep.subr.mxu0 0.0
  %1220 = vmatpush2.xpose.msra.mxu0 0.0
  %1221 = vmatprep.subr.mxu0 0.0
  %1222 = vmatpush2.xpose.msra.mxu0 0.0
  %1223 = vmatprep.mubr.f32.mxu0 0.0
  %1224 = vmatmul.mubr.f32.gmra.mxu0 %v1155
  %v1225 = vpop.f32.mrf.mxu0
  %v1226 = vadd.f32 %v814, %v1225
  %v1227 = vpop.f32.mrf.mxu0
  %1228 = vdwg.mxu0
  %v1229 = vsel %vm133, %v1226, -inf
  %1230 = vmax.xlane.f32.xlu0 %v1229
  %v1231 = vpop.xlane.xlu0 %1230
  %v1232 = vsub.f32 %v1226, %v1231
  %v1233 = vmul.f32 %v1232, 1.442695
  %v1234 = vpow.pop %v1233
  %v1235 = vsel %vm133, %v1234, 0.0
  %1236 = vadd.xlane.f32.xlu0 %v1235
  %v1237 = vpop.xlane.xlu0 %1236
  %1238 = vrot.lane.b32.xlu0 %v121, 48
  %v1239 = vpop.permute.xlu0 %1238
  %v1242 = vsel %vm133, %v1234, 0
  %1244 = vmatprep.subr.mxu0 0.0
  %1245 = vmatpush1.msra.mxu0 0.0
  %1246 = vmatprep.subr.mxu0 0.0
  %1247 = vmatpush1.msra.mxu0 0.0
  %1248 = vmatprep.subr.mxu0 0.0
  %1249 = vmatpush1.msra.mxu0 0.0
  %1250 = vmatprep.subr.mxu0 0.0
  %1251 = vmatpush1.msra.mxu0 0.0
  %1252 = vmatprep.subr.mxu0 0.0
  %1253 = vmatpush1.msra.mxu0 0.0
  %1254 = vmatprep.subr.mxu0 0.0
  %1255 = vmatpush1.msra.mxu0 0.0
  %1256 = vmatprep.subr.mxu0 0.0
  %1257 = vmatpush1.msra.mxu0 0.0
  %1258 = vmatprep.subr.mxu0 0.0
  %1259 = vmatpush1.msra.mxu0 0.0
  %1260 = vmatprep.subr.mxu0 0.0
  %1261 = vmatpush1.msra.mxu0 0.0
  %1262 = vmatprep.subr.mxu0 0.0
  %1263 = vmatpush1.msra.mxu0 0.0
  %1264 = vmatprep.subr.mxu0 0.0
  %1265 = vmatpush1.msra.mxu0 0.0
  %1266 = vmatprep.subr.mxu0 0.0
  %1267 = vmatpush1.msra.mxu0 0.0
  %1268 = vmatprep.subr.mxu0 0.0
  %1269 = vmatpush1.msra.mxu0 0.0
  %1270 = vmatprep.subr.mxu0 0.0
  %1271 = vmatpush1.msra.mxu0 0.0
  %1272 = vmatprep.subr.mxu0 0.0
  %1273 = vmatpush1.msra.mxu0 0.0
  %1274 = vmatprep.subr.mxu0 0.0
  %1275 = vmatpush1.msra.mxu0 %v1239
  %1276 = vmatprep.subr.mxu0 0.0
  %1277 = vmatpush2.msra.mxu0 0.0
  %1278 = vmatprep.subr.mxu0 0.0
  %1279 = vmatpush2.msra.mxu0 0.0
  %1280 = vmatprep.subr.mxu0 0.0
  %1281 = vmatpush2.msra.mxu0 0.0
  %1282 = vmatprep.subr.mxu0 0.0
  %1283 = vmatpush2.msra.mxu0 0.0
  %1284 = vmatprep.subr.mxu0 0.0
  %1285 = vmatpush2.msra.mxu0 0.0
  %1286 = vmatprep.subr.mxu0 0.0
  %1287 = vmatpush2.msra.mxu0 0.0
  %1288 = vmatprep.subr.mxu0 0.0
  %1289 = vmatpush2.msra.mxu0 0.0
  %1290 = vmatprep.subr.mxu0 0.0
  %1291 = vmatpush2.msra.mxu0 0.0
  %1292 = vmatprep.subr.mxu0 0.0
  %1293 = vmatpush2.msra.mxu0 0.0
  %1294 = vmatprep.subr.mxu0 0.0
  %1295 = vmatpush2.msra.mxu0 0.0
  %1296 = vmatprep.subr.mxu0 0.0
  %1297 = vmatpush2.msra.mxu0 0.0
  %1298 = vmatprep.subr.mxu0 0.0
  %1299 = vmatpush2.msra.mxu0 0.0
  %1300 = vmatprep.subr.mxu0 0.0
  %1301 = vmatpush2.msra.mxu0 0.0
  %1302 = vmatprep.subr.mxu0 0.0
  %1303 = vmatpush2.msra.mxu0 0.0
  %1304 = vmatprep.subr.mxu0 0.0
  %1305 = vmatpush2.msra.mxu0 0.0
  %1306 = vmatprep.subr.mxu0 0.0
  %1307 = vmatpush2.msra.mxu0 0.0
  %1308 = vmatprep.mubr.f32.mxu0 0.0
  %1309 = vmatmul.mubr.f32.gmra.mxu0 %v1242
  %v1310 = vpop.f32.mrf.mxu0
  %v1311 = vadd.f32 0.0, %v1310
  %v1312 = vpop.f32.mrf.mxu0
  %1313 = vdwg.mxu0
  %v1314 = vrcp.pop %v1237
  %v1315 = vmul.f32 %v1311, %v1314
  %1317 = vrot.lane.b32.xlu0 %v1315, 16
  %v1318 = vpop.permute.xlu0 %1317
  %1320 = vst.msk [vmem:[#allocation2 + $0x8] sm:$0xff] %vm637, %v1318
  %1321 = vrot.lane.b32.xlu0 %v810, 104
  %v1322 = vpop.permute.xlu0 %1321
  %1323 = vrot.lane.b32.xlu0 %v121, 72
  %v1324 = vpop.permute.xlu0 %1323
  %v1325 = vsel %vm133, %v1322, 0
  %v1327 = vsel %vm133, %v1324, 0
  %1329 = vmatprep.subr.mxu0 0.0
  %1330 = vmatpush1.xpose.msra.mxu0 0.0
  %1331 = vmatprep.subr.mxu0 0.0
  %1332 = vmatpush1.xpose.msra.mxu0 0.0
  %1333 = vmatprep.subr.mxu0 0.0
  %1334 = vmatpush1.xpose.msra.mxu0 0.0
  %1335 = vmatprep.subr.mxu0 0.0
  %1336 = vmatpush1.xpose.msra.mxu0 0.0
  %1337 = vmatprep.subr.mxu0 0.0
  %1338 = vmatpush1.xpose.msra.mxu0 0.0
  %1339 = vmatprep.subr.mxu0 0.0
  %1340 = vmatpush1.xpose.msra.mxu0 0.0
  %1341 = vmatprep.subr.mxu0 0.0
  %1342 = vmatpush1.xpose.msra.mxu0 0.0
  %1343 = vmatprep.subr.mxu0 0.0
  %1344 = vmatpush1.xpose.msra.mxu0 0.0
  %1345 = vmatprep.subr.mxu0 0.0
  %1346 = vmatpush1.xpose.msra.mxu0 0.0
  %1347 = vmatprep.subr.mxu0 0.0
  %1348 = vmatpush1.xpose.msra.mxu0 0.0
  %1349 = vmatprep.subr.mxu0 0.0
  %1350 = vmatpush1.xpose.msra.mxu0 0.0
  %1351 = vmatprep.subr.mxu0 0.0
  %1352 = vmatpush1.xpose.msra.mxu0 0.0
  %1353 = vmatprep.subr.mxu0 0.0
  %1354 = vmatpush1.xpose.msra.mxu0 0.0
  %1355 = vmatprep.subr.mxu0 0.0
  %1356 = vmatpush1.xpose.msra.mxu0 0.0
  %1357 = vmatprep.subr.mxu0 0.0
  %1358 = vmatpush1.xpose.msra.mxu0 0.0
  %1359 = vmatprep.subr.mxu0 0.0
  %1360 = vmatpush1.xpose.msra.mxu0 %v1327
  %1361 = vmatprep.subr.mxu0 0.0
  %1362 = vmatpush2.xpose.msra.mxu0 0.0
  %1363 = vmatprep.subr.mxu0 0.0
  %1364 = vmatpush2.xpose.msra.mxu0 0.0
  %1365 = vmatprep.subr.mxu0 0.0
  %1366 = vmatpush2.xpose.msra.mxu0 0.0
  %1367 = vmatprep.subr.mxu0 0.0
  %1368 = vmatpush2.xpose.msra.mxu0 0.0
  %1369 = vmatprep.subr.mxu0 0.0
  %1370 = vmatpush2.xpose.msra.mxu0 0.0
  %1371 = vmatprep.subr.mxu0 0.0
  %1372 = vmatpush2.xpose.msra.mxu0 0.0
  %1373 = vmatprep.subr.mxu0 0.0
  %1374 = vmatpush2.xpose.msra.mxu0 0.0
  %1375 = vmatprep.subr.mxu0 0.0
  %1376 = vmatpush2.xpose.msra.mxu0 0.0
  %1377 = vmatprep.subr.mxu0 0.0
  %1378 = vmatpush2.xpose.msra.mxu0 0.0
  %1379 = vmatprep.subr.mxu0 0.0
  %1380 = vmatpush2.xpose.msra.mxu0 0.0
  %1381 = vmatprep.subr.mxu0 0.0
  %1382 = vmatpush2.xpose.msra.mxu0 0.0
  %1383 = vmatprep.subr.mxu0 0.0
  %1384 = vmatpush2.xpose.msra.mxu0 0.0
  %1385 = vmatprep.subr.mxu0 0.0
  %1386 = vmatpush2.xpose.msra.mxu0 0.0
  %1387 = vmatprep.subr.mxu0 0.0
  %1388 = vmatpush2.xpose.msra.mxu0 0.0
  %1389 = vmatprep.subr.mxu0 0.0
  %1390 = vmatpush2.xpose.msra.mxu0 0.0
  %1391 = vmatprep.subr.mxu0 0.0
  %1392 = vmatpush2.xpose.msra.mxu0 0.0
  %1393 = vmatprep.mubr.f32.mxu0 0.0
  %1394 = vmatmul.mubr.f32.gmra.mxu0 %v1325
  %v1395 = vpop.f32.mrf.mxu0
  %v1396 = vadd.f32 %v814, %v1395
  %v1397 = vpop.f32.mrf.mxu0
  %1398 = vdwg.mxu0
  %v1399 = vsel %vm133, %v1396, -inf
  %1400 = vmax.xlane.f32.xlu0 %v1399
  %v1401 = vpop.xlane.xlu0 %1400
  %v1402 = vsub.f32 %v1396, %v1401
  %v1403 = vmul.f32 %v1402, 1.442695
  %v1404 = vpow.pop %v1403
  %v1405 = vsel %vm133, %v1404, 0.0
  %1406 = vadd.xlane.f32.xlu0 %v1405
  %v1407 = vpop.xlane.xlu0 %1406
  %1408 = vrot.lane.b32.xlu0 %v121, 40
  %v1409 = vpop.permute.xlu0 %1408
  %v1412 = vsel %vm133, %v1404, 0
  %1414 = vmatprep.subr.mxu0 0.0
  %1415 = vmatpush1.msra.mxu0 0.0
  %1416 = vmatprep.subr.mxu0 0.0
  %1417 = vmatpush1.msra.mxu0 0.0
  %1418 = vmatprep.subr.mxu0 0.0
  %1419 = vmatpush1.msra.mxu0 0.0
  %1420 = vmatprep.subr.mxu0 0.0
  %1421 = vmatpush1.msra.mxu0 0.0
  %1422 = vmatprep.subr.mxu0 0.0
  %1423 = vmatpush1.msra.mxu0 0.0
  %1424 = vmatprep.subr.mxu0 0.0
  %1425 = vmatpush1.msra.mxu0 0.0
  %1426 = vmatprep.subr.mxu0 0.0
  %1427 = vmatpush1.msra.mxu0 0.0
  %1428 = vmatprep.subr.mxu0 0.0
  %1429 = vmatpush1.msra.mxu0 0.0
  %1430 = vmatprep.subr.mxu0 0.0
  %1431 = vmatpush1.msra.mxu0 0.0
  %1432 = vmatprep.subr.mxu0 0.0
  %1433 = vmatpush1.msra.mxu0 0.0
  %1434 = vmatprep.subr.mxu0 0.0
  %1435 = vmatpush1.msra.mxu0 0.0
  %1436 = vmatprep.subr.mxu0 0.0
  %1437 = vmatpush1.msra.mxu0 0.0
  %1438 = vmatprep.subr.mxu0 0.0
  %1439 = vmatpush1.msra.mxu0 0.0
  %1440 = vmatprep.subr.mxu0 0.0
  %1441 = vmatpush1.msra.mxu0 0.0
  %1442 = vmatprep.subr.mxu0 0.0
  %1443 = vmatpush1.msra.mxu0 0.0
  %1444 = vmatprep.subr.mxu0 0.0
  %1445 = vmatpush1.msra.mxu0 %v1409
  %1446 = vmatprep.subr.mxu0 0.0
  %1447 = vmatpush2.msra.mxu0 0.0
  %1448 = vmatprep.subr.mxu0 0.0
  %1449 = vmatpush2.msra.mxu0 0.0
  %1450 = vmatprep.subr.mxu0 0.0
  %1451 = vmatpush2.msra.mxu0 0.0
  %1452 = vmatprep.subr.mxu0 0.0
  %1453 = vmatpush2.msra.mxu0 0.0
  %1454 = vmatprep.subr.mxu0 0.0
  %1455 = vmatpush2.msra.mxu0 0.0
  %1456 = vmatprep.subr.mxu0 0.0
  %1457 = vmatpush2.msra.mxu0 0.0
  %1458 = vmatprep.subr.mxu0 0.0
  %1459 = vmatpush2.msra.mxu0 0.0
  %1460 = vmatprep.subr.mxu0 0.0
  %1461 = vmatpush2.msra.mxu0 0.0
  %1462 = vmatprep.subr.mxu0 0.0
  %1463 = vmatpush2.msra.mxu0 0.0
  %1464 = vmatprep.subr.mxu0 0.0
  %1465 = vmatpush2.msra.mxu0 0.0
  %1466 = vmatprep.subr.mxu0 0.0
  %1467 = vmatpush2.msra.mxu0 0.0
  %1468 = vmatprep.subr.mxu0 0.0
  %1469 = vmatpush2.msra.mxu0 0.0
  %1470 = vmatprep.subr.mxu0 0.0
  %1471 = vmatpush2.msra.mxu0 0.0
  %1472 = vmatprep.subr.mxu0 0.0
  %1473 = vmatpush2.msra.mxu0 0.0
  %1474 = vmatprep.subr.mxu0 0.0
  %1475 = vmatpush2.msra.mxu0 0.0
  %1476 = vmatprep.subr.mxu0 0.0
  %1477 = vmatpush2.msra.mxu0 0.0
  %1478 = vmatprep.mubr.f32.mxu0 0.0
  %1479 = vmatmul.mubr.f32.gmra.mxu0 %v1412
  %v1480 = vpop.f32.mrf.mxu0
  %v1481 = vadd.f32 0.0, %v1480
  %v1482 = vpop.f32.mrf.mxu0
  %1483 = vdwg.mxu0
  %v1484 = vrcp.pop %v1407
  %v1485 = vmul.f32 %v1481, %v1484
  %1487 = vrot.lane.b32.xlu0 %v1485, 24
  %v1488 = vpop.permute.xlu0 %1487
  %1490 = vst.msk [vmem:[#allocation2 + $0x8] sm:$0xff] %vm808, %v1488
  %v1491 = vld [vmem:[#allocation2] sm:$0xff]
  %v1492 = vld [vmem:[#allocation2 + $0x8] sm:$0xff]
  %v1493 = vld [vmem:[%s4] sm:$0xff]
  %v1494 = vld [vmem:[%s4 + $0x8] sm:$0xff]
  %v1495 = vld [vmem:[%s4 + $0x10] sm:$0xff]
  %v1496 = vld [vmem:[%s4 + $0x18] sm:$0xff]
  %v1497 = vld [vmem:[%s5] sm:$0x1]
  %v1499 = vlaneseq
  %v1500 = vshrl.u32 %v1499, 7
  %v1501 = vsub.s32 0, %v1500
  %v1502 = vrot.slane %v1497, %v1501
  %v1505 = vsel %vm42, %v1491, 0
  %v1508 = vsel %vm42, %v1492, 0
  %1510 = vmatprep.subr.mxu0 0.0
  %1511 = vmatpush1.msra.mxu0 0.0
  %1512 = vmatprep.subr.mxu0 0.0
  %1513 = vmatpush1.msra.mxu0 0.0
  %1514 = vmatprep.subr.mxu0 0.0
  %1515 = vmatpush1.msra.mxu0 0.0
  %1516 = vmatprep.subr.mxu0 0.0
  %1517 = vmatpush1.msra.mxu0 0.0
  %1518 = vmatprep.subr.mxu0 0.0
  %1519 = vmatpush1.msra.mxu0 0.0
  %1520 = vmatprep.subr.mxu0 0.0
  %1521 = vmatpush1.msra.mxu0 0.0
  %1522 = vmatprep.subr.mxu0 0.0
  %1523 = vmatpush1.msra.mxu0 0.0
  %1524 = vmatprep.subr.mxu0 0.0
  %1525 = vmatpush1.msra.mxu0 0.0
  %1526 = vmatprep.subr.mxu0 0.0
  %1527 = vmatpush1.msra.mxu0 0.0
  %1528 = vmatprep.subr.mxu0 0.0
  %1529 = vmatpush1.msra.mxu0 0.0
  %1530 = vmatprep.subr.mxu0 0.0
  %1531 = vmatpush1.msra.mxu0 0.0
  %1532 = vmatprep.subr.mxu0 0.0
  %1533 = vmatpush1.msra.mxu0 0.0
  %1534 = vmatprep.subr.mxu0 0.0
  %1535 = vmatpush1.msra.mxu0 %v1496
  %1536 = vmatprep.subr.mxu0 0.0
  %1537 = vmatpush1.msra.mxu0 %v1495
  %1538 = vmatprep.subr.mxu0 0.0
  %1539 = vmatpush1.msra.mxu0 %v1494
  %1540 = vmatprep.subr.mxu0 0.0
  %1541 = vmatpush1.msra.mxu0 %v1493
  %1542 = vmatprep.subr.mxu0 0.0
  %1543 = vmatpush2.msra.mxu0 0.0
  %1544 = vmatprep.subr.mxu0 0.0
  %1545 = vmatpush2.msra.mxu0 0.0
  %1546 = vmatprep.subr.mxu0 0.0
  %1547 = vmatpush2.msra.mxu0 0.0
  %1548 = vmatprep.subr.mxu0 0.0
  %1549 = vmatpush2.msra.mxu0 0.0
  %1550 = vmatprep.subr.mxu0 0.0
  %1551 = vmatpush2.msra.mxu0 0.0
  %1552 = vmatprep.subr.mxu0 0.0
  %1553 = vmatpush2.msra.mxu0 0.0
  %1554 = vmatprep.subr.mxu0 0.0
  %1555 = vmatpush2.msra.mxu0 0.0
  %1556 = vmatprep.subr.mxu0 0.0
  %1557 = vmatpush2.msra.mxu0 0.0
  %1558 = vmatprep.subr.mxu0 0.0
  %1559 = vmatpush2.msra.mxu0 0.0
  %1560 = vmatprep.subr.mxu0 0.0
  %1561 = vmatpush2.msra.mxu0 0.0
  %1562 = vmatprep.subr.mxu0 0.0
  %1563 = vmatpush2.msra.mxu0 0.0
  %1564 = vmatprep.subr.mxu0 0.0
  %1565 = vmatpush2.msra.mxu0 0.0
  %1566 = vmatprep.subr.mxu0 0.0
  %1567 = vmatpush2.msra.mxu0 0.0
  %1568 = vmatprep.subr.mxu0 0.0
  %1569 = vmatpush2.msra.mxu0 0.0
  %1570 = vmatprep.subr.mxu0 0.0
  %1571 = vmatpush2.msra.mxu0 0.0
  %1572 = vmatprep.subr.mxu0 0.0
  %1573 = vmatpush2.msra.mxu0 0.0
  %1574 = vmatprep.mubr.f32.mxu0 0.0
  %1575 = vmatmul.mubr.f32.gmra.mxu0 %v1505
  %v1576 = vpop.f32.mrf.mxu0
  %v1577 = vadd.f32 %v1502, %v1576
  %v1578 = vpop.f32.mrf.mxu0
  %1579 = vmatprep.mubr.f32.mxu0 0.0
  %1580 = vmatmul.mubr.f32.gmra.mxu0 %v1508
  %v1581 = vpop.f32.mrf.mxu0
  %v1582 = vadd.f32 %v1502, %v1581
  %v1583 = vpop.f32.mrf.mxu0
  %1584 = vdwg.mxu0
  %v1585 = vadd.f32 %v29, %v1577
  %v1586 = vadd.f32 %v30, %v1582
  %v1587 = vsel %vm42, %v1585, 0.0
  %1588 = vadd.xlane.f32.xlu0 %v1587
  %v1589 = vpop.xlane.xlu0 %1588
  %v1590 = vsel %vm42, %v1586, 0.0
  %1591 = vadd.xlane.f32.xlu0 %v1590
  %v1592 = vpop.xlane.xlu0 %1591
  %v1593 = vrcp.pop 32.0
  %v1594 = vmul.f32 %v1589, %v1593
  %v1595 = vmul.f32 %v1592, %v1593
  %v1596 = vsub.f32 %v1585, %v1594
  %v1597 = vsub.f32 %v1586, %v1595
  %v1598 = vmul.f32 %v1596, %v1596
  %v1599 = vmul.f32 %v1597, %v1597
  %v1600 = vsel %vm42, %v1598, 0.0
  %1601 = vadd.xlane.f32.xlu0 %v1600
  %v1602 = vpop.xlane.xlu0 %1601
  %v1603 = vsel %vm42, %v1599, 0.0
  %1604 = vadd.xlane.f32.xlu0 %v1603
  %v1605 = vpop.xlane.xlu0 %1604
  %v1606 = vmul.f32 %v1602, %v1593
  %v1607 = vmul.f32 %v1605, %v1593
  %v1608 = vadd.f32 %v1606, 1e-05
  %v1609 = vadd.f32 %v1607, 1e-05
  %v1610 = vrsqrt.pop %v1608
  %v1611 = vrsqrt.pop %v1609
  %v1612 = vmul.f32 %v1596, %v1610
  %v1613 = vmul.f32 %v1597, %v1611
  %v1614 = vld [vmem:[%s6] sm:$0x1]
  %v1616 = vlaneseq
  %v1617 = vshrl.u32 %v1616, 7
  %v1618 = vsub.s32 0, %v1617
  %v1619 = vrot.slane %v1614, %v1618
  %v1621 = vmul.f32 %v1612, %v1619
  %v1622 = vmul.f32 %v1613, %v1619
  %v1623 = vld [vmem:[%s7] sm:$0x1]
  %v1625 = vlaneseq
  %v1626 = vshrl.u32 %v1625, 7
  %v1627 = vsub.s32 0, %v1626
  %v1628 = vrot.slane %v1623, %v1627
  %v1630 = vadd.f32 %v1621, %v1628
  %v1631 = vadd.f32 %v1622, %v1628
  %1632 = vst.msk [vmem:[%s8] sm:$0xff] %vm42, %v1630
  %1633 = vst.msk [vmem:[%s8 + $0x8] sm:$0xff] %vm42, %v1631
  // Predicated region
  $region34: #{transformer_forward.12} parent=0 // pred_check
    _
  $region35: #{transformer_forward.12} parent=0 // pred_check_branch
    %1635 = sbr.rel (0) target = $region37
  $region36: #{transformer_forward.12} parent=0 // pred_region
    _
  $region37: #{transformer_forward.12} parent=0 // pred_fallthru
    _
  // Predicated region
  $region38: #{transformer_forward.12} parent=0 // pred_check
    _
  $region39: #{transformer_forward.12} parent=0 // pred_check_branch
    %1637 = sbr.rel (0) target = $region41
  $region40: #{transformer_forward.12} parent=0 // pred_region
    _
  $region41: #{transformer_forward.12} parent=0 // pred_fallthru
    _

// kernel: transformer_forward.19
$region0: #{transformer_forward.19}
  #allocation0 [shape = 'u32[]', space=smem, size = 0x4, offset = 0x4, fixed_abs, tag = 'smem constant byte address 0x4 - core index']
  #allocation1 [shape = 'u32[144,128]{1,0:T(1,128)}', space=vmem, size = 0x12000, scoped, tag = 'internal scratch']
  %s0 = inlined_call_operand.vmem [shape: f32[12,32], index: 0, kind: input, shape index: {}]
  %s1 = inlined_call_operand.vmem [shape: f32[32,64], index: 1, kind: input, shape index: {}]
  %s2 = inlined_call_operand.vmem [shape: f32[1,64], index: 2, kind: input, shape index: {}]
  %s3 = inlined_call_operand.vmem [shape: f32[64,32], index: 3, kind: input, shape index: {}]
  %s4 = inlined_call_operand.vmem [shape: f32[1,32], index: 4, kind: input, shape index: {}]
  %s5 = inlined_call_operand.vmem [shape: f32[1,32], index: 5, kind: input, shape index: {}]
  %s6 = inlined_call_operand.vmem [shape: f32[1,32], index: 6, kind: input, shape index: {}]
  %s7 = inlined_call_operand.vmem [shape: f32[12,32], index: 7, kind: output, shape index: {}]
  %s8 = sld [smem:[#allocation0]]
  $region38: #{transformer_forward.19} parent=0
    _
  %s10 = ssub.s32 1, %s8
  %s11 = scalar_select 0, %s10, %s8
  // Predicated region
  $region2: #{transformer_forward.19} parent=0 // pred_check
    _
  $region3: #{transformer_forward.19} parent=0 // pred_check_branch
    %13 = sbr.rel (0) target = $region5
  $region4: #{transformer_forward.19} parent=0 // pred_region
    _
  $region5: #{transformer_forward.19} parent=0 // pred_fallthru
    _
  // Predicated region
  $region6: #{transformer_forward.19} parent=0 // pred_check
    _
  $region7: #{transformer_forward.19} parent=0 // pred_check_branch
    %15 = sbr.rel (0) target = $region9
  $region8: #{transformer_forward.19} parent=0 // pred_region
    _
  $region9: #{transformer_forward.19} parent=0 // pred_fallthru
    _
  // Predicated region
  $region10: #{transformer_forward.19} parent=0 // pred_check
    _
  $region11: #{transformer_forward.19} parent=0 // pred_check_branch
    %17 = sbr.rel (0) target = $region13
  $region12: #{transformer_forward.19} parent=0 // pred_region
    _
  $region13: #{transformer_forward.19} parent=0 // pred_fallthru
    _
  // Predicated region
  $region14: #{transformer_forward.19} parent=0 // pred_check
    _
  $region15: #{transformer_forward.19} parent=0 // pred_check_branch
    %19 = sbr.rel (0) target = $region17
  $region16: #{transformer_forward.19} parent=0 // pred_region
    _
  $region17: #{transformer_forward.19} parent=0 // pred_fallthru
    _
  // Predicated region
  $region18: #{transformer_forward.19} parent=0 // pred_check
    _
  $region19: #{transformer_forward.19} parent=0 // pred_check_branch
    %21 = sbr.rel (0) target = $region21
  $region20: #{transformer_forward.19} parent=0 // pred_region
    _
  $region21: #{transformer_forward.19} parent=0 // pred_fallthru
    _
  // Predicated region
  $region22: #{transformer_forward.19} parent=0 // pred_check
    _
  $region23: #{transformer_forward.19} parent=0 // pred_check_branch
    %23 = sbr.rel (0) target = $region25
  $region24: #{transformer_forward.19} parent=0 // pred_region
    _
  $region25: #{transformer_forward.19} parent=0 // pred_fallthru
    _
  // Predicated region
  $region26: #{transformer_forward.19} parent=0 // pred_check
    _
  $region27: #{transformer_forward.19} parent=0 // pred_check_branch
    %25 = sbr.rel (0) target = $region29
  $region28: #{transformer_forward.19} parent=0 // pred_region
    _
  $region29: #{transformer_forward.19} parent=0 // pred_fallthru
    _
  %v26 = vld [vmem:[%s0] sm:$0xff]
  %v27 = vld [vmem:[%s0 + $0x8] sm:$0xf]
  %v28 = vld [vmem:[%s1] sm:$0xff]
  %v29 = vld [vmem:[%s1 + $0x8] sm:$0xff]
  %v30 = vld [vmem:[%s1 + $0x10] sm:$0xff]
  %v31 = vld [vmem:[%s1 + $0x18] sm:$0xff]
  %v32 = vld [vmem:[%s2] sm:$0x1]
  %v34 = vlaneseq
  %v35 = vshrl.u32 %v34, 7
  %v36 = vsub.s32 0, %v35
  %v37 = vrot.slane %v32, %v36
  %vm39 = vcmask 261120
  %v41 = vsel %vm39, %v26, 0
  %v44 = vsel %vm39, %v27, 0
  %46 = vmatprep.subr.mxu0 0.0
  %47 = vmatpush1.msra.mxu0 0.0
  %48 = vmatprep.subr.mxu0 0.0
  %49 = vmatpush1.msra.mxu0 0.0
  %50 = vmatprep.subr.mxu0 0.0
  %51 = vmatpush1.msra.mxu0 0.0
  %52 = vmatprep.subr.mxu0 0.0
  %53 = vmatpush1.msra.mxu0 0.0
  %54 = vmatprep.subr.mxu0 0.0
  %55 = vmatpush1.msra.mxu0 0.0
  %56 = vmatprep.subr.mxu0 0.0
  %57 = vmatpush1.msra.mxu0 0.0
  %58 = vmatprep.subr.mxu0 0.0
  %59 = vmatpush1.msra.mxu0 0.0
  %60 = vmatprep.subr.mxu0 0.0
  %61 = vmatpush1.msra.mxu0 0.0
  %62 = vmatprep.subr.mxu0 0.0
  %63 = vmatpush1.msra.mxu0 0.0
  %64 = vmatprep.subr.mxu0 0.0
  %65 = vmatpush1.msra.mxu0 0.0
  %66 = vmatprep.subr.mxu0 0.0
  %67 = vmatpush1.msra.mxu0 0.0
  %68 = vmatprep.subr.mxu0 0.0
  %69 = vmatpush1.msra.mxu0 0.0
  %70 = vmatprep.subr.mxu0 0.0
  %71 = vmatpush1.msra.mxu0 %v31
  %72 = vmatprep.subr.mxu0 0.0
  %73 = vmatpush1.msra.mxu0 %v30
  %74 = vmatprep.subr.mxu0 0.0
  %75 = vmatpush1.msra.mxu0 %v29
  %76 = vmatprep.subr.mxu0 0.0
  %77 = vmatpush1.msra.mxu0 %v28
  %78 = vmatprep.subr.mxu0 0.0
  %79 = vmatpush2.msra.mxu0 0.0
  %80 = vmatprep.subr.mxu0 0.0
  %81 = vmatpush2.msra.mxu0 0.0
  %82 = vmatprep.subr.mxu0 0.0
  %83 = vmatpush2.msra.mxu0 0.0
  %84 = vmatprep.subr.mxu0 0.0
  %85 = vmatpush2.msra.mxu0 0.0
  %86 = vmatprep.subr.mxu0 0.0
  %87 = vmatpush2.msra.mxu0 0.0
  %88 = vmatprep.subr.mxu0 0.0
  %89 = vmatpush2.msra.mxu0 0.0
  %90 = vmatprep.subr.mxu0 0.0
  %91 = vmatpush2.msra.mxu0 0.0
  %92 = vmatprep.subr.mxu0 0.0
  %93 = vmatpush2.msra.mxu0 0.0
  %94 = vmatprep.subr.mxu0 0.0
  %95 = vmatpush2.msra.mxu0 0.0
  %96 = vmatprep.subr.mxu0 0.0
  %97 = vmatpush2.msra.mxu0 0.0
  %98 = vmatprep.subr.mxu0 0.0
  %99 = vmatpush2.msra.mxu0 0.0
  %100 = vmatprep.subr.mxu0 0.0
  %101 = vmatpush2.msra.mxu0 0.0
  %102 = vmatprep.subr.mxu0 0.0
  %103 = vmatpush2.msra.mxu0 0.0
  %104 = vmatprep.subr.mxu0 0.0
  %105 = vmatpush2.msra.mxu0 0.0
  %106 = vmatprep.subr.mxu0 0.0
  %107 = vmatpush2.msra.mxu0 0.0
  %108 = vmatprep.subr.mxu0 0.0
  %109 = vmatpush2.msra.mxu0 0.0
  %110 = vmatprep.mubr.f32.mxu0 0.0
  %111 = vmatmul.mubr.f32.gmra.mxu0 %v41
  %v112 = vpop.f32.mrf.mxu0
  %v113 = vadd.f32 %v37, %v112
  %v114 = vpop.f32.mrf.mxu0
  %115 = vmatprep.mubr.f32.mxu0 0.0
  %116 = vmatmul.mubr.f32.gmra.mxu0 %v44
  %v117 = vpop.f32.mrf.mxu0
  %v118 = vadd.f32 %v37, %v117
  %v119 = vpop.f32.mrf.mxu0
  %120 = vdwg.mxu0
  %v121 = vmax.f32 %v113, 0.0
  %v122 = vmax.f32 %v118, 0.0
  %v123 = vld [vmem:[%s3] sm:$0xff]
  %v124 = vld [vmem:[%s3 + $0x8] sm:$0xff]
  %v125 = vld [vmem:[%s3 + $0x10] sm:$0xff]
  %v126 = vld [vmem:[%s3 + $0x18] sm:$0xff]
  %v127 = vld [vmem:[%s3 + $0x20] sm:$0xff]
  %v128 = vld [vmem:[%s3 + $0x28] sm:$0xff]
  %v129 = vld [vmem:[%s3 + $0x30] sm:$0xff]
  %v130 = vld [vmem:[%s3 + $0x38] sm:$0xff]
  %v131 = vld [vmem:[%s4] sm:$0x1]
  %v133 = vlaneseq
  %v134 = vshrl.u32 %v133, 7
  %v135 = vsub.s32 0, %v134
  %v136 = vrot.slane %v131, %v135
  %vm138 = vcmask 523264
  %v140 = vsel %vm138, %v121, 0
  %v143 = vsel %vm138, %v122, 0
  %145 = vmatprep.subr.mxu0 0.0
  %146 = vmatpush1.msra.mxu0 0.0
  %147 = vmatprep.subr.mxu0 0.0
  %148 = vmatpush1.msra.mxu0 0.0
  %149 = vmatprep.subr.mxu0 0.0
  %150 = vmatpush1.msra.mxu0 0.0
  %151 = vmatprep.subr.mxu0 0.0
  %152 = vmatpush1.msra.mxu0 0.0
  %153 = vmatprep.subr.mxu0 0.0
  %154 = vmatpush1.msra.mxu0 0.0
  %155 = vmatprep.subr.mxu0 0.0
  %156 = vmatpush1.msra.mxu0 0.0
  %157 = vmatprep.subr.mxu0 0.0
  %158 = vmatpush1.msra.mxu0 0.0
  %159 = vmatprep.subr.mxu0 0.0
  %160 = vmatpush1.msra.mxu0 0.0
  %161 = vmatprep.subr.mxu0 0.0
  %162 = vmatpush1.msra.mxu0 %v130
  %163 = vmatprep.subr.mxu0 0.0
  %164 = vmatpush1.msra.mxu0 %v129
  %165 = vmatprep.subr.mxu0 0.0
  %166 = vmatpush1.msra.mxu0 %v128
  %167 = vmatprep.subr.mxu0 0.0
  %168 = vmatpush1.msra.mxu0 %v127
  %169 = vmatprep.subr.mxu0 0.0
  %170 = vmatpush1.msra.mxu0 %v126
  %171 = vmatprep.subr.mxu0 0.0
  %172 = vmatpush1.msra.mxu0 %v125
  %173 = vmatprep.subr.mxu0 0.0
  %174 = vmatpush1.msra.mxu0 %v124
  %175 = vmatprep.subr.mxu0 0.0
  %176 = vmatpush1.msra.mxu0 %v123
  %177 = vmatprep.subr.mxu0 0.0
  %178 = vmatpush2.msra.mxu0 0.0
  %179 = vmatprep.subr.mxu0 0.0
  %180 = vmatpush2.msra.mxu0 0.0
  %181 = vmatprep.subr.mxu0 0.0
  %182 = vmatpush2.msra.mxu0 0.0
  %183 = vmatprep.subr.mxu0 0.0
  %184 = vmatpush2.msra.mxu0 0.0
  %185 = vmatprep.subr.mxu0 0.0
  %186 = vmatpush2.msra.mxu0 0.0
  %187 = vmatprep.subr.mxu0 0.0
  %188 = vmatpush2.msra.mxu0 0.0
  %189 = vmatprep.subr.mxu0 0.0
  %190 = vmatpush2.msra.mxu0 0.0
  %191 = vmatprep.subr.mxu0 0.0
  %192 = vmatpush2.msra.mxu0 0.0
  %193 = vmatprep.subr.mxu0 0.0
  %194 = vmatpush2.msra.mxu0 0.0
  %195 = vmatprep.subr.mxu0 0.0
  %196 = vmatpush2.msra.mxu0 0.0
  %197 = vmatprep.subr.mxu0 0.0
  %198 = vmatpush2.msra.mxu0 0.0
  %199 = vmatprep.subr.mxu0 0.0
  %200 = vmatpush2.msra.mxu0 0.0
  %201 = vmatprep.subr.mxu0 0.0
  %202 = vmatpush2.msra.mxu0 0.0
  %203 = vmatprep.subr.mxu0 0.0
  %204 = vmatpush2.msra.mxu0 0.0
  %205 = vmatprep.subr.mxu0 0.0
  %206 = vmatpush2.msra.mxu0 0.0
  %207 = vmatprep.subr.mxu0 0.0
  %208 = vmatpush2.msra.mxu0 0.0
  %209 = vmatprep.mubr.f32.mxu0 0.0
  %210 = vmatmul.mubr.f32.gmra.mxu0 %v140
  %v211 = vpop.f32.mrf.mxu0
  %v212 = vadd.f32 %v136, %v211
  %v213 = vpop.f32.mrf.mxu0
  %214 = vmatprep.mubr.f32.mxu0 0.0
  %215 = vmatmul.mubr.f32.gmra.mxu0 %v143
  %v216 = vpop.f32.mrf.mxu0
  %v217 = vadd.f32 %v136, %v216
  %v218 = vpop.f32.mrf.mxu0
  %219 = vdwg.mxu0
  %v220 = vadd.f32 %v26, %v212
  %v221 = vadd.f32 %v27, %v217
  %v222 = vsel %vm39, %v220, 0.0
  %223 = vadd.xlane.f32.xlu0 %v222
  %v224 = vpop.xlane.xlu0 %223
  %vm225 = vcmask 257024
  %v226 = vsel %vm225, %v221, 0.0
  %227 = vadd.xlane.f32.xlu0 %v226
  %v228 = vpop.xlane.xlu0 %227
  %v229 = vrcp.pop 32.0
  %v230 = vmul.f32 %v224, %v229
  %v231 = vmul.f32 %v228, %v229
  %v232 = vsub.f32 %v220, %v230
  %v233 = vsub.f32 %v221, %v231
  %v234 = vmul.f32 %v232, %v232
  %v235 = vmul.f32 %v233, %v233
  %v236 = vsel %vm39, %v234, 0.0
  %237 = vadd.xlane.f32.xlu0 %v236
  %v238 = vpop.xlane.xlu0 %237
  %v239 = vsel %vm225, %v235, 0.0
  %240 = vadd.xlane.f32.xlu0 %v239
  %v241 = vpop.xlane.xlu0 %240
  %v242 = vmul.f32 %v238, %v229
  %v243 = vmul.f32 %v241, %v229
  %v244 = vadd.f32 %v242, 1e-05
  %v245 = vadd.f32 %v243, 1e-05
  %v246 = vrsqrt.pop %v244
  %v247 = vrsqrt.pop %v245
  %v248 = vmul.f32 %v232, %v246
  %v249 = vmul.f32 %v233, %v247
  %v250 = vld [vmem:[%s5] sm:$0x1]
  %v252 = vlaneseq
  %v253 = vshrl.u32 %v252, 7
  %v254 = vsub.s32 0, %v253
  %v255 = vrot.slane %v250, %v254
  %v257 = vmul.f32 %v248, %v255
  %v258 = vmul.f32 %v249, %v255
  %v259 = vld [vmem:[%s6] sm:$0x1]
  %v261 = vlaneseq
  %v262 = vshrl.u32 %v261, 7
  %v263 = vsub.s32 0, %v262
  %v264 = vrot.slane %v259, %v263
  %v266 = vadd.f32 %v257, %v264
  %v267 = vadd.f32 %v258, %v264
  %268 = vst.msk [vmem:[%s7] sm:$0xff] %vm39, %v266
  %269 = vst.msk [vmem:[%s7 + $0x8] sm:$0xf] %vm225, %v267
  // Predicated region
  $region30: #{transformer_forward.19} parent=0 // pred_check
    _
  $region31: #{transformer_forward.19} parent=0 // pred_check_branch
    %271 = sbr.rel (0) target = $region33
  $region32: #{transformer_forward.19} parent=0 // pred_region
    _
  $region33: #{transformer_forward.19} parent=0 // pred_fallthru
    _
  // Predicated region
  $region34: #{transformer_forward.19} parent=0 // pred_check
    _
  $region35: #{transformer_forward.19} parent=0 // pred_check_branch
    %273 = sbr.rel (0) target = $region37
  $region36: #{transformer_forward.19} parent=0 // pred_region
    _
  $region37: #{transformer_forward.19} parent=0 // pred_fallthru
    _

// kernel: transformer_forward.17
$region0: #{transformer_forward.17}
  #allocation0 [shape = 'u32[]', space=smem, size = 0x4, offset = 0x4, fixed_abs, tag = 'smem constant byte address 0x4 - core index']
  #allocation1 [shape = 'u32[144,128]{1,0:T(1,128)}', space=vmem, size = 0x12000, scoped, tag = 'internal scratch']
  #allocation2 [shape = 'f32[12,32]{1,0:T(8,128)}', space=vmem, size = 0x2000, scoped, tag = 'scratch operand']
  %s0 = inlined_call_operand.vmem [shape: f32[12,32], index: 0, kind: input, shape index: {}]
  %s1 = inlined_call_operand.vmem [shape: f32[32,96], index: 1, kind: input, shape index: {}]
  %s2 = inlined_call_operand.vmem [shape: f32[1,96], index: 2, kind: input, shape index: {}]
  %s3 = inlined_call_operand.vmem [shape: f32[32,32], index: 3, kind: input, shape index: {}]
  %s4 = inlined_call_operand.vmem [shape: f32[1,32], index: 4, kind: input, shape index: {}]
  %s5 = inlined_call_operand.vmem [shape: f32[1,32], index: 5, kind: input, shape index: {}]
  %s6 = inlined_call_operand.vmem [shape: f32[1,32], index: 6, kind: input, shape index: {}]
  %s7 = inlined_call_operand.vmem [shape: f32[12,32], index: 7, kind: output, shape index: {}]
  %s8 = sld [smem:[#allocation0]]
  $region38: #{transformer_forward.17} parent=0
    _
  %s10 = ssub.s32 1, %s8
  %s11 = scalar_select 0, %s10, %s8
  // Predicated region
  $region2: #{transformer_forward.17} parent=0 // pred_check
    _
  $region3: #{transformer_forward.17} parent=0 // pred_check_branch
    %13 = sbr.rel (0) target = $region5
  $region4: #{transformer_forward.17} parent=0 // pred_region
    _
  $region5: #{transformer_forward.17} parent=0 // pred_fallthru
    _
  // Predicated region
  $region6: #{transformer_forward.17} parent=0 // pred_check
    _
  $region7: #{transformer_forward.17} parent=0 // pred_check_branch
    %15 = sbr.rel (0) target = $region9
  $region8: #{transformer_forward.17} parent=0 // pred_region
    _
  $region9: #{transformer_forward.17} parent=0 // pred_fallthru
    _
  // Predicated region
  $region10: #{transformer_forward.17} parent=0 // pred_check
    _
  $region11: #{transformer_forward.17} parent=0 // pred_check_branch
    %17 = sbr.rel (0) target = $region13
  $region12: #{transformer_forward.17} parent=0 // pred_region
    _
  $region13: #{transformer_forward.17} parent=0 // pred_fallthru
    _
  // Predicated region
  $region14: #{transformer_forward.17} parent=0 // pred_check
    _
  $region15: #{transformer_forward.17} parent=0 // pred_check_branch
    %19 = sbr.rel (0) target = $region17
  $region16: #{transformer_forward.17} parent=0 // pred_region
    _
  $region17: #{transformer_forward.17} parent=0 // pred_fallthru
    _
  // Predicated region
  $region18: #{transformer_forward.17} parent=0 // pred_check
    _
  $region19: #{transformer_forward.17} parent=0 // pred_check_branch
    %21 = sbr.rel (0) target = $region21
  $region20: #{transformer_forward.17} parent=0 // pred_region
    _
  $region21: #{transformer_forward.17} parent=0 // pred_fallthru
    _
  // Predicated region
  $region22: #{transformer_forward.17} parent=0 // pred_check
    _
  $region23: #{transformer_forward.17} parent=0 // pred_check_branch
    %23 = sbr.rel (0) target = $region25
  $region24: #{transformer_forward.17} parent=0 // pred_region
    _
  $region25: #{transformer_forward.17} parent=0 // pred_fallthru
    _
  // Predicated region
  $region26: #{transformer_forward.17} parent=0 // pred_check
    _
  $region27: #{transformer_forward.17} parent=0 // pred_check_branch
    %25 = sbr.rel (0) target = $region29
  $region28: #{transformer_forward.17} parent=0 // pred_region
    _
  $region29: #{transformer_forward.17} parent=0 // pred_fallthru
    _
  %v26 = vld [vmem:[%s0] sm:$0xff]
  %v27 = vld [vmem:[%s0 + $0x8] sm:$0xf]
  %v28 = vld [vmem:[%s2] sm:$0x1]
  %v29 = vld [vmem:[%s1] sm:$0xff]
  %v30 = vld [vmem:[%s1 + $0x8] sm:$0xff]
  %v31 = vld [vmem:[%s1 + $0x10] sm:$0xff]
  %v32 = vld [vmem:[%s1 + $0x18] sm:$0xff]
  %v34 = vlaneseq
  %v35 = vshrl.u32 %v34, 7
  %v36 = vsub.s32 0, %v35
  %v37 = vrot.slane %v28, %v36
  %vm39 = vcmask 261120
  %v41 = vsel %vm39, %v26, 0
  %v44 = vsel %vm39, %v27, 0
  %46 = vmatprep.subr.mxu0 0.0
  %47 = vmatpush1.msra.mxu0 0.0
  %48 = vmatprep.subr.mxu0 0.0
  %49 = vmatpush1.msra.mxu0 0.0
  %50 = vmatprep.subr.mxu0 0.0
  %51 = vmatpush1.msra.mxu0 0.0
  %52 = vmatprep.subr.mxu0 0.0
  %53 = vmatpush1.msra.mxu0 0.0
  %54 = vmatprep.subr.mxu0 0.0
  %55 = vmatpush1.msra.mxu0 0.0
  %56 = vmatprep.subr.mxu0 0.0
  %57 = vmatpush1.msra.mxu0 0.0
  %58 = vmatprep.subr.mxu0 0.0
  %59 = vmatpush1.msra.mxu0 0.0
  %60 = vmatprep.subr.mxu0 0.0
  %61 = vmatpush1.msra.mxu0 0.0
  %62 = vmatprep.subr.mxu0 0.0
  %63 = vmatpush1.msra.mxu0 0.0
  %64 = vmatprep.subr.mxu0 0.0
  %65 = vmatpush1.msra.mxu0 0.0
  %66 = vmatprep.subr.mxu0 0.0
  %67 = vmatpush1.msra.mxu0 0.0
  %68 = vmatprep.subr.mxu0 0.0
  %69 = vmatpush1.msra.mxu0 0.0
  %70 = vmatprep.subr.mxu0 0.0
  %71 = vmatpush1.msra.mxu0 %v32
  %72 = vmatprep.subr.mxu0 0.0
  %73 = vmatpush1.msra.mxu0 %v31
  %74 = vmatprep.subr.mxu0 0.0
  %75 = vmatpush1.msra.mxu0 %v30
  %76 = vmatprep.subr.mxu0 0.0
  %77 = vmatpush1.msra.mxu0 %v29
  %78 = vmatprep.subr.mxu0 0.0
  %79 = vmatpush2.msra.mxu0 0.0
  %80 = vmatprep.subr.mxu0 0.0
  %81 = vmatpush2.msra.mxu0 0.0
  %82 = vmatprep.subr.mxu0 0.0
  %83 = vmatpush2.msra.mxu0 0.0
  %84 = vmatprep.subr.mxu0 0.0
  %85 = vmatpush2.msra.mxu0 0.0
  %86 = vmatprep.subr.mxu0 0.0
  %87 = vmatpush2.msra.mxu0 0.0
  %88 = vmatprep.subr.mxu0 0.0
  %89 = vmatpush2.msra.mxu0 0.0
  %90 = vmatprep.subr.mxu0 0.0
  %91 = vmatpush2.msra.mxu0 0.0
  %92 = vmatprep.subr.mxu0 0.0
  %93 = vmatpush2.msra.mxu0 0.0
  %94 = vmatprep.subr.mxu0 0.0
  %95 = vmatpush2.msra.mxu0 0.0
  %96 = vmatprep.subr.mxu0 0.0
  %97 = vmatpush2.msra.mxu0 0.0
  %98 = vmatprep.subr.mxu0 0.0
  %99 = vmatpush2.msra.mxu0 0.0
  %100 = vmatprep.subr.mxu0 0.0
  %101 = vmatpush2.msra.mxu0 0.0
  %102 = vmatprep.subr.mxu0 0.0
  %103 = vmatpush2.msra.mxu0 0.0
  %104 = vmatprep.subr.mxu0 0.0
  %105 = vmatpush2.msra.mxu0 0.0
  %106 = vmatprep.subr.mxu0 0.0
  %107 = vmatpush2.msra.mxu0 0.0
  %108 = vmatprep.subr.mxu0 0.0
  %109 = vmatpush2.msra.mxu0 0.0
  %110 = vmatprep.mubr.f32.mxu0 0.0
  %111 = vmatmul.mubr.f32.gmra.mxu0 %v41
  %v112 = vpop.f32.mrf.mxu0
  %v113 = vadd.f32 %v37, %v112
  %v114 = vpop.f32.mrf.mxu0
  %115 = vmatprep.mubr.f32.mxu0 0.0
  %116 = vmatmul.mubr.f32.gmra.mxu0 %v44
  %v117 = vpop.f32.mrf.mxu0
  %v118 = vadd.f32 %v37, %v117
  %v119 = vpop.f32.mrf.mxu0
  %120 = vdwg.mxu0
  %v121 = vlaneseq
  %v122 = vshrl.u32 %v121, 7
  %v123 = vlaneseq
  %v124 = vand.u32 %v123, 127
  %vm125 = vcmp.gt.s32.totalorder %v124, %v122
  %v126 = vsel %vm125, -1e+30, 0.0
  %v127 = vmul.f32 %v113, 0.35355338
  %129 = vrot.lane.b32.xlu0 %v113, 96
  %v130 = vpop.permute.xlu0 %129
  %vm131 = vcmask 64512
  %v133 = vsel %vm131, %v127, 0
  %v135 = vsel %vm131, %v130, 0
  %137 = vmatprep.subr.mxu0 0.0
  %138 = vmatpush1.xpose.msra.mxu0 0.0
  %139 = vmatprep.subr.mxu0 0.0
  %140 = vmatpush1.xpose.msra.mxu0 0.0
  %141 = vmatprep.subr.mxu0 0.0
  %142 = vmatpush1.xpose.msra.mxu0 0.0
  %143 = vmatprep.subr.mxu0 0.0
  %144 = vmatpush1.xpose.msra.mxu0 0.0
  %145 = vmatprep.subr.mxu0 0.0
  %146 = vmatpush1.xpose.msra.mxu0 0.0
  %147 = vmatprep.subr.mxu0 0.0
  %148 = vmatpush1.xpose.msra.mxu0 0.0
  %149 = vmatprep.subr.mxu0 0.0
  %150 = vmatpush1.xpose.msra.mxu0 0.0
  %151 = vmatprep.subr.mxu0 0.0
  %152 = vmatpush1.xpose.msra.mxu0 0.0
  %153 = vmatprep.subr.mxu0 0.0
  %154 = vmatpush1.xpose.msra.mxu0 0.0
  %155 = vmatprep.subr.mxu0 0.0
  %156 = vmatpush1.xpose.msra.mxu0 0.0
  %157 = vmatprep.subr.mxu0 0.0
  %158 = vmatpush1.xpose.msra.mxu0 0.0
  %159 = vmatprep.subr.mxu0 0.0
  %160 = vmatpush1.xpose.msra.mxu0 0.0
  %161 = vmatprep.subr.mxu0 0.0
  %162 = vmatpush1.xpose.msra.mxu0 0.0
  %163 = vmatprep.subr.mxu0 0.0
  %164 = vmatpush1.xpose.msra.mxu0 0.0
  %165 = vmatprep.subr.mxu0 0.0
  %166 = vmatpush1.xpose.msra.mxu0 0.0
  %167 = vmatprep.subr.mxu0 0.0
  %168 = vmatpush1.xpose.msra.mxu0 %v135
  %169 = vmatprep.subr.mxu0 0.0
  %170 = vmatpush2.xpose.msra.mxu0 0.0
  %171 = vmatprep.subr.mxu0 0.0
  %172 = vmatpush2.xpose.msra.mxu0 0.0
  %173 = vmatprep.subr.mxu0 0.0
  %174 = vmatpush2.xpose.msra.mxu0 0.0
  %175 = vmatprep.subr.mxu0 0.0
  %176 = vmatpush2.xpose.msra.mxu0 0.0
  %177 = vmatprep.subr.mxu0 0.0
  %178 = vmatpush2.xpose.msra.mxu0 0.0
  %179 = vmatprep.subr.mxu0 0.0
  %180 = vmatpush2.xpose.msra.mxu0 0.0
  %181 = vmatprep.subr.mxu0 0.0
  %182 = vmatpush2.xpose.msra.mxu0 0.0
  %183 = vmatprep.subr.mxu0 0.0
  %184 = vmatpush2.xpose.msra.mxu0 0.0
  %185 = vmatprep.subr.mxu0 0.0
  %186 = vmatpush2.xpose.msra.mxu0 0.0
  %187 = vmatprep.subr.mxu0 0.0
  %188 = vmatpush2.xpose.msra.mxu0 0.0
  %189 = vmatprep.subr.mxu0 0.0
  %190 = vmatpush2.xpose.msra.mxu0 0.0
  %191 = vmatprep.subr.mxu0 0.0
  %192 = vmatpush2.xpose.msra.mxu0 0.0
  %193 = vmatprep.subr.mxu0 0.0
  %194 = vmatpush2.xpose.msra.mxu0 0.0
  %195 = vmatprep.subr.mxu0 0.0
  %196 = vmatpush2.xpose.msra.mxu0 0.0
  %197 = vmatprep.subr.mxu0 0.0
  %198 = vmatpush2.xpose.msra.mxu0 0.0
  %199 = vmatprep.subr.mxu0 0.0
  %200 = vmatpush2.xpose.msra.mxu0 0.0
  %201 = vmatprep.mubr.f32.mxu0 0.0
  %202 = vmatmul.mubr.f32.gmra.mxu0 %v133
  %v203 = vpop.f32.mrf.mxu0
  %v204 = vadd.f32 %v126, %v203
  %v205 = vpop.f32.mrf.mxu0
  %206 = vdwg.mxu0
  %vm207 = vcmask 46080
  %v208 = vsel %vm207, %v204, -inf
  %209 = vmax.xlane.f32.xlu0 %v208
  %v210 = vpop.xlane.xlu0 %209
  %v211 = vsub.f32 %v204, %v210
  %v212 = vmul.f32 %v211, 1.442695
  %v213 = vpow.pop %v212
  %v214 = vsel %vm207, %v213, 0.0
  %215 = vadd.xlane.f32.xlu0 %v214
  %v216 = vpop.xlane.xlu0 %215
  %217 = vrot.lane.b32.xlu0 %v113, 64
  %v218 = vpop.permute.xlu0 %217
  %vm219 = vcmask 48128
  %v221 = vsel %vm219, %v213, 0
  %vm223 = vcmask 1045504
  %v224 = vsel %vm223, %v218, 0
  %226 = vmatprep.subr.mxu0 0.0
  %227 = vmatpush1.msra.mxu0 0.0
  %228 = vmatprep.subr.mxu0 0.0
  %229 = vmatpush1.msra.mxu0 0.0
  %230 = vmatprep.subr.mxu0 0.0
  %231 = vmatpush1.msra.mxu0 0.0
  %232 = vmatprep.subr.mxu0 0.0
  %233 = vmatpush1.msra.mxu0 0.0
  %234 = vmatprep.subr.mxu0 0.0
  %235 = vmatpush1.msra.mxu0 0.0
  %236 = vmatprep.subr.mxu0 0.0
  %237 = vmatpush1.msra.mxu0 0.0
  %238 = vmatprep.subr.mxu0 0.0
  %239 = vmatpush1.msra.mxu0 0.0
  %240 = vmatprep.subr.mxu0 0.0
  %241 = vmatpush1.msra.mxu0 0.0
  %242 = vmatprep.subr.mxu0 0.0
  %243 = vmatpush1.msra.mxu0 0.0
  %244 = vmatprep.subr.mxu0 0.0
  %245 = vmatpush1.msra.mxu0 0.0
  %246 = vmatprep.subr.mxu0 0.0
  %247 = vmatpush1.msra.mxu0 0.0
  %248 = vmatprep.subr.mxu0 0.0
  %249 = vmatpush1.msra.mxu0 0.0
  %250 = vmatprep.subr.mxu0 0.0
  %251 = vmatpush1.msra.mxu0 0.0
  %252 = vmatprep.subr.mxu0 0.0
  %253 = vmatpush1.msra.mxu0 0.0
  %254 = vmatprep.subr.mxu0 0.0
  %255 = vmatpush1.msra.mxu0 0.0
  %256 = vmatprep.subr.mxu0 0.0
  %257 = vmatpush1.msra.mxu0 %v224
  %258 = vmatprep.subr.mxu0 0.0
  %259 = vmatpush2.msra.mxu0 0.0
  %260 = vmatprep.subr.mxu0 0.0
  %261 = vmatpush2.msra.mxu0 0.0
  %262 = vmatprep.subr.mxu0 0.0
  %263 = vmatpush2.msra.mxu0 0.0
  %264 = vmatprep.subr.mxu0 0.0
  %265 = vmatpush2.msra.mxu0 0.0
  %266 = vmatprep.subr.mxu0 0.0
  %267 = vmatpush2.msra.mxu0 0.0
  %268 = vmatprep.subr.mxu0 0.0
  %269 = vmatpush2.msra.mxu0 0.0
  %270 = vmatprep.subr.mxu0 0.0
  %271 = vmatpush2.msra.mxu0 0.0
  %272 = vmatprep.subr.mxu0 0.0
  %273 = vmatpush2.msra.mxu0 0.0
  %274 = vmatprep.subr.mxu0 0.0
  %275 = vmatpush2.msra.mxu0 0.0
  %276 = vmatprep.subr.mxu0 0.0
  %277 = vmatpush2.msra.mxu0 0.0
  %278 = vmatprep.subr.mxu0 0.0
  %279 = vmatpush2.msra.mxu0 0.0
  %280 = vmatprep.subr.mxu0 0.0
  %281 = vmatpush2.msra.mxu0 0.0
  %282 = vmatprep.subr.mxu0 0.0
  %283 = vmatpush2.msra.mxu0 0.0
  %284 = vmatprep.subr.mxu0 0.0
  %285 = vmatpush2.msra.mxu0 0.0
  %286 = vmatprep.subr.mxu0 0.0
  %287 = vmatpush2.msra.mxu0 0.0
  %288 = vmatprep.subr.mxu0 0.0
  %289 = vmatpush2.msra.mxu0 0.0
  %290 = vmatprep.mubr.f32.mxu0 0.0
  %291 = vmatmul.mubr.f32.gmra.mxu0 %v221
  %v292 = vpop.f32.mrf.mxu0
  %v293 = vadd.f32 0.0, %v292
  %v294 = vpop.f32.mrf.mxu0
  %295 = vdwg.mxu0
  %v296 = vrcp.pop %v216
  %v297 = vmul.f32 %v293, %v296
  %vm298 = vcmask 62464
  %299 = vst.msk [vmem:[#allocation2] sm:$0x3f] %vm298, %v297
  %300 = vrot.lane.b32.xlu0 %v127, 120
  %v301 = vpop.permute.xlu0 %300
  %302 = vrot.lane.b32.xlu0 %v113, 88
  %v303 = vpop.permute.xlu0 %302
  %v304 = vsel %vm131, %v301, 0
  %v306 = vsel %vm131, %v303, 0
  %308 = vmatprep.subr.mxu0 0.0
  %309 = vmatpush1.xpose.msra.mxu0 0.0
  %310 = vmatprep.subr.mxu0 0.0
  %311 = vmatpush1.xpose.msra.mxu0 0.0
  %312 = vmatprep.subr.mxu0 0.0
  %313 = vmatpush1.xpose.msra.mxu0 0.0
  %314 = vmatprep.subr.mxu0 0.0
  %315 = vmatpush1.xpose.msra.mxu0 0.0
  %316 = vmatprep.subr.mxu0 0.0
  %317 = vmatpush1.xpose.msra.mxu0 0.0
  %318 = vmatprep.subr.mxu0 0.0
  %319 = vmatpush1.xpose.msra.mxu0 0.0
  %320 = vmatprep.subr.mxu0 0.0
  %321 = vmatpush1.xpose.msra.mxu0 0.0
  %322 = vmatprep.subr.mxu0 0.0
  %323 = vmatpush1.xpose.msra.mxu0 0.0
  %324 = vmatprep.subr.mxu0 0.0
  %325 = vmatpush1.xpose.msra.mxu0 0.0
  %326 = vmatprep.subr.mxu0 0.0
  %327 = vmatpush1.xpose.msra.mxu0 0.0
  %328 = vmatprep.subr.mxu0 0.0
  %329 = vmatpush1.xpose.msra.mxu0 0.0
  %330 = vmatprep.subr.mxu0 0.0
  %331 = vmatpush1.xpose.msra.mxu0 0.0
  %332 = vmatprep.subr.mxu0 0.0
  %333 = vmatpush1.xpose.msra.mxu0 0.0
  %334 = vmatprep.subr.mxu0 0.0
  %335 = vmatpush1.xpose.msra.mxu0 0.0
  %336 = vmatprep.subr.mxu0 0.0
  %337 = vmatpush1.xpose.msra.mxu0 0.0
  %338 = vmatprep.subr.mxu0 0.0
  %339 = vmatpush1.xpose.msra.mxu0 %v306
  %340 = vmatprep.subr.mxu0 0.0
  %341 = vmatpush2.xpose.msra.mxu0 0.0
  %342 = vmatprep.subr.mxu0 0.0
  %343 = vmatpush2.xpose.msra.mxu0 0.0
  %344 = vmatprep.subr.mxu0 0.0
  %345 = vmatpush2.xpose.msra.mxu0 0.0
  %346 = vmatprep.subr.mxu0 0.0
  %347 = vmatpush2.xpose.msra.mxu0 0.0
  %348 = vmatprep.subr.mxu0 0.0
  %349 = vmatpush2.xpose.msra.mxu0 0.0
  %350 = vmatprep.subr.mxu0 0.0
  %351 = vmatpush2.xpose.msra.mxu0 0.0
  %352 = vmatprep.subr.mxu0 0.0
  %353 = vmatpush2.xpose.msra.mxu0 0.0
  %354 = vmatprep.subr.mxu0 0.0
  %355 = vmatpush2.xpose.msra.mxu0 0.0
  %356 = vmatprep.subr.mxu0 0.0
  %357 = vmatpush2.xpose.msra.mxu0 0.0
  %358 = vmatprep.subr.mxu0 0.0
  %359 = vmatpush2.xpose.msra.mxu0 0.0
  %360 = vmatprep.subr.mxu0 0.0
  %361 = vmatpush2.xpose.msra.mxu0 0.0
  %362 = vmatprep.subr.mxu0 0.0
  %363 = vmatpush2.xpose.msra.mxu0 0.0
  %364 = vmatprep.subr.mxu0 0.0
  %365 = vmatpush2.xpose.msra.mxu0 0.0
  %366 = vmatprep.subr.mxu0 0.0
  %367 = vmatpush2.xpose.msra.mxu0 0.0
  %368 = vmatprep.subr.mxu0 0.0
  %369 = vmatpush2.xpose.msra.mxu0 0.0
  %370 = vmatprep.subr.mxu0 0.0
  %371 = vmatpush2.xpose.msra.mxu0 0.0
  %372 = vmatprep.mubr.f32.mxu0 0.0
  %373 = vmatmul.mubr.f32.gmra.mxu0 %v304
  %v374 = vpop.f32.mrf.mxu0
  %v375 = vadd.f32 %v126, %v374
  %v376 = vpop.f32.mrf.mxu0
  %377 = vdwg.mxu0
  %v378 = vsel %vm207, %v375, -inf
  %379 = vmax.xlane.f32.xlu0 %v378
  %v380 = vpop.xlane.xlu0 %379
  %v381 = vsub.f32 %v375, %v380
  %v382 = vmul.f32 %v381, 1.442695
  %v383 = vpow.pop %v382
  %v384 = vsel %vm207, %v383, 0.0
  %385 = vadd.xlane.f32.xlu0 %v384
  %v386 = vpop.xlane.xlu0 %385
  %387 = vrot.lane.b32.xlu0 %v113, 56
  %v388 = vpop.permute.xlu0 %387
  %v390 = vsel %vm219, %v383, 0
  %v392 = vsel %vm223, %v388, 0
  %394 = vmatprep.subr.mxu0 0.0
  %395 = vmatpush1.msra.mxu0 0.0
  %396 = vmatprep.subr.mxu0 0.0
  %397 = vmatpush1.msra.mxu0 0.0
  %398 = vmatprep.subr.mxu0 0.0
  %399 = vmatpush1.msra.mxu0 0.0
  %400 = vmatprep.subr.mxu0 0.0
  %401 = vmatpush1.msra.mxu0 0.0
  %402 = vmatprep.subr.mxu0 0.0
  %403 = vmatpush1.msra.mxu0 0.0
  %404 = vmatprep.subr.mxu0 0.0
  %405 = vmatpush1.msra.mxu0 0.0
  %406 = vmatprep.subr.mxu0 0.0
  %407 = vmatpush1.msra.mxu0 0.0
  %408 = vmatprep.subr.mxu0 0.0
  %409 = vmatpush1.msra.mxu0 0.0
  %410 = vmatprep.subr.mxu0 0.0
  %411 = vmatpush1.msra.mxu0 0.0
  %412 = vmatprep.subr.mxu0 0.0
  %413 = vmatpush1.msra.mxu0 0.0
  %414 = vmatprep.subr.mxu0 0.0
  %415 = vmatpush1.msra.mxu0 0.0
  %416 = vmatprep.subr.mxu0 0.0
  %417 = vmatpush1.msra.mxu0 0.0
  %418 = vmatprep.subr.mxu0 0.0
  %419 = vmatpush1.msra.mxu0 0.0
  %420 = vmatprep.subr.mxu0 0.0
  %421 = vmatpush1.msra.mxu0 0.0
  %422 = vmatprep.subr.mxu0 0.0
  %423 = vmatpush1.msra.mxu0 0.0
  %424 = vmatprep.subr.mxu0 0.0
  %425 = vmatpush1.msra.mxu0 %v392
  %426 = vmatprep.subr.mxu0 0.0
  %427 = vmatpush2.msra.mxu0 0.0
  %428 = vmatprep.subr.mxu0 0.0
  %429 = vmatpush2.msra.mxu0 0.0
  %430 = vmatprep.subr.mxu0 0.0
  %431 = vmatpush2.msra.mxu0 0.0
  %432 = vmatprep.subr.mxu0 0.0
  %433 = vmatpush2.msra.mxu0 0.0
  %434 = vmatprep.subr.mxu0 0.0
  %435 = vmatpush2.msra.mxu0 0.0
  %436 = vmatprep.subr.mxu0 0.0
  %437 = vmatpush2.msra.mxu0 0.0
  %438 = vmatprep.subr.mxu0 0.0
  %439 = vmatpush2.msra.mxu0 0.0
  %440 = vmatprep.subr.mxu0 0.0
  %441 = vmatpush2.msra.mxu0 0.0
  %442 = vmatprep.subr.mxu0 0.0
  %443 = vmatpush2.msra.mxu0 0.0
  %444 = vmatprep.subr.mxu0 0.0
  %445 = vmatpush2.msra.mxu0 0.0
  %446 = vmatprep.subr.mxu0 0.0
  %447 = vmatpush2.msra.mxu0 0.0
  %448 = vmatprep.subr.mxu0 0.0
  %449 = vmatpush2.msra.mxu0 0.0
  %450 = vmatprep.subr.mxu0 0.0
  %451 = vmatpush2.msra.mxu0 0.0
  %452 = vmatprep.subr.mxu0 0.0
  %453 = vmatpush2.msra.mxu0 0.0
  %454 = vmatprep.subr.mxu0 0.0
  %455 = vmatpush2.msra.mxu0 0.0
  %456 = vmatprep.subr.mxu0 0.0
  %457 = vmatpush2.msra.mxu0 0.0
  %458 = vmatprep.mubr.f32.mxu0 0.0
  %459 = vmatmul.mubr.f32.gmra.mxu0 %v390
  %v460 = vpop.f32.mrf.mxu0
  %v461 = vadd.f32 0.0, %v460
  %v462 = vpop.f32.mrf.mxu0
  %463 = vdwg.mxu0
  %v464 = vrcp.pop %v386
  %v465 = vmul.f32 %v461, %v464
  %467 = vrot.lane.b32.xlu0 %v465, 8
  %v468 = vpop.permute.xlu0 %467
  %vm470 = vcmask 128064
  %471 = vst.msk [vmem:[#allocation2] sm:$0x3f] %vm470, %v468
  %472 = vrot.lane.b32.xlu0 %v127, 112
  %v473 = vpop.permute.xlu0 %472
  %474 = vrot.lane.b32.xlu0 %v113, 80
  %v475 = vpop.permute.xlu0 %474
  %v476 = vsel %vm131, %v473, 0
  %v478 = vsel %vm131, %v475, 0
  %480 = vmatprep.subr.mxu0 0.0
  %481 = vmatpush1.xpose.msra.mxu0 0.0
  %482 = vmatprep.subr.mxu0 0.0
  %483 = vmatpush1.xpose.msra.mxu0 0.0
  %484 = vmatprep.subr.mxu0 0.0
  %485 = vmatpush1.xpose.msra.mxu0 0.0
  %486 = vmatprep.subr.mxu0 0.0
  %487 = vmatpush1.xpose.msra.mxu0 0.0
  %488 = vmatprep.subr.mxu0 0.0
  %489 = vmatpush1.xpose.msra.mxu0 0.0
  %490 = vmatprep.subr.mxu0 0.0
  %491 = vmatpush1.xpose.msra.mxu0 0.0
  %492 = vmatprep.subr.mxu0 0.0
  %493 = vmatpush1.xpose.msra.mxu0 0.0
  %494 = vmatprep.subr.mxu0 0.0
  %495 = vmatpush1.xpose.msra.mxu0 0.0
  %496 = vmatprep.subr.mxu0 0.0
  %497 = vmatpush1.xpose.msra.mxu0 0.0
  %498 = vmatprep.subr.mxu0 0.0
  %499 = vmatpush1.xpose.msra.mxu0 0.0
  %500 = vmatprep.subr.mxu0 0.0
  %501 = vmatpush1.xpose.msra.mxu0 0.0
  %502 = vmatprep.subr.mxu0 0.0
  %503 = vmatpush1.xpose.msra.mxu0 0.0
  %504 = vmatprep.subr.mxu0 0.0
  %505 = vmatpush1.xpose.msra.mxu0 0.0
  %506 = vmatprep.subr.mxu0 0.0
  %507 = vmatpush1.xpose.msra.mxu0 0.0
  %508 = vmatprep.subr.mxu0 0.0
  %509 = vmatpush1.xpose.msra.mxu0 0.0
  %510 = vmatprep.subr.mxu0 0.0
  %511 = vmatpush1.xpose.msra.mxu0 %v478
  %512 = vmatprep.subr.mxu0 0.0
  %513 = vmatpush2.xpose.msra.mxu0 0.0
  %514 = vmatprep.subr.mxu0 0.0
  %515 = vmatpush2.xpose.msra.mxu0 0.0
  %516 = vmatprep.subr.mxu0 0.0
  %517 = vmatpush2.xpose.msra.mxu0 0.0
  %518 = vmatprep.subr.mxu0 0.0
  %519 = vmatpush2.xpose.msra.mxu0 0.0
  %520 = vmatprep.subr.mxu0 0.0
  %521 = vmatpush2.xpose.msra.mxu0 0.0
  %522 = vmatprep.subr.mxu0 0.0
  %523 = vmatpush2.xpose.msra.mxu0 0.0
  %524 = vmatprep.subr.mxu0 0.0
  %525 = vmatpush2.xpose.msra.mxu0 0.0
  %526 = vmatprep.subr.mxu0 0.0
  %527 = vmatpush2.xpose.msra.mxu0 0.0
  %528 = vmatprep.subr.mxu0 0.0
  %529 = vmatpush2.xpose.msra.mxu0 0.0
  %530 = vmatprep.subr.mxu0 0.0
  %531 = vmatpush2.xpose.msra.mxu0 0.0
  %532 = vmatprep.subr.mxu0 0.0
  %533 = vmatpush2.xpose.msra.mxu0 0.0
  %534 = vmatprep.subr.mxu0 0.0
  %535 = vmatpush2.xpose.msra.mxu0 0.0
  %536 = vmatprep.subr.mxu0 0.0
  %537 = vmatpush2.xpose.msra.mxu0 0.0
  %538 = vmatprep.subr.mxu0 0.0
  %539 = vmatpush2.xpose.msra.mxu0 0.0
  %540 = vmatprep.subr.mxu0 0.0
  %541 = vmatpush2.xpose.msra.mxu0 0.0
  %542 = vmatprep.subr.mxu0 0.0
  %543 = vmatpush2.xpose.msra.mxu0 0.0
  %544 = vmatprep.mubr.f32.mxu0 0.0
  %545 = vmatmul.mubr.f32.gmra.mxu0 %v476
  %v546 = vpop.f32.mrf.mxu0
  %v547 = vadd.f32 %v126, %v546
  %v548 = vpop.f32.mrf.mxu0
  %549 = vdwg.mxu0
  %v550 = vsel %vm207, %v547, -inf
  %551 = vmax.xlane.f32.xlu0 %v550
  %v552 = vpop.xlane.xlu0 %551
  %v553 = vsub.f32 %v547, %v552
  %v554 = vmul.f32 %v553, 1.442695
  %v555 = vpow.pop %v554
  %v556 = vsel %vm207, %v555, 0.0
  %557 = vadd.xlane.f32.xlu0 %v556
  %v558 = vpop.xlane.xlu0 %557
  %559 = vrot.lane.b32.xlu0 %v113, 48
  %v560 = vpop.permute.xlu0 %559
  %v562 = vsel %vm219, %v555, 0
  %v564 = vsel %vm223, %v560, 0
  %566 = vmatprep.subr.mxu0 0.0
  %567 = vmatpush1.msra.mxu0 0.0
  %568 = vmatprep.subr.mxu0 0.0
  %569 = vmatpush1.msra.mxu0 0.0
  %570 = vmatprep.subr.mxu0 0.0
  %571 = vmatpush1.msra.mxu0 0.0
  %572 = vmatprep.subr.mxu0 0.0
  %573 = vmatpush1.msra.mxu0 0.0
  %574 = vmatprep.subr.mxu0 0.0
  %575 = vmatpush1.msra.mxu0 0.0
  %576 = vmatprep.subr.mxu0 0.0
  %577 = vmatpush1.msra.mxu0 0.0
  %578 = vmatprep.subr.mxu0 0.0
  %579 = vmatpush1.msra.mxu0 0.0
  %580 = vmatprep.subr.mxu0 0.0
  %581 = vmatpush1.msra.mxu0 0.0
  %582 = vmatprep.subr.mxu0 0.0
  %583 = vmatpush1.msra.mxu0 0.0
  %584 = vmatprep.subr.mxu0 0.0
  %585 = vmatpush1.msra.mxu0 0.0
  %586 = vmatprep.subr.mxu0 0.0
  %587 = vmatpush1.msra.mxu0 0.0
  %588 = vmatprep.subr.mxu0 0.0
  %589 = vmatpush1.msra.mxu0 0.0
  %590 = vmatprep.subr.mxu0 0.0
  %591 = vmatpush1.msra.mxu0 0.0
  %592 = vmatprep.subr.mxu0 0.0
  %593 = vmatpush1.msra.mxu0 0.0
  %594 = vmatprep.subr.mxu0 0.0
  %595 = vmatpush1.msra.mxu0 0.0
  %596 = vmatprep.subr.mxu0 0.0
  %597 = vmatpush1.msra.mxu0 %v564
  %598 = vmatprep.subr.mxu0 0.0
  %599 = vmatpush2.msra.mxu0 0.0
  %600 = vmatprep.subr.mxu0 0.0
  %601 = vmatpush2.msra.mxu0 0.0
  %602 = vmatprep.subr.mxu0 0.0
  %603 = vmatpush2.msra.mxu0 0.0
  %604 = vmatprep.subr.mxu0 0.0
  %605 = vmatpush2.msra.mxu0 0.0
  %606 = vmatprep.subr.mxu0 0.0
  %607 = vmatpush2.msra.mxu0 0.0
  %608 = vmatprep.subr.mxu0 0.0
  %609 = vmatpush2.msra.mxu0 0.0
  %610 = vmatprep.subr.mxu0 0.0
  %611 = vmatpush2.msra.mxu0 0.0
  %612 = vmatprep.subr.mxu0 0.0
  %613 = vmatpush2.msra.mxu0 0.0
  %614 = vmatprep.subr.mxu0 0.0
  %615 = vmatpush2.msra.mxu0 0.0
  %616 = vmatprep.subr.mxu0 0.0
  %617 = vmatpush2.msra.mxu0 0.0
  %618 = vmatprep.subr.mxu0 0.0
  %619 = vmatpush2.msra.mxu0 0.0
  %620 = vmatprep.subr.mxu0 0.0
  %621 = vmatpush2.msra.mxu0 0.0
  %622 = vmatprep.subr.mxu0 0.0
  %623 = vmatpush2.msra.mxu0 0.0
  %624 = vmatprep.subr.mxu0 0.0
  %625 = vmatpush2.msra.mxu0 0.0
  %626 = vmatprep.subr.mxu0 0.0
  %627 = vmatpush2.msra.mxu0 0.0
  %628 = vmatprep.subr.mxu0 0.0
  %629 = vmatpush2.msra.mxu0 0.0
  %630 = vmatprep.mubr.f32.mxu0 0.0
  %631 = vmatmul.mubr.f32.gmra.mxu0 %v562
  %v632 = vpop.f32.mrf.mxu0
  %v633 = vadd.f32 0.0, %v632
  %v634 = vpop.f32.mrf.mxu0
  %635 = vdwg.mxu0
  %v636 = vrcp.pop %v558
  %v637 = vmul.f32 %v633, %v636
  %639 = vrot.lane.b32.xlu0 %v637, 16
  %v640 = vpop.permute.xlu0 %639
  %vm642 = vcmask 193664
  %643 = vst.msk [vmem:[#allocation2] sm:$0x3f] %vm642, %v640
  %644 = vrot.lane.b32.xlu0 %v127, 104
  %v645 = vpop.permute.xlu0 %644
  %646 = vrot.lane.b32.xlu0 %v113, 72
  %v647 = vpop.permute.xlu0 %646
  %v648 = vsel %vm131, %v645, 0
  %v650 = vsel %vm131, %v647, 0
  %652 = vmatprep.subr.mxu0 0.0
  %653 = vmatpush1.xpose.msra.mxu0 0.0
  %654 = vmatprep.subr.mxu0 0.0
  %655 = vmatpush1.xpose.msra.mxu0 0.0
  %656 = vmatprep.subr.mxu0 0.0
  %657 = vmatpush1.xpose.msra.mxu0 0.0
  %658 = vmatprep.subr.mxu0 0.0
  %659 = vmatpush1.xpose.msra.mxu0 0.0
  %660 = vmatprep.subr.mxu0 0.0
  %661 = vmatpush1.xpose.msra.mxu0 0.0
  %662 = vmatprep.subr.mxu0 0.0
  %663 = vmatpush1.xpose.msra.mxu0 0.0
  %664 = vmatprep.subr.mxu0 0.0
  %665 = vmatpush1.xpose.msra.mxu0 0.0
  %666 = vmatprep.subr.mxu0 0.0
  %667 = vmatpush1.xpose.msra.mxu0 0.0
  %668 = vmatprep.subr.mxu0 0.0
  %669 = vmatpush1.xpose.msra.mxu0 0.0
  %670 = vmatprep.subr.mxu0 0.0
  %671 = vmatpush1.xpose.msra.mxu0 0.0
  %672 = vmatprep.subr.mxu0 0.0
  %673 = vmatpush1.xpose.msra.mxu0 0.0
  %674 = vmatprep.subr.mxu0 0.0
  %675 = vmatpush1.xpose.msra.mxu0 0.0
  %676 = vmatprep.subr.mxu0 0.0
  %677 = vmatpush1.xpose.msra.mxu0 0.0
  %678 = vmatprep.subr.mxu0 0.0
  %679 = vmatpush1.xpose.msra.mxu0 0.0
  %680 = vmatprep.subr.mxu0 0.0
  %681 = vmatpush1.xpose.msra.mxu0 0.0
  %682 = vmatprep.subr.mxu0 0.0
  %683 = vmatpush1.xpose.msra.mxu0 %v650
  %684 = vmatprep.subr.mxu0 0.0
  %685 = vmatpush2.xpose.msra.mxu0 0.0
  %686 = vmatprep.subr.mxu0 0.0
  %687 = vmatpush2.xpose.msra.mxu0 0.0
  %688 = vmatprep.subr.mxu0 0.0
  %689 = vmatpush2.xpose.msra.mxu0 0.0
  %690 = vmatprep.subr.mxu0 0.0
  %691 = vmatpush2.xpose.msra.mxu0 0.0
  %692 = vmatprep.subr.mxu0 0.0
  %693 = vmatpush2.xpose.msra.mxu0 0.0
  %694 = vmatprep.subr.mxu0 0.0
  %695 = vmatpush2.xpose.msra.mxu0 0.0
  %696 = vmatprep.subr.mxu0 0.0
  %697 = vmatpush2.xpose.msra.mxu0 0.0
  %698 = vmatprep.subr.mxu0 0.0
  %699 = vmatpush2.xpose.msra.mxu0 0.0
  %700 = vmatprep.subr.mxu0 0.0
  %701 = vmatpush2.xpose.msra.mxu0 0.0
  %702 = vmatprep.subr.mxu0 0.0
  %703 = vmatpush2.xpose.msra.mxu0 0.0
  %704 = vmatprep.subr.mxu0 0.0
  %705 = vmatpush2.xpose.msra.mxu0 0.0
  %706 = vmatprep.subr.mxu0 0.0
  %707 = vmatpush2.xpose.msra.mxu0 0.0
  %708 = vmatprep.subr.mxu0 0.0
  %709 = vmatpush2.xpose.msra.mxu0 0.0
  %710 = vmatprep.subr.mxu0 0.0
  %711 = vmatpush2.xpose.msra.mxu0 0.0
  %712 = vmatprep.subr.mxu0 0.0
  %713 = vmatpush2.xpose.msra.mxu0 0.0
  %714 = vmatprep.subr.mxu0 0.0
  %715 = vmatpush2.xpose.msra.mxu0 0.0
  %716 = vmatprep.mubr.f32.mxu0 0.0
  %717 = vmatmul.mubr.f32.gmra.mxu0 %v648
  %v718 = vpop.f32.mrf.mxu0
  %v719 = vadd.f32 %v126, %v718
  %v720 = vpop.f32.mrf.mxu0
  %721 = vdwg.mxu0
  %v722 = vsel %vm207, %v719, -inf
  %723 = vmax.xlane.f32.xlu0 %v722
  %v724 = vpop.xlane.xlu0 %723
  %v725 = vsub.f32 %v719, %v724
  %v726 = vmul.f32 %v725, 1.442695
  %v727 = vpow.pop %v726
  %v728 = vsel %vm207, %v727, 0.0
  %729 = vadd.xlane.f32.xlu0 %v728
  %v730 = vpop.xlane.xlu0 %729
  %731 = vrot.lane.b32.xlu0 %v113, 40
  %v732 = vpop.permute.xlu0 %731
  %v734 = vsel %vm219, %v727, 0
  %v736 = vsel %vm223, %v732, 0
  %738 = vmatprep.subr.mxu0 0.0
  %739 = vmatpush1.msra.mxu0 0.0
  %740 = vmatprep.subr.mxu0 0.0
  %741 = vmatpush1.msra.mxu0 0.0
  %742 = vmatprep.subr.mxu0 0.0
  %743 = vmatpush1.msra.mxu0 0.0
  %744 = vmatprep.subr.mxu0 0.0
  %745 = vmatpush1.msra.mxu0 0.0
  %746 = vmatprep.subr.mxu0 0.0
  %747 = vmatpush1.msra.mxu0 0.0
  %748 = vmatprep.subr.mxu0 0.0
  %749 = vmatpush1.msra.mxu0 0.0
  %750 = vmatprep.subr.mxu0 0.0
  %751 = vmatpush1.msra.mxu0 0.0
  %752 = vmatprep.subr.mxu0 0.0
  %753 = vmatpush1.msra.mxu0 0.0
  %754 = vmatprep.subr.mxu0 0.0
  %755 = vmatpush1.msra.mxu0 0.0
  %756 = vmatprep.subr.mxu0 0.0
  %757 = vmatpush1.msra.mxu0 0.0
  %758 = vmatprep.subr.mxu0 0.0
  %759 = vmatpush1.msra.mxu0 0.0
  %760 = vmatprep.subr.mxu0 0.0
  %761 = vmatpush1.msra.mxu0 0.0
  %762 = vmatprep.subr.mxu0 0.0
  %763 = vmatpush1.msra.mxu0 0.0
  %764 = vmatprep.subr.mxu0 0.0
  %765 = vmatpush1.msra.mxu0 0.0
  %766 = vmatprep.subr.mxu0 0.0
  %767 = vmatpush1.msra.mxu0 0.0
  %768 = vmatprep.subr.mxu0 0.0
  %769 = vmatpush1.msra.mxu0 %v736
  %770 = vmatprep.subr.mxu0 0.0
  %771 = vmatpush2.msra.mxu0 0.0
  %772 = vmatprep.subr.mxu0 0.0
  %773 = vmatpush2.msra.mxu0 0.0
  %774 = vmatprep.subr.mxu0 0.0
  %775 = vmatpush2.msra.mxu0 0.0
  %776 = vmatprep.subr.mxu0 0.0
  %777 = vmatpush2.msra.mxu0 0.0
  %778 = vmatprep.subr.mxu0 0.0
  %779 = vmatpush2.msra.mxu0 0.0
  %780 = vmatprep.subr.mxu0 0.0
  %781 = vmatpush2.msra.mxu0 0.0
  %782 = vmatprep.subr.mxu0 0.0
  %783 = vmatpush2.msra.mxu0 0.0
  %784 = vmatprep.subr.mxu0 0.0
  %785 = vmatpush2.msra.mxu0 0.0
  %786 = vmatprep.subr.mxu0 0.0
  %787 = vmatpush2.msra.mxu0 0.0
  %788 = vmatprep.subr.mxu0 0.0
  %789 = vmatpush2.msra.mxu0 0.0
  %790 = vmatprep.subr.mxu0 0.0
  %791 = vmatpush2.msra.mxu0 0.0
  %792 = vmatprep.subr.mxu0 0.0
  %793 = vmatpush2.msra.mxu0 0.0
  %794 = vmatprep.subr.mxu0 0.0
  %795 = vmatpush2.msra.mxu0 0.0
  %796 = vmatprep.subr.mxu0 0.0
  %797 = vmatpush2.msra.mxu0 0.0
  %798 = vmatprep.subr.mxu0 0.0
  %799 = vmatpush2.msra.mxu0 0.0
  %800 = vmatprep.subr.mxu0 0.0
  %801 = vmatpush2.msra.mxu0 0.0
  %802 = vmatprep.mubr.f32.mxu0 0.0
  %803 = vmatmul.mubr.f32.gmra.mxu0 %v734
  %v804 = vpop.f32.mrf.mxu0
  %v805 = vadd.f32 0.0, %v804
  %v806 = vpop.f32.mrf.mxu0
  %807 = vdwg.mxu0
  %v808 = vrcp.pop %v730
  %v809 = vmul.f32 %v805, %v808
  %811 = vrot.lane.b32.xlu0 %v809, 24
  %v812 = vpop.permute.xlu0 %811
  %vm814 = vcmask 259264
  %815 = vst.msk [vmem:[#allocation2] sm:$0x3f] %vm814, %v812
  %v816 = vmul.f32 %v118, 0.35355338
  %vm818 = vcmask 1041408
  %v819 = vrot.slane %v127, 6
  %v820 = vrot.slane %v816, 6
  %v821 = vsel %vm818, %v819, %v820
  %v823 = vrot.slane %v113, 6
  %v824 = vrot.slane %v118, 6
  %v825 = vsel %vm818, %v823, %v824
  %826 = vrot.lane.b32.xlu0 %v825, 96
  %v827 = vpop.permute.xlu0 %826
  %v828 = vsel %vm131, %v821, 0
  %v830 = vsel %vm131, %v827, 0
  %832 = vmatprep.subr.mxu0 0.0
  %833 = vmatpush1.xpose.msra.mxu0 0.0
  %834 = vmatprep.subr.mxu0 0.0
  %835 = vmatpush1.xpose.msra.mxu0 0.0
  %836 = vmatprep.subr.mxu0 0.0
  %837 = vmatpush1.xpose.msra.mxu0 0.0
  %838 = vmatprep.subr.mxu0 0.0
  %839 = vmatpush1.xpose.msra.mxu0 0.0
  %840 = vmatprep.subr.mxu0 0.0
  %841 = vmatpush1.xpose.msra.mxu0 0.0
  %842 = vmatprep.subr.mxu0 0.0
  %843 = vmatpush1.xpose.msra.mxu0 0.0
  %844 = vmatprep.subr.mxu0 0.0
  %845 = vmatpush1.xpose.msra.mxu0 0.0
  %846 = vmatprep.subr.mxu0 0.0
  %847 = vmatpush1.xpose.msra.mxu0 0.0
  %848 = vmatprep.subr.mxu0 0.0
  %849 = vmatpush1.xpose.msra.mxu0 0.0
  %850 = vmatprep.subr.mxu0 0.0
  %851 = vmatpush1.xpose.msra.mxu0 0.0
  %852 = vmatprep.subr.mxu0 0.0
  %853 = vmatpush1.xpose.msra.mxu0 0.0
  %854 = vmatprep.subr.mxu0 0.0
  %855 = vmatpush1.xpose.msra.mxu0 0.0
  %856 = vmatprep.subr.mxu0 0.0
  %857 = vmatpush1.xpose.msra.mxu0 0.0
  %858 = vmatprep.subr.mxu0 0.0
  %859 = vmatpush1.xpose.msra.mxu0 0.0
  %860 = vmatprep.subr.mxu0 0.0
  %861 = vmatpush1.xpose.msra.mxu0 0.0
  %862 = vmatprep.subr.mxu0 0.0
  %863 = vmatpush1.xpose.msra.mxu0 %v830
  %864 = vmatprep.subr.mxu0 0.0
  %865 = vmatpush2.xpose.msra.mxu0 0.0
  %866 = vmatprep.subr.mxu0 0.0
  %867 = vmatpush2.xpose.msra.mxu0 0.0
  %868 = vmatprep.subr.mxu0 0.0
  %869 = vmatpush2.xpose.msra.mxu0 0.0
  %870 = vmatprep.subr.mxu0 0.0
  %871 = vmatpush2.xpose.msra.mxu0 0.0
  %872 = vmatprep.subr.mxu0 0.0
  %873 = vmatpush2.xpose.msra.mxu0 0.0
  %874 = vmatprep.subr.mxu0 0.0
  %875 = vmatpush2.xpose.msra.mxu0 0.0
  %876 = vmatprep.subr.mxu0 0.0
  %877 = vmatpush2.xpose.msra.mxu0 0.0
  %878 = vmatprep.subr.mxu0 0.0
  %879 = vmatpush2.xpose.msra.mxu0 0.0
  %880 = vmatprep.subr.mxu0 0.0
  %881 = vmatpush2.xpose.msra.mxu0 0.0
  %882 = vmatprep.subr.mxu0 0.0
  %883 = vmatpush2.xpose.msra.mxu0 0.0
  %884 = vmatprep.subr.mxu0 0.0
  %885 = vmatpush2.xpose.msra.mxu0 0.0
  %886 = vmatprep.subr.mxu0 0.0
  %887 = vmatpush2.xpose.msra.mxu0 0.0
  %888 = vmatprep.subr.mxu0 0.0
  %889 = vmatpush2.xpose.msra.mxu0 0.0
  %890 = vmatprep.subr.mxu0 0.0
  %891 = vmatpush2.xpose.msra.mxu0 0.0
  %892 = vmatprep.subr.mxu0 0.0
  %893 = vmatpush2.xpose.msra.mxu0 0.0
  %894 = vmatprep.subr.mxu0 0.0
  %895 = vmatpush2.xpose.msra.mxu0 0.0
  %896 = vmatprep.mubr.f32.mxu0 0.0
  %897 = vmatmul.mubr.f32.gmra.mxu0 %v828
  %v898 = vpop.f32.mrf.mxu0
  %v899 = vadd.f32 %v126, %v898
  %v900 = vpop.f32.mrf.mxu0
  %901 = vdwg.mxu0
  %v902 = vsel %vm207, %v899, -inf
  %903 = vmax.xlane.f32.xlu0 %v902
  %v904 = vpop.xlane.xlu0 %903
  %v905 = vsub.f32 %v899, %v904
  %v906 = vmul.f32 %v905, 1.442695
  %v907 = vpow.pop %v906
  %v908 = vsel %vm207, %v907, 0.0
  %909 = vadd.xlane.f32.xlu0 %v908
  %v910 = vpop.xlane.xlu0 %909
  %911 = vrot.lane.b32.xlu0 %v825, 64
  %v912 = vpop.permute.xlu0 %911
  %v914 = vsel %vm219, %v907, 0
  %v916 = vsel %vm223, %v912, 0
  %918 = vmatprep.subr.mxu0 0.0
  %919 = vmatpush1.msra.mxu0 0.0
  %920 = vmatprep.subr.mxu0 0.0
  %921 = vmatpush1.msra.mxu0 0.0
  %922 = vmatprep.subr.mxu0 0.0
  %923 = vmatpush1.msra.mxu0 0.0
  %924 = vmatprep.subr.mxu0 0.0
  %925 = vmatpush1.msra.mxu0 0.0
  %926 = vmatprep.subr.mxu0 0.0
  %927 = vmatpush1.msra.mxu0 0.0
  %928 = vmatprep.subr.mxu0 0.0
  %929 = vmatpush1.msra.mxu0 0.0
  %930 = vmatprep.subr.mxu0 0.0
  %931 = vmatpush1.msra.mxu0 0.0
  %932 = vmatprep.subr.mxu0 0.0
  %933 = vmatpush1.msra.mxu0 0.0
  %934 = vmatprep.subr.mxu0 0.0
  %935 = vmatpush1.msra.mxu0 0.0
  %936 = vmatprep.subr.mxu0 0.0
  %937 = vmatpush1.msra.mxu0 0.0
  %938 = vmatprep.subr.mxu0 0.0
  %939 = vmatpush1.msra.mxu0 0.0
  %940 = vmatprep.subr.mxu0 0.0
  %941 = vmatpush1.msra.mxu0 0.0
  %942 = vmatprep.subr.mxu0 0.0
  %943 = vmatpush1.msra.mxu0 0.0
  %944 = vmatprep.subr.mxu0 0.0
  %945 = vmatpush1.msra.mxu0 0.0
  %946 = vmatprep.subr.mxu0 0.0
  %947 = vmatpush1.msra.mxu0 0.0
  %948 = vmatprep.subr.mxu0 0.0
  %949 = vmatpush1.msra.mxu0 %v916
  %950 = vmatprep.subr.mxu0 0.0
  %951 = vmatpush2.msra.mxu0 0.0
  %952 = vmatprep.subr.mxu0 0.0
  %953 = vmatpush2.msra.mxu0 0.0
  %954 = vmatprep.subr.mxu0 0.0
  %955 = vmatpush2.msra.mxu0 0.0
  %956 = vmatprep.subr.mxu0 0.0
  %957 = vmatpush2.msra.mxu0 0.0
  %958 = vmatprep.subr.mxu0 0.0
  %959 = vmatpush2.msra.mxu0 0.0
  %960 = vmatprep.subr.mxu0 0.0
  %961 = vmatpush2.msra.mxu0 0.0
  %962 = vmatprep.subr.mxu0 0.0
  %963 = vmatpush2.msra.mxu0 0.0
  %964 = vmatprep.subr.mxu0 0.0
  %965 = vmatpush2.msra.mxu0 0.0
  %966 = vmatprep.subr.mxu0 0.0
  %967 = vmatpush2.msra.mxu0 0.0
  %968 = vmatprep.subr.mxu0 0.0
  %969 = vmatpush2.msra.mxu0 0.0
  %970 = vmatprep.subr.mxu0 0.0
  %971 = vmatpush2.msra.mxu0 0.0
  %972 = vmatprep.subr.mxu0 0.0
  %973 = vmatpush2.msra.mxu0 0.0
  %974 = vmatprep.subr.mxu0 0.0
  %975 = vmatpush2.msra.mxu0 0.0
  %976 = vmatprep.subr.mxu0 0.0
  %977 = vmatpush2.msra.mxu0 0.0
  %978 = vmatprep.subr.mxu0 0.0
  %979 = vmatpush2.msra.mxu0 0.0
  %980 = vmatprep.subr.mxu0 0.0
  %981 = vmatpush2.msra.mxu0 0.0
  %982 = vmatprep.mubr.f32.mxu0 0.0
  %983 = vmatmul.mubr.f32.gmra.mxu0 %v914
  %v984 = vpop.f32.mrf.mxu0
  %v985 = vadd.f32 0.0, %v984
  %v986 = vpop.f32.mrf.mxu0
  %987 = vdwg.mxu0
  %v988 = vrcp.pop %v910
  %v989 = vmul.f32 %v985, %v988
  %990 = vst.msk [vmem:[#allocation2 + $0x6] sm:$0x3f] %vm298, %v989
  %991 = vrot.lane.b32.xlu0 %v821, 120
  %v992 = vpop.permute.xlu0 %991
  %993 = vrot.lane.b32.xlu0 %v825, 88
  %v994 = vpop.permute.xlu0 %993
  %v995 = vsel %vm131, %v992, 0
  %v997 = vsel %vm131, %v994, 0
  %999 = vmatprep.subr.mxu0 0.0
  %1000 = vmatpush1.xpose.msra.mxu0 0.0
  %1001 = vmatprep.subr.mxu0 0.0
  %1002 = vmatpush1.xpose.msra.mxu0 0.0
  %1003 = vmatprep.subr.mxu0 0.0
  %1004 = vmatpush1.xpose.msra.mxu0 0.0
  %1005 = vmatprep.subr.mxu0 0.0
  %1006 = vmatpush1.xpose.msra.mxu0 0.0
  %1007 = vmatprep.subr.mxu0 0.0
  %1008 = vmatpush1.xpose.msra.mxu0 0.0
  %1009 = vmatprep.subr.mxu0 0.0
  %1010 = vmatpush1.xpose.msra.mxu0 0.0
  %1011 = vmatprep.subr.mxu0 0.0
  %1012 = vmatpush1.xpose.msra.mxu0 0.0
  %1013 = vmatprep.subr.mxu0 0.0
  %1014 = vmatpush1.xpose.msra.mxu0 0.0
  %1015 = vmatprep.subr.mxu0 0.0
  %1016 = vmatpush1.xpose.msra.mxu0 0.0
  %1017 = vmatprep.subr.mxu0 0.0
  %1018 = vmatpush1.xpose.msra.mxu0 0.0
  %1019 = vmatprep.subr.mxu0 0.0
  %1020 = vmatpush1.xpose.msra.mxu0 0.0
  %1021 = vmatprep.subr.mxu0 0.0
  %1022 = vmatpush1.xpose.msra.mxu0 0.0
  %1023 = vmatprep.subr.mxu0 0.0
  %1024 = vmatpush1.xpose.msra.mxu0 0.0
  %1025 = vmatprep.subr.mxu0 0.0
  %1026 = vmatpush1.xpose.msra.mxu0 0.0
  %1027 = vmatprep.subr.mxu0 0.0
  %1028 = vmatpush1.xpose.msra.mxu0 0.0
  %1029 = vmatprep.subr.mxu0 0.0
  %1030 = vmatpush1.xpose.msra.mxu0 %v997
  %1031 = vmatprep.subr.mxu0 0.0
  %1032 = vmatpush2.xpose.msra.mxu0 0.0
  %1033 = vmatprep.subr.mxu0 0.0
  %1034 = vmatpush2.xpose.msra.mxu0 0.0
  %1035 = vmatprep.subr.mxu0 0.0
  %1036 = vmatpush2.xpose.msra.mxu0 0.0
  %1037 = vmatprep.subr.mxu0 0.0
  %1038 = vmatpush2.xpose.msra.mxu0 0.0
  %1039 = vmatprep.subr.mxu0 0.0
  %1040 = vmatpush2.xpose.msra.mxu0 0.0
  %1041 = vmatprep.subr.mxu0 0.0
  %1042 = vmatpush2.xpose.msra.mxu0 0.0
  %1043 = vmatprep.subr.mxu0 0.0
  %1044 = vmatpush2.xpose.msra.mxu0 0.0
  %1045 = vmatprep.subr.mxu0 0.0
  %1046 = vmatpush2.xpose.msra.mxu0 0.0
  %1047 = vmatprep.subr.mxu0 0.0
  %1048 = vmatpush2.xpose.msra.mxu0 0.0
  %1049 = vmatprep.subr.mxu0 0.0
  %1050 = vmatpush2.xpose.msra.mxu0 0.0
  %1051 = vmatprep.subr.mxu0 0.0
  %1052 = vmatpush2.xpose.msra.mxu0 0.0
  %1053 = vmatprep.subr.mxu0 0.0
  %1054 = vmatpush2.xpose.msra.mxu0 0.0
  %1055 = vmatprep.subr.mxu0 0.0
  %1056 = vmatpush2.xpose.msra.mxu0 0.0
  %1057 = vmatprep.subr.mxu0 0.0
  %1058 = vmatpush2.xpose.msra.mxu0 0.0
  %1059 = vmatprep.subr.mxu0 0.0
  %1060 = vmatpush2.xpose.msra.mxu0 0.0
  %1061 = vmatprep.subr.mxu0 0.0
  %1062 = vmatpush2.xpose.msra.mxu0 0.0
  %1063 = vmatprep.mubr.f32.mxu0 0.0
  %1064 = vmatmul.mubr.f32.gmra.mxu0 %v995
  %v1065 = vpop.f32.mrf.mxu0
  %v1066 = vadd.f32 %v126, %v1065
  %v1067 = vpop.f32.mrf.mxu0
  %1068 = vdwg.mxu0
  %v1069 = vsel %vm207, %v1066, -inf
  %1070 = vmax.xlane.f32.xlu0 %v1069
  %v1071 = vpop.xlane.xlu0 %1070
  %v1072 = vsub.f32 %v1066, %v1071
  %v1073 = vmul.f32 %v1072, 1.442695
  %v1074 = vpow.pop %v1073
  %v1075 = vsel %vm207, %v1074, 0.0
  %1076 = vadd.xlane.f32.xlu0 %v1075
  %v1077 = vpop.xlane.xlu0 %1076
  %1078 = vrot.lane.b32.xlu0 %v825, 56
  %v1079 = vpop.permute.xlu0 %1078
  %v1081 = vsel %vm219, %v1074, 0
  %v1083 = vsel %vm223, %v1079, 0
  %1085 = vmatprep.subr.mxu0 0.0
  %1086 = vmatpush1.msra.mxu0 0.0
  %1087 = vmatprep.subr.mxu0 0.0
  %1088 = vmatpush1.msra.mxu0 0.0
  %1089 = vmatprep.subr.mxu0 0.0
  %1090 = vmatpush1.msra.mxu0 0.0
  %1091 = vmatprep.subr.mxu0 0.0
  %1092 = vmatpush1.msra.mxu0 0.0
  %1093 = vmatprep.subr.mxu0 0.0
  %1094 = vmatpush1.msra.mxu0 0.0
  %1095 = vmatprep.subr.mxu0 0.0
  %1096 = vmatpush1.msra.mxu0 0.0
  %1097 = vmatprep.subr.mxu0 0.0
  %1098 = vmatpush1.msra.mxu0 0.0
  %1099 = vmatprep.subr.mxu0 0.0
  %1100 = vmatpush1.msra.mxu0 0.0
  %1101 = vmatprep.subr.mxu0 0.0
  %1102 = vmatpush1.msra.mxu0 0.0
  %1103 = vmatprep.subr.mxu0 0.0
  %1104 = vmatpush1.msra.mxu0 0.0
  %1105 = vmatprep.subr.mxu0 0.0
  %1106 = vmatpush1.msra.mxu0 0.0
  %1107 = vmatprep.subr.mxu0 0.0
  %1108 = vmatpush1.msra.mxu0 0.0
  %1109 = vmatprep.subr.mxu0 0.0
  %1110 = vmatpush1.msra.mxu0 0.0
  %1111 = vmatprep.subr.mxu0 0.0
  %1112 = vmatpush1.msra.mxu0 0.0
  %1113 = vmatprep.subr.mxu0 0.0
  %1114 = vmatpush1.msra.mxu0 0.0
  %1115 = vmatprep.subr.mxu0 0.0
  %1116 = vmatpush1.msra.mxu0 %v1083
  %1117 = vmatprep.subr.mxu0 0.0
  %1118 = vmatpush2.msra.mxu0 0.0
  %1119 = vmatprep.subr.mxu0 0.0
  %1120 = vmatpush2.msra.mxu0 0.0
  %1121 = vmatprep.subr.mxu0 0.0
  %1122 = vmatpush2.msra.mxu0 0.0
  %1123 = vmatprep.subr.mxu0 0.0
  %1124 = vmatpush2.msra.mxu0 0.0
  %1125 = vmatprep.subr.mxu0 0.0
  %1126 = vmatpush2.msra.mxu0 0.0
  %1127 = vmatprep.subr.mxu0 0.0
  %1128 = vmatpush2.msra.mxu0 0.0
  %1129 = vmatprep.subr.mxu0 0.0
  %1130 = vmatpush2.msra.mxu0 0.0
  %1131 = vmatprep.subr.mxu0 0.0
  %1132 = vmatpush2.msra.mxu0 0.0
  %1133 = vmatprep.subr.mxu0 0.0
  %1134 = vmatpush2.msra.mxu0 0.0
  %1135 = vmatprep.subr.mxu0 0.0
  %1136 = vmatpush2.msra.mxu0 0.0
  %1137 = vmatprep.subr.mxu0 0.0
  %1138 = vmatpush2.msra.mxu0 0.0
  %1139 = vmatprep.subr.mxu0 0.0
  %1140 = vmatpush2.msra.mxu0 0.0
  %1141 = vmatprep.subr.mxu0 0.0
  %1142 = vmatpush2.msra.mxu0 0.0
  %1143 = vmatprep.subr.mxu0 0.0
  %1144 = vmatpush2.msra.mxu0 0.0
  %1145 = vmatprep.subr.mxu0 0.0
  %1146 = vmatpush2.msra.mxu0 0.0
  %1147 = vmatprep.subr.mxu0 0.0
  %1148 = vmatpush2.msra.mxu0 0.0
  %1149 = vmatprep.mubr.f32.mxu0 0.0
  %1150 = vmatmul.mubr.f32.gmra.mxu0 %v1081
  %v1151 = vpop.f32.mrf.mxu0
  %v1152 = vadd.f32 0.0, %v1151
  %v1153 = vpop.f32.mrf.mxu0
  %1154 = vdwg.mxu0
  %v1155 = vrcp.pop %v1077
  %v1156 = vmul.f32 %v1152, %v1155
  %1158 = vrot.lane.b32.xlu0 %v1156, 8
  %v1159 = vpop.permute.xlu0 %1158
  %1161 = vst.msk [vmem:[#allocation2 + $0x6] sm:$0x3f] %vm470, %v1159
  %1162 = vrot.lane.b32.xlu0 %v821, 112
  %v1163 = vpop.permute.xlu0 %1162
  %1164 = vrot.lane.b32.xlu0 %v825, 80
  %v1165 = vpop.permute.xlu0 %1164
  %v1166 = vsel %vm131, %v1163, 0
  %v1168 = vsel %vm131, %v1165, 0
  %1170 = vmatprep.subr.mxu0 0.0
  %1171 = vmatpush1.xpose.msra.mxu0 0.0
  %1172 = vmatprep.subr.mxu0 0.0
  %1173 = vmatpush1.xpose.msra.mxu0 0.0
  %1174 = vmatprep.subr.mxu0 0.0
  %1175 = vmatpush1.xpose.msra.mxu0 0.0
  %1176 = vmatprep.subr.mxu0 0.0
  %1177 = vmatpush1.xpose.msra.mxu0 0.0
  %1178 = vmatprep.subr.mxu0 0.0
  %1179 = vmatpush1.xpose.msra.mxu0 0.0
  %1180 = vmatprep.subr.mxu0 0.0
  %1181 = vmatpush1.xpose.msra.mxu0 0.0
  %1182 = vmatprep.subr.mxu0 0.0
  %1183 = vmatpush1.xpose.msra.mxu0 0.0
  %1184 = vmatprep.subr.mxu0 0.0
  %1185 = vmatpush1.xpose.msra.mxu0 0.0
  %1186 = vmatprep.subr.mxu0 0.0
  %1187 = vmatpush1.xpose.msra.mxu0 0.0
  %1188 = vmatprep.subr.mxu0 0.0
  %1189 = vmatpush1.xpose.msra.mxu0 0.0
  %1190 = vmatprep.subr.mxu0 0.0
  %1191 = vmatpush1.xpose.msra.mxu0 0.0
  %1192 = vmatprep.subr.mxu0 0.0
  %1193 = vmatpush1.xpose.msra.mxu0 0.0
  %1194 = vmatprep.subr.mxu0 0.0
  %1195 = vmatpush1.xpose.msra.mxu0 0.0
  %1196 = vmatprep.subr.mxu0 0.0
  %1197 = vmatpush1.xpose.msra.mxu0 0.0
  %1198 = vmatprep.subr.mxu0 0.0
  %1199 = vmatpush1.xpose.msra.mxu0 0.0
  %1200 = vmatprep.subr.mxu0 0.0
  %1201 = vmatpush1.xpose.msra.mxu0 %v1168
  %1202 = vmatprep.subr.mxu0 0.0
  %1203 = vmatpush2.xpose.msra.mxu0 0.0
  %1204 = vmatprep.subr.mxu0 0.0
  %1205 = vmatpush2.xpose.msra.mxu0 0.0
  %1206 = vmatprep.subr.mxu0 0.0
  %1207 = vmatpush2.xpose.msra.mxu0 0.0
  %1208 = vmatprep.subr.mxu0 0.0
  %1209 = vmatpush2.xpose.msra.mxu0 0.0
  %1210 = vmatprep.subr.mxu0 0.0
  %1211 = vmatpush2.xpose.msra.mxu0 0.0
  %1212 = vmatprep.subr.mxu0 0.0
  %1213 = vmatpush2.xpose.msra.mxu0 0.0
  %1214 = vmatprep.subr.mxu0 0.0
  %1215 = vmatpush2.xpose.msra.mxu0 0.0
  %1216 = vmatprep.subr.mxu0 0.0
  %1217 = vmatpush2.xpose.msra.mxu0 0.0
  %1218 = vmatprep.subr.mxu0 0.0
  %1219 = vmatpush2.xpose.msra.mxu0 0.0
  %1220 = vmatprep.subr.mxu0 0.0
  %1221 = vmatpush2.xpose.msra.mxu0 0.0
  %1222 = vmatprep.subr.mxu0 0.0
  %1223 = vmatpush2.xpose.msra.mxu0 0.0
  %1224 = vmatprep.subr.mxu0 0.0
  %1225 = vmatpush2.xpose.msra.mxu0 0.0
  %1226 = vmatprep.subr.mxu0 0.0
  %1227 = vmatpush2.xpose.msra.mxu0 0.0
  %1228 = vmatprep.subr.mxu0 0.0
  %1229 = vmatpush2.xpose.msra.mxu0 0.0
  %1230 = vmatprep.subr.mxu0 0.0
  %1231 = vmatpush2.xpose.msra.mxu0 0.0
  %1232 = vmatprep.subr.mxu0 0.0
  %1233 = vmatpush2.xpose.msra.mxu0 0.0
  %1234 = vmatprep.mubr.f32.mxu0 0.0
  %1235 = vmatmul.mubr.f32.gmra.mxu0 %v1166
  %v1236 = vpop.f32.mrf.mxu0
  %v1237 = vadd.f32 %v126, %v1236
  %v1238 = vpop.f32.mrf.mxu0
  %1239 = vdwg.mxu0
  %v1240 = vsel %vm207, %v1237, -inf
  %1241 = vmax.xlane.f32.xlu0 %v1240
  %v1242 = vpop.xlane.xlu0 %1241
  %v1243 = vsub.f32 %v1237, %v1242
  %v1244 = vmul.f32 %v1243, 1.442695
  %v1245 = vpow.pop %v1244
  %v1246 = vsel %vm207, %v1245, 0.0
  %1247 = vadd.xlane.f32.xlu0 %v1246
  %v1248 = vpop.xlane.xlu0 %1247
  %1249 = vrot.lane.b32.xlu0 %v825, 48
  %v1250 = vpop.permute.xlu0 %1249
  %v1252 = vsel %vm219, %v1245, 0
  %v1254 = vsel %vm223, %v1250, 0
  %1256 = vmatprep.subr.mxu0 0.0
  %1257 = vmatpush1.msra.mxu0 0.0
  %1258 = vmatprep.subr.mxu0 0.0
  %1259 = vmatpush1.msra.mxu0 0.0
  %1260 = vmatprep.subr.mxu0 0.0
  %1261 = vmatpush1.msra.mxu0 0.0
  %1262 = vmatprep.subr.mxu0 0.0
  %1263 = vmatpush1.msra.mxu0 0.0
  %1264 = vmatprep.subr.mxu0 0.0
  %1265 = vmatpush1.msra.mxu0 0.0
  %1266 = vmatprep.subr.mxu0 0.0
  %1267 = vmatpush1.msra.mxu0 0.0
  %1268 = vmatprep.subr.mxu0 0.0
  %1269 = vmatpush1.msra.mxu0 0.0
  %1270 = vmatprep.subr.mxu0 0.0
  %1271 = vmatpush1.msra.mxu0 0.0
  %1272 = vmatprep.subr.mxu0 0.0
  %1273 = vmatpush1.msra.mxu0 0.0
  %1274 = vmatprep.subr.mxu0 0.0
  %1275 = vmatpush1.msra.mxu0 0.0
  %1276 = vmatprep.subr.mxu0 0.0
  %1277 = vmatpush1.msra.mxu0 0.0
  %1278 = vmatprep.subr.mxu0 0.0
  %1279 = vmatpush1.msra.mxu0 0.0
  %1280 = vmatprep.subr.mxu0 0.0
  %1281 = vmatpush1.msra.mxu0 0.0
  %1282 = vmatprep.subr.mxu0 0.0
  %1283 = vmatpush1.msra.mxu0 0.0
  %1284 = vmatprep.subr.mxu0 0.0
  %1285 = vmatpush1.msra.mxu0 0.0
  %1286 = vmatprep.subr.mxu0 0.0
  %1287 = vmatpush1.msra.mxu0 %v1254
  %1288 = vmatprep.subr.mxu0 0.0
  %1289 = vmatpush2.msra.mxu0 0.0
  %1290 = vmatprep.subr.mxu0 0.0
  %1291 = vmatpush2.msra.mxu0 0.0
  %1292 = vmatprep.subr.mxu0 0.0
  %1293 = vmatpush2.msra.mxu0 0.0
  %1294 = vmatprep.subr.mxu0 0.0
  %1295 = vmatpush2.msra.mxu0 0.0
  %1296 = vmatprep.subr.mxu0 0.0
  %1297 = vmatpush2.msra.mxu0 0.0
  %1298 = vmatprep.subr.mxu0 0.0
  %1299 = vmatpush2.msra.mxu0 0.0
  %1300 = vmatprep.subr.mxu0 0.0
  %1301 = vmatpush2.msra.mxu0 0.0
  %1302 = vmatprep.subr.mxu0 0.0
  %1303 = vmatpush2.msra.mxu0 0.0
  %1304 = vmatprep.subr.mxu0 0.0
  %1305 = vmatpush2.msra.mxu0 0.0
  %1306 = vmatprep.subr.mxu0 0.0
  %1307 = vmatpush2.msra.mxu0 0.0
  %1308 = vmatprep.subr.mxu0 0.0
  %1309 = vmatpush2.msra.mxu0 0.0
  %1310 = vmatprep.subr.mxu0 0.0
  %1311 = vmatpush2.msra.mxu0 0.0
  %1312 = vmatprep.subr.mxu0 0.0
  %1313 = vmatpush2.msra.mxu0 0.0
  %1314 = vmatprep.subr.mxu0 0.0
  %1315 = vmatpush2.msra.mxu0 0.0
  %1316 = vmatprep.subr.mxu0 0.0
  %1317 = vmatpush2.msra.mxu0 0.0
  %1318 = vmatprep.subr.mxu0 0.0
  %1319 = vmatpush2.msra.mxu0 0.0
  %1320 = vmatprep.mubr.f32.mxu0 0.0
  %1321 = vmatmul.mubr.f32.gmra.mxu0 %v1252
  %v1322 = vpop.f32.mrf.mxu0
  %v1323 = vadd.f32 0.0, %v1322
  %v1324 = vpop.f32.mrf.mxu0
  %1325 = vdwg.mxu0
  %v1326 = vrcp.pop %v1248
  %v1327 = vmul.f32 %v1323, %v1326
  %1329 = vrot.lane.b32.xlu0 %v1327, 16
  %v1330 = vpop.permute.xlu0 %1329
  %1332 = vst.msk [vmem:[#allocation2 + $0x6] sm:$0x3f] %vm642, %v1330
  %1333 = vrot.lane.b32.xlu0 %v821, 104
  %v1334 = vpop.permute.xlu0 %1333
  %1335 = vrot.lane.b32.xlu0 %v825, 72
  %v1336 = vpop.permute.xlu0 %1335
  %v1337 = vsel %vm131, %v1334, 0
  %v1339 = vsel %vm131, %v1336, 0
  %1341 = vmatprep.subr.mxu0 0.0
  %1342 = vmatpush1.xpose.msra.mxu0 0.0
  %1343 = vmatprep.subr.mxu0 0.0
  %1344 = vmatpush1.xpose.msra.mxu0 0.0
  %1345 = vmatprep.subr.mxu0 0.0
  %1346 = vmatpush1.xpose.msra.mxu0 0.0
  %1347 = vmatprep.subr.mxu0 0.0
  %1348 = vmatpush1.xpose.msra.mxu0 0.0
  %1349 = vmatprep.subr.mxu0 0.0
  %1350 = vmatpush1.xpose.msra.mxu0 0.0
  %1351 = vmatprep.subr.mxu0 0.0
  %1352 = vmatpush1.xpose.msra.mxu0 0.0
  %1353 = vmatprep.subr.mxu0 0.0
  %1354 = vmatpush1.xpose.msra.mxu0 0.0
  %1355 = vmatprep.subr.mxu0 0.0
  %1356 = vmatpush1.xpose.msra.mxu0 0.0
  %1357 = vmatprep.subr.mxu0 0.0
  %1358 = vmatpush1.xpose.msra.mxu0 0.0
  %1359 = vmatprep.subr.mxu0 0.0
  %1360 = vmatpush1.xpose.msra.mxu0 0.0
  %1361 = vmatprep.subr.mxu0 0.0
  %1362 = vmatpush1.xpose.msra.mxu0 0.0
  %1363 = vmatprep.subr.mxu0 0.0
  %1364 = vmatpush1.xpose.msra.mxu0 0.0
  %1365 = vmatprep.subr.mxu0 0.0
  %1366 = vmatpush1.xpose.msra.mxu0 0.0
  %1367 = vmatprep.subr.mxu0 0.0
  %1368 = vmatpush1.xpose.msra.mxu0 0.0
  %1369 = vmatprep.subr.mxu0 0.0
  %1370 = vmatpush1.xpose.msra.mxu0 0.0
  %1371 = vmatprep.subr.mxu0 0.0
  %1372 = vmatpush1.xpose.msra.mxu0 %v1339
  %1373 = vmatprep.subr.mxu0 0.0
  %1374 = vmatpush2.xpose.msra.mxu0 0.0
  %1375 = vmatprep.subr.mxu0 0.0
  %1376 = vmatpush2.xpose.msra.mxu0 0.0
  %1377 = vmatprep.subr.mxu0 0.0
  %1378 = vmatpush2.xpose.msra.mxu0 0.0
  %1379 = vmatprep.subr.mxu0 0.0
  %1380 = vmatpush2.xpose.msra.mxu0 0.0
  %1381 = vmatprep.subr.mxu0 0.0
  %1382 = vmatpush2.xpose.msra.mxu0 0.0
  %1383 = vmatprep.subr.mxu0 0.0
  %1384 = vmatpush2.xpose.msra.mxu0 0.0
  %1385 = vmatprep.subr.mxu0 0.0
  %1386 = vmatpush2.xpose.msra.mxu0 0.0
  %1387 = vmatprep.subr.mxu0 0.0
  %1388 = vmatpush2.xpose.msra.mxu0 0.0
  %1389 = vmatprep.subr.mxu0 0.0
  %1390 = vmatpush2.xpose.msra.mxu0 0.0
  %1391 = vmatprep.subr.mxu0 0.0
  %1392 = vmatpush2.xpose.msra.mxu0 0.0
  %1393 = vmatprep.subr.mxu0 0.0
  %1394 = vmatpush2.xpose.msra.mxu0 0.0
  %1395 = vmatprep.subr.mxu0 0.0
  %1396 = vmatpush2.xpose.msra.mxu0 0.0
  %1397 = vmatprep.subr.mxu0 0.0
  %1398 = vmatpush2.xpose.msra.mxu0 0.0
  %1399 = vmatprep.subr.mxu0 0.0
  %1400 = vmatpush2.xpose.msra.mxu0 0.0
  %1401 = vmatprep.subr.mxu0 0.0
  %1402 = vmatpush2.xpose.msra.mxu0 0.0
  %1403 = vmatprep.subr.mxu0 0.0
  %1404 = vmatpush2.xpose.msra.mxu0 0.0
  %1405 = vmatprep.mubr.f32.mxu0 0.0
  %1406 = vmatmul.mubr.f32.gmra.mxu0 %v1337
  %v1407 = vpop.f32.mrf.mxu0
  %v1408 = vadd.f32 %v126, %v1407
  %v1409 = vpop.f32.mrf.mxu0
  %1410 = vdwg.mxu0
  %v1411 = vsel %vm207, %v1408, -inf
  %1412 = vmax.xlane.f32.xlu0 %v1411
  %v1413 = vpop.xlane.xlu0 %1412
  %v1414 = vsub.f32 %v1408, %v1413
  %v1415 = vmul.f32 %v1414, 1.442695
  %v1416 = vpow.pop %v1415
  %v1417 = vsel %vm207, %v1416, 0.0
  %1418 = vadd.xlane.f32.xlu0 %v1417
  %v1419 = vpop.xlane.xlu0 %1418
  %1420 = vrot.lane.b32.xlu0 %v825, 40
  %v1421 = vpop.permute.xlu0 %1420
  %v1423 = vsel %vm219, %v1416, 0
  %v1425 = vsel %vm223, %v1421, 0
  %1427 = vmatprep.subr.mxu0 0.0
  %1428 = vmatpush1.msra.mxu0 0.0
  %1429 = vmatprep.subr.mxu0 0.0
  %1430 = vmatpush1.msra.mxu0 0.0
  %1431 = vmatprep.subr.mxu0 0.0
  %1432 = vmatpush1.msra.mxu0 0.0
  %1433 = vmatprep.subr.mxu0 0.0
  %1434 = vmatpush1.msra.mxu0 0.0
  %1435 = vmatprep.subr.mxu0 0.0
  %1436 = vmatpush1.msra.mxu0 0.0
  %1437 = vmatprep.subr.mxu0 0.0
  %1438 = vmatpush1.msra.mxu0 0.0
  %1439 = vmatprep.subr.mxu0 0.0
  %1440 = vmatpush1.msra.mxu0 0.0
  %1441 = vmatprep.subr.mxu0 0.0
  %1442 = vmatpush1.msra.mxu0 0.0
  %1443 = vmatprep.subr.mxu0 0.0
  %1444 = vmatpush1.msra.mxu0 0.0
  %1445 = vmatprep.subr.mxu0 0.0
  %1446 = vmatpush1.msra.mxu0 0.0
  %1447 = vmatprep.subr.mxu0 0.0
  %1448 = vmatpush1.msra.mxu0 0.0
  %1449 = vmatprep.subr.mxu0 0.0
  %1450 = vmatpush1.msra.mxu0 0.0
  %1451 = vmatprep.subr.mxu0 0.0
  %1452 = vmatpush1.msra.mxu0 0.0
  %1453 = vmatprep.subr.mxu0 0.0
  %1454 = vmatpush1.msra.mxu0 0.0
  %1455 = vmatprep.subr.mxu0 0.0
  %1456 = vmatpush1.msra.mxu0 0.0
  %1457 = vmatprep.subr.mxu0 0.0
  %1458 = vmatpush1.msra.mxu0 %v1425
  %1459 = vmatprep.subr.mxu0 0.0
  %1460 = vmatpush2.msra.mxu0 0.0
  %1461 = vmatprep.subr.mxu0 0.0
  %1462 = vmatpush2.msra.mxu0 0.0
  %1463 = vmatprep.subr.mxu0 0.0
  %1464 = vmatpush2.msra.mxu0 0.0
  %1465 = vmatprep.subr.mxu0 0.0
  %1466 = vmatpush2.msra.mxu0 0.0
  %1467 = vmatprep.subr.mxu0 0.0
  %1468 = vmatpush2.msra.mxu0 0.0
  %1469 = vmatprep.subr.mxu0 0.0
  %1470 = vmatpush2.msra.mxu0 0.0
  %1471 = vmatprep.subr.mxu0 0.0
  %1472 = vmatpush2.msra.mxu0 0.0
  %1473 = vmatprep.subr.mxu0 0.0
  %1474 = vmatpush2.msra.mxu0 0.0
  %1475 = vmatprep.subr.mxu0 0.0
  %1476 = vmatpush2.msra.mxu0 0.0
  %1477 = vmatprep.subr.mxu0 0.0
  %1478 = vmatpush2.msra.mxu0 0.0
  %1479 = vmatprep.subr.mxu0 0.0
  %1480 = vmatpush2.msra.mxu0 0.0
  %1481 = vmatprep.subr.mxu0 0.0
  %1482 = vmatpush2.msra.mxu0 0.0
  %1483 = vmatprep.subr.mxu0 0.0
  %1484 = vmatpush2.msra.mxu0 0.0
  %1485 = vmatprep.subr.mxu0 0.0
  %1486 = vmatpush2.msra.mxu0 0.0
  %1487 = vmatprep.subr.mxu0 0.0
  %1488 = vmatpush2.msra.mxu0 0.0
  %1489 = vmatprep.subr.mxu0 0.0
  %1490 = vmatpush2.msra.mxu0 0.0
  %1491 = vmatprep.mubr.f32.mxu0 0.0
  %1492 = vmatmul.mubr.f32.gmra.mxu0 %v1423
  %v1493 = vpop.f32.mrf.mxu0
  %v1494 = vadd.f32 0.0, %v1493
  %v1495 = vpop.f32.mrf.mxu0
  %1496 = vdwg.mxu0
  %v1497 = vrcp.pop %v1419
  %v1498 = vmul.f32 %v1494, %v1497
  %1500 = vrot.lane.b32.xlu0 %v1498, 24
  %v1501 = vpop.permute.xlu0 %1500
  %1503 = vst.msk [vmem:[#allocation2 + $0x6] sm:$0x3f] %vm814, %v1501
  %v1504 = vld [vmem:[#allocation2] sm:$0xff]
  %v1505 = vld [vmem:[#allocation2 + $0x8] sm:$0xf]
  %v1506 = vld [vmem:[%s3] sm:$0xff]
  %v1507 = vld [vmem:[%s3 + $0x8] sm:$0xff]
  %v1508 = vld [vmem:[%s3 + $0x10] sm:$0xff]
  %v1509 = vld [vmem:[%s3 + $0x18] sm:$0xff]
  %v1510 = vld [vmem:[%s4] sm:$0x1]
  %v1512 = vlaneseq
  %v1513 = vshrl.u32 %v1512, 7
  %v1514 = vsub.s32 0, %v1513
  %v1515 = vrot.slane %v1510, %v1514
  %v1518 = vsel %vm39, %v1504, 0
  %v1521 = vsel %vm39, %v1505, 0
  %1523 = vmatprep.subr.mxu0 0.0
  %1524 = vmatpush1.msra.mxu0 0.0
  %1525 = vmatprep.subr.mxu0 0.0
  %1526 = vmatpush1.msra.mxu0 0.0
  %1527 = vmatprep.subr.mxu0 0.0
  %1528 = vmatpush1.msra.mxu0 0.0
  %1529 = vmatprep.subr.mxu0 0.0
  %1530 = vmatpush1.msra.mxu0 0.0
  %1531 = vmatprep.subr.mxu0 0.0
  %1532 = vmatpush1.msra.mxu0 0.0
  %1533 = vmatprep.subr.mxu0 0.0
  %1534 = vmatpush1.msra.mxu0 0.0
  %1535 = vmatprep.subr.mxu0 0.0
  %1536 = vmatpush1.msra.mxu0 0.0
  %1537 = vmatprep.subr.mxu0 0.0
  %1538 = vmatpush1.msra.mxu0 0.0
  %1539 = vmatprep.subr.mxu0 0.0
  %1540 = vmatpush1.msra.mxu0 0.0
  %1541 = vmatprep.subr.mxu0 0.0
  %1542 = vmatpush1.msra.mxu0 0.0
  %1543 = vmatprep.subr.mxu0 0.0
  %1544 = vmatpush1.msra.mxu0 0.0
  %1545 = vmatprep.subr.mxu0 0.0
  %1546 = vmatpush1.msra.mxu0 0.0
  %1547 = vmatprep.subr.mxu0 0.0
  %1548 = vmatpush1.msra.mxu0 %v1509
  %1549 = vmatprep.subr.mxu0 0.0
  %1550 = vmatpush1.msra.mxu0 %v1508
  %1551 = vmatprep.subr.mxu0 0.0
  %1552 = vmatpush1.msra.mxu0 %v1507
  %1553 = vmatprep.subr.mxu0 0.0
  %1554 = vmatpush1.msra.mxu0 %v1506
  %1555 = vmatprep.subr.mxu0 0.0
  %1556 = vmatpush2.msra.mxu0 0.0
  %1557 = vmatprep.subr.mxu0 0.0
  %1558 = vmatpush2.msra.mxu0 0.0
  %1559 = vmatprep.subr.mxu0 0.0
  %1560 = vmatpush2.msra.mxu0 0.0
  %1561 = vmatprep.subr.mxu0 0.0
  %1562 = vmatpush2.msra.mxu0 0.0
  %1563 = vmatprep.subr.mxu0 0.0
  %1564 = vmatpush2.msra.mxu0 0.0
  %1565 = vmatprep.subr.mxu0 0.0
  %1566 = vmatpush2.msra.mxu0 0.0
  %1567 = vmatprep.subr.mxu0 0.0
  %1568 = vmatpush2.msra.mxu0 0.0
  %1569 = vmatprep.subr.mxu0 0.0
  %1570 = vmatpush2.msra.mxu0 0.0
  %1571 = vmatprep.subr.mxu0 0.0
  %1572 = vmatpush2.msra.mxu0 0.0
  %1573 = vmatprep.subr.mxu0 0.0
  %1574 = vmatpush2.msra.mxu0 0.0
  %1575 = vmatprep.subr.mxu0 0.0
  %1576 = vmatpush2.msra.mxu0 0.0
  %1577 = vmatprep.subr.mxu0 0.0
  %1578 = vmatpush2.msra.mxu0 0.0
  %1579 = vmatprep.subr.mxu0 0.0
  %1580 = vmatpush2.msra.mxu0 0.0
  %1581 = vmatprep.subr.mxu0 0.0
  %1582 = vmatpush2.msra.mxu0 0.0
  %1583 = vmatprep.subr.mxu0 0.0
  %1584 = vmatpush2.msra.mxu0 0.0
  %1585 = vmatprep.subr.mxu0 0.0
  %1586 = vmatpush2.msra.mxu0 0.0
  %1587 = vmatprep.mubr.f32.mxu0 0.0
  %1588 = vmatmul.mubr.f32.gmra.mxu0 %v1518
  %v1589 = vpop.f32.mrf.mxu0
  %v1590 = vadd.f32 %v1515, %v1589
  %v1591 = vpop.f32.mrf.mxu0
  %1592 = vmatprep.mubr.f32.mxu0 0.0
  %1593 = vmatmul.mubr.f32.gmra.mxu0 %v1521
  %v1594 = vpop.f32.mrf.mxu0
  %v1595 = vadd.f32 %v1515, %v1594
  %v1596 = vpop.f32.mrf.mxu0
  %1597 = vdwg.mxu0
  %v1598 = vadd.f32 %v26, %v1590
  %v1599 = vadd.f32 %v27, %v1595
  %v1600 = vsel %vm39, %v1598, 0.0
  %1601 = vadd.xlane.f32.xlu0 %v1600
  %v1602 = vpop.xlane.xlu0 %1601
  %vm1603 = vcmask 257024
  %v1604 = vsel %vm1603, %v1599, 0.0
  %1605 = vadd.xlane.f32.xlu0 %v1604
  %v1606 = vpop.xlane.xlu0 %1605
  %v1607 = vrcp.pop 32.0
  %v1608 = vmul.f32 %v1602, %v1607
  %v1609 = vmul.f32 %v1606, %v1607
  %v1610 = vsub.f32 %v1598, %v1608
  %v1611 = vsub.f32 %v1599, %v1609
  %v1612 = vmul.f32 %v1610, %v1610
  %v1613 = vmul.f32 %v1611, %v1611
  %v1614 = vsel %vm39, %v1612, 0.0
  %1615 = vadd.xlane.f32.xlu0 %v1614
  %v1616 = vpop.xlane.xlu0 %1615
  %v1617 = vsel %vm1603, %v1613, 0.0
  %1618 = vadd.xlane.f32.xlu0 %v1617
  %v1619 = vpop.xlane.xlu0 %1618
  %v1620 = vmul.f32 %v1616, %v1607
  %v1621 = vmul.f32 %v1619, %v1607
  %v1622 = vadd.f32 %v1620, 1e-05
  %v1623 = vadd.f32 %v1621, 1e-05
  %v1624 = vrsqrt.pop %v1622
  %v1625 = vrsqrt.pop %v1623
  %v1626 = vmul.f32 %v1610, %v1624
  %v1627 = vmul.f32 %v1611, %v1625
  %v1628 = vld [vmem:[%s5] sm:$0x1]
  %v1630 = vlaneseq
  %v1631 = vshrl.u32 %v1630, 7
  %v1632 = vsub.s32 0, %v1631
  %v1633 = vrot.slane %v1628, %v1632
  %v1635 = vmul.f32 %v1626, %v1633
  %v1636 = vmul.f32 %v1627, %v1633
  %v1637 = vld [vmem:[%s6] sm:$0x1]
  %v1639 = vlaneseq
  %v1640 = vshrl.u32 %v1639, 7
  %v1641 = vsub.s32 0, %v1640
  %v1642 = vrot.slane %v1637, %v1641
  %v1644 = vadd.f32 %v1635, %v1642
  %v1645 = vadd.f32 %v1636, %v1642
  %1646 = vst.msk [vmem:[%s7] sm:$0xff] %vm39, %v1644
  %1647 = vst.msk [vmem:[%s7 + $0x8] sm:$0xf] %vm1603, %v1645
  // Predicated region
  $region30: #{transformer_forward.17} parent=0 // pred_check
    _
  $region31: #{transformer_forward.17} parent=0 // pred_check_branch
    %1649 = sbr.rel (0) target = $region33
  $region32: #{transformer_forward.17} parent=0 // pred_region
    _
  $region33: #{transformer_forward.17} parent=0 // pred_fallthru
    _
  // Predicated region
  $region34: #{transformer_forward.17} parent=0 // pred_check
    _
  $region35: #{transformer_forward.17} parent=0 // pred_check_branch
    %1651 = sbr.rel (0) target = $region37
  $region36: #{transformer_forward.17} parent=0 // pred_region
    _
  $region37: #{transformer_forward.17} parent=0 // pred_fallthru
    _

// kernel: transformer_forward.23
$region0: #{transformer_forward.23}
  #allocation0 [shape = 'u32[]', space=smem, size = 0x4, offset = 0x4, fixed_abs, tag = 'smem constant byte address 0x4 - core index']
  #allocation1 [shape = 'u32[144,128]{1,0:T(1,128)}', space=vmem, size = 0x12000, scoped, tag = 'internal scratch']
  %s0 = inlined_call_operand.vmem [shape: f32[12,32], index: 0, kind: input, shape index: {}]
  %s1 = inlined_call_operand.vmem [shape: f32[1,32], index: 1, kind: input, shape index: {}]
  %s2 = inlined_call_operand.vmem [shape: f32[1,32], index: 2, kind: input, shape index: {}]
  %s3 = inlined_call_operand.vmem [shape: f32[12,32], index: 3, kind: output, shape index: {}]
  %s4 = sld [smem:[#allocation0]]
  $region22: #{transformer_forward.23} parent=0
    _
  %s6 = ssub.s32 1, %s4
  %s7 = scalar_select 0, %s6, %s4
  // Predicated region
  $region2: #{transformer_forward.23} parent=0 // pred_check
    _
  $region3: #{transformer_forward.23} parent=0 // pred_check_branch
    %9 = sbr.rel (0) target = $region5
  $region4: #{transformer_forward.23} parent=0 // pred_region
    _
  $region5: #{transformer_forward.23} parent=0 // pred_fallthru
    _
  // Predicated region
  $region6: #{transformer_forward.23} parent=0 // pred_check
    _
  $region7: #{transformer_forward.23} parent=0 // pred_check_branch
    %11 = sbr.rel (0) target = $region9
  $region8: #{transformer_forward.23} parent=0 // pred_region
    _
  $region9: #{transformer_forward.23} parent=0 // pred_fallthru
    _
  // Predicated region
  $region10: #{transformer_forward.23} parent=0 // pred_check
    _
  $region11: #{transformer_forward.23} parent=0 // pred_check_branch
    %13 = sbr.rel (0) target = $region13
  $region12: #{transformer_forward.23} parent=0 // pred_region
    _
  $region13: #{transformer_forward.23} parent=0 // pred_fallthru
    _
  %v14 = vld [vmem:[%s0] sm:$0xff]
  %v15 = vld [vmem:[%s0 + $0x8] sm:$0xf]
  %vm16 = vcmask 261120
  %v17 = vsel %vm16, %v14, 0.0
  %18 = vadd.xlane.f32.xlu0 %v17
  %v19 = vpop.xlane.xlu0 %18
  %vm20 = vcmask 257024
  %v21 = vsel %vm20, %v15, 0.0
  %22 = vadd.xlane.f32.xlu0 %v21
  %v23 = vpop.xlane.xlu0 %22
  %v24 = vrcp.pop 32.0
  %v25 = vmul.f32 %v19, %v24
  %v26 = vmul.f32 %v23, %v24
  %v27 = vsub.f32 %v14, %v25
  %v28 = vsub.f32 %v15, %v26
  %v29 = vmul.f32 %v27, %v27
  %v30 = vmul.f32 %v28, %v28
  %v31 = vsel %vm16, %v29, 0.0
  %32 = vadd.xlane.f32.xlu0 %v31
  %v33 = vpop.xlane.xlu0 %32
  %v34 = vsel %vm20, %v30, 0.0
  %35 = vadd.xlane.f32.xlu0 %v34
  %v36 = vpop.xlane.xlu0 %35
  %v37 = vmul.f32 %v33, %v24
  %v38 = vmul.f32 %v36, %v24
  %v39 = vadd.f32 %v37, 1e-05
  %v40 = vadd.f32 %v38, 1e-05
  %v41 = vrsqrt.pop %v39
  %v42 = vrsqrt.pop %v40
  %v43 = vmul.f32 %v27, %v41
  %v44 = vmul.f32 %v28, %v42
  %v45 = vld [vmem:[%s1] sm:$0x1]
  %v47 = vlaneseq
  %v48 = vshrl.u32 %v47, 7
  %v49 = vsub.s32 0, %v48
  %v50 = vrot.slane %v45, %v49
  %v52 = vmul.f32 %v43, %v50
  %v53 = vmul.f32 %v44, %v50
  %v54 = vld [vmem:[%s2] sm:$0x1]
  %v56 = vlaneseq
  %v57 = vshrl.u32 %v56, 7
  %v58 = vsub.s32 0, %v57
  %v59 = vrot.slane %v54, %v58
  %v61 = vadd.f32 %v52, %v59
  %v62 = vadd.f32 %v53, %v59
  %63 = vst.msk [vmem:[%s3] sm:$0xff] %vm16, %v61
  %64 = vst.msk [vmem:[%s3 + $0x8] sm:$0xf] %vm20, %v62
  // Predicated region
  $region14: #{transformer_forward.23} parent=0 // pred_check
    _
  $region15: #{transformer_forward.23} parent=0 // pred_check_branch
    %66 = sbr.rel (0) target = $region17
  $region16: #{transformer_forward.23} parent=0 // pred_region
    _
  $region17: #{transformer_forward.23} parent=0 // pred_fallthru
    _
  // Predicated region
  $region18: #{transformer_forward.23} parent=0 // pred_check
    _
  $region19: #{transformer_forward.23} parent=0 // pred_check_branch
    %68 = sbr.rel (0) target = $region21
  $region20: #{transformer_forward.23} parent=0 // pred_region
    _
  $region21: #{transformer_forward.23} parent=0 // pred_fallthru
    _

// kernel: transformer_forward.18
$region0: #{transformer_forward.18}
  #allocation0 [shape = 'u32[]', space=smem, size = 0x4, offset = 0x4, fixed_abs, tag = 'smem constant byte address 0x4 - core index']
  #allocation1 [shape = 'u32[144,128]{1,0:T(1,128)}', space=vmem, size = 0x12000, scoped, tag = 'internal scratch']
  #allocation2 [shape = 'f32[12,32]{1,0:T(8,128)}', space=vmem, size = 0x2000, scoped, tag = 'scratch operand']
  %s0 = inlined_call_operand.vmem [shape: f32[12,32], index: 0, kind: input, shape index: {}]
  %s1 = inlined_call_operand.vmem [shape: f32[16,32], index: 1, kind: input, shape index: {}]
  %s2 = inlined_call_operand.vmem [shape: f32[32,96], index: 2, kind: input, shape index: {}]
  %s3 = inlined_call_operand.vmem [shape: f32[1,96], index: 3, kind: input, shape index: {}]
  %s4 = inlined_call_operand.vmem [shape: f32[32,32], index: 4, kind: input, shape index: {}]
  %s5 = inlined_call_operand.vmem [shape: f32[1,32], index: 5, kind: input, shape index: {}]
  %s6 = inlined_call_operand.vmem [shape: f32[1,32], index: 6, kind: input, shape index: {}]
  %s7 = inlined_call_operand.vmem [shape: f32[1,32], index: 7, kind: input, shape index: {}]
  %s8 = inlined_call_operand.vmem [shape: f32[12,32], index: 8, kind: output, shape index: {}]
  %s9 = sld [smem:[#allocation0]]
  $region42: #{transformer_forward.18} parent=0
    _
  %s11 = ssub.s32 1, %s9
  %s12 = scalar_select 0, %s11, %s9
  // Predicated region
  $region2: #{transformer_forward.18} parent=0 // pred_check
    _
  $region3: #{transformer_forward.18} parent=0 // pred_check_branch
    %14 = sbr.rel (0) target = $region5
  $region4: #{transformer_forward.18} parent=0 // pred_region
    _
  $region5: #{transformer_forward.18} parent=0 // pred_fallthru
    _
  // Predicated region
  $region6: #{transformer_forward.18} parent=0 // pred_check
    _
  $region7: #{transformer_forward.18} parent=0 // pred_check_branch
    %16 = sbr.rel (0) target = $region9
  $region8: #{transformer_forward.18} parent=0 // pred_region
    _
  $region9: #{transformer_forward.18} parent=0 // pred_fallthru
    _
  // Predicated region
  $region10: #{transformer_forward.18} parent=0 // pred_check
    _
  $region11: #{transformer_forward.18} parent=0 // pred_check_branch
    %18 = sbr.rel (0) target = $region13
  $region12: #{transformer_forward.18} parent=0 // pred_region
    _
  $region13: #{transformer_forward.18} parent=0 // pred_fallthru
    _
  // Predicated region
  $region14: #{transformer_forward.18} parent=0 // pred_check
    _
  $region15: #{transformer_forward.18} parent=0 // pred_check_branch
    %20 = sbr.rel (0) target = $region17
  $region16: #{transformer_forward.18} parent=0 // pred_region
    _
  $region17: #{transformer_forward.18} parent=0 // pred_fallthru
    _
  // Predicated region
  $region18: #{transformer_forward.18} parent=0 // pred_check
    _
  $region19: #{transformer_forward.18} parent=0 // pred_check_branch
    %22 = sbr.rel (0) target = $region21
  $region20: #{transformer_forward.18} parent=0 // pred_region
    _
  $region21: #{transformer_forward.18} parent=0 // pred_fallthru
    _
  // Predicated region
  $region22: #{transformer_forward.18} parent=0 // pred_check
    _
  $region23: #{transformer_forward.18} parent=0 // pred_check_branch
    %24 = sbr.rel (0) target = $region25
  $region24: #{transformer_forward.18} parent=0 // pred_region
    _
  $region25: #{transformer_forward.18} parent=0 // pred_fallthru
    _
  // Predicated region
  $region26: #{transformer_forward.18} parent=0 // pred_check
    _
  $region27: #{transformer_forward.18} parent=0 // pred_check_branch
    %26 = sbr.rel (0) target = $region29
  $region28: #{transformer_forward.18} parent=0 // pred_region
    _
  $region29: #{transformer_forward.18} parent=0 // pred_fallthru
    _
  // Predicated region
  $region30: #{transformer_forward.18} parent=0 // pred_check
    _
  $region31: #{transformer_forward.18} parent=0 // pred_check_branch
    %28 = sbr.rel (0) target = $region33
  $region32: #{transformer_forward.18} parent=0 // pred_region
    _
  $region33: #{transformer_forward.18} parent=0 // pred_fallthru
    _
  %v29 = vld [vmem:[%s0] sm:$0xff]
  %v30 = vld [vmem:[%s0 + $0x8] sm:$0xf]
  %v31 = vld [vmem:[%s3] sm:$0x1]
  %v32 = vld [vmem:[%s1] sm:$0xff]
  %v33 = vld [vmem:[%s1 + $0x8] sm:$0xff]
  %v34 = vld [vmem:[%s2] sm:$0xff]
  %v35 = vld [vmem:[%s2 + $0x8] sm:$0xff]
  %v36 = vld [vmem:[%s2 + $0x10] sm:$0xff]
  %v37 = vld [vmem:[%s2 + $0x18] sm:$0xff]
  %v39 = vlaneseq
  %v40 = vshrl.u32 %v39, 7
  %v41 = vsub.s32 0, %v40
  %v42 = vrot.slane %v31, %v41
  %vm44 = vcmask 261120
  %v46 = vsel %vm44, %v29, 0
  %v49 = vsel %vm44, %v30, 0
  %51 = vmatprep.subr.mxu0 0.0
  %52 = vmatpush1.msra.mxu0 0.0
  %53 = vmatprep.subr.mxu0 0.0
  %54 = vmatpush1.msra.mxu0 0.0
  %55 = vmatprep.subr.mxu0 0.0
  %56 = vmatpush1.msra.mxu0 0.0
  %57 = vmatprep.subr.mxu0 0.0
  %58 = vmatpush1.msra.mxu0 0.0
  %59 = vmatprep.subr.mxu0 0.0
  %60 = vmatpush1.msra.mxu0 0.0
  %61 = vmatprep.subr.mxu0 0.0
  %62 = vmatpush1.msra.mxu0 0.0
  %63 = vmatprep.subr.mxu0 0.0
  %64 = vmatpush1.msra.mxu0 0.0
  %65 = vmatprep.subr.mxu0 0.0
  %66 = vmatpush1.msra.mxu0 0.0
  %67 = vmatprep.subr.mxu0 0.0
  %68 = vmatpush1.msra.mxu0 0.0
  %69 = vmatprep.subr.mxu0 0.0
  %70 = vmatpush1.msra.mxu0 0.0
  %71 = vmatprep.subr.mxu0 0.0
  %72 = vmatpush1.msra.mxu0 0.0
  %73 = vmatprep.subr.mxu0 0.0
  %74 = vmatpush1.msra.mxu0 0.0
  %75 = vmatprep.subr.mxu0 0.0
  %76 = vmatpush1.msra.mxu0 %v37
  %77 = vmatprep.subr.mxu0 0.0
  %78 = vmatpush1.msra.mxu0 %v36
  %79 = vmatprep.subr.mxu0 0.0
  %80 = vmatpush1.msra.mxu0 %v35
  %81 = vmatprep.subr.mxu0 0.0
  %82 = vmatpush1.msra.mxu0 %v34
  %83 = vmatprep.subr.mxu0 0.0
  %84 = vmatpush2.msra.mxu0 0.0
  %85 = vmatprep.subr.mxu0 0.0
  %86 = vmatpush2.msra.mxu0 0.0
  %87 = vmatprep.subr.mxu0 0.0
  %88 = vmatpush2.msra.mxu0 0.0
  %89 = vmatprep.subr.mxu0 0.0
  %90 = vmatpush2.msra.mxu0 0.0
  %91 = vmatprep.subr.mxu0 0.0
  %92 = vmatpush2.msra.mxu0 0.0
  %93 = vmatprep.subr.mxu0 0.0
  %94 = vmatpush2.msra.mxu0 0.0
  %95 = vmatprep.subr.mxu0 0.0
  %96 = vmatpush2.msra.mxu0 0.0
  %97 = vmatprep.subr.mxu0 0.0
  %98 = vmatpush2.msra.mxu0 0.0
  %99 = vmatprep.subr.mxu0 0.0
  %100 = vmatpush2.msra.mxu0 0.0
  %101 = vmatprep.subr.mxu0 0.0
  %102 = vmatpush2.msra.mxu0 0.0
  %103 = vmatprep.subr.mxu0 0.0
  %104 = vmatpush2.msra.mxu0 0.0
  %105 = vmatprep.subr.mxu0 0.0
  %106 = vmatpush2.msra.mxu0 0.0
  %107 = vmatprep.subr.mxu0 0.0
  %108 = vmatpush2.msra.mxu0 0.0
  %109 = vmatprep.subr.mxu0 0.0
  %110 = vmatpush2.msra.mxu0 0.0
  %111 = vmatprep.subr.mxu0 0.0
  %112 = vmatpush2.msra.mxu0 0.0
  %113 = vmatprep.subr.mxu0 0.0
  %114 = vmatpush2.msra.mxu0 0.0
  %115 = vmatprep.mubr.f32.mxu0 0.0
  %116 = vmatmul.mubr.f32.gmra.mxu0 %v46
  %v117 = vpop.f32.mrf.mxu0
  %v118 = vadd.f32 %v42, %v117
  %v119 = vpop.f32.mrf.mxu0
  %120 = vmatprep.mubr.f32.mxu0 0.0
  %121 = vmatmul.mubr.f32.gmra.mxu0 %v49
  %v122 = vpop.f32.mrf.mxu0
  %v123 = vadd.f32 %v42, %v122
  %v124 = vpop.f32.mrf.mxu0
  %125 = vdwg.mxu0
  %130 = vrot.lane.b32.xlu0 %v34, 96
  %v131 = vpop.permute.xlu0 %130
  %132 = vrot.lane.b32.xlu0 %v35, 96
  %v133 = vpop.permute.xlu0 %132
  %134 = vrot.lane.b32.xlu0 %v36, 96
  %v135 = vpop.permute.xlu0 %134
  %136 = vrot.lane.b32.xlu0 %v37, 96
  %v137 = vpop.permute.xlu0 %136
  %142 = vrot.lane.b32.xlu0 %v42, 96
  %v143 = vpop.permute.xlu0 %142
  %v146 = vsel %vm44, %v32, 0
  %v149 = vsel %vm44, %v33, 0
  %151 = vmatprep.subr.mxu0 0.0
  %152 = vmatpush1.msra.mxu0 0.0
  %153 = vmatprep.subr.mxu0 0.0
  %154 = vmatpush1.msra.mxu0 0.0
  %155 = vmatprep.subr.mxu0 0.0
  %156 = vmatpush1.msra.mxu0 0.0
  %157 = vmatprep.subr.mxu0 0.0
  %158 = vmatpush1.msra.mxu0 0.0
  %159 = vmatprep.subr.mxu0 0.0
  %160 = vmatpush1.msra.mxu0 0.0
  %161 = vmatprep.subr.mxu0 0.0
  %162 = vmatpush1.msra.mxu0 0.0
  %163 = vmatprep.subr.mxu0 0.0
  %164 = vmatpush1.msra.mxu0 0.0
  %165 = vmatprep.subr.mxu0 0.0
  %166 = vmatpush1.msra.mxu0 0.0
  %167 = vmatprep.subr.mxu0 0.0
  %168 = vmatpush1.msra.mxu0 0.0
  %169 = vmatprep.subr.mxu0 0.0
  %170 = vmatpush1.msra.mxu0 0.0
  %171 = vmatprep.subr.mxu0 0.0
  %172 = vmatpush1.msra.mxu0 0.0
  %173 = vmatprep.subr.mxu0 0.0
  %174 = vmatpush1.msra.mxu0 0.0
  %175 = vmatprep.subr.mxu0 0.0
  %176 = vmatpush1.msra.mxu0 %v137
  %177 = vmatprep.subr.mxu0 0.0
  %178 = vmatpush1.msra.mxu0 %v135
  %179 = vmatprep.subr.mxu0 0.0
  %180 = vmatpush1.msra.mxu0 %v133
  %181 = vmatprep.subr.mxu0 0.0
  %182 = vmatpush1.msra.mxu0 %v131
  %183 = vmatprep.subr.mxu0 0.0
  %184 = vmatpush2.msra.mxu0 0.0
  %185 = vmatprep.subr.mxu0 0.0
  %186 = vmatpush2.msra.mxu0 0.0
  %187 = vmatprep.subr.mxu0 0.0
  %188 = vmatpush2.msra.mxu0 0.0
  %189 = vmatprep.subr.mxu0 0.0
  %190 = vmatpush2.msra.mxu0 0.0
  %191 = vmatprep.subr.mxu0 0.0
  %192 = vmatpush2.msra.mxu0 0.0
  %193 = vmatprep.subr.mxu0 0.0
  %194 = vmatpush2.msra.mxu0 0.0
  %195 = vmatprep.subr.mxu0 0.0
  %196 = vmatpush2.msra.mxu0 0.0
  %197 = vmatprep.subr.mxu0 0.0
  %198 = vmatpush2.msra.mxu0 0.0
  %199 = vmatprep.subr.mxu0 0.0
  %200 = vmatpush2.msra.mxu0 0.0
  %201 = vmatprep.subr.mxu0 0.0
  %202 = vmatpush2.msra.mxu0 0.0
  %203 = vmatprep.subr.mxu0 0.0
  %204 = vmatpush2.msra.mxu0 0.0
  %205 = vmatprep.subr.mxu0 0.0
  %206 = vmatpush2.msra.mxu0 0.0
  %207 = vmatprep.subr.mxu0 0.0
  %208 = vmatpush2.msra.mxu0 0.0
  %209 = vmatprep.subr.mxu0 0.0
  %210 = vmatpush2.msra.mxu0 0.0
  %211 = vmatprep.subr.mxu0 0.0
  %212 = vmatpush2.msra.mxu0 0.0
  %213 = vmatprep.subr.mxu0 0.0
  %214 = vmatpush2.msra.mxu0 0.0
  %215 = vmatprep.mubr.f32.mxu0 0.0
  %216 = vmatmul.mubr.f32.gmra.mxu0 %v146
  %v217 = vpop.f32.mrf.mxu0
  %v218 = vadd.f32 %v143, %v217
  %v219 = vpop.f32.mrf.mxu0
  %220 = vmatprep.mubr.f32.mxu0 0.0
  %221 = vmatmul.mubr.f32.gmra.mxu0 %v149
  %v222 = vpop.f32.mrf.mxu0
  %v223 = vadd.f32 %v143, %v222
  %v224 = vpop.f32.mrf.mxu0
  %225 = vdwg.mxu0
  %v226 = vmul.f32 %v118, 0.35355338
  %vm227 = vcmask 64512
  %v229 = vsel %vm227, %v226, 0
  %v232 = vsel %vm227, %v218, 0
  %234 = vmatprep.subr.mxu0 0.0
  %235 = vmatpush1.xpose.msra.mxu0 0.0
  %236 = vmatprep.subr.mxu0 0.0
  %237 = vmatpush1.xpose.msra.mxu0 0.0
  %238 = vmatprep.subr.mxu0 0.0
  %239 = vmatpush1.xpose.msra.mxu0 0.0
  %240 = vmatprep.subr.mxu0 0.0
  %241 = vmatpush1.xpose.msra.mxu0 0.0
  %242 = vmatprep.subr.mxu0 0.0
  %243 = vmatpush1.xpose.msra.mxu0 0.0
  %244 = vmatprep.subr.mxu0 0.0
  %245 = vmatpush1.xpose.msra.mxu0 0.0
  %246 = vmatprep.subr.mxu0 0.0
  %247 = vmatpush1.xpose.msra.mxu0 0.0
  %248 = vmatprep.subr.mxu0 0.0
  %249 = vmatpush1.xpose.msra.mxu0 0.0
  %250 = vmatprep.subr.mxu0 0.0
  %251 = vmatpush1.xpose.msra.mxu0 0.0
  %252 = vmatprep.subr.mxu0 0.0
  %253 = vmatpush1.xpose.msra.mxu0 0.0
  %254 = vmatprep.subr.mxu0 0.0
  %255 = vmatpush1.xpose.msra.mxu0 0.0
  %256 = vmatprep.subr.mxu0 0.0
  %257 = vmatpush1.xpose.msra.mxu0 0.0
  %258 = vmatprep.subr.mxu0 0.0
  %259 = vmatpush1.xpose.msra.mxu0 0.0
  %260 = vmatprep.subr.mxu0 0.0
  %261 = vmatpush1.xpose.msra.mxu0 0.0
  %262 = vmatprep.subr.mxu0 0.0
  %263 = vmatpush1.xpose.msra.mxu0 0.0
  %264 = vmatprep.subr.mxu0 0.0
  %265 = vmatpush1.xpose.msra.mxu0 %v232
  %266 = vmatprep.subr.mxu0 0.0
  %267 = vmatpush2.xpose.msra.mxu0 0.0
  %268 = vmatprep.subr.mxu0 0.0
  %269 = vmatpush2.xpose.msra.mxu0 0.0
  %270 = vmatprep.subr.mxu0 0.0
  %271 = vmatpush2.xpose.msra.mxu0 0.0
  %272 = vmatprep.subr.mxu0 0.0
  %273 = vmatpush2.xpose.msra.mxu0 0.0
  %274 = vmatprep.subr.mxu0 0.0
  %275 = vmatpush2.xpose.msra.mxu0 0.0
  %276 = vmatprep.subr.mxu0 0.0
  %277 = vmatpush2.xpose.msra.mxu0 0.0
  %278 = vmatprep.subr.mxu0 0.0
  %279 = vmatpush2.xpose.msra.mxu0 0.0
  %280 = vmatprep.subr.mxu0 0.0
  %281 = vmatpush2.xpose.msra.mxu0 0.0
  %282 = vmatprep.subr.mxu0 0.0
  %283 = vmatpush2.xpose.msra.mxu0 0.0
  %284 = vmatprep.subr.mxu0 0.0
  %285 = vmatpush2.xpose.msra.mxu0 0.0
  %286 = vmatprep.subr.mxu0 0.0
  %287 = vmatpush2.xpose.msra.mxu0 0.0
  %288 = vmatprep.subr.mxu0 0.0
  %289 = vmatpush2.xpose.msra.mxu0 0.0
  %290 = vmatprep.subr.mxu0 0.0
  %291 = vmatpush2.xpose.msra.mxu0 0.0
  %292 = vmatprep.subr.mxu0 0.0
  %293 = vmatpush2.xpose.msra.mxu0 0.0
  %294 = vmatprep.subr.mxu0 0.0
  %295 = vmatpush2.xpose.msra.mxu0 0.0
  %296 = vmatprep.subr.mxu0 0.0
  %297 = vmatpush2.xpose.msra.mxu0 0.0
  %298 = vmatprep.mubr.f32.mxu0 0.0
  %299 = vmatmul.mubr.f32.gmra.mxu0 %v229
  %v300 = vpop.f32.mrf.mxu0
  %v301 = vadd.f32 0.0, %v300
  %v302 = vpop.f32.mrf.mxu0
  %303 = vdwg.mxu0
  %vm304 = vcmask 62464
  %v305 = vsel %vm304, %v301, -inf
  %306 = vmax.xlane.f32.xlu0 %v305
  %v307 = vpop.xlane.xlu0 %306
  %v308 = vsub.f32 %v301, %v307
  %v309 = vmul.f32 %v308, 1.442695
  %v310 = vpow.pop %v309
  %v311 = vsel %vm304, %v310, 0.0
  %312 = vadd.xlane.f32.xlu0 %v311
  %v313 = vpop.xlane.xlu0 %312
  %314 = vrot.lane.b32.xlu0 %v218, 96
  %v315 = vpop.permute.xlu0 %314
  %v318 = vsel %vm227, %v310, 0
  %320 = vmatprep.subr.mxu0 0.0
  %321 = vmatpush1.msra.mxu0 0.0
  %322 = vmatprep.subr.mxu0 0.0
  %323 = vmatpush1.msra.mxu0 0.0
  %324 = vmatprep.subr.mxu0 0.0
  %325 = vmatpush1.msra.mxu0 0.0
  %326 = vmatprep.subr.mxu0 0.0
  %327 = vmatpush1.msra.mxu0 0.0
  %328 = vmatprep.subr.mxu0 0.0
  %329 = vmatpush1.msra.mxu0 0.0
  %330 = vmatprep.subr.mxu0 0.0
  %331 = vmatpush1.msra.mxu0 0.0
  %332 = vmatprep.subr.mxu0 0.0
  %333 = vmatpush1.msra.mxu0 0.0
  %334 = vmatprep.subr.mxu0 0.0
  %335 = vmatpush1.msra.mxu0 0.0
  %336 = vmatprep.subr.mxu0 0.0
  %337 = vmatpush1.msra.mxu0 0.0
  %338 = vmatprep.subr.mxu0 0.0
  %339 = vmatpush1.msra.mxu0 0.0
  %340 = vmatprep.subr.mxu0 0.0
  %341 = vmatpush1.msra.mxu0 0.0
  %342 = vmatprep.subr.mxu0 0.0
  %343 = vmatpush1.msra.mxu0 0.0
  %344 = vmatprep.subr.mxu0 0.0
  %345 = vmatpush1.msra.mxu0 0.0
  %346 = vmatprep.subr.mxu0 0.0
  %347 = vmatpush1.msra.mxu0 0.0
  %348 = vmatprep.subr.mxu0 0.0
  %349 = vmatpush1.msra.mxu0 0.0
  %350 = vmatprep.subr.mxu0 0.0
  %351 = vmatpush1.msra.mxu0 %v315
  %352 = vmatprep.subr.mxu0 0.0
  %353 = vmatpush2.msra.mxu0 0.0
  %354 = vmatprep.subr.mxu0 0.0
  %355 = vmatpush2.msra.mxu0 0.0
  %356 = vmatprep.subr.mxu0 0.0
  %357 = vmatpush2.msra.mxu0 0.0
  %358 = vmatprep.subr.mxu0 0.0
  %359 = vmatpush2.msra.mxu0 0.0
  %360 = vmatprep.subr.mxu0 0.0
  %361 = vmatpush2.msra.mxu0 0.0
  %362 = vmatprep.subr.mxu0 0.0
  %363 = vmatpush2.msra.mxu0 0.0
  %364 = vmatprep.subr.mxu0 0.0
  %365 = vmatpush2.msra.mxu0 0.0
  %366 = vmatprep.subr.mxu0 0.0
  %367 = vmatpush2.msra.mxu0 0.0
  %368 = vmatprep.subr.mxu0 0.0
  %369 = vmatpush2.msra.mxu0 0.0
  %370 = vmatprep.subr.mxu0 0.0
  %371 = vmatpush2.msra.mxu0 0.0
  %372 = vmatprep.subr.mxu0 0.0
  %373 = vmatpush2.msra.mxu0 0.0
  %374 = vmatprep.subr.mxu0 0.0
  %375 = vmatpush2.msra.mxu0 0.0
  %376 = vmatprep.subr.mxu0 0.0
  %377 = vmatpush2.msra.mxu0 0.0
  %378 = vmatprep.subr.mxu0 0.0
  %379 = vmatpush2.msra.mxu0 0.0
  %380 = vmatprep.subr.mxu0 0.0
  %381 = vmatpush2.msra.mxu0 0.0
  %382 = vmatprep.subr.mxu0 0.0
  %383 = vmatpush2.msra.mxu0 0.0
  %384 = vmatprep.mubr.f32.mxu0 0.0
  %385 = vmatmul.mubr.f32.gmra.mxu0 %v318
  %v386 = vpop.f32.mrf.mxu0
  %v387 = vadd.f32 0.0, %v386
  %v388 = vpop.f32.mrf.mxu0
  %389 = vdwg.mxu0
  %v390 = vrcp.pop %v313
  %v391 = vmul.f32 %v387, %v390
  %392 = vst.msk [vmem:[#allocation2] sm:$0x3f] %vm304, %v391
  %393 = vrot.lane.b32.xlu0 %v226, 120
  %v394 = vpop.permute.xlu0 %393
  %395 = vrot.lane.b32.xlu0 %v218, 120
  %v396 = vpop.permute.xlu0 %395
  %v397 = vsel %vm227, %v394, 0
  %v399 = vsel %vm227, %v396, 0
  %401 = vmatprep.subr.mxu0 0.0
  %402 = vmatpush1.xpose.msra.mxu0 0.0
  %403 = vmatprep.subr.mxu0 0.0
  %404 = vmatpush1.xpose.msra.mxu0 0.0
  %405 = vmatprep.subr.mxu0 0.0
  %406 = vmatpush1.xpose.msra.mxu0 0.0
  %407 = vmatprep.subr.mxu0 0.0
  %408 = vmatpush1.xpose.msra.mxu0 0.0
  %409 = vmatprep.subr.mxu0 0.0
  %410 = vmatpush1.xpose.msra.mxu0 0.0
  %411 = vmatprep.subr.mxu0 0.0
  %412 = vmatpush1.xpose.msra.mxu0 0.0
  %413 = vmatprep.subr.mxu0 0.0
  %414 = vmatpush1.xpose.msra.mxu0 0.0
  %415 = vmatprep.subr.mxu0 0.0
  %416 = vmatpush1.xpose.msra.mxu0 0.0
  %417 = vmatprep.subr.mxu0 0.0
  %418 = vmatpush1.xpose.msra.mxu0 0.0
  %419 = vmatprep.subr.mxu0 0.0
  %420 = vmatpush1.xpose.msra.mxu0 0.0
  %421 = vmatprep.subr.mxu0 0.0
  %422 = vmatpush1.xpose.msra.mxu0 0.0
  %423 = vmatprep.subr.mxu0 0.0
  %424 = vmatpush1.xpose.msra.mxu0 0.0
  %425 = vmatprep.subr.mxu0 0.0
  %426 = vmatpush1.xpose.msra.mxu0 0.0
  %427 = vmatprep.subr.mxu0 0.0
  %428 = vmatpush1.xpose.msra.mxu0 0.0
  %429 = vmatprep.subr.mxu0 0.0
  %430 = vmatpush1.xpose.msra.mxu0 0.0
  %431 = vmatprep.subr.mxu0 0.0
  %432 = vmatpush1.xpose.msra.mxu0 %v399
  %433 = vmatprep.subr.mxu0 0.0
  %434 = vmatpush2.xpose.msra.mxu0 0.0
  %435 = vmatprep.subr.mxu0 0.0
  %436 = vmatpush2.xpose.msra.mxu0 0.0
  %437 = vmatprep.subr.mxu0 0.0
  %438 = vmatpush2.xpose.msra.mxu0 0.0
  %439 = vmatprep.subr.mxu0 0.0
  %440 = vmatpush2.xpose.msra.mxu0 0.0
  %441 = vmatprep.subr.mxu0 0.0
  %442 = vmatpush2.xpose.msra.mxu0 0.0
  %443 = vmatprep.subr.mxu0 0.0
  %444 = vmatpush2.xpose.msra.mxu0 0.0
  %445 = vmatprep.subr.mxu0 0.0
  %446 = vmatpush2.xpose.msra.mxu0 0.0
  %447 = vmatprep.subr.mxu0 0.0
  %448 = vmatpush2.xpose.msra.mxu0 0.0
  %449 = vmatprep.subr.mxu0 0.0
  %450 = vmatpush2.xpose.msra.mxu0 0.0
  %451 = vmatprep.subr.mxu0 0.0
  %452 = vmatpush2.xpose.msra.mxu0 0.0
  %453 = vmatprep.subr.mxu0 0.0
  %454 = vmatpush2.xpose.msra.mxu0 0.0
  %455 = vmatprep.subr.mxu0 0.0
  %456 = vmatpush2.xpose.msra.mxu0 0.0
  %457 = vmatprep.subr.mxu0 0.0
  %458 = vmatpush2.xpose.msra.mxu0 0.0
  %459 = vmatprep.subr.mxu0 0.0
  %460 = vmatpush2.xpose.msra.mxu0 0.0
  %461 = vmatprep.subr.mxu0 0.0
  %462 = vmatpush2.xpose.msra.mxu0 0.0
  %463 = vmatprep.subr.mxu0 0.0
  %464 = vmatpush2.xpose.msra.mxu0 0.0
  %465 = vmatprep.mubr.f32.mxu0 0.0
  %466 = vmatmul.mubr.f32.gmra.mxu0 %v397
  %v467 = vpop.f32.mrf.mxu0
  %v468 = vadd.f32 0.0, %v467
  %v469 = vpop.f32.mrf.mxu0
  %470 = vdwg.mxu0
  %v471 = vsel %vm304, %v468, -inf
  %472 = vmax.xlane.f32.xlu0 %v471
  %v473 = vpop.xlane.xlu0 %472
  %v474 = vsub.f32 %v468, %v473
  %v475 = vmul.f32 %v474, 1.442695
  %v476 = vpow.pop %v475
  %v477 = vsel %vm304, %v476, 0.0
  %478 = vadd.xlane.f32.xlu0 %v477
  %v479 = vpop.xlane.xlu0 %478
  %480 = vrot.lane.b32.xlu0 %v218, 88
  %v481 = vpop.permute.xlu0 %480
  %v484 = vsel %vm227, %v476, 0
  %486 = vmatprep.subr.mxu0 0.0
  %487 = vmatpush1.msra.mxu0 0.0
  %488 = vmatprep.subr.mxu0 0.0
  %489 = vmatpush1.msra.mxu0 0.0
  %490 = vmatprep.subr.mxu0 0.0
  %491 = vmatpush1.msra.mxu0 0.0
  %492 = vmatprep.subr.mxu0 0.0
  %493 = vmatpush1.msra.mxu0 0.0
  %494 = vmatprep.subr.mxu0 0.0
  %495 = vmatpush1.msra.mxu0 0.0
  %496 = vmatprep.subr.mxu0 0.0
  %497 = vmatpush1.msra.mxu0 0.0
  %498 = vmatprep.subr.mxu0 0.0
  %499 = vmatpush1.msra.mxu0 0.0
  %500 = vmatprep.subr.mxu0 0.0
  %501 = vmatpush1.msra.mxu0 0.0
  %502 = vmatprep.subr.mxu0 0.0
  %503 = vmatpush1.msra.mxu0 0.0
  %504 = vmatprep.subr.mxu0 0.0
  %505 = vmatpush1.msra.mxu0 0.0
  %506 = vmatprep.subr.mxu0 0.0
  %507 = vmatpush1.msra.mxu0 0.0
  %508 = vmatprep.subr.mxu0 0.0
  %509 = vmatpush1.msra.mxu0 0.0
  %510 = vmatprep.subr.mxu0 0.0
  %511 = vmatpush1.msra.mxu0 0.0
  %512 = vmatprep.subr.mxu0 0.0
  %513 = vmatpush1.msra.mxu0 0.0
  %514 = vmatprep.subr.mxu0 0.0
  %515 = vmatpush1.msra.mxu0 0.0
  %516 = vmatprep.subr.mxu0 0.0
  %517 = vmatpush1.msra.mxu0 %v481
  %518 = vmatprep.subr.mxu0 0.0
  %519 = vmatpush2.msra.mxu0 0.0
  %520 = vmatprep.subr.mxu0 0.0
  %521 = vmatpush2.msra.mxu0 0.0
  %522 = vmatprep.subr.mxu0 0.0
  %523 = vmatpush2.msra.mxu0 0.0
  %524 = vmatprep.subr.mxu0 0.0
  %525 = vmatpush2.msra.mxu0 0.0
  %526 = vmatprep.subr.mxu0 0.0
  %527 = vmatpush2.msra.mxu0 0.0
  %528 = vmatprep.subr.mxu0 0.0
  %529 = vmatpush2.msra.mxu0 0.0
  %530 = vmatprep.subr.mxu0 0.0
  %531 = vmatpush2.msra.mxu0 0.0
  %532 = vmatprep.subr.mxu0 0.0
  %533 = vmatpush2.msra.mxu0 0.0
  %534 = vmatprep.subr.mxu0 0.0
  %535 = vmatpush2.msra.mxu0 0.0
  %536 = vmatprep.subr.mxu0 0.0
  %537 = vmatpush2.msra.mxu0 0.0
  %538 = vmatprep.subr.mxu0 0.0
  %539 = vmatpush2.msra.mxu0 0.0
  %540 = vmatprep.subr.mxu0 0.0
  %541 = vmatpush2.msra.mxu0 0.0
  %542 = vmatprep.subr.mxu0 0.0
  %543 = vmatpush2.msra.mxu0 0.0
  %544 = vmatprep.subr.mxu0 0.0
  %545 = vmatpush2.msra.mxu0 0.0
  %546 = vmatprep.subr.mxu0 0.0
  %547 = vmatpush2.msra.mxu0 0.0
  %548 = vmatprep.subr.mxu0 0.0
  %549 = vmatpush2.msra.mxu0 0.0
  %550 = vmatprep.mubr.f32.mxu0 0.0
  %551 = vmatmul.mubr.f32.gmra.mxu0 %v484
  %v552 = vpop.f32.mrf.mxu0
  %v553 = vadd.f32 0.0, %v552
  %v554 = vpop.f32.mrf.mxu0
  %555 = vdwg.mxu0
  %v556 = vrcp.pop %v479
  %v557 = vmul.f32 %v553, %v556
  %559 = vrot.lane.b32.xlu0 %v557, 8
  %v560 = vpop.permute.xlu0 %559
  %vm562 = vcmask 128064
  %563 = vst.msk [vmem:[#allocation2] sm:$0x3f] %vm562, %v560
  %564 = vrot.lane.b32.xlu0 %v226, 112
  %v565 = vpop.permute.xlu0 %564
  %566 = vrot.lane.b32.xlu0 %v218, 112
  %v567 = vpop.permute.xlu0 %566
  %v568 = vsel %vm227, %v565, 0
  %v570 = vsel %vm227, %v567, 0
  %572 = vmatprep.subr.mxu0 0.0
  %573 = vmatpush1.xpose.msra.mxu0 0.0
  %574 = vmatprep.subr.mxu0 0.0
  %575 = vmatpush1.xpose.msra.mxu0 0.0
  %576 = vmatprep.subr.mxu0 0.0
  %577 = vmatpush1.xpose.msra.mxu0 0.0
  %578 = vmatprep.subr.mxu0 0.0
  %579 = vmatpush1.xpose.msra.mxu0 0.0
  %580 = vmatprep.subr.mxu0 0.0
  %581 = vmatpush1.xpose.msra.mxu0 0.0
  %582 = vmatprep.subr.mxu0 0.0
  %583 = vmatpush1.xpose.msra.mxu0 0.0
  %584 = vmatprep.subr.mxu0 0.0
  %585 = vmatpush1.xpose.msra.mxu0 0.0
  %586 = vmatprep.subr.mxu0 0.0
  %587 = vmatpush1.xpose.msra.mxu0 0.0
  %588 = vmatprep.subr.mxu0 0.0
  %589 = vmatpush1.xpose.msra.mxu0 0.0
  %590 = vmatprep.subr.mxu0 0.0
  %591 = vmatpush1.xpose.msra.mxu0 0.0
  %592 = vmatprep.subr.mxu0 0.0
  %593 = vmatpush1.xpose.msra.mxu0 0.0
  %594 = vmatprep.subr.mxu0 0.0
  %595 = vmatpush1.xpose.msra.mxu0 0.0
  %596 = vmatprep.subr.mxu0 0.0
  %597 = vmatpush1.xpose.msra.mxu0 0.0
  %598 = vmatprep.subr.mxu0 0.0
  %599 = vmatpush1.xpose.msra.mxu0 0.0
  %600 = vmatprep.subr.mxu0 0.0
  %601 = vmatpush1.xpose.msra.mxu0 0.0
  %602 = vmatprep.subr.mxu0 0.0
  %603 = vmatpush1.xpose.msra.mxu0 %v570
  %604 = vmatprep.subr.mxu0 0.0
  %605 = vmatpush2.xpose.msra.mxu0 0.0
  %606 = vmatprep.subr.mxu0 0.0
  %607 = vmatpush2.xpose.msra.mxu0 0.0
  %608 = vmatprep.subr.mxu0 0.0
  %609 = vmatpush2.xpose.msra.mxu0 0.0
  %610 = vmatprep.subr.mxu0 0.0
  %611 = vmatpush2.xpose.msra.mxu0 0.0
  %612 = vmatprep.subr.mxu0 0.0
  %613 = vmatpush2.xpose.msra.mxu0 0.0
  %614 = vmatprep.subr.mxu0 0.0
  %615 = vmatpush2.xpose.msra.mxu0 0.0
  %616 = vmatprep.subr.mxu0 0.0
  %617 = vmatpush2.xpose.msra.mxu0 0.0
  %618 = vmatprep.subr.mxu0 0.0
  %619 = vmatpush2.xpose.msra.mxu0 0.0
  %620 = vmatprep.subr.mxu0 0.0
  %621 = vmatpush2.xpose.msra.mxu0 0.0
  %622 = vmatprep.subr.mxu0 0.0
  %623 = vmatpush2.xpose.msra.mxu0 0.0
  %624 = vmatprep.subr.mxu0 0.0
  %625 = vmatpush2.xpose.msra.mxu0 0.0
  %626 = vmatprep.subr.mxu0 0.0
  %627 = vmatpush2.xpose.msra.mxu0 0.0
  %628 = vmatprep.subr.mxu0 0.0
  %629 = vmatpush2.xpose.msra.mxu0 0.0
  %630 = vmatprep.subr.mxu0 0.0
  %631 = vmatpush2.xpose.msra.mxu0 0.0
  %632 = vmatprep.subr.mxu0 0.0
  %633 = vmatpush2.xpose.msra.mxu0 0.0
  %634 = vmatprep.subr.mxu0 0.0
  %635 = vmatpush2.xpose.msra.mxu0 0.0
  %636 = vmatprep.mubr.f32.mxu0 0.0
  %637 = vmatmul.mubr.f32.gmra.mxu0 %v568
  %v638 = vpop.f32.mrf.mxu0
  %v639 = vadd.f32 0.0, %v638
  %v640 = vpop.f32.mrf.mxu0
  %641 = vdwg.mxu0
  %v642 = vsel %vm304, %v639, -inf
  %643 = vmax.xlane.f32.xlu0 %v642
  %v644 = vpop.xlane.xlu0 %643
  %v645 = vsub.f32 %v639, %v644
  %v646 = vmul.f32 %v645, 1.442695
  %v647 = vpow.pop %v646
  %v648 = vsel %vm304, %v647, 0.0
  %649 = vadd.xlane.f32.xlu0 %v648
  %v650 = vpop.xlane.xlu0 %649
  %651 = vrot.lane.b32.xlu0 %v218, 80
  %v652 = vpop.permute.xlu0 %651
  %v655 = vsel %vm227, %v647, 0
  %657 = vmatprep.subr.mxu0 0.0
  %658 = vmatpush1.msra.mxu0 0.0
  %659 = vmatprep.subr.mxu0 0.0
  %660 = vmatpush1.msra.mxu0 0.0
  %661 = vmatprep.subr.mxu0 0.0
  %662 = vmatpush1.msra.mxu0 0.0
  %663 = vmatprep.subr.mxu0 0.0
  %664 = vmatpush1.msra.mxu0 0.0
  %665 = vmatprep.subr.mxu0 0.0
  %666 = vmatpush1.msra.mxu0 0.0
  %667 = vmatprep.subr.mxu0 0.0
  %668 = vmatpush1.msra.mxu0 0.0
  %669 = vmatprep.subr.mxu0 0.0
  %670 = vmatpush1.msra.mxu0 0.0
  %671 = vmatprep.subr.mxu0 0.0
  %672 = vmatpush1.msra.mxu0 0.0
  %673 = vmatprep.subr.mxu0 0.0
  %674 = vmatpush1.msra.mxu0 0.0
  %675 = vmatprep.subr.mxu0 0.0
  %676 = vmatpush1.msra.mxu0 0.0
  %677 = vmatprep.subr.mxu0 0.0
  %678 = vmatpush1.msra.mxu0 0.0
  %679 = vmatprep.subr.mxu0 0.0
  %680 = vmatpush1.msra.mxu0 0.0
  %681 = vmatprep.subr.mxu0 0.0
  %682 = vmatpush1.msra.mxu0 0.0
  %683 = vmatprep.subr.mxu0 0.0
  %684 = vmatpush1.msra.mxu0 0.0
  %685 = vmatprep.subr.mxu0 0.0
  %686 = vmatpush1.msra.mxu0 0.0
  %687 = vmatprep.subr.mxu0 0.0
  %688 = vmatpush1.msra.mxu0 %v652
  %689 = vmatprep.subr.mxu0 0.0
  %690 = vmatpush2.msra.mxu0 0.0
  %691 = vmatprep.subr.mxu0 0.0
  %692 = vmatpush2.msra.mxu0 0.0
  %693 = vmatprep.subr.mxu0 0.0
  %694 = vmatpush2.msra.mxu0 0.0
  %695 = vmatprep.subr.mxu0 0.0
  %696 = vmatpush2.msra.mxu0 0.0
  %697 = vmatprep.subr.mxu0 0.0
  %698 = vmatpush2.msra.mxu0 0.0
  %699 = vmatprep.subr.mxu0 0.0
  %700 = vmatpush2.msra.mxu0 0.0
  %701 = vmatprep.subr.mxu0 0.0
  %702 = vmatpush2.msra.mxu0 0.0
  %703 = vmatprep.subr.mxu0 0.0
  %704 = vmatpush2.msra.mxu0 0.0
  %705 = vmatprep.subr.mxu0 0.0
  %706 = vmatpush2.msra.mxu0 0.0
  %707 = vmatprep.subr.mxu0 0.0
  %708 = vmatpush2.msra.mxu0 0.0
  %709 = vmatprep.subr.mxu0 0.0
  %710 = vmatpush2.msra.mxu0 0.0
  %711 = vmatprep.subr.mxu0 0.0
  %712 = vmatpush2.msra.mxu0 0.0
  %713 = vmatprep.subr.mxu0 0.0
  %714 = vmatpush2.msra.mxu0 0.0
  %715 = vmatprep.subr.mxu0 0.0
  %716 = vmatpush2.msra.mxu0 0.0
  %717 = vmatprep.subr.mxu0 0.0
  %718 = vmatpush2.msra.mxu0 0.0
  %719 = vmatprep.subr.mxu0 0.0
  %720 = vmatpush2.msra.mxu0 0.0
  %721 = vmatprep.mubr.f32.mxu0 0.0
  %722 = vmatmul.mubr.f32.gmra.mxu0 %v655
  %v723 = vpop.f32.mrf.mxu0
  %v724 = vadd.f32 0.0, %v723
  %v725 = vpop.f32.mrf.mxu0
  %726 = vdwg.mxu0
  %v727 = vrcp.pop %v650
  %v728 = vmul.f32 %v724, %v727
  %730 = vrot.lane.b32.xlu0 %v728, 16
  %v731 = vpop.permute.xlu0 %730
  %vm733 = vcmask 193664
  %734 = vst.msk [vmem:[#allocation2] sm:$0x3f] %vm733, %v731
  %735 = vrot.lane.b32.xlu0 %v226, 104
  %v736 = vpop.permute.xlu0 %735
  %737 = vrot.lane.b32.xlu0 %v218, 104
  %v738 = vpop.permute.xlu0 %737
  %v739 = vsel %vm227, %v736, 0
  %v741 = vsel %vm227, %v738, 0
  %743 = vmatprep.subr.mxu0 0.0
  %744 = vmatpush1.xpose.msra.mxu0 0.0
  %745 = vmatprep.subr.mxu0 0.0
  %746 = vmatpush1.xpose.msra.mxu0 0.0
  %747 = vmatprep.subr.mxu0 0.0
  %748 = vmatpush1.xpose.msra.mxu0 0.0
  %749 = vmatprep.subr.mxu0 0.0
  %750 = vmatpush1.xpose.msra.mxu0 0.0
  %751 = vmatprep.subr.mxu0 0.0
  %752 = vmatpush1.xpose.msra.mxu0 0.0
  %753 = vmatprep.subr.mxu0 0.0
  %754 = vmatpush1.xpose.msra.mxu0 0.0
  %755 = vmatprep.subr.mxu0 0.0
  %756 = vmatpush1.xpose.msra.mxu0 0.0
  %757 = vmatprep.subr.mxu0 0.0
  %758 = vmatpush1.xpose.msra.mxu0 0.0
  %759 = vmatprep.subr.mxu0 0.0
  %760 = vmatpush1.xpose.msra.mxu0 0.0
  %761 = vmatprep.subr.mxu0 0.0
  %762 = vmatpush1.xpose.msra.mxu0 0.0
  %763 = vmatprep.subr.mxu0 0.0
  %764 = vmatpush1.xpose.msra.mxu0 0.0
  %765 = vmatprep.subr.mxu0 0.0
  %766 = vmatpush1.xpose.msra.mxu0 0.0
  %767 = vmatprep.subr.mxu0 0.0
  %768 = vmatpush1.xpose.msra.mxu0 0.0
  %769 = vmatprep.subr.mxu0 0.0
  %770 = vmatpush1.xpose.msra.mxu0 0.0
  %771 = vmatprep.subr.mxu0 0.0
  %772 = vmatpush1.xpose.msra.mxu0 0.0
  %773 = vmatprep.subr.mxu0 0.0
  %774 = vmatpush1.xpose.msra.mxu0 %v741
  %775 = vmatprep.subr.mxu0 0.0
  %776 = vmatpush2.xpose.msra.mxu0 0.0
  %777 = vmatprep.subr.mxu0 0.0
  %778 = vmatpush2.xpose.msra.mxu0 0.0
  %779 = vmatprep.subr.mxu0 0.0
  %780 = vmatpush2.xpose.msra.mxu0 0.0
  %781 = vmatprep.subr.mxu0 0.0
  %782 = vmatpush2.xpose.msra.mxu0 0.0
  %783 = vmatprep.subr.mxu0 0.0
  %784 = vmatpush2.xpose.msra.mxu0 0.0
  %785 = vmatprep.subr.mxu0 0.0
  %786 = vmatpush2.xpose.msra.mxu0 0.0
  %787 = vmatprep.subr.mxu0 0.0
  %788 = vmatpush2.xpose.msra.mxu0 0.0
  %789 = vmatprep.subr.mxu0 0.0
  %790 = vmatpush2.xpose.msra.mxu0 0.0
  %791 = vmatprep.subr.mxu0 0.0
  %792 = vmatpush2.xpose.msra.mxu0 0.0
  %793 = vmatprep.subr.mxu0 0.0
  %794 = vmatpush2.xpose.msra.mxu0 0.0
  %795 = vmatprep.subr.mxu0 0.0
  %796 = vmatpush2.xpose.msra.mxu0 0.0
  %797 = vmatprep.subr.mxu0 0.0
  %798 = vmatpush2.xpose.msra.mxu0 0.0
  %799 = vmatprep.subr.mxu0 0.0
  %800 = vmatpush2.xpose.msra.mxu0 0.0
  %801 = vmatprep.subr.mxu0 0.0
  %802 = vmatpush2.xpose.msra.mxu0 0.0
  %803 = vmatprep.subr.mxu0 0.0
  %804 = vmatpush2.xpose.msra.mxu0 0.0
  %805 = vmatprep.subr.mxu0 0.0
  %806 = vmatpush2.xpose.msra.mxu0 0.0
  %807 = vmatprep.mubr.f32.mxu0 0.0
  %808 = vmatmul.mubr.f32.gmra.mxu0 %v739
  %v809 = vpop.f32.mrf.mxu0
  %v810 = vadd.f32 0.0, %v809
  %v811 = vpop.f32.mrf.mxu0
  %812 = vdwg.mxu0
  %v813 = vsel %vm304, %v810, -inf
  %814 = vmax.xlane.f32.xlu0 %v813
  %v815 = vpop.xlane.xlu0 %814
  %v816 = vsub.f32 %v810, %v815
  %v817 = vmul.f32 %v816, 1.442695
  %v818 = vpow.pop %v817
  %v819 = vsel %vm304, %v818, 0.0
  %820 = vadd.xlane.f32.xlu0 %v819
  %v821 = vpop.xlane.xlu0 %820
  %822 = vrot.lane.b32.xlu0 %v218, 72
  %v823 = vpop.permute.xlu0 %822
  %v826 = vsel %vm227, %v818, 0
  %828 = vmatprep.subr.mxu0 0.0
  %829 = vmatpush1.msra.mxu0 0.0
  %830 = vmatprep.subr.mxu0 0.0
  %831 = vmatpush1.msra.mxu0 0.0
  %832 = vmatprep.subr.mxu0 0.0
  %833 = vmatpush1.msra.mxu0 0.0
  %834 = vmatprep.subr.mxu0 0.0
  %835 = vmatpush1.msra.mxu0 0.0
  %836 = vmatprep.subr.mxu0 0.0
  %837 = vmatpush1.msra.mxu0 0.0
  %838 = vmatprep.subr.mxu0 0.0
  %839 = vmatpush1.msra.mxu0 0.0
  %840 = vmatprep.subr.mxu0 0.0
  %841 = vmatpush1.msra.mxu0 0.0
  %842 = vmatprep.subr.mxu0 0.0
  %843 = vmatpush1.msra.mxu0 0.0
  %844 = vmatprep.subr.mxu0 0.0
  %845 = vmatpush1.msra.mxu0 0.0
  %846 = vmatprep.subr.mxu0 0.0
  %847 = vmatpush1.msra.mxu0 0.0
  %848 = vmatprep.subr.mxu0 0.0
  %849 = vmatpush1.msra.mxu0 0.0
  %850 = vmatprep.subr.mxu0 0.0
  %851 = vmatpush1.msra.mxu0 0.0
  %852 = vmatprep.subr.mxu0 0.0
  %853 = vmatpush1.msra.mxu0 0.0
  %854 = vmatprep.subr.mxu0 0.0
  %855 = vmatpush1.msra.mxu0 0.0
  %856 = vmatprep.subr.mxu0 0.0
  %857 = vmatpush1.msra.mxu0 0.0
  %858 = vmatprep.subr.mxu0 0.0
  %859 = vmatpush1.msra.mxu0 %v823
  %860 = vmatprep.subr.mxu0 0.0
  %861 = vmatpush2.msra.mxu0 0.0
  %862 = vmatprep.subr.mxu0 0.0
  %863 = vmatpush2.msra.mxu0 0.0
  %864 = vmatprep.subr.mxu0 0.0
  %865 = vmatpush2.msra.mxu0 0.0
  %866 = vmatprep.subr.mxu0 0.0
  %867 = vmatpush2.msra.mxu0 0.0
  %868 = vmatprep.subr.mxu0 0.0
  %869 = vmatpush2.msra.mxu0 0.0
  %870 = vmatprep.subr.mxu0 0.0
  %871 = vmatpush2.msra.mxu0 0.0
  %872 = vmatprep.subr.mxu0 0.0
  %873 = vmatpush2.msra.mxu0 0.0
  %874 = vmatprep.subr.mxu0 0.0
  %875 = vmatpush2.msra.mxu0 0.0
  %876 = vmatprep.subr.mxu0 0.0
  %877 = vmatpush2.msra.mxu0 0.0
  %878 = vmatprep.subr.mxu0 0.0
  %879 = vmatpush2.msra.mxu0 0.0
  %880 = vmatprep.subr.mxu0 0.0
  %881 = vmatpush2.msra.mxu0 0.0
  %882 = vmatprep.subr.mxu0 0.0
  %883 = vmatpush2.msra.mxu0 0.0
  %884 = vmatprep.subr.mxu0 0.0
  %885 = vmatpush2.msra.mxu0 0.0
  %886 = vmatprep.subr.mxu0 0.0
  %887 = vmatpush2.msra.mxu0 0.0
  %888 = vmatprep.subr.mxu0 0.0
  %889 = vmatpush2.msra.mxu0 0.0
  %890 = vmatprep.subr.mxu0 0.0
  %891 = vmatpush2.msra.mxu0 0.0
  %892 = vmatprep.mubr.f32.mxu0 0.0
  %893 = vmatmul.mubr.f32.gmra.mxu0 %v826
  %v894 = vpop.f32.mrf.mxu0
  %v895 = vadd.f32 0.0, %v894
  %v896 = vpop.f32.mrf.mxu0
  %897 = vdwg.mxu0
  %v898 = vrcp.pop %v821
  %v899 = vmul.f32 %v895, %v898
  %901 = vrot.lane.b32.xlu0 %v899, 24
  %v902 = vpop.permute.xlu0 %901
  %vm904 = vcmask 259264
  %905 = vst.msk [vmem:[#allocation2] sm:$0x3f] %vm904, %v902
  %v906 = vmul.f32 %v123, 0.35355338
  %vm908 = vcmask 1041408
  %v909 = vrot.slane %v226, 6
  %v910 = vrot.slane %v906, 6
  %v911 = vsel %vm908, %v909, %v910
  %v912 = vsel %vm227, %v911, 0
  %v915 = vsel %vm227, %v223, 0
  %917 = vmatprep.subr.mxu0 0.0
  %918 = vmatpush1.xpose.msra.mxu0 0.0
  %919 = vmatprep.subr.mxu0 0.0
  %920 = vmatpush1.xpose.msra.mxu0 0.0
  %921 = vmatprep.subr.mxu0 0.0
  %922 = vmatpush1.xpose.msra.mxu0 0.0
  %923 = vmatprep.subr.mxu0 0.0
  %924 = vmatpush1.xpose.msra.mxu0 0.0
  %925 = vmatprep.subr.mxu0 0.0
  %926 = vmatpush1.xpose.msra.mxu0 0.0
  %927 = vmatprep.subr.mxu0 0.0
  %928 = vmatpush1.xpose.msra.mxu0 0.0
  %929 = vmatprep.subr.mxu0 0.0
  %930 = vmatpush1.xpose.msra.mxu0 0.0
  %931 = vmatprep.subr.mxu0 0.0
  %932 = vmatpush1.xpose.msra.mxu0 0.0
  %933 = vmatprep.subr.mxu0 0.0
  %934 = vmatpush1.xpose.msra.mxu0 0.0
  %935 = vmatprep.subr.mxu0 0.0
  %936 = vmatpush1.xpose.msra.mxu0 0.0
  %937 = vmatprep.subr.mxu0 0.0
  %938 = vmatpush1.xpose.msra.mxu0 0.0
  %939 = vmatprep.subr.mxu0 0.0
  %940 = vmatpush1.xpose.msra.mxu0 0.0
  %941 = vmatprep.subr.mxu0 0.0
  %942 = vmatpush1.xpose.msra.mxu0 0.0
  %943 = vmatprep.subr.mxu0 0.0
  %944 = vmatpush1.xpose.msra.mxu0 0.0
  %945 = vmatprep.subr.mxu0 0.0
  %946 = vmatpush1.xpose.msra.mxu0 0.0
  %947 = vmatprep.subr.mxu0 0.0
  %948 = vmatpush1.xpose.msra.mxu0 %v915
  %949 = vmatprep.subr.mxu0 0.0
  %950 = vmatpush2.xpose.msra.mxu0 0.0
  %951 = vmatprep.subr.mxu0 0.0
  %952 = vmatpush2.xpose.msra.mxu0 0.0
  %953 = vmatprep.subr.mxu0 0.0
  %954 = vmatpush2.xpose.msra.mxu0 0.0
  %955 = vmatprep.subr.mxu0 0.0
  %956 = vmatpush2.xpose.msra.mxu0 0.0
  %957 = vmatprep.subr.mxu0 0.0
  %958 = vmatpush2.xpose.msra.mxu0 0.0
  %959 = vmatprep.subr.mxu0 0.0
  %960 = vmatpush2.xpose.msra.mxu0 0.0
  %961 = vmatprep.subr.mxu0 0.0
  %962 = vmatpush2.xpose.msra.mxu0 0.0
  %963 = vmatprep.subr.mxu0 0.0
  %964 = vmatpush2.xpose.msra.mxu0 0.0
  %965 = vmatprep.subr.mxu0 0.0
  %966 = vmatpush2.xpose.msra.mxu0 0.0
  %967 = vmatprep.subr.mxu0 0.0
  %968 = vmatpush2.xpose.msra.mxu0 0.0
  %969 = vmatprep.subr.mxu0 0.0
  %970 = vmatpush2.xpose.msra.mxu0 0.0
  %971 = vmatprep.subr.mxu0 0.0
  %972 = vmatpush2.xpose.msra.mxu0 0.0
  %973 = vmatprep.subr.mxu0 0.0
  %974 = vmatpush2.xpose.msra.mxu0 0.0
  %975 = vmatprep.subr.mxu0 0.0
  %976 = vmatpush2.xpose.msra.mxu0 0.0
  %977 = vmatprep.subr.mxu0 0.0
  %978 = vmatpush2.xpose.msra.mxu0 0.0
  %979 = vmatprep.subr.mxu0 0.0
  %980 = vmatpush2.xpose.msra.mxu0 0.0
  %981 = vmatprep.mubr.f32.mxu0 0.0
  %982 = vmatmul.mubr.f32.gmra.mxu0 %v912
  %v983 = vpop.f32.mrf.mxu0
  %v984 = vadd.f32 0.0, %v983
  %v985 = vpop.f32.mrf.mxu0
  %986 = vdwg.mxu0
  %v987 = vsel %vm304, %v984, -inf
  %988 = vmax.xlane.f32.xlu0 %v987
  %v989 = vpop.xlane.xlu0 %988
  %v990 = vsub.f32 %v984, %v989
  %v991 = vmul.f32 %v990, 1.442695
  %v992 = vpow.pop %v991
  %v993 = vsel %vm304, %v992, 0.0
  %994 = vadd.xlane.f32.xlu0 %v993
  %v995 = vpop.xlane.xlu0 %994
  %996 = vrot.lane.b32.xlu0 %v223, 96
  %v997 = vpop.permute.xlu0 %996
  %v1000 = vsel %vm227, %v992, 0
  %1002 = vmatprep.subr.mxu0 0.0
  %1003 = vmatpush1.msra.mxu0 0.0
  %1004 = vmatprep.subr.mxu0 0.0
  %1005 = vmatpush1.msra.mxu0 0.0
  %1006 = vmatprep.subr.mxu0 0.0
  %1007 = vmatpush1.msra.mxu0 0.0
  %1008 = vmatprep.subr.mxu0 0.0
  %1009 = vmatpush1.msra.mxu0 0.0
  %1010 = vmatprep.subr.mxu0 0.0
  %1011 = vmatpush1.msra.mxu0 0.0
  %1012 = vmatprep.subr.mxu0 0.0
  %1013 = vmatpush1.msra.mxu0 0.0
  %1014 = vmatprep.subr.mxu0 0.0
  %1015 = vmatpush1.msra.mxu0 0.0
  %1016 = vmatprep.subr.mxu0 0.0
  %1017 = vmatpush1.msra.mxu0 0.0
  %1018 = vmatprep.subr.mxu0 0.0
  %1019 = vmatpush1.msra.mxu0 0.0
  %1020 = vmatprep.subr.mxu0 0.0
  %1021 = vmatpush1.msra.mxu0 0.0
  %1022 = vmatprep.subr.mxu0 0.0
  %1023 = vmatpush1.msra.mxu0 0.0
  %1024 = vmatprep.subr.mxu0 0.0
  %1025 = vmatpush1.msra.mxu0 0.0
  %1026 = vmatprep.subr.mxu0 0.0
  %1027 = vmatpush1.msra.mxu0 0.0
  %1028 = vmatprep.subr.mxu0 0.0
  %1029 = vmatpush1.msra.mxu0 0.0
  %1030 = vmatprep.subr.mxu0 0.0
  %1031 = vmatpush1.msra.mxu0 0.0
  %1032 = vmatprep.subr.mxu0 0.0
  %1033 = vmatpush1.msra.mxu0 %v997
  %1034 = vmatprep.subr.mxu0 0.0
  %1035 = vmatpush2.msra.mxu0 0.0
  %1036 = vmatprep.subr.mxu0 0.0
  %1037 = vmatpush2.msra.mxu0 0.0
  %1038 = vmatprep.subr.mxu0 0.0
  %1039 = vmatpush2.msra.mxu0 0.0
  %1040 = vmatprep.subr.mxu0 0.0
  %1041 = vmatpush2.msra.mxu0 0.0
  %1042 = vmatprep.subr.mxu0 0.0
  %1043 = vmatpush2.msra.mxu0 0.0
  %1044 = vmatprep.subr.mxu0 0.0
  %1045 = vmatpush2.msra.mxu0 0.0
  %1046 = vmatprep.subr.mxu0 0.0
  %1047 = vmatpush2.msra.mxu0 0.0
  %1048 = vmatprep.subr.mxu0 0.0
  %1049 = vmatpush2.msra.mxu0 0.0
  %1050 = vmatprep.subr.mxu0 0.0
  %1051 = vmatpush2.msra.mxu0 0.0
  %1052 = vmatprep.subr.mxu0 0.0
  %1053 = vmatpush2.msra.mxu0 0.0
  %1054 = vmatprep.subr.mxu0 0.0
  %1055 = vmatpush2.msra.mxu0 0.0
  %1056 = vmatprep.subr.mxu0 0.0
  %1057 = vmatpush2.msra.mxu0 0.0
  %1058 = vmatprep.subr.mxu0 0.0
  %1059 = vmatpush2.msra.mxu0 0.0
  %1060 = vmatprep.subr.mxu0 0.0
  %1061 = vmatpush2.msra.mxu0 0.0
  %1062 = vmatprep.subr.mxu0 0.0
  %1063 = vmatpush2.msra.mxu0 0.0
  %1064 = vmatprep.subr.mxu0 0.0
  %1065 = vmatpush2.msra.mxu0 0.0
  %1066 = vmatprep.mubr.f32.mxu0 0.0
  %1067 = vmatmul.mubr.f32.gmra.mxu0 %v1000
  %v1068 = vpop.f32.mrf.mxu0
  %v1069 = vadd.f32 0.0, %v1068
  %v1070 = vpop.f32.mrf.mxu0
  %1071 = vdwg.mxu0
  %v1072 = vrcp.pop %v995
  %v1073 = vmul.f32 %v1069, %v1072
  %1074 = vst.msk [vmem:[#allocation2 + $0x6] sm:$0x3f] %vm304, %v1073
  %1075 = vrot.lane.b32.xlu0 %v911, 120
  %v1076 = vpop.permute.xlu0 %1075
  %1077 = vrot.lane.b32.xlu0 %v223, 120
  %v1078 = vpop.permute.xlu0 %1077
  %v1079 = vsel %vm227, %v1076, 0
  %v1081 = vsel %vm227, %v1078, 0
  %1083 = vmatprep.subr.mxu0 0.0
  %1084 = vmatpush1.xpose.msra.mxu0 0.0
  %1085 = vmatprep.subr.mxu0 0.0
  %1086 = vmatpush1.xpose.msra.mxu0 0.0
  %1087 = vmatprep.subr.mxu0 0.0
  %1088 = vmatpush1.xpose.msra.mxu0 0.0
  %1089 = vmatprep.subr.mxu0 0.0
  %1090 = vmatpush1.xpose.msra.mxu0 0.0
  %1091 = vmatprep.subr.mxu0 0.0
  %1092 = vmatpush1.xpose.msra.mxu0 0.0
  %1093 = vmatprep.subr.mxu0 0.0
  %1094 = vmatpush1.xpose.msra.mxu0 0.0
  %1095 = vmatprep.subr.mxu0 0.0
  %1096 = vmatpush1.xpose.msra.mxu0 0.0
  %1097 = vmatprep.subr.mxu0 0.0
  %1098 = vmatpush1.xpose.msra.mxu0 0.0
  %1099 = vmatprep.subr.mxu0 0.0
  %1100 = vmatpush1.xpose.msra.mxu0 0.0
  %1101 = vmatprep.subr.mxu0 0.0
  %1102 = vmatpush1.xpose.msra.mxu0 0.0
  %1103 = vmatprep.subr.mxu0 0.0
  %1104 = vmatpush1.xpose.msra.mxu0 0.0
  %1105 = vmatprep.subr.mxu0 0.0
  %1106 = vmatpush1.xpose.msra.mxu0 0.0
  %1107 = vmatprep.subr.mxu0 0.0
  %1108 = vmatpush1.xpose.msra.mxu0 0.0
  %1109 = vmatprep.subr.mxu0 0.0
  %1110 = vmatpush1.xpose.msra.mxu0 0.0
  %1111 = vmatprep.subr.mxu0 0.0
  %1112 = vmatpush1.xpose.msra.mxu0 0.0
  %1113 = vmatprep.subr.mxu0 0.0
  %1114 = vmatpush1.xpose.msra.mxu0 %v1081
  %1115 = vmatprep.subr.mxu0 0.0
  %1116 = vmatpush2.xpose.msra.mxu0 0.0
  %1117 = vmatprep.subr.mxu0 0.0
  %1118 = vmatpush2.xpose.msra.mxu0 0.0
  %1119 = vmatprep.subr.mxu0 0.0
  %1120 = vmatpush2.xpose.msra.mxu0 0.0
  %1121 = vmatprep.subr.mxu0 0.0
  %1122 = vmatpush2.xpose.msra.mxu0 0.0
  %1123 = vmatprep.subr.mxu0 0.0
  %1124 = vmatpush2.xpose.msra.mxu0 0.0
  %1125 = vmatprep.subr.mxu0 0.0
  %1126 = vmatpush2.xpose.msra.mxu0 0.0
  %1127 = vmatprep.subr.mxu0 0.0
  %1128 = vmatpush2.xpose.msra.mxu0 0.0
  %1129 = vmatprep.subr.mxu0 0.0
  %1130 = vmatpush2.xpose.msra.mxu0 0.0
  %1131 = vmatprep.subr.mxu0 0.0
  %1132 = vmatpush2.xpose.msra.mxu0 0.0
  %1133 = vmatprep.subr.mxu0 0.0
  %1134 = vmatpush2.xpose.msra.mxu0 0.0
  %1135 = vmatprep.subr.mxu0 0.0
  %1136 = vmatpush2.xpose.msra.mxu0 0.0
  %1137 = vmatprep.subr.mxu0 0.0
  %1138 = vmatpush2.xpose.msra.mxu0 0.0
  %1139 = vmatprep.subr.mxu0 0.0
  %1140 = vmatpush2.xpose.msra.mxu0 0.0
  %1141 = vmatprep.subr.mxu0 0.0
  %1142 = vmatpush2.xpose.msra.mxu0 0.0
  %1143 = vmatprep.subr.mxu0 0.0
  %1144 = vmatpush2.xpose.msra.mxu0 0.0
  %1145 = vmatprep.subr.mxu0 0.0
  %1146 = vmatpush2.xpose.msra.mxu0 0.0
  %1147 = vmatprep.mubr.f32.mxu0 0.0
  %1148 = vmatmul.mubr.f32.gmra.mxu0 %v1079
  %v1149 = vpop.f32.mrf.mxu0
  %v1150 = vadd.f32 0.0, %v1149
  %v1151 = vpop.f32.mrf.mxu0
  %1152 = vdwg.mxu0
  %v1153 = vsel %vm304, %v1150, -inf
  %1154 = vmax.xlane.f32.xlu0 %v1153
  %v1155 = vpop.xlane.xlu0 %1154
  %v1156 = vsub.f32 %v1150, %v1155
  %v1157 = vmul.f32 %v1156, 1.442695
  %v1158 = vpow.pop %v1157
  %v1159 = vsel %vm304, %v1158, 0.0
  %1160 = vadd.xlane.f32.xlu0 %v1159
  %v1161 = vpop.xlane.xlu0 %1160
  %1162 = vrot.lane.b32.xlu0 %v223, 88
  %v1163 = vpop.permute.xlu0 %1162
  %v1166 = vsel %vm227, %v1158, 0
  %1168 = vmatprep.subr.mxu0 0.0
  %1169 = vmatpush1.msra.mxu0 0.0
  %1170 = vmatprep.subr.mxu0 0.0
  %1171 = vmatpush1.msra.mxu0 0.0
  %1172 = vmatprep.subr.mxu0 0.0
  %1173 = vmatpush1.msra.mxu0 0.0
  %1174 = vmatprep.subr.mxu0 0.0
  %1175 = vmatpush1.msra.mxu0 0.0
  %1176 = vmatprep.subr.mxu0 0.0
  %1177 = vmatpush1.msra.mxu0 0.0
  %1178 = vmatprep.subr.mxu0 0.0
  %1179 = vmatpush1.msra.mxu0 0.0
  %1180 = vmatprep.subr.mxu0 0.0
  %1181 = vmatpush1.msra.mxu0 0.0
  %1182 = vmatprep.subr.mxu0 0.0
  %1183 = vmatpush1.msra.mxu0 0.0
  %1184 = vmatprep.subr.mxu0 0.0
  %1185 = vmatpush1.msra.mxu0 0.0
  %1186 = vmatprep.subr.mxu0 0.0
  %1187 = vmatpush1.msra.mxu0 0.0
  %1188 = vmatprep.subr.mxu0 0.0
  %1189 = vmatpush1.msra.mxu0 0.0
  %1190 = vmatprep.subr.mxu0 0.0
  %1191 = vmatpush1.msra.mxu0 0.0
  %1192 = vmatprep.subr.mxu0 0.0
  %1193 = vmatpush1.msra.mxu0 0.0
  %1194 = vmatprep.subr.mxu0 0.0
  %1195 = vmatpush1.msra.mxu0 0.0
  %1196 = vmatprep.subr.mxu0 0.0
  %1197 = vmatpush1.msra.mxu0 0.0
  %1198 = vmatprep.subr.mxu0 0.0
  %1199 = vmatpush1.msra.mxu0 %v1163
  %1200 = vmatprep.subr.mxu0 0.0
  %1201 = vmatpush2.msra.mxu0 0.0
  %1202 = vmatprep.subr.mxu0 0.0
  %1203 = vmatpush2.msra.mxu0 0.0
  %1204 = vmatprep.subr.mxu0 0.0
  %1205 = vmatpush2.msra.mxu0 0.0
  %1206 = vmatprep.subr.mxu0 0.0
  %1207 = vmatpush2.msra.mxu0 0.0
  %1208 = vmatprep.subr.mxu0 0.0
  %1209 = vmatpush2.msra.mxu0 0.0
  %1210 = vmatprep.subr.mxu0 0.0
  %1211 = vmatpush2.msra.mxu0 0.0
  %1212 = vmatprep.subr.mxu0 0.0
  %1213 = vmatpush2.msra.mxu0 0.0
  %1214 = vmatprep.subr.mxu0 0.0
  %1215 = vmatpush2.msra.mxu0 0.0
  %1216 = vmatprep.subr.mxu0 0.0
  %1217 = vmatpush2.msra.mxu0 0.0
  %1218 = vmatprep.subr.mxu0 0.0
  %1219 = vmatpush2.msra.mxu0 0.0
  %1220 = vmatprep.subr.mxu0 0.0
  %1221 = vmatpush2.msra.mxu0 0.0
  %1222 = vmatprep.subr.mxu0 0.0
  %1223 = vmatpush2.msra.mxu0 0.0
  %1224 = vmatprep.subr.mxu0 0.0
  %1225 = vmatpush2.msra.mxu0 0.0
  %1226 = vmatprep.subr.mxu0 0.0
  %1227 = vmatpush2.msra.mxu0 0.0
  %1228 = vmatprep.subr.mxu0 0.0
  %1229 = vmatpush2.msra.mxu0 0.0
  %1230 = vmatprep.subr.mxu0 0.0
  %1231 = vmatpush2.msra.mxu0 0.0
  %1232 = vmatprep.mubr.f32.mxu0 0.0
  %1233 = vmatmul.mubr.f32.gmra.mxu0 %v1166
  %v1234 = vpop.f32.mrf.mxu0
  %v1235 = vadd.f32 0.0, %v1234
  %v1236 = vpop.f32.mrf.mxu0
  %1237 = vdwg.mxu0
  %v1238 = vrcp.pop %v1161
  %v1239 = vmul.f32 %v1235, %v1238
  %1241 = vrot.lane.b32.xlu0 %v1239, 8
  %v1242 = vpop.permute.xlu0 %1241
  %1244 = vst.msk [vmem:[#allocation2 + $0x6] sm:$0x3f] %vm562, %v1242
  %1245 = vrot.lane.b32.xlu0 %v911, 112
  %v1246 = vpop.permute.xlu0 %1245
  %1247 = vrot.lane.b32.xlu0 %v223, 112
  %v1248 = vpop.permute.xlu0 %1247
  %v1249 = vsel %vm227, %v1246, 0
  %v1251 = vsel %vm227, %v1248, 0
  %1253 = vmatprep.subr.mxu0 0.0
  %1254 = vmatpush1.xpose.msra.mxu0 0.0
  %1255 = vmatprep.subr.mxu0 0.0
  %1256 = vmatpush1.xpose.msra.mxu0 0.0
  %1257 = vmatprep.subr.mxu0 0.0
  %1258 = vmatpush1.xpose.msra.mxu0 0.0
  %1259 = vmatprep.subr.mxu0 0.0
  %1260 = vmatpush1.xpose.msra.mxu0 0.0
  %1261 = vmatprep.subr.mxu0 0.0
  %1262 = vmatpush1.xpose.msra.mxu0 0.0
  %1263 = vmatprep.subr.mxu0 0.0
  %1264 = vmatpush1.xpose.msra.mxu0 0.0
  %1265 = vmatprep.subr.mxu0 0.0
  %1266 = vmatpush1.xpose.msra.mxu0 0.0
  %1267 = vmatprep.subr.mxu0 0.0
  %1268 = vmatpush1.xpose.msra.mxu0 0.0
  %1269 = vmatprep.subr.mxu0 0.0
  %1270 = vmatpush1.xpose.msra.mxu0 0.0
  %1271 = vmatprep.subr.mxu0 0.0
  %1272 = vmatpush1.xpose.msra.mxu0 0.0
  %1273 = vmatprep.subr.mxu0 0.0
  %1274 = vmatpush1.xpose.msra.mxu0 0.0
  %1275 = vmatprep.subr.mxu0 0.0
  %1276 = vmatpush1.xpose.msra.mxu0 0.0
  %1277 = vmatprep.subr.mxu0 0.0
  %1278 = vmatpush1.xpose.msra.mxu0 0.0
  %1279 = vmatprep.subr.mxu0 0.0
  %1280 = vmatpush1.xpose.msra.mxu0 0.0
  %1281 = vmatprep.subr.mxu0 0.0
  %1282 = vmatpush1.xpose.msra.mxu0 0.0
  %1283 = vmatprep.subr.mxu0 0.0
  %1284 = vmatpush1.xpose.msra.mxu0 %v1251
  %1285 = vmatprep.subr.mxu0 0.0
  %1286 = vmatpush2.xpose.msra.mxu0 0.0
  %1287 = vmatprep.subr.mxu0 0.0
  %1288 = vmatpush2.xpose.msra.mxu0 0.0
  %1289 = vmatprep.subr.mxu0 0.0
  %1290 = vmatpush2.xpose.msra.mxu0 0.0
  %1291 = vmatprep.subr.mxu0 0.0
  %1292 = vmatpush2.xpose.msra.mxu0 0.0
  %1293 = vmatprep.subr.mxu0 0.0
  %1294 = vmatpush2.xpose.msra.mxu0 0.0
  %1295 = vmatprep.subr.mxu0 0.0
  %1296 = vmatpush2.xpose.msra.mxu0 0.0
  %1297 = vmatprep.subr.mxu0 0.0
  %1298 = vmatpush2.xpose.msra.mxu0 0.0
  %1299 = vmatprep.subr.mxu0 0.0
  %1300 = vmatpush2.xpose.msra.mxu0 0.0
  %1301 = vmatprep.subr.mxu0 0.0
  %1302 = vmatpush2.xpose.msra.mxu0 0.0
  %1303 = vmatprep.subr.mxu0 0.0
  %1304 = vmatpush2.xpose.msra.mxu0 0.0
  %1305 = vmatprep.subr.mxu0 0.0
  %1306 = vmatpush2.xpose.msra.mxu0 0.0
  %1307 = vmatprep.subr.mxu0 0.0
  %1308 = vmatpush2.xpose.msra.mxu0 0.0
  %1309 = vmatprep.subr.mxu0 0.0
  %1310 = vmatpush2.xpose.msra.mxu0 0.0
  %1311 = vmatprep.subr.mxu0 0.0
  %1312 = vmatpush2.xpose.msra.mxu0 0.0
  %1313 = vmatprep.subr.mxu0 0.0
  %1314 = vmatpush2.xpose.msra.mxu0 0.0
  %1315 = vmatprep.subr.mxu0 0.0
  %1316 = vmatpush2.xpose.msra.mxu0 0.0
  %1317 = vmatprep.mubr.f32.mxu0 0.0
  %1318 = vmatmul.mubr.f32.gmra.mxu0 %v1249
  %v1319 = vpop.f32.mrf.mxu0
  %v1320 = vadd.f32 0.0, %v1319
  %v1321 = vpop.f32.mrf.mxu0
  %1322 = vdwg.mxu0
  %v1323 = vsel %vm304, %v1320, -inf
  %1324 = vmax.xlane.f32.xlu0 %v1323
  %v1325 = vpop.xlane.xlu0 %1324
  %v1326 = vsub.f32 %v1320, %v1325
  %v1327 = vmul.f32 %v1326, 1.442695
  %v1328 = vpow.pop %v1327
  %v1329 = vsel %vm304, %v1328, 0.0
  %1330 = vadd.xlane.f32.xlu0 %v1329
  %v1331 = vpop.xlane.xlu0 %1330
  %1332 = vrot.lane.b32.xlu0 %v223, 80
  %v1333 = vpop.permute.xlu0 %1332
  %v1336 = vsel %vm227, %v1328, 0
  %1338 = vmatprep.subr.mxu0 0.0
  %1339 = vmatpush1.msra.mxu0 0.0
  %1340 = vmatprep.subr.mxu0 0.0
  %1341 = vmatpush1.msra.mxu0 0.0
  %1342 = vmatprep.subr.mxu0 0.0
  %1343 = vmatpush1.msra.mxu0 0.0
  %1344 = vmatprep.subr.mxu0 0.0
  %1345 = vmatpush1.msra.mxu0 0.0
  %1346 = vmatprep.subr.mxu0 0.0
  %1347 = vmatpush1.msra.mxu0 0.0
  %1348 = vmatprep.subr.mxu0 0.0
  %1349 = vmatpush1.msra.mxu0 0.0
  %1350 = vmatprep.subr.mxu0 0.0
  %1351 = vmatpush1.msra.mxu0 0.0
  %1352 = vmatprep.subr.mxu0 0.0
  %1353 = vmatpush1.msra.mxu0 0.0
  %1354 = vmatprep.subr.mxu0 0.0
  %1355 = vmatpush1.msra.mxu0 0.0
  %1356 = vmatprep.subr.mxu0 0.0
  %1357 = vmatpush1.msra.mxu0 0.0
  %1358 = vmatprep.subr.mxu0 0.0
  %1359 = vmatpush1.msra.mxu0 0.0
  %1360 = vmatprep.subr.mxu0 0.0
  %1361 = vmatpush1.msra.mxu0 0.0
  %1362 = vmatprep.subr.mxu0 0.0
  %1363 = vmatpush1.msra.mxu0 0.0
  %1364 = vmatprep.subr.mxu0 0.0
  %1365 = vmatpush1.msra.mxu0 0.0
  %1366 = vmatprep.subr.mxu0 0.0
  %1367 = vmatpush1.msra.mxu0 0.0
  %1368 = vmatprep.subr.mxu0 0.0
  %1369 = vmatpush1.msra.mxu0 %v1333
  %1370 = vmatprep.subr.mxu0 0.0
  %1371 = vmatpush2.msra.mxu0 0.0
  %1372 = vmatprep.subr.mxu0 0.0
  %1373 = vmatpush2.msra.mxu0 0.0
  %1374 = vmatprep.subr.mxu0 0.0
  %1375 = vmatpush2.msra.mxu0 0.0
  %1376 = vmatprep.subr.mxu0 0.0
  %1377 = vmatpush2.msra.mxu0 0.0
  %1378 = vmatprep.subr.mxu0 0.0
  %1379 = vmatpush2.msra.mxu0 0.0
  %1380 = vmatprep.subr.mxu0 0.0
  %1381 = vmatpush2.msra.mxu0 0.0
  %1382 = vmatprep.subr.mxu0 0.0
  %1383 = vmatpush2.msra.mxu0 0.0
  %1384 = vmatprep.subr.mxu0 0.0
  %1385 = vmatpush2.msra.mxu0 0.0
  %1386 = vmatprep.subr.mxu0 0.0
  %1387 = vmatpush2.msra.mxu0 0.0
  %1388 = vmatprep.subr.mxu0 0.0
  %1389 = vmatpush2.msra.mxu0 0.0
  %1390 = vmatprep.subr.mxu0 0.0
  %1391 = vmatpush2.msra.mxu0 0.0
  %1392 = vmatprep.subr.mxu0 0.0
  %1393 = vmatpush2.msra.mxu0 0.0
  %1394 = vmatprep.subr.mxu0 0.0
  %1395 = vmatpush2.msra.mxu0 0.0
  %1396 = vmatprep.subr.mxu0 0.0
  %1397 = vmatpush2.msra.mxu0 0.0
  %1398 = vmatprep.subr.mxu0 0.0
  %1399 = vmatpush2.msra.mxu0 0.0
  %1400 = vmatprep.subr.mxu0 0.0
  %1401 = vmatpush2.msra.mxu0 0.0
  %1402 = vmatprep.mubr.f32.mxu0 0.0
  %1403 = vmatmul.mubr.f32.gmra.mxu0 %v1336
  %v1404 = vpop.f32.mrf.mxu0
  %v1405 = vadd.f32 0.0, %v1404
  %v1406 = vpop.f32.mrf.mxu0
  %1407 = vdwg.mxu0
  %v1408 = vrcp.pop %v1331
  %v1409 = vmul.f32 %v1405, %v1408
  %1411 = vrot.lane.b32.xlu0 %v1409, 16
  %v1412 = vpop.permute.xlu0 %1411
  %1414 = vst.msk [vmem:[#allocation2 + $0x6] sm:$0x3f] %vm733, %v1412
  %1415 = vrot.lane.b32.xlu0 %v911, 104
  %v1416 = vpop.permute.xlu0 %1415
  %1417 = vrot.lane.b32.xlu0 %v223, 104
  %v1418 = vpop.permute.xlu0 %1417
  %v1419 = vsel %vm227, %v1416, 0
  %v1421 = vsel %vm227, %v1418, 0
  %1423 = vmatprep.subr.mxu0 0.0
  %1424 = vmatpush1.xpose.msra.mxu0 0.0
  %1425 = vmatprep.subr.mxu0 0.0
  %1426 = vmatpush1.xpose.msra.mxu0 0.0
  %1427 = vmatprep.subr.mxu0 0.0
  %1428 = vmatpush1.xpose.msra.mxu0 0.0
  %1429 = vmatprep.subr.mxu0 0.0
  %1430 = vmatpush1.xpose.msra.mxu0 0.0
  %1431 = vmatprep.subr.mxu0 0.0
  %1432 = vmatpush1.xpose.msra.mxu0 0.0
  %1433 = vmatprep.subr.mxu0 0.0
  %1434 = vmatpush1.xpose.msra.mxu0 0.0
  %1435 = vmatprep.subr.mxu0 0.0
  %1436 = vmatpush1.xpose.msra.mxu0 0.0
  %1437 = vmatprep.subr.mxu0 0.0
  %1438 = vmatpush1.xpose.msra.mxu0 0.0
  %1439 = vmatprep.subr.mxu0 0.0
  %1440 = vmatpush1.xpose.msra.mxu0 0.0
  %1441 = vmatprep.subr.mxu0 0.0
  %1442 = vmatpush1.xpose.msra.mxu0 0.0
  %1443 = vmatprep.subr.mxu0 0.0
  %1444 = vmatpush1.xpose.msra.mxu0 0.0
  %1445 = vmatprep.subr.mxu0 0.0
  %1446 = vmatpush1.xpose.msra.mxu0 0.0
  %1447 = vmatprep.subr.mxu0 0.0
  %1448 = vmatpush1.xpose.msra.mxu0 0.0
  %1449 = vmatprep.subr.mxu0 0.0
  %1450 = vmatpush1.xpose.msra.mxu0 0.0
  %1451 = vmatprep.subr.mxu0 0.0
  %1452 = vmatpush1.xpose.msra.mxu0 0.0
  %1453 = vmatprep.subr.mxu0 0.0
  %1454 = vmatpush1.xpose.msra.mxu0 %v1421
  %1455 = vmatprep.subr.mxu0 0.0
  %1456 = vmatpush2.xpose.msra.mxu0 0.0
  %1457 = vmatprep.subr.mxu0 0.0
  %1458 = vmatpush2.xpose.msra.mxu0 0.0
  %1459 = vmatprep.subr.mxu0 0.0
  %1460 = vmatpush2.xpose.msra.mxu0 0.0
  %1461 = vmatprep.subr.mxu0 0.0
  %1462 = vmatpush2.xpose.msra.mxu0 0.0
  %1463 = vmatprep.subr.mxu0 0.0
  %1464 = vmatpush2.xpose.msra.mxu0 0.0
  %1465 = vmatprep.subr.mxu0 0.0
  %1466 = vmatpush2.xpose.msra.mxu0 0.0
  %1467 = vmatprep.subr.mxu0 0.0
  %1468 = vmatpush2.xpose.msra.mxu0 0.0
  %1469 = vmatprep.subr.mxu0 0.0
  %1470 = vmatpush2.xpose.msra.mxu0 0.0
  %1471 = vmatprep.subr.mxu0 0.0
  %1472 = vmatpush2.xpose.msra.mxu0 0.0
  %1473 = vmatprep.subr.mxu0 0.0
  %1474 = vmatpush2.xpose.msra.mxu0 0.0
  %1475 = vmatprep.subr.mxu0 0.0
  %1476 = vmatpush2.xpose.msra.mxu0 0.0
  %1477 = vmatprep.subr.mxu0 0.0
  %1478 = vmatpush2.xpose.msra.mxu0 0.0
  %1479 = vmatprep.subr.mxu0 0.0
  %1480 = vmatpush2.xpose.msra.mxu0 0.0
  %1481 = vmatprep.subr.mxu0 0.0
  %1482 = vmatpush2.xpose.msra.mxu0 0.0
  %1483 = vmatprep.subr.mxu0 0.0
  %1484 = vmatpush2.xpose.msra.mxu0 0.0
  %1485 = vmatprep.subr.mxu0 0.0
  %1486 = vmatpush2.xpose.msra.mxu0 0.0
  %1487 = vmatprep.mubr.f32.mxu0 0.0
  %1488 = vmatmul.mubr.f32.gmra.mxu0 %v1419
  %v1489 = vpop.f32.mrf.mxu0
  %v1490 = vadd.f32 0.0, %v1489
  %v1491 = vpop.f32.mrf.mxu0
  %1492 = vdwg.mxu0
  %v1493 = vsel %vm304, %v1490, -inf
  %1494 = vmax.xlane.f32.xlu0 %v1493
  %v1495 = vpop.xlane.xlu0 %1494
  %v1496 = vsub.f32 %v1490, %v1495
  %v1497 = vmul.f32 %v1496, 1.442695
  %v1498 = vpow.pop %v1497
  %v1499 = vsel %vm304, %v1498, 0.0
  %1500 = vadd.xlane.f32.xlu0 %v1499
  %v1501 = vpop.xlane.xlu0 %1500
  %1502 = vrot.lane.b32.xlu0 %v223, 72
  %v1503 = vpop.permute.xlu0 %1502
  %v1506 = vsel %vm227, %v1498, 0
  %1508 = vmatprep.subr.mxu0 0.0
  %1509 = vmatpush1.msra.mxu0 0.0
  %1510 = vmatprep.subr.mxu0 0.0
  %1511 = vmatpush1.msra.mxu0 0.0
  %1512 = vmatprep.subr.mxu0 0.0
  %1513 = vmatpush1.msra.mxu0 0.0
  %1514 = vmatprep.subr.mxu0 0.0
  %1515 = vmatpush1.msra.mxu0 0.0
  %1516 = vmatprep.subr.mxu0 0.0
  %1517 = vmatpush1.msra.mxu0 0.0
  %1518 = vmatprep.subr.mxu0 0.0
  %1519 = vmatpush1.msra.mxu0 0.0
  %1520 = vmatprep.subr.mxu0 0.0
  %1521 = vmatpush1.msra.mxu0 0.0
  %1522 = vmatprep.subr.mxu0 0.0
  %1523 = vmatpush1.msra.mxu0 0.0
  %1524 = vmatprep.subr.mxu0 0.0
  %1525 = vmatpush1.msra.mxu0 0.0
  %1526 = vmatprep.subr.mxu0 0.0
  %1527 = vmatpush1.msra.mxu0 0.0
  %1528 = vmatprep.subr.mxu0 0.0
  %1529 = vmatpush1.msra.mxu0 0.0
  %1530 = vmatprep.subr.mxu0 0.0
  %1531 = vmatpush1.msra.mxu0 0.0
  %1532 = vmatprep.subr.mxu0 0.0
  %1533 = vmatpush1.msra.mxu0 0.0
  %1534 = vmatprep.subr.mxu0 0.0
  %1535 = vmatpush1.msra.mxu0 0.0
  %1536 = vmatprep.subr.mxu0 0.0
  %1537 = vmatpush1.msra.mxu0 0.0
  %1538 = vmatprep.subr.mxu0 0.0
  %1539 = vmatpush1.msra.mxu0 %v1503
  %1540 = vmatprep.subr.mxu0 0.0
  %1541 = vmatpush2.msra.mxu0 0.0
  %1542 = vmatprep.subr.mxu0 0.0
  %1543 = vmatpush2.msra.mxu0 0.0
  %1544 = vmatprep.subr.mxu0 0.0
  %1545 = vmatpush2.msra.mxu0 0.0
  %1546 = vmatprep.subr.mxu0 0.0
  %1547 = vmatpush2.msra.mxu0 0.0
  %1548 = vmatprep.subr.mxu0 0.0
  %1549 = vmatpush2.msra.mxu0 0.0
  %1550 = vmatprep.subr.mxu0 0.0
  %1551 = vmatpush2.msra.mxu0 0.0
  %1552 = vmatprep.subr.mxu0 0.0
  %1553 = vmatpush2.msra.mxu0 0.0
  %1554 = vmatprep.subr.mxu0 0.0
  %1555 = vmatpush2.msra.mxu0 0.0
  %1556 = vmatprep.subr.mxu0 0.0
  %1557 = vmatpush2.msra.mxu0 0.0
  %1558 = vmatprep.subr.mxu0 0.0
  %1559 = vmatpush2.msra.mxu0 0.0
  %1560 = vmatprep.subr.mxu0 0.0
  %1561 = vmatpush2.msra.mxu0 0.0
  %1562 = vmatprep.subr.mxu0 0.0
  %1563 = vmatpush2.msra.mxu0 0.0
  %1564 = vmatprep.subr.mxu0 0.0
  %1565 = vmatpush2.msra.mxu0 0.0
  %1566 = vmatprep.subr.mxu0 0.0
  %1567 = vmatpush2.msra.mxu0 0.0
  %1568 = vmatprep.subr.mxu0 0.0
  %1569 = vmatpush2.msra.mxu0 0.0
  %1570 = vmatprep.subr.mxu0 0.0
  %1571 = vmatpush2.msra.mxu0 0.0
  %1572 = vmatprep.mubr.f32.mxu0 0.0
  %1573 = vmatmul.mubr.f32.gmra.mxu0 %v1506
  %v1574 = vpop.f32.mrf.mxu0
  %v1575 = vadd.f32 0.0, %v1574
  %v1576 = vpop.f32.mrf.mxu0
  %1577 = vdwg.mxu0
  %v1578 = vrcp.pop %v1501
  %v1579 = vmul.f32 %v1575, %v1578
  %1581 = vrot.lane.b32.xlu0 %v1579, 24
  %v1582 = vpop.permute.xlu0 %1581
  %1584 = vst.msk [vmem:[#allocation2 + $0x6] sm:$0x3f] %vm904, %v1582
  %v1585 = vld [vmem:[#allocation2] sm:$0xff]
  %v1586 = vld [vmem:[#allocation2 + $0x8] sm:$0xf]
  %v1587 = vld [vmem:[%s4] sm:$0xff]
  %v1588 = vld [vmem:[%s4 + $0x8] sm:$0xff]
  %v1589 = vld [vmem:[%s4 + $0x10] sm:$0xff]
  %v1590 = vld [vmem:[%s4 + $0x18] sm:$0xff]
  %v1591 = vld [vmem:[%s5] sm:$0x1]
  %v1593 = vlaneseq
  %v1594 = vshrl.u32 %v1593, 7
  %v1595 = vsub.s32 0, %v1594
  %v1596 = vrot.slane %v1591, %v1595
  %v1599 = vsel %vm44, %v1585, 0
  %v1602 = vsel %vm44, %v1586, 0
  %1604 = vmatprep.subr.mxu0 0.0
  %1605 = vmatpush1.msra.mxu0 0.0
  %1606 = vmatprep.subr.mxu0 0.0
  %1607 = vmatpush1.msra.mxu0 0.0
  %1608 = vmatprep.subr.mxu0 0.0
  %1609 = vmatpush1.msra.mxu0 0.0
  %1610 = vmatprep.subr.mxu0 0.0
  %1611 = vmatpush1.msra.mxu0 0.0
  %1612 = vmatprep.subr.mxu0 0.0
  %1613 = vmatpush1.msra.mxu0 0.0
  %1614 = vmatprep.subr.mxu0 0.0
  %1615 = vmatpush1.msra.mxu0 0.0
  %1616 = vmatprep.subr.mxu0 0.0
  %1617 = vmatpush1.msra.mxu0 0.0
  %1618 = vmatprep.subr.mxu0 0.0
  %1619 = vmatpush1.msra.mxu0 0.0
  %1620 = vmatprep.subr.mxu0 0.0
  %1621 = vmatpush1.msra.mxu0 0.0
  %1622 = vmatprep.subr.mxu0 0.0
  %1623 = vmatpush1.msra.mxu0 0.0
  %1624 = vmatprep.subr.mxu0 0.0
  %1625 = vmatpush1.msra.mxu0 0.0
  %1626 = vmatprep.subr.mxu0 0.0
  %1627 = vmatpush1.msra.mxu0 0.0
  %1628 = vmatprep.subr.mxu0 0.0
  %1629 = vmatpush1.msra.mxu0 %v1590
  %1630 = vmatprep.subr.mxu0 0.0
  %1631 = vmatpush1.msra.mxu0 %v1589
  %1632 = vmatprep.subr.mxu0 0.0
  %1633 = vmatpush1.msra.mxu0 %v1588
  %1634 = vmatprep.subr.mxu0 0.0
  %1635 = vmatpush1.msra.mxu0 %v1587
  %1636 = vmatprep.subr.mxu0 0.0
  %1637 = vmatpush2.msra.mxu0 0.0
  %1638 = vmatprep.subr.mxu0 0.0
  %1639 = vmatpush2.msra.mxu0 0.0
  %1640 = vmatprep.subr.mxu0 0.0
  %1641 = vmatpush2.msra.mxu0 0.0
  %1642 = vmatprep.subr.mxu0 0.0
  %1643 = vmatpush2.msra.mxu0 0.0
  %1644 = vmatprep.subr.mxu0 0.0
  %1645 = vmatpush2.msra.mxu0 0.0
  %1646 = vmatprep.subr.mxu0 0.0
  %1647 = vmatpush2.msra.mxu0 0.0
  %1648 = vmatprep.subr.mxu0 0.0
  %1649 = vmatpush2.msra.mxu0 0.0
  %1650 = vmatprep.subr.mxu0 0.0
  %1651 = vmatpush2.msra.mxu0 0.0
  %1652 = vmatprep.subr.mxu0 0.0
  %1653 = vmatpush2.msra.mxu0 0.0
  %1654 = vmatprep.subr.mxu0 0.0
  %1655 = vmatpush2.msra.mxu0 0.0
  %1656 = vmatprep.subr.mxu0 0.0
  %1657 = vmatpush2.msra.mxu0 0.0
  %1658 = vmatprep.subr.mxu0 0.0
  %1659 = vmatpush2.msra.mxu0 0.0
  %1660 = vmatprep.subr.mxu0 0.0
  %1661 = vmatpush2.msra.mxu0 0.0
  %1662 = vmatprep.subr.mxu0 0.0
  %1663 = vmatpush2.msra.mxu0 0.0
  %1664 = vmatprep.subr.mxu0 0.0
  %1665 = vmatpush2.msra.mxu0 0.0
  %1666 = vmatprep.subr.mxu0 0.0
  %1667 = vmatpush2.msra.mxu0 0.0
  %1668 = vmatprep.mubr.f32.mxu0 0.0
  %1669 = vmatmul.mubr.f32.gmra.mxu0 %v1599
  %v1670 = vpop.f32.mrf.mxu0
  %v1671 = vadd.f32 %v1596, %v1670
  %v1672 = vpop.f32.mrf.mxu0
  %1673 = vmatprep.mubr.f32.mxu0 0.0
  %1674 = vmatmul.mubr.f32.gmra.mxu0 %v1602
  %v1675 = vpop.f32.mrf.mxu0
  %v1676 = vadd.f32 %v1596, %v1675
  %v1677 = vpop.f32.mrf.mxu0
  %1678 = vdwg.mxu0
  %v1679 = vadd.f32 %v29, %v1671
  %v1680 = vadd.f32 %v30, %v1676
  %v1681 = vsel %vm44, %v1679, 0.0
  %1682 = vadd.xlane.f32.xlu0 %v1681
  %v1683 = vpop.xlane.xlu0 %1682
  %vm1684 = vcmask 257024
  %v1685 = vsel %vm1684, %v1680, 0.0
  %1686 = vadd.xlane.f32.xlu0 %v1685
  %v1687 = vpop.xlane.xlu0 %1686
  %v1688 = vrcp.pop 32.0
  %v1689 = vmul.f32 %v1683, %v1688
  %v1690 = vmul.f32 %v1687, %v1688
  %v1691 = vsub.f32 %v1679, %v1689
  %v1692 = vsub.f32 %v1680, %v1690
  %v1693 = vmul.f32 %v1691, %v1691
  %v1694 = vmul.f32 %v1692, %v1692
  %v1695 = vsel %vm44, %v1693, 0.0
  %1696 = vadd.xlane.f32.xlu0 %v1695
  %v1697 = vpop.xlane.xlu0 %1696
  %v1698 = vsel %vm1684, %v1694, 0.0
  %1699 = vadd.xlane.f32.xlu0 %v1698
  %v1700 = vpop.xlane.xlu0 %1699
  %v1701 = vmul.f32 %v1697, %v1688
  %v1702 = vmul.f32 %v1700, %v1688
  %v1703 = vadd.f32 %v1701, 1e-05
  %v1704 = vadd.f32 %v1702, 1e-05
  %v1705 = vrsqrt.pop %v1703
  %v1706 = vrsqrt.pop %v1704
  %v1707 = vmul.f32 %v1691, %v1705
  %v1708 = vmul.f32 %v1692, %v1706
  %v1709 = vld [vmem:[%s6] sm:$0x1]
  %v1711 = vlaneseq
  %v1712 = vshrl.u32 %v1711, 7
  %v1713 = vsub.s32 0, %v1712
  %v1714 = vrot.slane %v1709, %v1713
  %v1716 = vmul.f32 %v1707, %v1714
  %v1717 = vmul.f32 %v1708, %v1714
  %v1718 = vld [vmem:[%s7] sm:$0x1]
  %v1720 = vlaneseq
  %v1721 = vshrl.u32 %v1720, 7
  %v1722 = vsub.s32 0, %v1721
  %v1723 = vrot.slane %v1718, %v1722
  %v1725 = vadd.f32 %v1716, %v1723
  %v1726 = vadd.f32 %v1717, %v1723
  %1727 = vst.msk [vmem:[%s8] sm:$0xff] %vm44, %v1725
  %1728 = vst.msk [vmem:[%s8 + $0x8] sm:$0xf] %vm1684, %v1726
  // Predicated region
  $region34: #{transformer_forward.18} parent=0 // pred_check
    _
  $region35: #{transformer_forward.18} parent=0 // pred_check_branch
    %1730 = sbr.rel (0) target = $region37
  $region36: #{transformer_forward.18} parent=0 // pred_region
    _
  $region37: #{transformer_forward.18} parent=0 // pred_fallthru
    _
  // Predicated region
  $region38: #{transformer_forward.18} parent=0 // pred_check
    _
  $region39: #{transformer_forward.18} parent=0 // pred_check_branch
    %1732 = sbr.rel (0) target = $region41
  $region40: #{transformer_forward.18} parent=0 // pred_region
    _
  $region41: #{transformer_forward.18} parent=0 // pred_fallthru
    _

</llo_original>
